<compile_context>
chip_gen: v5e
topology: v5e:2x2
jax: 0.10.0
libtpu: 0.0.40
codegen_flags: <defaults>
</compile_context>

<pallas_src>
import functools

import jax
import jax.numpy as jnp
from jax.experimental import pallas as pl
from jax.experimental.pallas import tpu as pltpu

HIDDEN = 32
NUM_LAYERS = 4
SEQ_X = 16
SEQ_Y = 8


def _sigmoid(x):
    # tanh-based sigmoid: one EUP op instead of exp + divide.
    return 0.5 * (jnp.tanh(0.5 * x) + 1.0)


def _lstm_turnover_kernel(x_ref, ax_ref, ay_ref, win0_ref, whh0_ref, wcat_ref,
                          b_ref, wlin_ref, blin_ref, out_ref, *, hidden,
                          num_layers, future_pred):
    B = x_ref.shape[0]
    H = hidden
    L = num_layers

    # ---- hoisted loop-invariant small reads --------------------------------
    row_x = win0_ref[0:1, :]                      # (1, 4H) layer-0 x weight row
    row_ax = win0_ref[1:2, :]                     # (1, 4H) layer-0 annual row
    b0 = b_ref[0:1, :]                            # (1, 4H)
    biases = [b_ref[l:l + 1, :] for l in range(1, L)]
    w_lin_row = wlin_ref[...]                     # (1, H)
    b_lin = blin_ref[...]                         # (1, 1)

    # Hidden / cell states carried in registers (time loop is fully unrolled).
    h = [jnp.zeros((B, H), jnp.float32) for _ in range(L)]
    c = [jnp.zeros((B, H), jnp.float32) for _ in range(L)]

    def apply_gates(l, gates):
        # Full-width activations, then slice (i, f, g, o in PyTorch order).
        sg = _sigmoid(gates)                      # (B, 4H)
        tg = jnp.tanh(gates)                      # (B, 4H)
        i_g = sg[:, 0:H]
        f_g = sg[:, H:2 * H]
        g_g = tg[:, 2 * H:3 * H]
        o_g = sg[:, 3 * H:4 * H]
        c_new = f_g * c[l] + i_g * g_g
        h_new = o_g * jnp.tanh(c_new)
        c[l] = c_new
        h[l] = h_new
        return h_new

    def cell0(pre):
        # Layer-0 in-loop work: one K=H matmul + precomputed input term.
        gates = jnp.dot(h[0], whh0_ref[...],
                        preferred_element_type=jnp.float32) + pre
        return apply_gates(0, gates)

    def cell(l, inp):
        # Layers 1..L-1: fused [inp, h] @ [w_ih; w_hh]  (one K=2H matmul).
        cat = jnp.concatenate([inp, h[l]], axis=1)           # (B, 2H)
        gates = (jnp.dot(cat, wcat_ref[l - 1],
                         preferred_element_type=jnp.float32)
                 + biases[l - 1])
        return apply_gates(l, gates)

    def step(pre0, add_col):
        out = cell0(pre0)
        for l in range(1, L):
            out = cell(l, out)
        # Linear head as VPU multiply + lane reduce (avoids an N=1 MXU matmul).
        pred = jnp.tanh(
            jnp.sum(out * w_lin_row, axis=-1, keepdims=True) + b_lin)
        return add_col + pred

    # ---- precompute the known layer-0 gate pre-activation terms ------------
    # Phase 1 (teacher forced): both inputs known -> full input term + bias.
    ax_cols = [ax_ref[:, t + 1:t + 2] for t in range(SEQ_X - 1)]
    pre1 = [x_ref[:, t:t + 1] * row_x + ax_cols[t] * row_ax + b0
            for t in range(SEQ_X - 1)]
    # Phase 2 (autoregressive): annual term + bias known ahead of time.
    ay_cols = [ay_ref[:, p:p + 1] for p in range(future_pred)]
    pre2 = [ay_cols[p] * row_ax + b0 for p in range(future_pred)]

    # ---- phase 1: 15 teacher-forced steps -----------------------------------
    for t in range(SEQ_X - 1):
        y = step(pre1[t], ax_cols[t])
        out_ref[:, t:t + 1] = y

    # ---- phase 2: autoregressive prediction ---------------------------------
    out_prev = x_ref[:, SEQ_X - 1:SEQ_X]
    for p in range(future_pred):
        y = step(out_prev * row_x + pre2[p], ay_cols[p])
        out_ref[:, SEQ_X - 1 + p:SEQ_X + p] = y
        out_prev = y


def lstm_turnover_forward(params, x, annual_x, annual_y, future_pred,
                          *, block_b=None):
    # future_pred must stay a static Python int (retrace per value otherwise).
    future_pred = min(int(future_pred), annual_y.shape[1])
    B = x.shape[0]
    out_len = (SEQ_X - 1) + future_pred

    # Pad the batch to a sublane-friendly multiple and grid over it so large
    # batches split across TensorCores (v7x) / keep per-block VMEM tiny.
    if block_b is None:
        block_b = 8 if B <= 256 else 256
    B_pad = ((B + block_b - 1) // block_b) * block_b
    if B_pad != B:
        pad = ((0, B_pad - B), (0, 0))
        x = jnp.pad(x, pad)
        annual_x = jnp.pad(annual_x, pad)
        annual_y = jnp.pad(annual_y, pad)

    def batch_spec(cols):
        return pl.BlockSpec((block_b, cols), lambda i: (i, 0))

    def rep_spec(shape):
        nd = len(shape)
        return pl.BlockSpec(shape, lambda i, _nd=nd: (0,) * _nd)

    kernel = functools.partial(
        _lstm_turnover_kernel,
        hidden=HIDDEN,
        num_layers=NUM_LAYERS,
        future_pred=future_pred,
    )

    out = pl.pallas_call(
        kernel,
        out_shape=jax.ShapeDtypeStruct((B_pad, out_len), jnp.float32),
        grid=(B_pad // block_b,),
        in_specs=[
            batch_spec(SEQ_X),                     # x
            batch_spec(SEQ_X),                     # annual_x
            batch_spec(SEQ_Y),                     # annual_y
            rep_spec(params["w_in0"].shape),       # (2, 4H)
            rep_spec(params["w_hh0"].shape),       # (H, 4H)
            rep_spec(params["w_cat"].shape),       # (L-1, 2H, 4H)
            rep_spec(params["b"].shape),           # (L, 4H)
            rep_spec(params["w_lin"].shape),       # (1, H)
            rep_spec(params["b_lin"].shape),       # (1, 1)
        ],
        out_specs=batch_spec(out_len),
        compiler_params=pltpu.CompilerParams(
            dimension_semantics=("parallel",)),
    )(x, annual_x, annual_y, params["w_in0"], params["w_hh0"],
      params["w_cat"], params["b"], params["w_lin"], params["b_lin"])
    return out[:B]


def init_params(key, hidden=HIDDEN, num_layers=NUM_LAYERS):
    """Deterministic xavier-uniform init mirroring init_weights=True."""
    H = hidden
    ks = jax.random.split(key, 2 * num_layers + 1)

    # Layer 0: input dim 2.
    lim = (6.0 / (4 * H + 2)) ** 0.5
    w_ih0 = jax.random.uniform(ks[0], (4 * H, 2), jnp.float32, -lim, lim)
    lim_h = (6.0 / (4 * H + H)) ** 0.5
    w_hh0 = jax.random.uniform(ks[1], (4 * H, H), jnp.float32, -lim_h, lim_h)

    # Layers 1..L-1: fused [w_ih; w_hh] as (2H, 4H).
    w_cat = []
    for l in range(1, num_layers):
        wi = jax.random.uniform(ks[2 * l], (4 * H, H), jnp.float32,
                                -lim_h, lim_h)
        wh = jax.random.uniform(ks[2 * l + 1], (4 * H, H), jnp.float32,
                                -lim_h, lim_h)
        w_cat.append(jnp.concatenate([wi.T, wh.T], axis=0))

    lim_lin = (6.0 / (H + 1)) ** 0.5
    w_lin = jax.random.uniform(ks[-1], (1, H), jnp.float32, -lim_lin, lim_lin)

    return dict(
        w_in0=w_ih0.T,                                    # (2, 4H)
        w_hh0=w_hh0.T,                                    # (H, 4H)
        w_cat=jnp.stack(w_cat),                           # (L-1, 2H, 4H)
        b=jnp.full((num_layers, 4 * H), 0.02, jnp.float32),  # b_ih + b_hh
        w_lin=w_lin,                                      # (1, H)
        b_lin=jnp.full((1, 1), 0.01, jnp.float32),
    )


def reference_forward(params, x, annual_x, annual_y, future_pred):
    """Pure-JAX reference matching the PyTorch forward pass."""
    future_pred = min(int(future_pred), annual_y.shape[1])
    B = x.shape[0]
    H = HIDDEN
    L = NUM_LAYERS
    h = [jnp.zeros((B, H), jnp.float32) for _ in range(L)]
    c = [jnp.zeros((B, H), jnp.float32) for _ in range(L)]
    w_ih = [params["w_in0"]] + [params["w_cat"][l - 1][:H] for l in range(1, L)]
    w_hh = [params["w_hh0"]] + [params["w_cat"][l - 1][H:] for l in range(1, L)]

    def cell(l, inp):
        gates = inp @ w_ih[l] + h[l] @ w_hh[l] + params["b"][l]
        i_g = jax.nn.sigmoid(gates[:, 0:H])
        f_g = jax.nn.sigmoid(gates[:, H:2 * H])
        g_g = jnp.tanh(gates[:, 2 * H:3 * H])
        o_g = jax.nn.sigmoid(gates[:, 3 * H:4 * H])
        c[l] = f_g * c[l] + i_g * g_g
        h[l] = o_g * jnp.tanh(c[l])
        return h[l]

    def step(x_col, ax_col):
        out = cell(0, jnp.concatenate([x_col, ax_col], axis=1))
        for l in range(1, L):
            out = cell(l, out)
        return ax_col + jnp.tanh(out @ params["w_lin"].T + params["b_lin"])

    outs = []
    for t in range(SEQ_X - 1):
        outs.append(step(x[:, t:t + 1], annual_x[:, t + 1:t + 2]))
    prev = x[:, SEQ_X - 1:SEQ_X]
    for p in range(future_pred):
        y = step(prev, annual_y[:, p:p + 1])
        outs.append(y)
        prev = y
    return jnp.concatenate(outs, axis=1)


if __name__ == "__main__":
    key = jax.random.PRNGKey(0)
    k_params, kx, kax, kay = jax.random.split(key, 4)

    params = init_params(k_params)

    batch = 2
    future_pred = 8
    x = jax.random.normal(kx, (batch, SEQ_X), jnp.float32)
    annual_x = jax.random.normal(kax, (batch, SEQ_X), jnp.float32)
    annual_y = jax.random.normal(kay, (batch, SEQ_Y), jnp.float32)

    out = lstm_turnover_forward(params, x, annual_x, annual_y, future_pred)
    out = jax.block_until_ready(out)

    ref = reference_forward(params, x, annual_x, annual_y, future_pred)
    assert out.shape == (batch, (SEQ_X - 1) + future_pred), out.shape
    # Kernel uses the tanh-based sigmoid form (exact same function, ~1 ulp
    # different from jax.nn.sigmoid), so compare at a slightly looser tol.
    assert jnp.allclose(out, ref, atol=1e-4, rtol=1e-4), (
        float(jnp.max(jnp.abs(out - ref))))

    print("KERNEL_OK")
</pallas_src>

<mosaic_0001>
module attributes {stable_mosaic.version = 11 : i64} {
  func.func @_lstm_turnover_kernel(%arg0: i32, %arg1: memref<8x16xf32, #tpu.memory_space<vmem>>, %arg2: memref<8x16xf32, #tpu.memory_space<vmem>>, %arg3: memref<8x8xf32, #tpu.memory_space<vmem>>, %arg4: memref<2x128xf32, #tpu.memory_space<vmem>>, %arg5: memref<32x128xf32, #tpu.memory_space<vmem>>, %arg6: memref<3x64x128xf32, #tpu.memory_space<vmem>>, %arg7: memref<4x128xf32, #tpu.memory_space<vmem>>, %arg8: memref<1x32xf32, #tpu.memory_space<vmem>>, %arg9: memref<1x1xf32, #tpu.memory_space<vmem>>, %arg10: memref<8x23xf32, #tpu.memory_space<vmem>>) attributes {dimension_semantics = [#tpu.dimension_semantics<parallel>], iteration_bounds = array<i64: 1>, scalar_prefetch = 0 : i64, scratch_operands = 0 : i64, tpu.core_type = #tpu.core_type<tc>, window_params = [{transform_indices = @transform_0, window_bounds = array<i64: 8, 16>}, {transform_indices = @transform_1, window_bounds = array<i64: 8, 16>}, {transform_indices = @transform_2, window_bounds = array<i64: 8, 8>}, {pipeline_mode = #tpu.pipeline_mode<synchronous>, transform_indices = @transform_3, window_bounds = array<i64: 2, 128>}, {pipeline_mode = #tpu.pipeline_mode<synchronous>, transform_indices = @transform_4, window_bounds = array<i64: 32, 128>}, {pipeline_mode = #tpu.pipeline_mode<synchronous>, transform_indices = @transform_5, window_bounds = array<i64: 3, 64, 128>}, {pipeline_mode = #tpu.pipeline_mode<synchronous>, transform_indices = @transform_6, window_bounds = array<i64: 4, 128>}, {pipeline_mode = #tpu.pipeline_mode<synchronous>, transform_indices = @transform_7, window_bounds = array<i64: 1, 32>}, {pipeline_mode = #tpu.pipeline_mode<synchronous>, transform_indices = @transform_8, window_bounds = array<i64: 1, 1>}, {transform_indices = @transform_9, window_bounds = array<i64: 8, 23>}]} {
    %c0 = arith.constant 0 : index
    %c0_0 = arith.constant 0 : index
    %0 = vector.load %arg4[%c0, %c0_0] : memref<2x128xf32, #tpu.memory_space<vmem>>, vector<1x128xf32>
    %c1 = arith.constant 1 : index
    %c0_1 = arith.constant 0 : index
    %1 = vector.load %arg4[%c1, %c0_1] : memref<2x128xf32, #tpu.memory_space<vmem>>, vector<1x128xf32>
    %c0_2 = arith.constant 0 : index
    %c0_3 = arith.constant 0 : index
    %2 = vector.load %arg7[%c0_2, %c0_3] : memref<4x128xf32, #tpu.memory_space<vmem>>, vector<1x128xf32>
    %c1_4 = arith.constant 1 : index
    %c0_5 = arith.constant 0 : index
    %3 = vector.load %arg7[%c1_4, %c0_5] : memref<4x128xf32, #tpu.memory_space<vmem>>, vector<1x128xf32>
    %c2 = arith.constant 2 : index
    %c0_6 = arith.constant 0 : index
    %4 = vector.load %arg7[%c2, %c0_6] : memref<4x128xf32, #tpu.memory_space<vmem>>, vector<1x128xf32>
    %c3 = arith.constant 3 : index
    %c0_7 = arith.constant 0 : index
    %5 = vector.load %arg7[%c3, %c0_7] : memref<4x128xf32, #tpu.memory_space<vmem>>, vector<1x128xf32>
    %c0_8 = arith.constant 0 : index
    %c0_9 = arith.constant 0 : index
    %6 = vector.load %arg8[%c0_8, %c0_9] : memref<1x32xf32, #tpu.memory_space<vmem>>, vector<1x32xf32>
    %c0_10 = arith.constant 0 : index
    %c0_11 = arith.constant 0 : index
    %7 = vector.load %arg9[%c0_10, %c0_11] : memref<1x1xf32, #tpu.memory_space<vmem>>, vector<1x1xf32>
    %cst = arith.constant 0.000000e+00 : f32
    %8 = vector.broadcast %cst : f32 to vector<8x32xf32>
    %cst_12 = arith.constant 0.000000e+00 : f32
    %9 = vector.broadcast %cst_12 : f32 to vector<8x32xf32>
    %cst_13 = arith.constant 0.000000e+00 : f32
    %10 = vector.broadcast %cst_13 : f32 to vector<8x32xf32>
    %cst_14 = arith.constant 0.000000e+00 : f32
    %11 = vector.broadcast %cst_14 : f32 to vector<8x32xf32>
    %cst_15 = arith.constant 0.000000e+00 : f32
    %12 = vector.broadcast %cst_15 : f32 to vector<8x32xf32>
    %cst_16 = arith.constant 0.000000e+00 : f32
    %13 = vector.broadcast %cst_16 : f32 to vector<8x32xf32>
    %cst_17 = arith.constant 0.000000e+00 : f32
    %14 = vector.broadcast %cst_17 : f32 to vector<8x32xf32>
    %cst_18 = arith.constant 0.000000e+00 : f32
    %15 = vector.broadcast %cst_18 : f32 to vector<8x32xf32>
    %c0_19 = arith.constant 0 : index
    %c1_20 = arith.constant 1 : index
    %16 = vector.load %arg2[%c0_19, %c1_20] : memref<8x16xf32, #tpu.memory_space<vmem>>, vector<8x1xf32>
    %c0_21 = arith.constant 0 : index
    %c2_22 = arith.constant 2 : index
    %17 = vector.load %arg2[%c0_21, %c2_22] : memref<8x16xf32, #tpu.memory_space<vmem>>, vector<8x1xf32>
    %c0_23 = arith.constant 0 : index
    %c3_24 = arith.constant 3 : index
    %18 = vector.load %arg2[%c0_23, %c3_24] : memref<8x16xf32, #tpu.memory_space<vmem>>, vector<8x1xf32>
    %c0_25 = arith.constant 0 : index
    %c4 = arith.constant 4 : index
    %19 = vector.load %arg2[%c0_25, %c4] : memref<8x16xf32, #tpu.memory_space<vmem>>, vector<8x1xf32>
    %c0_26 = arith.constant 0 : index
    %c5 = arith.constant 5 : index
    %20 = vector.load %arg2[%c0_26, %c5] : memref<8x16xf32, #tpu.memory_space<vmem>>, vector<8x1xf32>
    %c0_27 = arith.constant 0 : index
    %c6 = arith.constant 6 : index
    %21 = vector.load %arg2[%c0_27, %c6] : memref<8x16xf32, #tpu.memory_space<vmem>>, vector<8x1xf32>
    %c0_28 = arith.constant 0 : index
    %c7 = arith.constant 7 : index
    %22 = vector.load %arg2[%c0_28, %c7] : memref<8x16xf32, #tpu.memory_space<vmem>>, vector<8x1xf32>
    %c0_29 = arith.constant 0 : index
    %c8 = arith.constant 8 : index
    %23 = vector.load %arg2[%c0_29, %c8] : memref<8x16xf32, #tpu.memory_space<vmem>>, vector<8x1xf32>
    %c0_30 = arith.constant 0 : index
    %c9 = arith.constant 9 : index
    %24 = vector.load %arg2[%c0_30, %c9] : memref<8x16xf32, #tpu.memory_space<vmem>>, vector<8x1xf32>
    %c0_31 = arith.constant 0 : index
    %c10 = arith.constant 10 : index
    %25 = vector.load %arg2[%c0_31, %c10] : memref<8x16xf32, #tpu.memory_space<vmem>>, vector<8x1xf32>
    %c0_32 = arith.constant 0 : index
    %c11 = arith.constant 11 : index
    %26 = vector.load %arg2[%c0_32, %c11] : memref<8x16xf32, #tpu.memory_space<vmem>>, vector<8x1xf32>
    %c0_33 = arith.constant 0 : index
    %c12 = arith.constant 12 : index
    %27 = vector.load %arg2[%c0_33, %c12] : memref<8x16xf32, #tpu.memory_space<vmem>>, vector<8x1xf32>
    %c0_34 = arith.constant 0 : index
    %c13 = arith.constant 13 : index
    %28 = vector.load %arg2[%c0_34, %c13] : memref<8x16xf32, #tpu.memory_space<vmem>>, vector<8x1xf32>
    %c0_35 = arith.constant 0 : index
    %c14 = arith.constant 14 : index
    %29 = vector.load %arg2[%c0_35, %c14] : memref<8x16xf32, #tpu.memory_space<vmem>>, vector<8x1xf32>
    %c0_36 = arith.constant 0 : index
    %c15 = arith.constant 15 : index
    %30 = vector.load %arg2[%c0_36, %c15] : memref<8x16xf32, #tpu.memory_space<vmem>>, vector<8x1xf32>
    %c0_37 = arith.constant 0 : index
    %c0_38 = arith.constant 0 : index
    %31 = vector.load %arg1[%c0_37, %c0_38] : memref<8x16xf32, #tpu.memory_space<vmem>>, vector<8x1xf32>
    %32 = vector.broadcast %31 : vector<8x1xf32> to vector<8x128xf32>
    %33 = vector.broadcast %0 : vector<1x128xf32> to vector<8x128xf32>
    %34 = arith.mulf %32, %33 : vector<8x128xf32>
    %35 = vector.broadcast %16 : vector<8x1xf32> to vector<8x128xf32>
    %36 = vector.broadcast %1 : vector<1x128xf32> to vector<8x128xf32>
    %37 = arith.mulf %35, %36 : vector<8x128xf32>
    %38 = arith.addf %34, %37 : vector<8x128xf32>
    %39 = vector.broadcast %2 : vector<1x128xf32> to vector<8x128xf32>
    %40 = arith.addf %38, %39 : vector<8x128xf32>
    %c0_39 = arith.constant 0 : index
    %c1_40 = arith.constant 1 : index
    %41 = vector.load %arg1[%c0_39, %c1_40] : memref<8x16xf32, #tpu.memory_space<vmem>>, vector<8x1xf32>
    %42 = vector.broadcast %41 : vector<8x1xf32> to vector<8x128xf32>
    %43 = vector.broadcast %0 : vector<1x128xf32> to vector<8x128xf32>
    %44 = arith.mulf %42, %43 : vector<8x128xf32>
    %45 = vector.broadcast %17 : vector<8x1xf32> to vector<8x128xf32>
    %46 = vector.broadcast %1 : vector<1x128xf32> to vector<8x128xf32>
    %47 = arith.mulf %45, %46 : vector<8x128xf32>
    %48 = arith.addf %44, %47 : vector<8x128xf32>
    %49 = vector.broadcast %2 : vector<1x128xf32> to vector<8x128xf32>
    %50 = arith.addf %48, %49 : vector<8x128xf32>
    %c0_41 = arith.constant 0 : index
    %c2_42 = arith.constant 2 : index
    %51 = vector.load %arg1[%c0_41, %c2_42] : memref<8x16xf32, #tpu.memory_space<vmem>>, vector<8x1xf32>
    %52 = vector.broadcast %51 : vector<8x1xf32> to vector<8x128xf32>
    %53 = vector.broadcast %0 : vector<1x128xf32> to vector<8x128xf32>
    %54 = arith.mulf %52, %53 : vector<8x128xf32>
    %55 = vector.broadcast %18 : vector<8x1xf32> to vector<8x128xf32>
    %56 = vector.broadcast %1 : vector<1x128xf32> to vector<8x128xf32>
    %57 = arith.mulf %55, %56 : vector<8x128xf32>
    %58 = arith.addf %54, %57 : vector<8x128xf32>
    %59 = vector.broadcast %2 : vector<1x128xf32> to vector<8x128xf32>
    %60 = arith.addf %58, %59 : vector<8x128xf32>
    %c0_43 = arith.constant 0 : index
    %c3_44 = arith.constant 3 : index
    %61 = vector.load %arg1[%c0_43, %c3_44] : memref<8x16xf32, #tpu.memory_space<vmem>>, vector<8x1xf32>
    %62 = vector.broadcast %61 : vector<8x1xf32> to vector<8x128xf32>
    %63 = vector.broadcast %0 : vector<1x128xf32> to vector<8x128xf32>
    %64 = arith.mulf %62, %63 : vector<8x128xf32>
    %65 = vector.broadcast %19 : vector<8x1xf32> to vector<8x128xf32>
    %66 = vector.broadcast %1 : vector<1x128xf32> to vector<8x128xf32>
    %67 = arith.mulf %65, %66 : vector<8x128xf32>
    %68 = arith.addf %64, %67 : vector<8x128xf32>
    %69 = vector.broadcast %2 : vector<1x128xf32> to vector<8x128xf32>
    %70 = arith.addf %68, %69 : vector<8x128xf32>
    %c0_45 = arith.constant 0 : index
    %c4_46 = arith.constant 4 : index
    %71 = vector.load %arg1[%c0_45, %c4_46] : memref<8x16xf32, #tpu.memory_space<vmem>>, vector<8x1xf32>
    %72 = vector.broadcast %71 : vector<8x1xf32> to vector<8x128xf32>
    %73 = vector.broadcast %0 : vector<1x128xf32> to vector<8x128xf32>
    %74 = arith.mulf %72, %73 : vector<8x128xf32>
    %75 = vector.broadcast %20 : vector<8x1xf32> to vector<8x128xf32>
    %76 = vector.broadcast %1 : vector<1x128xf32> to vector<8x128xf32>
    %77 = arith.mulf %75, %76 : vector<8x128xf32>
    %78 = arith.addf %74, %77 : vector<8x128xf32>
    %79 = vector.broadcast %2 : vector<1x128xf32> to vector<8x128xf32>
    %80 = arith.addf %78, %79 : vector<8x128xf32>
    %c0_47 = arith.constant 0 : index
    %c5_48 = arith.constant 5 : index
    %81 = vector.load %arg1[%c0_47, %c5_48] : memref<8x16xf32, #tpu.memory_space<vmem>>, vector<8x1xf32>
    %82 = vector.broadcast %81 : vector<8x1xf32> to vector<8x128xf32>
    %83 = vector.broadcast %0 : vector<1x128xf32> to vector<8x128xf32>
    %84 = arith.mulf %82, %83 : vector<8x128xf32>
    %85 = vector.broadcast %21 : vector<8x1xf32> to vector<8x128xf32>
    %86 = vector.broadcast %1 : vector<1x128xf32> to vector<8x128xf32>
    %87 = arith.mulf %85, %86 : vector<8x128xf32>
    %88 = arith.addf %84, %87 : vector<8x128xf32>
    %89 = vector.broadcast %2 : vector<1x128xf32> to vector<8x128xf32>
    %90 = arith.addf %88, %89 : vector<8x128xf32>
    %c0_49 = arith.constant 0 : index
    %c6_50 = arith.constant 6 : index
    %91 = vector.load %arg1[%c0_49, %c6_50] : memref<8x16xf32, #tpu.memory_space<vmem>>, vector<8x1xf32>
    %92 = vector.broadcast %91 : vector<8x1xf32> to vector<8x128xf32>
    %93 = vector.broadcast %0 : vector<1x128xf32> to vector<8x128xf32>
    %94 = arith.mulf %92, %93 : vector<8x128xf32>
    %95 = vector.broadcast %22 : vector<8x1xf32> to vector<8x128xf32>
    %96 = vector.broadcast %1 : vector<1x128xf32> to vector<8x128xf32>
    %97 = arith.mulf %95, %96 : vector<8x128xf32>
    %98 = arith.addf %94, %97 : vector<8x128xf32>
    %99 = vector.broadcast %2 : vector<1x128xf32> to vector<8x128xf32>
    %100 = arith.addf %98, %99 : vector<8x128xf32>
    %c0_51 = arith.constant 0 : index
    %c7_52 = arith.constant 7 : index
    %101 = vector.load %arg1[%c0_51, %c7_52] : memref<8x16xf32, #tpu.memory_space<vmem>>, vector<8x1xf32>
    %102 = vector.broadcast %101 : vector<8x1xf32> to vector<8x128xf32>
    %103 = vector.broadcast %0 : vector<1x128xf32> to vector<8x128xf32>
    %104 = arith.mulf %102, %103 : vector<8x128xf32>
    %105 = vector.broadcast %23 : vector<8x1xf32> to vector<8x128xf32>
    %106 = vector.broadcast %1 : vector<1x128xf32> to vector<8x128xf32>
    %107 = arith.mulf %105, %106 : vector<8x128xf32>
    %108 = arith.addf %104, %107 : vector<8x128xf32>
    %109 = vector.broadcast %2 : vector<1x128xf32> to vector<8x128xf32>
    %110 = arith.addf %108, %109 : vector<8x128xf32>
    %c0_53 = arith.constant 0 : index
    %c8_54 = arith.constant 8 : index
    %111 = vector.load %arg1[%c0_53, %c8_54] : memref<8x16xf32, #tpu.memory_space<vmem>>, vector<8x1xf32>
    %112 = vector.broadcast %111 : vector<8x1xf32> to vector<8x128xf32>
    %113 = vector.broadcast %0 : vector<1x128xf32> to vector<8x128xf32>
    %114 = arith.mulf %112, %113 : vector<8x128xf32>
    %115 = vector.broadcast %24 : vector<8x1xf32> to vector<8x128xf32>
    %116 = vector.broadcast %1 : vector<1x128xf32> to vector<8x128xf32>
    %117 = arith.mulf %115, %116 : vector<8x128xf32>
    %118 = arith.addf %114, %117 : vector<8x128xf32>
    %119 = vector.broadcast %2 : vector<1x128xf32> to vector<8x128xf32>
    %120 = arith.addf %118, %119 : vector<8x128xf32>
    %c0_55 = arith.constant 0 : index
    %c9_56 = arith.constant 9 : index
    %121 = vector.load %arg1[%c0_55, %c9_56] : memref<8x16xf32, #tpu.memory_space<vmem>>, vector<8x1xf32>
    %122 = vector.broadcast %121 : vector<8x1xf32> to vector<8x128xf32>
    %123 = vector.broadcast %0 : vector<1x128xf32> to vector<8x128xf32>
    %124 = arith.mulf %122, %123 : vector<8x128xf32>
    %125 = vector.broadcast %25 : vector<8x1xf32> to vector<8x128xf32>
    %126 = vector.broadcast %1 : vector<1x128xf32> to vector<8x128xf32>
    %127 = arith.mulf %125, %126 : vector<8x128xf32>
    %128 = arith.addf %124, %127 : vector<8x128xf32>
    %129 = vector.broadcast %2 : vector<1x128xf32> to vector<8x128xf32>
    %130 = arith.addf %128, %129 : vector<8x128xf32>
    %c0_57 = arith.constant 0 : index
    %c10_58 = arith.constant 10 : index
    %131 = vector.load %arg1[%c0_57, %c10_58] : memref<8x16xf32, #tpu.memory_space<vmem>>, vector<8x1xf32>
    %132 = vector.broadcast %131 : vector<8x1xf32> to vector<8x128xf32>
    %133 = vector.broadcast %0 : vector<1x128xf32> to vector<8x128xf32>
    %134 = arith.mulf %132, %133 : vector<8x128xf32>
    %135 = vector.broadcast %26 : vector<8x1xf32> to vector<8x128xf32>
    %136 = vector.broadcast %1 : vector<1x128xf32> to vector<8x128xf32>
    %137 = arith.mulf %135, %136 : vector<8x128xf32>
    %138 = arith.addf %134, %137 : vector<8x128xf32>
    %139 = vector.broadcast %2 : vector<1x128xf32> to vector<8x128xf32>
    %140 = arith.addf %138, %139 : vector<8x128xf32>
    %c0_59 = arith.constant 0 : index
    %c11_60 = arith.constant 11 : index
    %141 = vector.load %arg1[%c0_59, %c11_60] : memref<8x16xf32, #tpu.memory_space<vmem>>, vector<8x1xf32>
    %142 = vector.broadcast %141 : vector<8x1xf32> to vector<8x128xf32>
    %143 = vector.broadcast %0 : vector<1x128xf32> to vector<8x128xf32>
    %144 = arith.mulf %142, %143 : vector<8x128xf32>
    %145 = vector.broadcast %27 : vector<8x1xf32> to vector<8x128xf32>
    %146 = vector.broadcast %1 : vector<1x128xf32> to vector<8x128xf32>
    %147 = arith.mulf %145, %146 : vector<8x128xf32>
    %148 = arith.addf %144, %147 : vector<8x128xf32>
    %149 = vector.broadcast %2 : vector<1x128xf32> to vector<8x128xf32>
    %150 = arith.addf %148, %149 : vector<8x128xf32>
    %c0_61 = arith.constant 0 : index
    %c12_62 = arith.constant 12 : index
    %151 = vector.load %arg1[%c0_61, %c12_62] : memref<8x16xf32, #tpu.memory_space<vmem>>, vector<8x1xf32>
    %152 = vector.broadcast %151 : vector<8x1xf32> to vector<8x128xf32>
    %153 = vector.broadcast %0 : vector<1x128xf32> to vector<8x128xf32>
    %154 = arith.mulf %152, %153 : vector<8x128xf32>
    %155 = vector.broadcast %28 : vector<8x1xf32> to vector<8x128xf32>
    %156 = vector.broadcast %1 : vector<1x128xf32> to vector<8x128xf32>
    %157 = arith.mulf %155, %156 : vector<8x128xf32>
    %158 = arith.addf %154, %157 : vector<8x128xf32>
    %159 = vector.broadcast %2 : vector<1x128xf32> to vector<8x128xf32>
    %160 = arith.addf %158, %159 : vector<8x128xf32>
    %c0_63 = arith.constant 0 : index
    %c13_64 = arith.constant 13 : index
    %161 = vector.load %arg1[%c0_63, %c13_64] : memref<8x16xf32, #tpu.memory_space<vmem>>, vector<8x1xf32>
    %162 = vector.broadcast %161 : vector<8x1xf32> to vector<8x128xf32>
    %163 = vector.broadcast %0 : vector<1x128xf32> to vector<8x128xf32>
    %164 = arith.mulf %162, %163 : vector<8x128xf32>
    %165 = vector.broadcast %29 : vector<8x1xf32> to vector<8x128xf32>
    %166 = vector.broadcast %1 : vector<1x128xf32> to vector<8x128xf32>
    %167 = arith.mulf %165, %166 : vector<8x128xf32>
    %168 = arith.addf %164, %167 : vector<8x128xf32>
    %169 = vector.broadcast %2 : vector<1x128xf32> to vector<8x128xf32>
    %170 = arith.addf %168, %169 : vector<8x128xf32>
    %c0_65 = arith.constant 0 : index
    %c14_66 = arith.constant 14 : index
    %171 = vector.load %arg1[%c0_65, %c14_66] : memref<8x16xf32, #tpu.memory_space<vmem>>, vector<8x1xf32>
    %172 = vector.broadcast %171 : vector<8x1xf32> to vector<8x128xf32>
    %173 = vector.broadcast %0 : vector<1x128xf32> to vector<8x128xf32>
    %174 = arith.mulf %172, %173 : vector<8x128xf32>
    %175 = vector.broadcast %30 : vector<8x1xf32> to vector<8x128xf32>
    %176 = vector.broadcast %1 : vector<1x128xf32> to vector<8x128xf32>
    %177 = arith.mulf %175, %176 : vector<8x128xf32>
    %178 = arith.addf %174, %177 : vector<8x128xf32>
    %179 = vector.broadcast %2 : vector<1x128xf32> to vector<8x128xf32>
    %180 = arith.addf %178, %179 : vector<8x128xf32>
    %c0_67 = arith.constant 0 : index
    %c0_68 = arith.constant 0 : index
    %181 = vector.load %arg3[%c0_67, %c0_68] : memref<8x8xf32, #tpu.memory_space<vmem>>, vector<8x1xf32>
    %c0_69 = arith.constant 0 : index
    %c1_70 = arith.constant 1 : index
    %182 = vector.load %arg3[%c0_69, %c1_70] : memref<8x8xf32, #tpu.memory_space<vmem>>, vector<8x1xf32>
    %c0_71 = arith.constant 0 : index
    %c2_72 = arith.constant 2 : index
    %183 = vector.load %arg3[%c0_71, %c2_72] : memref<8x8xf32, #tpu.memory_space<vmem>>, vector<8x1xf32>
    %c0_73 = arith.constant 0 : index
    %c3_74 = arith.constant 3 : index
    %184 = vector.load %arg3[%c0_73, %c3_74] : memref<8x8xf32, #tpu.memory_space<vmem>>, vector<8x1xf32>
    %c0_75 = arith.constant 0 : index
    %c4_76 = arith.constant 4 : index
    %185 = vector.load %arg3[%c0_75, %c4_76] : memref<8x8xf32, #tpu.memory_space<vmem>>, vector<8x1xf32>
    %c0_77 = arith.constant 0 : index
    %c5_78 = arith.constant 5 : index
    %186 = vector.load %arg3[%c0_77, %c5_78] : memref<8x8xf32, #tpu.memory_space<vmem>>, vector<8x1xf32>
    %c0_79 = arith.constant 0 : index
    %c6_80 = arith.constant 6 : index
    %187 = vector.load %arg3[%c0_79, %c6_80] : memref<8x8xf32, #tpu.memory_space<vmem>>, vector<8x1xf32>
    %c0_81 = arith.constant 0 : index
    %c7_82 = arith.constant 7 : index
    %188 = vector.load %arg3[%c0_81, %c7_82] : memref<8x8xf32, #tpu.memory_space<vmem>>, vector<8x1xf32>
    %189 = vector.broadcast %181 : vector<8x1xf32> to vector<8x128xf32>
    %190 = vector.broadcast %1 : vector<1x128xf32> to vector<8x128xf32>
    %191 = arith.mulf %189, %190 : vector<8x128xf32>
    %192 = vector.broadcast %2 : vector<1x128xf32> to vector<8x128xf32>
    %193 = arith.addf %191, %192 : vector<8x128xf32>
    %194 = vector.broadcast %182 : vector<8x1xf32> to vector<8x128xf32>
    %195 = vector.broadcast %1 : vector<1x128xf32> to vector<8x128xf32>
    %196 = arith.mulf %194, %195 : vector<8x128xf32>
    %197 = vector.broadcast %2 : vector<1x128xf32> to vector<8x128xf32>
    %198 = arith.addf %196, %197 : vector<8x128xf32>
    %199 = vector.broadcast %183 : vector<8x1xf32> to vector<8x128xf32>
    %200 = vector.broadcast %1 : vector<1x128xf32> to vector<8x128xf32>
    %201 = arith.mulf %199, %200 : vector<8x128xf32>
    %202 = vector.broadcast %2 : vector<1x128xf32> to vector<8x128xf32>
    %203 = arith.addf %201, %202 : vector<8x128xf32>
    %204 = vector.broadcast %184 : vector<8x1xf32> to vector<8x128xf32>
    %205 = vector.broadcast %1 : vector<1x128xf32> to vector<8x128xf32>
    %206 = arith.mulf %204, %205 : vector<8x128xf32>
    %207 = vector.broadcast %2 : vector<1x128xf32> to vector<8x128xf32>
    %208 = arith.addf %206, %207 : vector<8x128xf32>
    %209 = vector.broadcast %185 : vector<8x1xf32> to vector<8x128xf32>
    %210 = vector.broadcast %1 : vector<1x128xf32> to vector<8x128xf32>
    %211 = arith.mulf %209, %210 : vector<8x128xf32>
    %212 = vector.broadcast %2 : vector<1x128xf32> to vector<8x128xf32>
    %213 = arith.addf %211, %212 : vector<8x128xf32>
    %214 = vector.broadcast %186 : vector<8x1xf32> to vector<8x128xf32>
    %215 = vector.broadcast %1 : vector<1x128xf32> to vector<8x128xf32>
    %216 = arith.mulf %214, %215 : vector<8x128xf32>
    %217 = vector.broadcast %2 : vector<1x128xf32> to vector<8x128xf32>
    %218 = arith.addf %216, %217 : vector<8x128xf32>
    %219 = vector.broadcast %187 : vector<8x1xf32> to vector<8x128xf32>
    %220 = vector.broadcast %1 : vector<1x128xf32> to vector<8x128xf32>
    %221 = arith.mulf %219, %220 : vector<8x128xf32>
    %222 = vector.broadcast %2 : vector<1x128xf32> to vector<8x128xf32>
    %223 = arith.addf %221, %222 : vector<8x128xf32>
    %224 = vector.broadcast %188 : vector<8x1xf32> to vector<8x128xf32>
    %225 = vector.broadcast %1 : vector<1x128xf32> to vector<8x128xf32>
    %226 = arith.mulf %224, %225 : vector<8x128xf32>
    %227 = vector.broadcast %2 : vector<1x128xf32> to vector<8x128xf32>
    %228 = arith.addf %226, %227 : vector<8x128xf32>
    %c0_83 = arith.constant 0 : index
    %c0_84 = arith.constant 0 : index
    %229 = vector.load %arg5[%c0_83, %c0_84] : memref<32x128xf32, #tpu.memory_space<vmem>>, vector<32x128xf32>
    %cst_85 = arith.constant dense<0.000000e+00> : vector<8x128xf32>
    %230 = tpu.matmul %8, %229, %cst_85 {dimension_numbers = #tpu.dot_dimension_numbers<[1], [0], [0], [1], [0, 0, 1, 1], [], []>} : vector<8x32xf32>, vector<32x128xf32>, vector<8x128xf32> -> vector<8x128xf32>
    %231 = arith.addf %230, %40 : vector<8x128xf32>
    %cst_86 = arith.constant 5.000000e-01 : f32
    %232 = vector.broadcast %cst_86 : f32 to vector<8x128xf32>
    %233 = arith.mulf %232, %231 : vector<8x128xf32>
    %234 = math.tanh %233 : vector<8x128xf32>
    %cst_87 = arith.constant 1.000000e+00 : f32
    %235 = vector.broadcast %cst_87 : f32 to vector<8x128xf32>
    %236 = arith.addf %234, %235 : vector<8x128xf32>
    %cst_88 = arith.constant 5.000000e-01 : f32
    %237 = vector.broadcast %cst_88 : f32 to vector<8x128xf32>
    %238 = arith.mulf %237, %236 : vector<8x128xf32>
    %239 = math.tanh %231 : vector<8x128xf32>
    %240 = vector.extract_strided_slice %238 {offsets = [0, 0], sizes = [8, 32], strides = [1, 1]} : vector<8x128xf32> to vector<8x32xf32>
    %241 = vector.extract_strided_slice %238 {offsets = [0, 32], sizes = [8, 32], strides = [1, 1]} : vector<8x128xf32> to vector<8x32xf32>
    %242 = vector.extract_strided_slice %239 {offsets = [0, 64], sizes = [8, 32], strides = [1, 1]} : vector<8x128xf32> to vector<8x32xf32>
    %243 = vector.extract_strided_slice %238 {offsets = [0, 96], sizes = [8, 32], strides = [1, 1]} : vector<8x128xf32> to vector<8x32xf32>
    %244 = arith.mulf %241, %12 : vector<8x32xf32>
    %245 = arith.mulf %240, %242 : vector<8x32xf32>
    %246 = arith.addf %244, %245 : vector<8x32xf32>
    %247 = math.tanh %246 : vector<8x32xf32>
    %248 = arith.mulf %243, %247 : vector<8x32xf32>
    %249 = tpu.concatenate %248, %9 in 1 : vector<8x32xf32>, vector<8x32xf32> -> vector<8x64xf32>
    %c0_89 = arith.constant 0 : index
    %c0_90 = arith.constant 0 : index
    %c0_91 = arith.constant 0 : index
    %250 = vector.load %arg6[%c0_89, %c0_90, %c0_91] : memref<3x64x128xf32, #tpu.memory_space<vmem>>, vector<1x64x128xf32>
    %251 = vector.shape_cast %250 : vector<1x64x128xf32> to vector<64x128xf32>
    %cst_92 = arith.constant dense<0.000000e+00> : vector<8x128xf32>
    %252 = tpu.matmul %249, %251, %cst_92 {dimension_numbers = #tpu.dot_dimension_numbers<[1], [0], [0], [1], [0, 0, 1, 1], [], []>} : vector<8x64xf32>, vector<64x128xf32>, vector<8x128xf32> -> vector<8x128xf32>
    %253 = vector.broadcast %3 : vector<1x128xf32> to vector<8x128xf32>
    %254 = arith.addf %252, %253 : vector<8x128xf32>
    %cst_93 = arith.constant 5.000000e-01 : f32
    %255 = vector.broadcast %cst_93 : f32 to vector<8x128xf32>
    %256 = arith.mulf %255, %254 : vector<8x128xf32>
    %257 = math.tanh %256 : vector<8x128xf32>
    %cst_94 = arith.constant 1.000000e+00 : f32
    %258 = vector.broadcast %cst_94 : f32 to vector<8x128xf32>
    %259 = arith.addf %257, %258 : vector<8x128xf32>
    %cst_95 = arith.constant 5.000000e-01 : f32
    %260 = vector.broadcast %cst_95 : f32 to vector<8x128xf32>
    %261 = arith.mulf %260, %259 : vector<8x128xf32>
    %262 = math.tanh %254 : vector<8x128xf32>
    %263 = vector.extract_strided_slice %261 {offsets = [0, 0], sizes = [8, 32], strides = [1, 1]} : vector<8x128xf32> to vector<8x32xf32>
    %264 = vector.extract_strided_slice %261 {offsets = [0, 32], sizes = [8, 32], strides = [1, 1]} : vector<8x128xf32> to vector<8x32xf32>
    %265 = vector.extract_strided_slice %262 {offsets = [0, 64], sizes = [8, 32], strides = [1, 1]} : vector<8x128xf32> to vector<8x32xf32>
    %266 = vector.extract_strided_slice %261 {offsets = [0, 96], sizes = [8, 32], strides = [1, 1]} : vector<8x128xf32> to vector<8x32xf32>
    %267 = arith.mulf %264, %13 : vector<8x32xf32>
    %268 = arith.mulf %263, %265 : vector<8x32xf32>
    %269 = arith.addf %267, %268 : vector<8x32xf32>
    %270 = math.tanh %269 : vector<8x32xf32>
    %271 = arith.mulf %266, %270 : vector<8x32xf32>
    %272 = tpu.concatenate %271, %10 in 1 : vector<8x32xf32>, vector<8x32xf32> -> vector<8x64xf32>
    %c1_96 = arith.constant 1 : index
    %c0_97 = arith.constant 0 : index
    %c0_98 = arith.constant 0 : index
    %273 = vector.load %arg6[%c1_96, %c0_97, %c0_98] : memref<3x64x128xf32, #tpu.memory_space<vmem>>, vector<1x64x128xf32>
    %274 = vector.shape_cast %273 : vector<1x64x128xf32> to vector<64x128xf32>
    %cst_99 = arith.constant dense<0.000000e+00> : vector<8x128xf32>
    %275 = tpu.matmul %272, %274, %cst_99 {dimension_numbers = #tpu.dot_dimension_numbers<[1], [0], [0], [1], [0, 0, 1, 1], [], []>} : vector<8x64xf32>, vector<64x128xf32>, vector<8x128xf32> -> vector<8x128xf32>
    %276 = vector.broadcast %4 : vector<1x128xf32> to vector<8x128xf32>
    %277 = arith.addf %275, %276 : vector<8x128xf32>
    %cst_100 = arith.constant 5.000000e-01 : f32
    %278 = vector.broadcast %cst_100 : f32 to vector<8x128xf32>
    %279 = arith.mulf %278, %277 : vector<8x128xf32>
    %280 = math.tanh %279 : vector<8x128xf32>
    %cst_101 = arith.constant 1.000000e+00 : f32
    %281 = vector.broadcast %cst_101 : f32 to vector<8x128xf32>
    %282 = arith.addf %280, %281 : vector<8x128xf32>
    %cst_102 = arith.constant 5.000000e-01 : f32
    %283 = vector.broadcast %cst_102 : f32 to vector<8x128xf32>
    %284 = arith.mulf %283, %282 : vector<8x128xf32>
    %285 = math.tanh %277 : vector<8x128xf32>
    %286 = vector.extract_strided_slice %284 {offsets = [0, 0], sizes = [8, 32], strides = [1, 1]} : vector<8x128xf32> to vector<8x32xf32>
    %287 = vector.extract_strided_slice %284 {offsets = [0, 32], sizes = [8, 32], strides = [1, 1]} : vector<8x128xf32> to vector<8x32xf32>
    %288 = vector.extract_strided_slice %285 {offsets = [0, 64], sizes = [8, 32], strides = [1, 1]} : vector<8x128xf32> to vector<8x32xf32>
    %289 = vector.extract_strided_slice %284 {offsets = [0, 96], sizes = [8, 32], strides = [1, 1]} : vector<8x128xf32> to vector<8x32xf32>
    %290 = arith.mulf %287, %14 : vector<8x32xf32>
    %291 = arith.mulf %286, %288 : vector<8x32xf32>
    %292 = arith.addf %290, %291 : vector<8x32xf32>
    %293 = math.tanh %292 : vector<8x32xf32>
    %294 = arith.mulf %289, %293 : vector<8x32xf32>
    %295 = tpu.concatenate %294, %11 in 1 : vector<8x32xf32>, vector<8x32xf32> -> vector<8x64xf32>
    %c2_103 = arith.constant 2 : index
    %c0_104 = arith.constant 0 : index
    %c0_105 = arith.constant 0 : index
    %296 = vector.load %arg6[%c2_103, %c0_104, %c0_105] : memref<3x64x128xf32, #tpu.memory_space<vmem>>, vector<1x64x128xf32>
    %297 = vector.shape_cast %296 : vector<1x64x128xf32> to vector<64x128xf32>
    %cst_106 = arith.constant dense<0.000000e+00> : vector<8x128xf32>
    %298 = tpu.matmul %295, %297, %cst_106 {dimension_numbers = #tpu.dot_dimension_numbers<[1], [0], [0], [1], [0, 0, 1, 1], [], []>} : vector<8x64xf32>, vector<64x128xf32>, vector<8x128xf32> -> vector<8x128xf32>
    %299 = vector.broadcast %5 : vector<1x128xf32> to vector<8x128xf32>
    %300 = arith.addf %298, %299 : vector<8x128xf32>
    %cst_107 = arith.constant 5.000000e-01 : f32
    %301 = vector.broadcast %cst_107 : f32 to vector<8x128xf32>
    %302 = arith.mulf %301, %300 : vector<8x128xf32>
    %303 = math.tanh %302 : vector<8x128xf32>
    %cst_108 = arith.constant 1.000000e+00 : f32
    %304 = vector.broadcast %cst_108 : f32 to vector<8x128xf32>
    %305 = arith.addf %303, %304 : vector<8x128xf32>
    %cst_109 = arith.constant 5.000000e-01 : f32
    %306 = vector.broadcast %cst_109 : f32 to vector<8x128xf32>
    %307 = arith.mulf %306, %305 : vector<8x128xf32>
    %308 = math.tanh %300 : vector<8x128xf32>
    %309 = vector.extract_strided_slice %307 {offsets = [0, 0], sizes = [8, 32], strides = [1, 1]} : vector<8x128xf32> to vector<8x32xf32>
    %310 = vector.extract_strided_slice %307 {offsets = [0, 32], sizes = [8, 32], strides = [1, 1]} : vector<8x128xf32> to vector<8x32xf32>
    %311 = vector.extract_strided_slice %308 {offsets = [0, 64], sizes = [8, 32], strides = [1, 1]} : vector<8x128xf32> to vector<8x32xf32>
    %312 = vector.extract_strided_slice %307 {offsets = [0, 96], sizes = [8, 32], strides = [1, 1]} : vector<8x128xf32> to vector<8x32xf32>
    %313 = arith.mulf %310, %15 : vector<8x32xf32>
    %314 = arith.mulf %309, %311 : vector<8x32xf32>
    %315 = arith.addf %313, %314 : vector<8x32xf32>
    %316 = math.tanh %315 : vector<8x32xf32>
    %317 = arith.mulf %312, %316 : vector<8x32xf32>
    %318 = vector.broadcast %6 : vector<1x32xf32> to vector<8x32xf32>
    %319 = arith.mulf %317, %318 : vector<8x32xf32>
    %cst_110 = arith.constant dense<0.000000e+00> : vector<8xf32>
    %320 = vector.multi_reduction <add>, %319, %cst_110 [1] : vector<8x32xf32> to vector<8xf32>
    %321 = vector.shape_cast %320 : vector<8xf32> to vector<8x1xf32>
    %322 = vector.broadcast %7 : vector<1x1xf32> to vector<8x1xf32>
    %323 = arith.addf %321, %322 : vector<8x1xf32>
    %324 = math.tanh %323 : vector<8x1xf32>
    %325 = arith.addf %16, %324 : vector<8x1xf32>
    %c0_111 = arith.constant 0 : index
    %c0_112 = arith.constant 0 : index
    %326 = vector.load %arg10[%c0_111, %c0_112] : memref<8x23xf32, #tpu.memory_space<vmem>>, vector<8x1xf32>
    tpu.vector_store %arg10[%c0_111, %c0_112], %325 {strides = array<i32>} : memref<8x23xf32, #tpu.memory_space<vmem>>, vector<8x1xf32>,
    %c0_113 = arith.constant 0 : index
    %c0_114 = arith.constant 0 : index
    %327 = vector.load %arg5[%c0_113, %c0_114] : memref<32x128xf32, #tpu.memory_space<vmem>>, vector<32x128xf32>
    %cst_115 = arith.constant dense<0.000000e+00> : vector<8x128xf32>
    %328 = tpu.matmul %248, %327, %cst_115 {dimension_numbers = #tpu.dot_dimension_numbers<[1], [0], [0], [1], [0, 0, 1, 1], [], []>} : vector<8x32xf32>, vector<32x128xf32>, vector<8x128xf32> -> vector<8x128xf32>
    %329 = arith.addf %328, %50 : vector<8x128xf32>
    %cst_116 = arith.constant 5.000000e-01 : f32
    %330 = vector.broadcast %cst_116 : f32 to vector<8x128xf32>
    %331 = arith.mulf %330, %329 : vector<8x128xf32>
    %332 = math.tanh %331 : vector<8x128xf32>
    %cst_117 = arith.constant 1.000000e+00 : f32
    %333 = vector.broadcast %cst_117 : f32 to vector<8x128xf32>
    %334 = arith.addf %332, %333 : vector<8x128xf32>
    %cst_118 = arith.constant 5.000000e-01 : f32
    %335 = vector.broadcast %cst_118 : f32 to vector<8x128xf32>
    %336 = arith.mulf %335, %334 : vector<8x128xf32>
    %337 = math.tanh %329 : vector<8x128xf32>
    %338 = vector.extract_strided_slice %336 {offsets = [0, 0], sizes = [8, 32], strides = [1, 1]} : vector<8x128xf32> to vector<8x32xf32>
    %339 = vector.extract_strided_slice %336 {offsets = [0, 32], sizes = [8, 32], strides = [1, 1]} : vector<8x128xf32> to vector<8x32xf32>
    %340 = vector.extract_strided_slice %337 {offsets = [0, 64], sizes = [8, 32], strides = [1, 1]} : vector<8x128xf32> to vector<8x32xf32>
    %341 = vector.extract_strided_slice %336 {offsets = [0, 96], sizes = [8, 32], strides = [1, 1]} : vector<8x128xf32> to vector<8x32xf32>
    %342 = arith.mulf %339, %246 : vector<8x32xf32>
    %343 = arith.mulf %338, %340 : vector<8x32xf32>
    %344 = arith.addf %342, %343 : vector<8x32xf32>
    %345 = math.tanh %344 : vector<8x32xf32>
    %346 = arith.mulf %341, %345 : vector<8x32xf32>
    %347 = tpu.concatenate %346, %271 in 1 : vector<8x32xf32>, vector<8x32xf32> -> vector<8x64xf32>
    %c0_119 = arith.constant 0 : index
    %c0_120 = arith.constant 0 : index
    %c0_121 = arith.constant 0 : index
    %348 = vector.load %arg6[%c0_119, %c0_120, %c0_121] : memref<3x64x128xf32, #tpu.memory_space<vmem>>, vector<1x64x128xf32>
    %349 = vector.shape_cast %348 : vector<1x64x128xf32> to vector<64x128xf32>
    %cst_122 = arith.constant dense<0.000000e+00> : vector<8x128xf32>
    %350 = tpu.matmul %347, %349, %cst_122 {dimension_numbers = #tpu.dot_dimension_numbers<[1], [0], [0], [1], [0, 0, 1, 1], [], []>} : vector<8x64xf32>, vector<64x128xf32>, vector<8x128xf32> -> vector<8x128xf32>
    %351 = vector.broadcast %3 : vector<1x128xf32> to vector<8x128xf32>
    %352 = arith.addf %350, %351 : vector<8x128xf32>
    %cst_123 = arith.constant 5.000000e-01 : f32
    %353 = vector.broadcast %cst_123 : f32 to vector<8x128xf32>
    %354 = arith.mulf %353, %352 : vector<8x128xf32>
    %355 = math.tanh %354 : vector<8x128xf32>
    %cst_124 = arith.constant 1.000000e+00 : f32
    %356 = vector.broadcast %cst_124 : f32 to vector<8x128xf32>
    %357 = arith.addf %355, %356 : vector<8x128xf32>
    %cst_125 = arith.constant 5.000000e-01 : f32
    %358 = vector.broadcast %cst_125 : f32 to vector<8x128xf32>
    %359 = arith.mulf %358, %357 : vector<8x128xf32>
    %360 = math.tanh %352 : vector<8x128xf32>
    %361 = vector.extract_strided_slice %359 {offsets = [0, 0], sizes = [8, 32], strides = [1, 1]} : vector<8x128xf32> to vector<8x32xf32>
    %362 = vector.extract_strided_slice %359 {offsets = [0, 32], sizes = [8, 32], strides = [1, 1]} : vector<8x128xf32> to vector<8x32xf32>
    %363 = vector.extract_strided_slice %360 {offsets = [0, 64], sizes = [8, 32], strides = [1, 1]} : vector<8x128xf32> to vector<8x32xf32>
    %364 = vector.extract_strided_slice %359 {offsets = [0, 96], sizes = [8, 32], strides = [1, 1]} : vector<8x128xf32> to vector<8x32xf32>
    %365 = arith.mulf %362, %269 : vector<8x32xf32>
    %366 = arith.mulf %361, %363 : vector<8x32xf32>
    %367 = arith.addf %365, %366 : vector<8x32xf32>
    %368 = math.tanh %367 : vector<8x32xf32>
    %369 = arith.mulf %364, %368 : vector<8x32xf32>
    %370 = tpu.concatenate %369, %294 in 1 : vector<8x32xf32>, vector<8x32xf32> -> vector<8x64xf32>
    %c1_126 = arith.constant 1 : index
    %c0_127 = arith.constant 0 : index
    %c0_128 = arith.constant 0 : index
    %371 = vector.load %arg6[%c1_126, %c0_127, %c0_128] : memref<3x64x128xf32, #tpu.memory_space<vmem>>, vector<1x64x128xf32>
    %372 = vector.shape_cast %371 : vector<1x64x128xf32> to vector<64x128xf32>
    %cst_129 = arith.constant dense<0.000000e+00> : vector<8x128xf32>
    %373 = tpu.matmul %370, %372, %cst_129 {dimension_numbers = #tpu.dot_dimension_numbers<[1], [0], [0], [1], [0, 0, 1, 1], [], []>} : vector<8x64xf32>, vector<64x128xf32>, vector<8x128xf32> -> vector<8x128xf32>
    %374 = vector.broadcast %4 : vector<1x128xf32> to vector<8x128xf32>
    %375 = arith.addf %373, %374 : vector<8x128xf32>
    %cst_130 = arith.constant 5.000000e-01 : f32
    %376 = vector.broadcast %cst_130 : f32 to vector<8x128xf32>
    %377 = arith.mulf %376, %375 : vector<8x128xf32>
    %378 = math.tanh %377 : vector<8x128xf32>
    %cst_131 = arith.constant 1.000000e+00 : f32
    %379 = vector.broadcast %cst_131 : f32 to vector<8x128xf32>
    %380 = arith.addf %378, %379 : vector<8x128xf32>
    %cst_132 = arith.constant 5.000000e-01 : f32
    %381 = vector.broadcast %cst_132 : f32 to vector<8x128xf32>
    %382 = arith.mulf %381, %380 : vector<8x128xf32>
    %383 = math.tanh %375 : vector<8x128xf32>
    %384 = vector.extract_strided_slice %382 {offsets = [0, 0], sizes = [8, 32], strides = [1, 1]} : vector<8x128xf32> to vector<8x32xf32>
    %385 = vector.extract_strided_slice %382 {offsets = [0, 32], sizes = [8, 32], strides = [1, 1]} : vector<8x128xf32> to vector<8x32xf32>
    %386 = vector.extract_strided_slice %383 {offsets = [0, 64], sizes = [8, 32], strides = [1, 1]} : vector<8x128xf32> to vector<8x32xf32>
    %387 = vector.extract_strided_slice %382 {offsets = [0, 96], sizes = [8, 32], strides = [1, 1]} : vector<8x128xf32> to vector<8x32xf32>
    %388 = arith.mulf %385, %292 : vector<8x32xf32>
    %389 = arith.mulf %384, %386 : vector<8x32xf32>
    %390 = arith.addf %388, %389 : vector<8x32xf32>
    %391 = math.tanh %390 : vector<8x32xf32>
    %392 = arith.mulf %387, %391 : vector<8x32xf32>
    %393 = tpu.concatenate %392, %317 in 1 : vector<8x32xf32>, vector<8x32xf32> -> vector<8x64xf32>
    %c2_133 = arith.constant 2 : index
    %c0_134 = arith.constant 0 : index
    %c0_135 = arith.constant 0 : index
    %394 = vector.load %arg6[%c2_133, %c0_134, %c0_135] : memref<3x64x128xf32, #tpu.memory_space<vmem>>, vector<1x64x128xf32>
    %395 = vector.shape_cast %394 : vector<1x64x128xf32> to vector<64x128xf32>
    %cst_136 = arith.constant dense<0.000000e+00> : vector<8x128xf32>
    %396 = tpu.matmul %393, %395, %cst_136 {dimension_numbers = #tpu.dot_dimension_numbers<[1], [0], [0], [1], [0, 0, 1, 1], [], []>} : vector<8x64xf32>, vector<64x128xf32>, vector<8x128xf32> -> vector<8x128xf32>
    %397 = vector.broadcast %5 : vector<1x128xf32> to vector<8x128xf32>
    %398 = arith.addf %396, %397 : vector<8x128xf32>
    %cst_137 = arith.constant 5.000000e-01 : f32
    %399 = vector.broadcast %cst_137 : f32 to vector<8x128xf32>
    %400 = arith.mulf %399, %398 : vector<8x128xf32>
    %401 = math.tanh %400 : vector<8x128xf32>
    %cst_138 = arith.constant 1.000000e+00 : f32
    %402 = vector.broadcast %cst_138 : f32 to vector<8x128xf32>
    %403 = arith.addf %401, %402 : vector<8x128xf32>
    %cst_139 = arith.constant 5.000000e-01 : f32
    %404 = vector.broadcast %cst_139 : f32 to vector<8x128xf32>
    %405 = arith.mulf %404, %403 : vector<8x128xf32>
    %406 = math.tanh %398 : vector<8x128xf32>
    %407 = vector.extract_strided_slice %405 {offsets = [0, 0], sizes = [8, 32], strides = [1, 1]} : vector<8x128xf32> to vector<8x32xf32>
    %408 = vector.extract_strided_slice %405 {offsets = [0, 32], sizes = [8, 32], strides = [1, 1]} : vector<8x128xf32> to vector<8x32xf32>
    %409 = vector.extract_strided_slice %406 {offsets = [0, 64], sizes = [8, 32], strides = [1, 1]} : vector<8x128xf32> to vector<8x32xf32>
    %410 = vector.extract_strided_slice %405 {offsets = [0, 96], sizes = [8, 32], strides = [1, 1]} : vector<8x128xf32> to vector<8x32xf32>
    %411 = arith.mulf %408, %315 : vector<8x32xf32>
    %412 = arith.mulf %407, %409 : vector<8x32xf32>
    %413 = arith.addf %411, %412 : vector<8x32xf32>
    %414 = math.tanh %413 : vector<8x32xf32>
    %415 = arith.mulf %410, %414 : vector<8x32xf32>
    %416 = vector.broadcast %6 : vector<1x32xf32> to vector<8x32xf32>
    %417 = arith.mulf %415, %416 : vector<8x32xf32>
    %cst_140 = arith.constant dense<0.000000e+00> : vector<8xf32>
    %418 = vector.multi_reduction <add>, %417, %cst_140 [1] : vector<8x32xf32> to vector<8xf32>
    %419 = vector.shape_cast %418 : vector<8xf32> to vector<8x1xf32>
    %420 = vector.broadcast %7 : vector<1x1xf32> to vector<8x1xf32>
    %421 = arith.addf %419, %420 : vector<8x1xf32>
    %422 = math.tanh %421 : vector<8x1xf32>
    %423 = arith.addf %17, %422 : vector<8x1xf32>
    %c0_141 = arith.constant 0 : index
    %c1_142 = arith.constant 1 : index
    %424 = vector.load %arg10[%c0_141, %c1_142] : memref<8x23xf32, #tpu.memory_space<vmem>>, vector<8x1xf32>
    tpu.vector_store %arg10[%c0_141, %c1_142], %423 {strides = array<i32>} : memref<8x23xf32, #tpu.memory_space<vmem>>, vector<8x1xf32>,
    %c0_143 = arith.constant 0 : index
    %c0_144 = arith.constant 0 : index
    %425 = vector.load %arg5[%c0_143, %c0_144] : memref<32x128xf32, #tpu.memory_space<vmem>>, vector<32x128xf32>
    %cst_145 = arith.constant dense<0.000000e+00> : vector<8x128xf32>
    %426 = tpu.matmul %346, %425, %cst_145 {dimension_numbers = #tpu.dot_dimension_numbers<[1], [0], [0], [1], [0, 0, 1, 1], [], []>} : vector<8x32xf32>, vector<32x128xf32>, vector<8x128xf32> -> vector<8x128xf32>
    %427 = arith.addf %426, %60 : vector<8x128xf32>
    %cst_146 = arith.constant 5.000000e-01 : f32
    %428 = vector.broadcast %cst_146 : f32 to vector<8x128xf32>
    %429 = arith.mulf %428, %427 : vector<8x128xf32>
    %430 = math.tanh %429 : vector<8x128xf32>
    %cst_147 = arith.constant 1.000000e+00 : f32
    %431 = vector.broadcast %cst_147 : f32 to vector<8x128xf32>
    %432 = arith.addf %430, %431 : vector<8x128xf32>
    %cst_148 = arith.constant 5.000000e-01 : f32
    %433 = vector.broadcast %cst_148 : f32 to vector<8x128xf32>
    %434 = arith.mulf %433, %432 : vector<8x128xf32>
    %435 = math.tanh %427 : vector<8x128xf32>
    %436 = vector.extract_strided_slice %434 {offsets = [0, 0], sizes = [8, 32], strides = [1, 1]} : vector<8x128xf32> to vector<8x32xf32>
    %437 = vector.extract_strided_slice %434 {offsets = [0, 32], sizes = [8, 32], strides = [1, 1]} : vector<8x128xf32> to vector<8x32xf32>
    %438 = vector.extract_strided_slice %435 {offsets = [0, 64], sizes = [8, 32], strides = [1, 1]} : vector<8x128xf32> to vector<8x32xf32>
    %439 = vector.extract_strided_slice %434 {offsets = [0, 96], sizes = [8, 32], strides = [1, 1]} : vector<8x128xf32> to vector<8x32xf32>
    %440 = arith.mulf %437, %344 : vector<8x32xf32>
    %441 = arith.mulf %436, %438 : vector<8x32xf32>
    %442 = arith.addf %440, %441 : vector<8x32xf32>
    %443 = math.tanh %442 : vector<8x32xf32>
    %444 = arith.mulf %439, %443 : vector<8x32xf32>
    %445 = tpu.concatenate %444, %369 in 1 : vector<8x32xf32>, vector<8x32xf32> -> vector<8x64xf32>
    %c0_149 = arith.constant 0 : index
    %c0_150 = arith.constant 0 : index
    %c0_151 = arith.constant 0 : index
    %446 = vector.load %arg6[%c0_149, %c0_150, %c0_151] : memref<3x64x128xf32, #tpu.memory_space<vmem>>, vector<1x64x128xf32>
    %447 = vector.shape_cast %446 : vector<1x64x128xf32> to vector<64x128xf32>
    %cst_152 = arith.constant dense<0.000000e+00> : vector<8x128xf32>
    %448 = tpu.matmul %445, %447, %cst_152 {dimension_numbers = #tpu.dot_dimension_numbers<[1], [0], [0], [1], [0, 0, 1, 1], [], []>} : vector<8x64xf32>, vector<64x128xf32>, vector<8x128xf32> -> vector<8x128xf32>
    %449 = vector.broadcast %3 : vector<1x128xf32> to vector<8x128xf32>
    %450 = arith.addf %448, %449 : vector<8x128xf32>
    %cst_153 = arith.constant 5.000000e-01 : f32
    %451 = vector.broadcast %cst_153 : f32 to vector<8x128xf32>
    %452 = arith.mulf %451, %450 : vector<8x128xf32>
    %453 = math.tanh %452 : vector<8x128xf32>
    %cst_154 = arith.constant 1.000000e+00 : f32
    %454 = vector.broadcast %cst_154 : f32 to vector<8x128xf32>
    %455 = arith.addf %453, %454 : vector<8x128xf32>
    %cst_155 = arith.constant 5.000000e-01 : f32
    %456 = vector.broadcast %cst_155 : f32 to vector<8x128xf32>
    %457 = arith.mulf %456, %455 : vector<8x128xf32>
    %458 = math.tanh %450 : vector<8x128xf32>
    %459 = vector.extract_strided_slice %457 {offsets = [0, 0], sizes = [8, 32], strides = [1, 1]} : vector<8x128xf32> to vector<8x32xf32>
    %460 = vector.extract_strided_slice %457 {offsets = [0, 32], sizes = [8, 32], strides = [1, 1]} : vector<8x128xf32> to vector<8x32xf32>
    %461 = vector.extract_strided_slice %458 {offsets = [0, 64], sizes = [8, 32], strides = [1, 1]} : vector<8x128xf32> to vector<8x32xf32>
    %462 = vector.extract_strided_slice %457 {offsets = [0, 96], sizes = [8, 32], strides = [1, 1]} : vector<8x128xf32> to vector<8x32xf32>
    %463 = arith.mulf %460, %367 : vector<8x32xf32>
    %464 = arith.mulf %459, %461 : vector<8x32xf32>
    %465 = arith.addf %463, %464 : vector<8x32xf32>
    %466 = math.tanh %465 : vector<8x32xf32>
    %467 = arith.mulf %462, %466 : vector<8x32xf32>
    %468 = tpu.concatenate %467, %392 in 1 : vector<8x32xf32>, vector<8x32xf32> -> vector<8x64xf32>
    %c1_156 = arith.constant 1 : index
    %c0_157 = arith.constant 0 : index
    %c0_158 = arith.constant 0 : index
    %469 = vector.load %arg6[%c1_156, %c0_157, %c0_158] : memref<3x64x128xf32, #tpu.memory_space<vmem>>, vector<1x64x128xf32>
    %470 = vector.shape_cast %469 : vector<1x64x128xf32> to vector<64x128xf32>
    %cst_159 = arith.constant dense<0.000000e+00> : vector<8x128xf32>
    %471 = tpu.matmul %468, %470, %cst_159 {dimension_numbers = #tpu.dot_dimension_numbers<[1], [0], [0], [1], [0, 0, 1, 1], [], []>} : vector<8x64xf32>, vector<64x128xf32>, vector<8x128xf32> -> vector<8x128xf32>
    %472 = vector.broadcast %4 : vector<1x128xf32> to vector<8x128xf32>
    %473 = arith.addf %471, %472 : vector<8x128xf32>
    %cst_160 = arith.constant 5.000000e-01 : f32
    %474 = vector.broadcast %cst_160 : f32 to vector<8x128xf32>
    %475 = arith.mulf %474, %473 : vector<8x128xf32>
    %476 = math.tanh %475 : vector<8x128xf32>
    %cst_161 = arith.constant 1.000000e+00 : f32
    %477 = vector.broadcast %cst_161 : f32 to vector<8x128xf32>
    %478 = arith.addf %476, %477 : vector<8x128xf32>
    %cst_162 = arith.constant 5.000000e-01 : f32
    %479 = vector.broadcast %cst_162 : f32 to vector<8x128xf32>
    %480 = arith.mulf %479, %478 : vector<8x128xf32>
    %481 = math.tanh %473 : vector<8x128xf32>
    %482 = vector.extract_strided_slice %480 {offsets = [0, 0], sizes = [8, 32], strides = [1, 1]} : vector<8x128xf32> to vector<8x32xf32>
    %483 = vector.extract_strided_slice %480 {offsets = [0, 32], sizes = [8, 32], strides = [1, 1]} : vector<8x128xf32> to vector<8x32xf32>
    %484 = vector.extract_strided_slice %481 {offsets = [0, 64], sizes = [8, 32], strides = [1, 1]} : vector<8x128xf32> to vector<8x32xf32>
    %485 = vector.extract_strided_slice %480 {offsets = [0, 96], sizes = [8, 32], strides = [1, 1]} : vector<8x128xf32> to vector<8x32xf32>
    %486 = arith.mulf %483, %390 : vector<8x32xf32>
    %487 = arith.mulf %482, %484 : vector<8x32xf32>
    %488 = arith.addf %486, %487 : vector<8x32xf32>
    %489 = math.tanh %488 : vector<8x32xf32>
    %490 = arith.mulf %485, %489 : vector<8x32xf32>
    %491 = tpu.concatenate %490, %415 in 1 : vector<8x32xf32>, vector<8x32xf32> -> vector<8x64xf32>
    %c2_163 = arith.constant 2 : index
    %c0_164 = arith.constant 0 : index
    %c0_165 = arith.constant 0 : index
    %492 = vector.load %arg6[%c2_163, %c0_164, %c0_165] : memref<3x64x128xf32, #tpu.memory_space<vmem>>, vector<1x64x128xf32>
    %493 = vector.shape_cast %492 : vector<1x64x128xf32> to vector<64x128xf32>
    %cst_166 = arith.constant dense<0.000000e+00> : vector<8x128xf32>
    %494 = tpu.matmul %491, %493, %cst_166 {dimension_numbers = #tpu.dot_dimension_numbers<[1], [0], [0], [1], [0, 0, 1, 1], [], []>} : vector<8x64xf32>, vector<64x128xf32>, vector<8x128xf32> -> vector<8x128xf32>
    %495 = vector.broadcast %5 : vector<1x128xf32> to vector<8x128xf32>
    %496 = arith.addf %494, %495 : vector<8x128xf32>
    %cst_167 = arith.constant 5.000000e-01 : f32
    %497 = vector.broadcast %cst_167 : f32 to vector<8x128xf32>
    %498 = arith.mulf %497, %496 : vector<8x128xf32>
    %499 = math.tanh %498 : vector<8x128xf32>
    %cst_168 = arith.constant 1.000000e+00 : f32
    %500 = vector.broadcast %cst_168 : f32 to vector<8x128xf32>
    %501 = arith.addf %499, %500 : vector<8x128xf32>
    %cst_169 = arith.constant 5.000000e-01 : f32
    %502 = vector.broadcast %cst_169 : f32 to vector<8x128xf32>
    %503 = arith.mulf %502, %501 : vector<8x128xf32>
    %504 = math.tanh %496 : vector<8x128xf32>
    %505 = vector.extract_strided_slice %503 {offsets = [0, 0], sizes = [8, 32], strides = [1, 1]} : vector<8x128xf32> to vector<8x32xf32>
    %506 = vector.extract_strided_slice %503 {offsets = [0, 32], sizes = [8, 32], strides = [1, 1]} : vector<8x128xf32> to vector<8x32xf32>
    %507 = vector.extract_strided_slice %504 {offsets = [0, 64], sizes = [8, 32], strides = [1, 1]} : vector<8x128xf32> to vector<8x32xf32>
    %508 = vector.extract_strided_slice %503 {offsets = [0, 96], sizes = [8, 32], strides = [1, 1]} : vector<8x128xf32> to vector<8x32xf32>
    %509 = arith.mulf %506, %413 : vector<8x32xf32>
    %510 = arith.mulf %505, %507 : vector<8x32xf32>
    %511 = arith.addf %509, %510 : vector<8x32xf32>
    %512 = math.tanh %511 : vector<8x32xf32>
    %513 = arith.mulf %508, %512 : vector<8x32xf32>
    %514 = vector.broadcast %6 : vector<1x32xf32> to vector<8x32xf32>
    %515 = arith.mulf %513, %514 : vector<8x32xf32>
    %cst_170 = arith.constant dense<0.000000e+00> : vector<8xf32>
    %516 = vector.multi_reduction <add>, %515, %cst_170 [1] : vector<8x32xf32> to vector<8xf32>
    %517 = vector.shape_cast %516 : vector<8xf32> to vector<8x1xf32>
    %518 = vector.broadcast %7 : vector<1x1xf32> to vector<8x1xf32>
    %519 = arith.addf %517, %518 : vector<8x1xf32>
    %520 = math.tanh %519 : vector<8x1xf32>
    %521 = arith.addf %18, %520 : vector<8x1xf32>
    %c0_171 = arith.constant 0 : index
    %c2_172 = arith.constant 2 : index
    %522 = vector.load %arg10[%c0_171, %c2_172] : memref<8x23xf32, #tpu.memory_space<vmem>>, vector<8x1xf32>
    tpu.vector_store %arg10[%c0_171, %c2_172], %521 {strides = array<i32>} : memref<8x23xf32, #tpu.memory_space<vmem>>, vector<8x1xf32>,
    %c0_173 = arith.constant 0 : index
    %c0_174 = arith.constant 0 : index
    %523 = vector.load %arg5[%c0_173, %c0_174] : memref<32x128xf32, #tpu.memory_space<vmem>>, vector<32x128xf32>
    %cst_175 = arith.constant dense<0.000000e+00> : vector<8x128xf32>
    %524 = tpu.matmul %444, %523, %cst_175 {dimension_numbers = #tpu.dot_dimension_numbers<[1], [0], [0], [1], [0, 0, 1, 1], [], []>} : vector<8x32xf32>, vector<32x128xf32>, vector<8x128xf32> -> vector<8x128xf32>
    %525 = arith.addf %524, %70 : vector<8x128xf32>
    %cst_176 = arith.constant 5.000000e-01 : f32
    %526 = vector.broadcast %cst_176 : f32 to vector<8x128xf32>
    %527 = arith.mulf %526, %525 : vector<8x128xf32>
    %528 = math.tanh %527 : vector<8x128xf32>
    %cst_177 = arith.constant 1.000000e+00 : f32
    %529 = vector.broadcast %cst_177 : f32 to vector<8x128xf32>
    %530 = arith.addf %528, %529 : vector<8x128xf32>
    %cst_178 = arith.constant 5.000000e-01 : f32
    %531 = vector.broadcast %cst_178 : f32 to vector<8x128xf32>
    %532 = arith.mulf %531, %530 : vector<8x128xf32>
    %533 = math.tanh %525 : vector<8x128xf32>
    %534 = vector.extract_strided_slice %532 {offsets = [0, 0], sizes = [8, 32], strides = [1, 1]} : vector<8x128xf32> to vector<8x32xf32>
    %535 = vector.extract_strided_slice %532 {offsets = [0, 32], sizes = [8, 32], strides = [1, 1]} : vector<8x128xf32> to vector<8x32xf32>
    %536 = vector.extract_strided_slice %533 {offsets = [0, 64], sizes = [8, 32], strides = [1, 1]} : vector<8x128xf32> to vector<8x32xf32>
    %537 = vector.extract_strided_slice %532 {offsets = [0, 96], sizes = [8, 32], strides = [1, 1]} : vector<8x128xf32> to vector<8x32xf32>
    %538 = arith.mulf %535, %442 : vector<8x32xf32>
    %539 = arith.mulf %534, %536 : vector<8x32xf32>
    %540 = arith.addf %538, %539 : vector<8x32xf32>
    %541 = math.tanh %540 : vector<8x32xf32>
    %542 = arith.mulf %537, %541 : vector<8x32xf32>
    %543 = tpu.concatenate %542, %467 in 1 : vector<8x32xf32>, vector<8x32xf32> -> vector<8x64xf32>
    %c0_179 = arith.constant 0 : index
    %c0_180 = arith.constant 0 : index
    %c0_181 = arith.constant 0 : index
    %544 = vector.load %arg6[%c0_179, %c0_180, %c0_181] : memref<3x64x128xf32, #tpu.memory_space<vmem>>, vector<1x64x128xf32>
    %545 = vector.shape_cast %544 : vector<1x64x128xf32> to vector<64x128xf32>
    %cst_182 = arith.constant dense<0.000000e+00> : vector<8x128xf32>
    %546 = tpu.matmul %543, %545, %cst_182 {dimension_numbers = #tpu.dot_dimension_numbers<[1], [0], [0], [1], [0, 0, 1, 1], [], []>} : vector<8x64xf32>, vector<64x128xf32>, vector<8x128xf32> -> vector<8x128xf32>
    %547 = vector.broadcast %3 : vector<1x128xf32> to vector<8x128xf32>
    %548 = arith.addf %546, %547 : vector<8x128xf32>
    %cst_183 = arith.constant 5.000000e-01 : f32
    %549 = vector.broadcast %cst_183 : f32 to vector<8x128xf32>
    %550 = arith.mulf %549, %548 : vector<8x128xf32>
    %551 = math.tanh %550 : vector<8x128xf32>
    %cst_184 = arith.constant 1.000000e+00 : f32
    %552 = vector.broadcast %cst_184 : f32 to vector<8x128xf32>
    %553 = arith.addf %551, %552 : vector<8x128xf32>
    %cst_185 = arith.constant 5.000000e-01 : f32
    %554 = vector.broadcast %cst_185 : f32 to vector<8x128xf32>
    %555 = arith.mulf %554, %553 : vector<8x128xf32>
    %556 = math.tanh %548 : vector<8x128xf32>
    %557 = vector.extract_strided_slice %555 {offsets = [0, 0], sizes = [8, 32], strides = [1, 1]} : vector<8x128xf32> to vector<8x32xf32>
    %558 = vector.extract_strided_slice %555 {offsets = [0, 32], sizes = [8, 32], strides = [1, 1]} : vector<8x128xf32> to vector<8x32xf32>
    %559 = vector.extract_strided_slice %556 {offsets = [0, 64], sizes = [8, 32], strides = [1, 1]} : vector<8x128xf32> to vector<8x32xf32>
    %560 = vector.extract_strided_slice %555 {offsets = [0, 96], sizes = [8, 32], strides = [1, 1]} : vector<8x128xf32> to vector<8x32xf32>
    %561 = arith.mulf %558, %465 : vector<8x32xf32>
    %562 = arith.mulf %557, %559 : vector<8x32xf32>
    %563 = arith.addf %561, %562 : vector<8x32xf32>
    %564 = math.tanh %563 : vector<8x32xf32>
    %565 = arith.mulf %560, %564 : vector<8x32xf32>
    %566 = tpu.concatenate %565, %490 in 1 : vector<8x32xf32>, vector<8x32xf32> -> vector<8x64xf32>
    %c1_186 = arith.constant 1 : index
    %c0_187 = arith.constant 0 : index
    %c0_188 = arith.constant 0 : index
    %567 = vector.load %arg6[%c1_186, %c0_187, %c0_188] : memref<3x64x128xf32, #tpu.memory_space<vmem>>, vector<1x64x128xf32>
    %568 = vector.shape_cast %567 : vector<1x64x128xf32> to vector<64x128xf32>
    %cst_189 = arith.constant dense<0.000000e+00> : vector<8x128xf32>
    %569 = tpu.matmul %566, %568, %cst_189 {dimension_numbers = #tpu.dot_dimension_numbers<[1], [0], [0], [1], [0, 0, 1, 1], [], []>} : vector<8x64xf32>, vector<64x128xf32>, vector<8x128xf32> -> vector<8x128xf32>
    %570 = vector.broadcast %4 : vector<1x128xf32> to vector<8x128xf32>
    %571 = arith.addf %569, %570 : vector<8x128xf32>
    %cst_190 = arith.constant 5.000000e-01 : f32
    %572 = vector.broadcast %cst_190 : f32 to vector<8x128xf32>
    %573 = arith.mulf %572, %571 : vector<8x128xf32>
    %574 = math.tanh %573 : vector<8x128xf32>
    %cst_191 = arith.constant 1.000000e+00 : f32
    %575 = vector.broadcast %cst_191 : f32 to vector<8x128xf32>
    %576 = arith.addf %574, %575 : vector<8x128xf32>
    %cst_192 = arith.constant 5.000000e-01 : f32
    %577 = vector.broadcast %cst_192 : f32 to vector<8x128xf32>
    %578 = arith.mulf %577, %576 : vector<8x128xf32>
    %579 = math.tanh %571 : vector<8x128xf32>
    %580 = vector.extract_strided_slice %578 {offsets = [0, 0], sizes = [8, 32], strides = [1, 1]} : vector<8x128xf32> to vector<8x32xf32>
    %581 = vector.extract_strided_slice %578 {offsets = [0, 32], sizes = [8, 32], strides = [1, 1]} : vector<8x128xf32> to vector<8x32xf32>
    %582 = vector.extract_strided_slice %579 {offsets = [0, 64], sizes = [8, 32], strides = [1, 1]} : vector<8x128xf32> to vector<8x32xf32>
    %583 = vector.extract_strided_slice %578 {offsets = [0, 96], sizes = [8, 32], strides = [1, 1]} : vector<8x128xf32> to vector<8x32xf32>
    %584 = arith.mulf %581, %488 : vector<8x32xf32>
    %585 = arith.mulf %580, %582 : vector<8x32xf32>
    %586 = arith.addf %584, %585 : vector<8x32xf32>
    %587 = math.tanh %586 : vector<8x32xf32>
    %588 = arith.mulf %583, %587 : vector<8x32xf32>
    %589 = tpu.concatenate %588, %513 in 1 : vector<8x32xf32>, vector<8x32xf32> -> vector<8x64xf32>
    %c2_193 = arith.constant 2 : index
    %c0_194 = arith.constant 0 : index
    %c0_195 = arith.constant 0 : index
    %590 = vector.load %arg6[%c2_193, %c0_194, %c0_195] : memref<3x64x128xf32, #tpu.memory_space<vmem>>, vector<1x64x128xf32>
    %591 = vector.shape_cast %590 : vector<1x64x128xf32> to vector<64x128xf32>
    %cst_196 = arith.constant dense<0.000000e+00> : vector<8x128xf32>
    %592 = tpu.matmul %589, %591, %cst_196 {dimension_numbers = #tpu.dot_dimension_numbers<[1], [0], [0], [1], [0, 0, 1, 1], [], []>} : vector<8x64xf32>, vector<64x128xf32>, vector<8x128xf32> -> vector<8x128xf32>
    %593 = vector.broadcast %5 : vector<1x128xf32> to vector<8x128xf32>
    %594 = arith.addf %592, %593 : vector<8x128xf32>
    %cst_197 = arith.constant 5.000000e-01 : f32
    %595 = vector.broadcast %cst_197 : f32 to vector<8x128xf32>
    %596 = arith.mulf %595, %594 : vector<8x128xf32>
    %597 = math.tanh %596 : vector<8x128xf32>
    %cst_198 = arith.constant 1.000000e+00 : f32
    %598 = vector.broadcast %cst_198 : f32 to vector<8x128xf32>
    %599 = arith.addf %597, %598 : vector<8x128xf32>
    %cst_199 = arith.constant 5.000000e-01 : f32
    %600 = vector.broadcast %cst_199 : f32 to vector<8x128xf32>
    %601 = arith.mulf %600, %599 : vector<8x128xf32>
    %602 = math.tanh %594 : vector<8x128xf32>
    %603 = vector.extract_strided_slice %601 {offsets = [0, 0], sizes = [8, 32], strides = [1, 1]} : vector<8x128xf32> to vector<8x32xf32>
    %604 = vector.extract_strided_slice %601 {offsets = [0, 32], sizes = [8, 32], strides = [1, 1]} : vector<8x128xf32> to vector<8x32xf32>
    %605 = vector.extract_strided_slice %602 {offsets = [0, 64], sizes = [8, 32], strides = [1, 1]} : vector<8x128xf32> to vector<8x32xf32>
    %606 = vector.extract_strided_slice %601 {offsets = [0, 96], sizes = [8, 32], strides = [1, 1]} : vector<8x128xf32> to vector<8x32xf32>
    %607 = arith.mulf %604, %511 : vector<8x32xf32>
    %608 = arith.mulf %603, %605 : vector<8x32xf32>
    %609 = arith.addf %607, %608 : vector<8x32xf32>
    %610 = math.tanh %609 : vector<8x32xf32>
    %611 = arith.mulf %606, %610 : vector<8x32xf32>
    %612 = vector.broadcast %6 : vector<1x32xf32> to vector<8x32xf32>
    %613 = arith.mulf %611, %612 : vector<8x32xf32>
    %cst_200 = arith.constant dense<0.000000e+00> : vector<8xf32>
    %614 = vector.multi_reduction <add>, %613, %cst_200 [1] : vector<8x32xf32> to vector<8xf32>
    %615 = vector.shape_cast %614 : vector<8xf32> to vector<8x1xf32>
    %616 = vector.broadcast %7 : vector<1x1xf32> to vector<8x1xf32>
    %617 = arith.addf %615, %616 : vector<8x1xf32>
    %618 = math.tanh %617 : vector<8x1xf32>
    %619 = arith.addf %19, %618 : vector<8x1xf32>
    %c0_201 = arith.constant 0 : index
    %c3_202 = arith.constant 3 : index
    %620 = vector.load %arg10[%c0_201, %c3_202] : memref<8x23xf32, #tpu.memory_space<vmem>>, vector<8x1xf32>
    tpu.vector_store %arg10[%c0_201, %c3_202], %619 {strides = array<i32>} : memref<8x23xf32, #tpu.memory_space<vmem>>, vector<8x1xf32>,
    %c0_203 = arith.constant 0 : index
    %c0_204 = arith.constant 0 : index
    %621 = vector.load %arg5[%c0_203, %c0_204] : memref<32x128xf32, #tpu.memory_space<vmem>>, vector<32x128xf32>
    %cst_205 = arith.constant dense<0.000000e+00> : vector<8x128xf32>
    %622 = tpu.matmul %542, %621, %cst_205 {dimension_numbers = #tpu.dot_dimension_numbers<[1], [0], [0], [1], [0, 0, 1, 1], [], []>} : vector<8x32xf32>, vector<32x128xf32>, vector<8x128xf32> -> vector<8x128xf32>
    %623 = arith.addf %622, %80 : vector<8x128xf32>
    %cst_206 = arith.constant 5.000000e-01 : f32
    %624 = vector.broadcast %cst_206 : f32 to vector<8x128xf32>
    %625 = arith.mulf %624, %623 : vector<8x128xf32>
    %626 = math.tanh %625 : vector<8x128xf32>
    %cst_207 = arith.constant 1.000000e+00 : f32
    %627 = vector.broadcast %cst_207 : f32 to vector<8x128xf32>
    %628 = arith.addf %626, %627 : vector<8x128xf32>
    %cst_208 = arith.constant 5.000000e-01 : f32
    %629 = vector.broadcast %cst_208 : f32 to vector<8x128xf32>
    %630 = arith.mulf %629, %628 : vector<8x128xf32>
    %631 = math.tanh %623 : vector<8x128xf32>
    %632 = vector.extract_strided_slice %630 {offsets = [0, 0], sizes = [8, 32], strides = [1, 1]} : vector<8x128xf32> to vector<8x32xf32>
    %633 = vector.extract_strided_slice %630 {offsets = [0, 32], sizes = [8, 32], strides = [1, 1]} : vector<8x128xf32> to vector<8x32xf32>
    %634 = vector.extract_strided_slice %631 {offsets = [0, 64], sizes = [8, 32], strides = [1, 1]} : vector<8x128xf32> to vector<8x32xf32>
    %635 = vector.extract_strided_slice %630 {offsets = [0, 96], sizes = [8, 32], strides = [1, 1]} : vector<8x128xf32> to vector<8x32xf32>
    %636 = arith.mulf %633, %540 : vector<8x32xf32>
    %637 = arith.mulf %632, %634 : vector<8x32xf32>
    %638 = arith.addf %636, %637 : vector<8x32xf32>
    %639 = math.tanh %638 : vector<8x32xf32>
    %640 = arith.mulf %635, %639 : vector<8x32xf32>
    %641 = tpu.concatenate %640, %565 in 1 : vector<8x32xf32>, vector<8x32xf32> -> vector<8x64xf32>
    %c0_209 = arith.constant 0 : index
    %c0_210 = arith.constant 0 : index
    %c0_211 = arith.constant 0 : index
    %642 = vector.load %arg6[%c0_209, %c0_210, %c0_211] : memref<3x64x128xf32, #tpu.memory_space<vmem>>, vector<1x64x128xf32>
    %643 = vector.shape_cast %642 : vector<1x64x128xf32> to vector<64x128xf32>
    %cst_212 = arith.constant dense<0.000000e+00> : vector<8x128xf32>
    %644 = tpu.matmul %641, %643, %cst_212 {dimension_numbers = #tpu.dot_dimension_numbers<[1], [0], [0], [1], [0, 0, 1, 1], [], []>} : vector<8x64xf32>, vector<64x128xf32>, vector<8x128xf32> -> vector<8x128xf32>
    %645 = vector.broadcast %3 : vector<1x128xf32> to vector<8x128xf32>
    %646 = arith.addf %644, %645 : vector<8x128xf32>
    %cst_213 = arith.constant 5.000000e-01 : f32
    %647 = vector.broadcast %cst_213 : f32 to vector<8x128xf32>
    %648 = arith.mulf %647, %646 : vector<8x128xf32>
    %649 = math.tanh %648 : vector<8x128xf32>
    %cst_214 = arith.constant 1.000000e+00 : f32
    %650 = vector.broadcast %cst_214 : f32 to vector<8x128xf32>
    %651 = arith.addf %649, %650 : vector<8x128xf32>
    %cst_215 = arith.constant 5.000000e-01 : f32
    %652 = vector.broadcast %cst_215 : f32 to vector<8x128xf32>
    %653 = arith.mulf %652, %651 : vector<8x128xf32>
    %654 = math.tanh %646 : vector<8x128xf32>
    %655 = vector.extract_strided_slice %653 {offsets = [0, 0], sizes = [8, 32], strides = [1, 1]} : vector<8x128xf32> to vector<8x32xf32>
    %656 = vector.extract_strided_slice %653 {offsets = [0, 32], sizes = [8, 32], strides = [1, 1]} : vector<8x128xf32> to vector<8x32xf32>
    %657 = vector.extract_strided_slice %654 {offsets = [0, 64], sizes = [8, 32], strides = [1, 1]} : vector<8x128xf32> to vector<8x32xf32>
    %658 = vector.extract_strided_slice %653 {offsets = [0, 96], sizes = [8, 32], strides = [1, 1]} : vector<8x128xf32> to vector<8x32xf32>
    %659 = arith.mulf %656, %563 : vector<8x32xf32>
    %660 = arith.mulf %655, %657 : vector<8x32xf32>
    %661 = arith.addf %659, %660 : vector<8x32xf32>
    %662 = math.tanh %661 : vector<8x32xf32>
    %663 = arith.mulf %658, %662 : vector<8x32xf32>
    %664 = tpu.concatenate %663, %588 in 1 : vector<8x32xf32>, vector<8x32xf32> -> vector<8x64xf32>
    %c1_216 = arith.constant 1 : index
    %c0_217 = arith.constant 0 : index
    %c0_218 = arith.constant 0 : index
    %665 = vector.load %arg6[%c1_216, %c0_217, %c0_218] : memref<3x64x128xf32, #tpu.memory_space<vmem>>, vector<1x64x128xf32>
    %666 = vector.shape_cast %665 : vector<1x64x128xf32> to vector<64x128xf32>
    %cst_219 = arith.constant dense<0.000000e+00> : vector<8x128xf32>
    %667 = tpu.matmul %664, %666, %cst_219 {dimension_numbers = #tpu.dot_dimension_numbers<[1], [0], [0], [1], [0, 0, 1, 1], [], []>} : vector<8x64xf32>, vector<64x128xf32>, vector<8x128xf32> -> vector<8x128xf32>
    %668 = vector.broadcast %4 : vector<1x128xf32> to vector<8x128xf32>
    %669 = arith.addf %667, %668 : vector<8x128xf32>
    %cst_220 = arith.constant 5.000000e-01 : f32
    %670 = vector.broadcast %cst_220 : f32 to vector<8x128xf32>
    %671 = arith.mulf %670, %669 : vector<8x128xf32>
    %672 = math.tanh %671 : vector<8x128xf32>
    %cst_221 = arith.constant 1.000000e+00 : f32
    %673 = vector.broadcast %cst_221 : f32 to vector<8x128xf32>
    %674 = arith.addf %672, %673 : vector<8x128xf32>
    %cst_222 = arith.constant 5.000000e-01 : f32
    %675 = vector.broadcast %cst_222 : f32 to vector<8x128xf32>
    %676 = arith.mulf %675, %674 : vector<8x128xf32>
    %677 = math.tanh %669 : vector<8x128xf32>
    %678 = vector.extract_strided_slice %676 {offsets = [0, 0], sizes = [8, 32], strides = [1, 1]} : vector<8x128xf32> to vector<8x32xf32>
    %679 = vector.extract_strided_slice %676 {offsets = [0, 32], sizes = [8, 32], strides = [1, 1]} : vector<8x128xf32> to vector<8x32xf32>
    %680 = vector.extract_strided_slice %677 {offsets = [0, 64], sizes = [8, 32], strides = [1, 1]} : vector<8x128xf32> to vector<8x32xf32>
    %681 = vector.extract_strided_slice %676 {offsets = [0, 96], sizes = [8, 32], strides = [1, 1]} : vector<8x128xf32> to vector<8x32xf32>
    %682 = arith.mulf %679, %586 : vector<8x32xf32>
    %683 = arith.mulf %678, %680 : vector<8x32xf32>
    %684 = arith.addf %682, %683 : vector<8x32xf32>
    %685 = math.tanh %684 : vector<8x32xf32>
    %686 = arith.mulf %681, %685 : vector<8x32xf32>
    %687 = tpu.concatenate %686, %611 in 1 : vector<8x32xf32>, vector<8x32xf32> -> vector<8x64xf32>
    %c2_223 = arith.constant 2 : index
    %c0_224 = arith.constant 0 : index
    %c0_225 = arith.constant 0 : index
    %688 = vector.load %arg6[%c2_223, %c0_224, %c0_225] : memref<3x64x128xf32, #tpu.memory_space<vmem>>, vector<1x64x128xf32>
    %689 = vector.shape_cast %688 : vector<1x64x128xf32> to vector<64x128xf32>
    %cst_226 = arith.constant dense<0.000000e+00> : vector<8x128xf32>
    %690 = tpu.matmul %687, %689, %cst_226 {dimension_numbers = #tpu.dot_dimension_numbers<[1], [0], [0], [1], [0, 0, 1, 1], [], []>} : vector<8x64xf32>, vector<64x128xf32>, vector<8x128xf32> -> vector<8x128xf32>
    %691 = vector.broadcast %5 : vector<1x128xf32> to vector<8x128xf32>
    %692 = arith.addf %690, %691 : vector<8x128xf32>
    %cst_227 = arith.constant 5.000000e-01 : f32
    %693 = vector.broadcast %cst_227 : f32 to vector<8x128xf32>
    %694 = arith.mulf %693, %692 : vector<8x128xf32>
    %695 = math.tanh %694 : vector<8x128xf32>
    %cst_228 = arith.constant 1.000000e+00 : f32
    %696 = vector.broadcast %cst_228 : f32 to vector<8x128xf32>
    %697 = arith.addf %695, %696 : vector<8x128xf32>
    %cst_229 = arith.constant 5.000000e-01 : f32
    %698 = vector.broadcast %cst_229 : f32 to vector<8x128xf32>
    %699 = arith.mulf %698, %697 : vector<8x128xf32>
    %700 = math.tanh %692 : vector<8x128xf32>
    %701 = vector.extract_strided_slice %699 {offsets = [0, 0], sizes = [8, 32], strides = [1, 1]} : vector<8x128xf32> to vector<8x32xf32>
    %702 = vector.extract_strided_slice %699 {offsets = [0, 32], sizes = [8, 32], strides = [1, 1]} : vector<8x128xf32> to vector<8x32xf32>
    %703 = vector.extract_strided_slice %700 {offsets = [0, 64], sizes = [8, 32], strides = [1, 1]} : vector<8x128xf32> to vector<8x32xf32>
    %704 = vector.extract_strided_slice %699 {offsets = [0, 96], sizes = [8, 32], strides = [1, 1]} : vector<8x128xf32> to vector<8x32xf32>
    %705 = arith.mulf %702, %609 : vector<8x32xf32>
    %706 = arith.mulf %701, %703 : vector<8x32xf32>
    %707 = arith.addf %705, %706 : vector<8x32xf32>
    %708 = math.tanh %707 : vector<8x32xf32>
    %709 = arith.mulf %704, %708 : vector<8x32xf32>
    %710 = vector.broadcast %6 : vector<1x32xf32> to vector<8x32xf32>
    %711 = arith.mulf %709, %710 : vector<8x32xf32>
    %cst_230 = arith.constant dense<0.000000e+00> : vector<8xf32>
    %712 = vector.multi_reduction <add>, %711, %cst_230 [1] : vector<8x32xf32> to vector<8xf32>
    %713 = vector.shape_cast %712 : vector<8xf32> to vector<8x1xf32>
    %714 = vector.broadcast %7 : vector<1x1xf32> to vector<8x1xf32>
    %715 = arith.addf %713, %714 : vector<8x1xf32>
    %716 = math.tanh %715 : vector<8x1xf32>
    %717 = arith.addf %20, %716 : vector<8x1xf32>
    %c0_231 = arith.constant 0 : index
    %c4_232 = arith.constant 4 : index
    %718 = vector.load %arg10[%c0_231, %c4_232] : memref<8x23xf32, #tpu.memory_space<vmem>>, vector<8x1xf32>
    tpu.vector_store %arg10[%c0_231, %c4_232], %717 {strides = array<i32>} : memref<8x23xf32, #tpu.memory_space<vmem>>, vector<8x1xf32>,
    %c0_233 = arith.constant 0 : index
    %c0_234 = arith.constant 0 : index
    %719 = vector.load %arg5[%c0_233, %c0_234] : memref<32x128xf32, #tpu.memory_space<vmem>>, vector<32x128xf32>
    %cst_235 = arith.constant dense<0.000000e+00> : vector<8x128xf32>
    %720 = tpu.matmul %640, %719, %cst_235 {dimension_numbers = #tpu.dot_dimension_numbers<[1], [0], [0], [1], [0, 0, 1, 1], [], []>} : vector<8x32xf32>, vector<32x128xf32>, vector<8x128xf32> -> vector<8x128xf32>
    %721 = arith.addf %720, %90 : vector<8x128xf32>
    %cst_236 = arith.constant 5.000000e-01 : f32
    %722 = vector.broadcast %cst_236 : f32 to vector<8x128xf32>
    %723 = arith.mulf %722, %721 : vector<8x128xf32>
    %724 = math.tanh %723 : vector<8x128xf32>
    %cst_237 = arith.constant 1.000000e+00 : f32
    %725 = vector.broadcast %cst_237 : f32 to vector<8x128xf32>
    %726 = arith.addf %724, %725 : vector<8x128xf32>
    %cst_238 = arith.constant 5.000000e-01 : f32
    %727 = vector.broadcast %cst_238 : f32 to vector<8x128xf32>
    %728 = arith.mulf %727, %726 : vector<8x128xf32>
    %729 = math.tanh %721 : vector<8x128xf32>
    %730 = vector.extract_strided_slice %728 {offsets = [0, 0], sizes = [8, 32], strides = [1, 1]} : vector<8x128xf32> to vector<8x32xf32>
    %731 = vector.extract_strided_slice %728 {offsets = [0, 32], sizes = [8, 32], strides = [1, 1]} : vector<8x128xf32> to vector<8x32xf32>
    %732 = vector.extract_strided_slice %729 {offsets = [0, 64], sizes = [8, 32], strides = [1, 1]} : vector<8x128xf32> to vector<8x32xf32>
    %733 = vector.extract_strided_slice %728 {offsets = [0, 96], sizes = [8, 32], strides = [1, 1]} : vector<8x128xf32> to vector<8x32xf32>
    %734 = arith.mulf %731, %638 : vector<8x32xf32>
    %735 = arith.mulf %730, %732 : vector<8x32xf32>
    %736 = arith.addf %734, %735 : vector<8x32xf32>
    %737 = math.tanh %736 : vector<8x32xf32>
    %738 = arith.mulf %733, %737 : vector<8x32xf32>
    %739 = tpu.concatenate %738, %663 in 1 : vector<8x32xf32>, vector<8x32xf32> -> vector<8x64xf32>
    %c0_239 = arith.constant 0 : index
    %c0_240 = arith.constant 0 : index
    %c0_241 = arith.constant 0 : index
    %740 = vector.load %arg6[%c0_239, %c0_240, %c0_241] : memref<3x64x128xf32, #tpu.memory_space<vmem>>, vector<1x64x128xf32>
    %741 = vector.shape_cast %740 : vector<1x64x128xf32> to vector<64x128xf32>
    %cst_242 = arith.constant dense<0.000000e+00> : vector<8x128xf32>
    %742 = tpu.matmul %739, %741, %cst_242 {dimension_numbers = #tpu.dot_dimension_numbers<[1], [0], [0], [1], [0, 0, 1, 1], [], []>} : vector<8x64xf32>, vector<64x128xf32>, vector<8x128xf32> -> vector<8x128xf32>
    %743 = vector.broadcast %3 : vector<1x128xf32> to vector<8x128xf32>
    %744 = arith.addf %742, %743 : vector<8x128xf32>
    %cst_243 = arith.constant 5.000000e-01 : f32
    %745 = vector.broadcast %cst_243 : f32 to vector<8x128xf32>
    %746 = arith.mulf %745, %744 : vector<8x128xf32>
    %747 = math.tanh %746 : vector<8x128xf32>
    %cst_244 = arith.constant 1.000000e+00 : f32
    %748 = vector.broadcast %cst_244 : f32 to vector<8x128xf32>
    %749 = arith.addf %747, %748 : vector<8x128xf32>
    %cst_245 = arith.constant 5.000000e-01 : f32
    %750 = vector.broadcast %cst_245 : f32 to vector<8x128xf32>
    %751 = arith.mulf %750, %749 : vector<8x128xf32>
    %752 = math.tanh %744 : vector<8x128xf32>
    %753 = vector.extract_strided_slice %751 {offsets = [0, 0], sizes = [8, 32], strides = [1, 1]} : vector<8x128xf32> to vector<8x32xf32>
    %754 = vector.extract_strided_slice %751 {offsets = [0, 32], sizes = [8, 32], strides = [1, 1]} : vector<8x128xf32> to vector<8x32xf32>
    %755 = vector.extract_strided_slice %752 {offsets = [0, 64], sizes = [8, 32], strides = [1, 1]} : vector<8x128xf32> to vector<8x32xf32>
    %756 = vector.extract_strided_slice %751 {offsets = [0, 96], sizes = [8, 32], strides = [1, 1]} : vector<8x128xf32> to vector<8x32xf32>
    %757 = arith.mulf %754, %661 : vector<8x32xf32>
    %758 = arith.mulf %753, %755 : vector<8x32xf32>
    %759 = arith.addf %757, %758 : vector<8x32xf32>
    %760 = math.tanh %759 : vector<8x32xf32>
    %761 = arith.mulf %756, %760 : vector<8x32xf32>
    %762 = tpu.concatenate %761, %686 in 1 : vector<8x32xf32>, vector<8x32xf32> -> vector<8x64xf32>
    %c1_246 = arith.constant 1 : index
    %c0_247 = arith.constant 0 : index
    %c0_248 = arith.constant 0 : index
    %763 = vector.load %arg6[%c1_246, %c0_247, %c0_248] : memref<3x64x128xf32, #tpu.memory_space<vmem>>, vector<1x64x128xf32>
    %764 = vector.shape_cast %763 : vector<1x64x128xf32> to vector<64x128xf32>
    %cst_249 = arith.constant dense<0.000000e+00> : vector<8x128xf32>
    %765 = tpu.matmul %762, %764, %cst_249 {dimension_numbers = #tpu.dot_dimension_numbers<[1], [0], [0], [1], [0, 0, 1, 1], [], []>} : vector<8x64xf32>, vector<64x128xf32>, vector<8x128xf32> -> vector<8x128xf32>
    %766 = vector.broadcast %4 : vector<1x128xf32> to vector<8x128xf32>
    %767 = arith.addf %765, %766 : vector<8x128xf32>
    %cst_250 = arith.constant 5.000000e-01 : f32
    %768 = vector.broadcast %cst_250 : f32 to vector<8x128xf32>
    %769 = arith.mulf %768, %767 : vector<8x128xf32>
    %770 = math.tanh %769 : vector<8x128xf32>
    %cst_251 = arith.constant 1.000000e+00 : f32
    %771 = vector.broadcast %cst_251 : f32 to vector<8x128xf32>
    %772 = arith.addf %770, %771 : vector<8x128xf32>
    %cst_252 = arith.constant 5.000000e-01 : f32
    %773 = vector.broadcast %cst_252 : f32 to vector<8x128xf32>
    %774 = arith.mulf %773, %772 : vector<8x128xf32>
    %775 = math.tanh %767 : vector<8x128xf32>
    %776 = vector.extract_strided_slice %774 {offsets = [0, 0], sizes = [8, 32], strides = [1, 1]} : vector<8x128xf32> to vector<8x32xf32>
    %777 = vector.extract_strided_slice %774 {offsets = [0, 32], sizes = [8, 32], strides = [1, 1]} : vector<8x128xf32> to vector<8x32xf32>
    %778 = vector.extract_strided_slice %775 {offsets = [0, 64], sizes = [8, 32], strides = [1, 1]} : vector<8x128xf32> to vector<8x32xf32>
    %779 = vector.extract_strided_slice %774 {offsets = [0, 96], sizes = [8, 32], strides = [1, 1]} : vector<8x128xf32> to vector<8x32xf32>
    %780 = arith.mulf %777, %684 : vector<8x32xf32>
    %781 = arith.mulf %776, %778 : vector<8x32xf32>
    %782 = arith.addf %780, %781 : vector<8x32xf32>
    %783 = math.tanh %782 : vector<8x32xf32>
    %784 = arith.mulf %779, %783 : vector<8x32xf32>
    %785 = tpu.concatenate %784, %709 in 1 : vector<8x32xf32>, vector<8x32xf32> -> vector<8x64xf32>
    %c2_253 = arith.constant 2 : index
    %c0_254 = arith.constant 0 : index
    %c0_255 = arith.constant 0 : index
    %786 = vector.load %arg6[%c2_253, %c0_254, %c0_255] : memref<3x64x128xf32, #tpu.memory_space<vmem>>, vector<1x64x128xf32>
    %787 = vector.shape_cast %786 : vector<1x64x128xf32> to vector<64x128xf32>
    %cst_256 = arith.constant dense<0.000000e+00> : vector<8x128xf32>
    %788 = tpu.matmul %785, %787, %cst_256 {dimension_numbers = #tpu.dot_dimension_numbers<[1], [0], [0], [1], [0, 0, 1, 1], [], []>} : vector<8x64xf32>, vector<64x128xf32>, vector<8x128xf32> -> vector<8x128xf32>
    %789 = vector.broadcast %5 : vector<1x128xf32> to vector<8x128xf32>
    %790 = arith.addf %788, %789 : vector<8x128xf32>
    %cst_257 = arith.constant 5.000000e-01 : f32
    %791 = vector.broadcast %cst_257 : f32 to vector<8x128xf32>
    %792 = arith.mulf %791, %790 : vector<8x128xf32>
    %793 = math.tanh %792 : vector<8x128xf32>
    %cst_258 = arith.constant 1.000000e+00 : f32
    %794 = vector.broadcast %cst_258 : f32 to vector<8x128xf32>
    %795 = arith.addf %793, %794 : vector<8x128xf32>
    %cst_259 = arith.constant 5.000000e-01 : f32
    %796 = vector.broadcast %cst_259 : f32 to vector<8x128xf32>
    %797 = arith.mulf %796, %795 : vector<8x128xf32>
    %798 = math.tanh %790 : vector<8x128xf32>
    %799 = vector.extract_strided_slice %797 {offsets = [0, 0], sizes = [8, 32], strides = [1, 1]} : vector<8x128xf32> to vector<8x32xf32>
    %800 = vector.extract_strided_slice %797 {offsets = [0, 32], sizes = [8, 32], strides = [1, 1]} : vector<8x128xf32> to vector<8x32xf32>
    %801 = vector.extract_strided_slice %798 {offsets = [0, 64], sizes = [8, 32], strides = [1, 1]} : vector<8x128xf32> to vector<8x32xf32>
    %802 = vector.extract_strided_slice %797 {offsets = [0, 96], sizes = [8, 32], strides = [1, 1]} : vector<8x128xf32> to vector<8x32xf32>
    %803 = arith.mulf %800, %707 : vector<8x32xf32>
    %804 = arith.mulf %799, %801 : vector<8x32xf32>
    %805 = arith.addf %803, %804 : vector<8x32xf32>
    %806 = math.tanh %805 : vector<8x32xf32>
    %807 = arith.mulf %802, %806 : vector<8x32xf32>
    %808 = vector.broadcast %6 : vector<1x32xf32> to vector<8x32xf32>
    %809 = arith.mulf %807, %808 : vector<8x32xf32>
    %cst_260 = arith.constant dense<0.000000e+00> : vector<8xf32>
    %810 = vector.multi_reduction <add>, %809, %cst_260 [1] : vector<8x32xf32> to vector<8xf32>
    %811 = vector.shape_cast %810 : vector<8xf32> to vector<8x1xf32>
    %812 = vector.broadcast %7 : vector<1x1xf32> to vector<8x1xf32>
    %813 = arith.addf %811, %812 : vector<8x1xf32>
    %814 = math.tanh %813 : vector<8x1xf32>
    %815 = arith.addf %21, %814 : vector<8x1xf32>
    %c0_261 = arith.constant 0 : index
    %c5_262 = arith.constant 5 : index
    %816 = vector.load %arg10[%c0_261, %c5_262] : memref<8x23xf32, #tpu.memory_space<vmem>>, vector<8x1xf32>
    tpu.vector_store %arg10[%c0_261, %c5_262], %815 {strides = array<i32>} : memref<8x23xf32, #tpu.memory_space<vmem>>, vector<8x1xf32>,
    %c0_263 = arith.constant 0 : index
    %c0_264 = arith.constant 0 : index
    %817 = vector.load %arg5[%c0_263, %c0_264] : memref<32x128xf32, #tpu.memory_space<vmem>>, vector<32x128xf32>
    %cst_265 = arith.constant dense<0.000000e+00> : vector<8x128xf32>
    %818 = tpu.matmul %738, %817, %cst_265 {dimension_numbers = #tpu.dot_dimension_numbers<[1], [0], [0], [1], [0, 0, 1, 1], [], []>} : vector<8x32xf32>, vector<32x128xf32>, vector<8x128xf32> -> vector<8x128xf32>
    %819 = arith.addf %818, %100 : vector<8x128xf32>
    %cst_266 = arith.constant 5.000000e-01 : f32
    %820 = vector.broadcast %cst_266 : f32 to vector<8x128xf32>
    %821 = arith.mulf %820, %819 : vector<8x128xf32>
    %822 = math.tanh %821 : vector<8x128xf32>
    %cst_267 = arith.constant 1.000000e+00 : f32
    %823 = vector.broadcast %cst_267 : f32 to vector<8x128xf32>
    %824 = arith.addf %822, %823 : vector<8x128xf32>
    %cst_268 = arith.constant 5.000000e-01 : f32
    %825 = vector.broadcast %cst_268 : f32 to vector<8x128xf32>
    %826 = arith.mulf %825, %824 : vector<8x128xf32>
    %827 = math.tanh %819 : vector<8x128xf32>
    %828 = vector.extract_strided_slice %826 {offsets = [0, 0], sizes = [8, 32], strides = [1, 1]} : vector<8x128xf32> to vector<8x32xf32>
    %829 = vector.extract_strided_slice %826 {offsets = [0, 32], sizes = [8, 32], strides = [1, 1]} : vector<8x128xf32> to vector<8x32xf32>
    %830 = vector.extract_strided_slice %827 {offsets = [0, 64], sizes = [8, 32], strides = [1, 1]} : vector<8x128xf32> to vector<8x32xf32>
    %831 = vector.extract_strided_slice %826 {offsets = [0, 96], sizes = [8, 32], strides = [1, 1]} : vector<8x128xf32> to vector<8x32xf32>
    %832 = arith.mulf %829, %736 : vector<8x32xf32>
    %833 = arith.mulf %828, %830 : vector<8x32xf32>
    %834 = arith.addf %832, %833 : vector<8x32xf32>
    %835 = math.tanh %834 : vector<8x32xf32>
    %836 = arith.mulf %831, %835 : vector<8x32xf32>
    %837 = tpu.concatenate %836, %761 in 1 : vector<8x32xf32>, vector<8x32xf32> -> vector<8x64xf32>
    %c0_269 = arith.constant 0 : index
    %c0_270 = arith.constant 0 : index
    %c0_271 = arith.constant 0 : index
    %838 = vector.load %arg6[%c0_269, %c0_270, %c0_271] : memref<3x64x128xf32, #tpu.memory_space<vmem>>, vector<1x64x128xf32>
    %839 = vector.shape_cast %838 : vector<1x64x128xf32> to vector<64x128xf32>
    %cst_272 = arith.constant dense<0.000000e+00> : vector<8x128xf32>
    %840 = tpu.matmul %837, %839, %cst_272 {dimension_numbers = #tpu.dot_dimension_numbers<[1], [0], [0], [1], [0, 0, 1, 1], [], []>} : vector<8x64xf32>, vector<64x128xf32>, vector<8x128xf32> -> vector<8x128xf32>
    %841 = vector.broadcast %3 : vector<1x128xf32> to vector<8x128xf32>
    %842 = arith.addf %840, %841 : vector<8x128xf32>
    %cst_273 = arith.constant 5.000000e-01 : f32
    %843 = vector.broadcast %cst_273 : f32 to vector<8x128xf32>
    %844 = arith.mulf %843, %842 : vector<8x128xf32>
    %845 = math.tanh %844 : vector<8x128xf32>
    %cst_274 = arith.constant 1.000000e+00 : f32
    %846 = vector.broadcast %cst_274 : f32 to vector<8x128xf32>
    %847 = arith.addf %845, %846 : vector<8x128xf32>
    %cst_275 = arith.constant 5.000000e-01 : f32
    %848 = vector.broadcast %cst_275 : f32 to vector<8x128xf32>
    %849 = arith.mulf %848, %847 : vector<8x128xf32>
    %850 = math.tanh %842 : vector<8x128xf32>
    %851 = vector.extract_strided_slice %849 {offsets = [0, 0], sizes = [8, 32], strides = [1, 1]} : vector<8x128xf32> to vector<8x32xf32>
    %852 = vector.extract_strided_slice %849 {offsets = [0, 32], sizes = [8, 32], strides = [1, 1]} : vector<8x128xf32> to vector<8x32xf32>
    %853 = vector.extract_strided_slice %850 {offsets = [0, 64], sizes = [8, 32], strides = [1, 1]} : vector<8x128xf32> to vector<8x32xf32>
    %854 = vector.extract_strided_slice %849 {offsets = [0, 96], sizes = [8, 32], strides = [1, 1]} : vector<8x128xf32> to vector<8x32xf32>
    %855 = arith.mulf %852, %759 : vector<8x32xf32>
    %856 = arith.mulf %851, %853 : vector<8x32xf32>
    %857 = arith.addf %855, %856 : vector<8x32xf32>
    %858 = math.tanh %857 : vector<8x32xf32>
    %859 = arith.mulf %854, %858 : vector<8x32xf32>
    %860 = tpu.concatenate %859, %784 in 1 : vector<8x32xf32>, vector<8x32xf32> -> vector<8x64xf32>
    %c1_276 = arith.constant 1 : index
    %c0_277 = arith.constant 0 : index
    %c0_278 = arith.constant 0 : index
    %861 = vector.load %arg6[%c1_276, %c0_277, %c0_278] : memref<3x64x128xf32, #tpu.memory_space<vmem>>, vector<1x64x128xf32>
    %862 = vector.shape_cast %861 : vector<1x64x128xf32> to vector<64x128xf32>
    %cst_279 = arith.constant dense<0.000000e+00> : vector<8x128xf32>
    %863 = tpu.matmul %860, %862, %cst_279 {dimension_numbers = #tpu.dot_dimension_numbers<[1], [0], [0], [1], [0, 0, 1, 1], [], []>} : vector<8x64xf32>, vector<64x128xf32>, vector<8x128xf32> -> vector<8x128xf32>
    %864 = vector.broadcast %4 : vector<1x128xf32> to vector<8x128xf32>
    %865 = arith.addf %863, %864 : vector<8x128xf32>
    %cst_280 = arith.constant 5.000000e-01 : f32
    %866 = vector.broadcast %cst_280 : f32 to vector<8x128xf32>
    %867 = arith.mulf %866, %865 : vector<8x128xf32>
    %868 = math.tanh %867 : vector<8x128xf32>
    %cst_281 = arith.constant 1.000000e+00 : f32
    %869 = vector.broadcast %cst_281 : f32 to vector<8x128xf32>
    %870 = arith.addf %868, %869 : vector<8x128xf32>
    %cst_282 = arith.constant 5.000000e-01 : f32
    %871 = vector.broadcast %cst_282 : f32 to vector<8x128xf32>
    %872 = arith.mulf %871, %870 : vector<8x128xf32>
    %873 = math.tanh %865 : vector<8x128xf32>
    %874 = vector.extract_strided_slice %872 {offsets = [0, 0], sizes = [8, 32], strides = [1, 1]} : vector<8x128xf32> to vector<8x32xf32>
    %875 = vector.extract_strided_slice %872 {offsets = [0, 32], sizes = [8, 32], strides = [1, 1]} : vector<8x128xf32> to vector<8x32xf32>
    %876 = vector.extract_strided_slice %873 {offsets = [0, 64], sizes = [8, 32], strides = [1, 1]} : vector<8x128xf32> to vector<8x32xf32>
    %877 = vector.extract_strided_slice %872 {offsets = [0, 96], sizes = [8, 32], strides = [1, 1]} : vector<8x128xf32> to vector<8x32xf32>
    %878 = arith.mulf %875, %782 : vector<8x32xf32>
    %879 = arith.mulf %874, %876 : vector<8x32xf32>
    %880 = arith.addf %878, %879 : vector<8x32xf32>
    %881 = math.tanh %880 : vector<8x32xf32>
    %882 = arith.mulf %877, %881 : vector<8x32xf32>
    %883 = tpu.concatenate %882, %807 in 1 : vector<8x32xf32>, vector<8x32xf32> -> vector<8x64xf32>
    %c2_283 = arith.constant 2 : index
    %c0_284 = arith.constant 0 : index
    %c0_285 = arith.constant 0 : index
    %884 = vector.load %arg6[%c2_283, %c0_284, %c0_285] : memref<3x64x128xf32, #tpu.memory_space<vmem>>, vector<1x64x128xf32>
    %885 = vector.shape_cast %884 : vector<1x64x128xf32> to vector<64x128xf32>
    %cst_286 = arith.constant dense<0.000000e+00> : vector<8x128xf32>
    %886 = tpu.matmul %883, %885, %cst_286 {dimension_numbers = #tpu.dot_dimension_numbers<[1], [0], [0], [1], [0, 0, 1, 1], [], []>} : vector<8x64xf32>, vector<64x128xf32>, vector<8x128xf32> -> vector<8x128xf32>
    %887 = vector.broadcast %5 : vector<1x128xf32> to vector<8x128xf32>
    %888 = arith.addf %886, %887 : vector<8x128xf32>
    %cst_287 = arith.constant 5.000000e-01 : f32
    %889 = vector.broadcast %cst_287 : f32 to vector<8x128xf32>
    %890 = arith.mulf %889, %888 : vector<8x128xf32>
    %891 = math.tanh %890 : vector<8x128xf32>
    %cst_288 = arith.constant 1.000000e+00 : f32
    %892 = vector.broadcast %cst_288 : f32 to vector<8x128xf32>
    %893 = arith.addf %891, %892 : vector<8x128xf32>
    %cst_289 = arith.constant 5.000000e-01 : f32
    %894 = vector.broadcast %cst_289 : f32 to vector<8x128xf32>
    %895 = arith.mulf %894, %893 : vector<8x128xf32>
    %896 = math.tanh %888 : vector<8x128xf32>
    %897 = vector.extract_strided_slice %895 {offsets = [0, 0], sizes = [8, 32], strides = [1, 1]} : vector<8x128xf32> to vector<8x32xf32>
    %898 = vector.extract_strided_slice %895 {offsets = [0, 32], sizes = [8, 32], strides = [1, 1]} : vector<8x128xf32> to vector<8x32xf32>
    %899 = vector.extract_strided_slice %896 {offsets = [0, 64], sizes = [8, 32], strides = [1, 1]} : vector<8x128xf32> to vector<8x32xf32>
    %900 = vector.extract_strided_slice %895 {offsets = [0, 96], sizes = [8, 32], strides = [1, 1]} : vector<8x128xf32> to vector<8x32xf32>
    %901 = arith.mulf %898, %805 : vector<8x32xf32>
    %902 = arith.mulf %897, %899 : vector<8x32xf32>
    %903 = arith.addf %901, %902 : vector<8x32xf32>
    %904 = math.tanh %903 : vector<8x32xf32>
    %905 = arith.mulf %900, %904 : vector<8x32xf32>
    %906 = vector.broadcast %6 : vector<1x32xf32> to vector<8x32xf32>
    %907 = arith.mulf %905, %906 : vector<8x32xf32>
    %cst_290 = arith.constant dense<0.000000e+00> : vector<8xf32>
    %908 = vector.multi_reduction <add>, %907, %cst_290 [1] : vector<8x32xf32> to vector<8xf32>
    %909 = vector.shape_cast %908 : vector<8xf32> to vector<8x1xf32>
    %910 = vector.broadcast %7 : vector<1x1xf32> to vector<8x1xf32>
    %911 = arith.addf %909, %910 : vector<8x1xf32>
    %912 = math.tanh %911 : vector<8x1xf32>
    %913 = arith.addf %22, %912 : vector<8x1xf32>
    %c0_291 = arith.constant 0 : index
    %c6_292 = arith.constant 6 : index
    %914 = vector.load %arg10[%c0_291, %c6_292] : memref<8x23xf32, #tpu.memory_space<vmem>>, vector<8x1xf32>
    tpu.vector_store %arg10[%c0_291, %c6_292], %913 {strides = array<i32>} : memref<8x23xf32, #tpu.memory_space<vmem>>, vector<8x1xf32>,
    %c0_293 = arith.constant 0 : index
    %c0_294 = arith.constant 0 : index
    %915 = vector.load %arg5[%c0_293, %c0_294] : memref<32x128xf32, #tpu.memory_space<vmem>>, vector<32x128xf32>
    %cst_295 = arith.constant dense<0.000000e+00> : vector<8x128xf32>
    %916 = tpu.matmul %836, %915, %cst_295 {dimension_numbers = #tpu.dot_dimension_numbers<[1], [0], [0], [1], [0, 0, 1, 1], [], []>} : vector<8x32xf32>, vector<32x128xf32>, vector<8x128xf32> -> vector<8x128xf32>
    %917 = arith.addf %916, %110 : vector<8x128xf32>
    %cst_296 = arith.constant 5.000000e-01 : f32
    %918 = vector.broadcast %cst_296 : f32 to vector<8x128xf32>
    %919 = arith.mulf %918, %917 : vector<8x128xf32>
    %920 = math.tanh %919 : vector<8x128xf32>
    %cst_297 = arith.constant 1.000000e+00 : f32
    %921 = vector.broadcast %cst_297 : f32 to vector<8x128xf32>
    %922 = arith.addf %920, %921 : vector<8x128xf32>
    %cst_298 = arith.constant 5.000000e-01 : f32
    %923 = vector.broadcast %cst_298 : f32 to vector<8x128xf32>
    %924 = arith.mulf %923, %922 : vector<8x128xf32>
    %925 = math.tanh %917 : vector<8x128xf32>
    %926 = vector.extract_strided_slice %924 {offsets = [0, 0], sizes = [8, 32], strides = [1, 1]} : vector<8x128xf32> to vector<8x32xf32>
    %927 = vector.extract_strided_slice %924 {offsets = [0, 32], sizes = [8, 32], strides = [1, 1]} : vector<8x128xf32> to vector<8x32xf32>
    %928 = vector.extract_strided_slice %925 {offsets = [0, 64], sizes = [8, 32], strides = [1, 1]} : vector<8x128xf32> to vector<8x32xf32>
    %929 = vector.extract_strided_slice %924 {offsets = [0, 96], sizes = [8, 32], strides = [1, 1]} : vector<8x128xf32> to vector<8x32xf32>
    %930 = arith.mulf %927, %834 : vector<8x32xf32>
    %931 = arith.mulf %926, %928 : vector<8x32xf32>
    %932 = arith.addf %930, %931 : vector<8x32xf32>
    %933 = math.tanh %932 : vector<8x32xf32>
    %934 = arith.mulf %929, %933 : vector<8x32xf32>
    %935 = tpu.concatenate %934, %859 in 1 : vector<8x32xf32>, vector<8x32xf32> -> vector<8x64xf32>
    %c0_299 = arith.constant 0 : index
    %c0_300 = arith.constant 0 : index
    %c0_301 = arith.constant 0 : index
    %936 = vector.load %arg6[%c0_299, %c0_300, %c0_301] : memref<3x64x128xf32, #tpu.memory_space<vmem>>, vector<1x64x128xf32>
    %937 = vector.shape_cast %936 : vector<1x64x128xf32> to vector<64x128xf32>
    %cst_302 = arith.constant dense<0.000000e+00> : vector<8x128xf32>
    %938 = tpu.matmul %935, %937, %cst_302 {dimension_numbers = #tpu.dot_dimension_numbers<[1], [0], [0], [1], [0, 0, 1, 1], [], []>} : vector<8x64xf32>, vector<64x128xf32>, vector<8x128xf32> -> vector<8x128xf32>
    %939 = vector.broadcast %3 : vector<1x128xf32> to vector<8x128xf32>
    %940 = arith.addf %938, %939 : vector<8x128xf32>
    %cst_303 = arith.constant 5.000000e-01 : f32
    %941 = vector.broadcast %cst_303 : f32 to vector<8x128xf32>
    %942 = arith.mulf %941, %940 : vector<8x128xf32>
    %943 = math.tanh %942 : vector<8x128xf32>
    %cst_304 = arith.constant 1.000000e+00 : f32
    %944 = vector.broadcast %cst_304 : f32 to vector<8x128xf32>
    %945 = arith.addf %943, %944 : vector<8x128xf32>
    %cst_305 = arith.constant 5.000000e-01 : f32
    %946 = vector.broadcast %cst_305 : f32 to vector<8x128xf32>
    %947 = arith.mulf %946, %945 : vector<8x128xf32>
    %948 = math.tanh %940 : vector<8x128xf32>
    %949 = vector.extract_strided_slice %947 {offsets = [0, 0], sizes = [8, 32], strides = [1, 1]} : vector<8x128xf32> to vector<8x32xf32>
    %950 = vector.extract_strided_slice %947 {offsets = [0, 32], sizes = [8, 32], strides = [1, 1]} : vector<8x128xf32> to vector<8x32xf32>
    %951 = vector.extract_strided_slice %948 {offsets = [0, 64], sizes = [8, 32], strides = [1, 1]} : vector<8x128xf32> to vector<8x32xf32>
    %952 = vector.extract_strided_slice %947 {offsets = [0, 96], sizes = [8, 32], strides = [1, 1]} : vector<8x128xf32> to vector<8x32xf32>
    %953 = arith.mulf %950, %857 : vector<8x32xf32>
    %954 = arith.mulf %949, %951 : vector<8x32xf32>
    %955 = arith.addf %953, %954 : vector<8x32xf32>
    %956 = math.tanh %955 : vector<8x32xf32>
    %957 = arith.mulf %952, %956 : vector<8x32xf32>
    %958 = tpu.concatenate %957, %882 in 1 : vector<8x32xf32>, vector<8x32xf32> -> vector<8x64xf32>
    %c1_306 = arith.constant 1 : index
    %c0_307 = arith.constant 0 : index
    %c0_308 = arith.constant 0 : index
    %959 = vector.load %arg6[%c1_306, %c0_307, %c0_308] : memref<3x64x128xf32, #tpu.memory_space<vmem>>, vector<1x64x128xf32>
    %960 = vector.shape_cast %959 : vector<1x64x128xf32> to vector<64x128xf32>
    %cst_309 = arith.constant dense<0.000000e+00> : vector<8x128xf32>
    %961 = tpu.matmul %958, %960, %cst_309 {dimension_numbers = #tpu.dot_dimension_numbers<[1], [0], [0], [1], [0, 0, 1, 1], [], []>} : vector<8x64xf32>, vector<64x128xf32>, vector<8x128xf32> -> vector<8x128xf32>
    %962 = vector.broadcast %4 : vector<1x128xf32> to vector<8x128xf32>
    %963 = arith.addf %961, %962 : vector<8x128xf32>
    %cst_310 = arith.constant 5.000000e-01 : f32
    %964 = vector.broadcast %cst_310 : f32 to vector<8x128xf32>
    %965 = arith.mulf %964, %963 : vector<8x128xf32>
    %966 = math.tanh %965 : vector<8x128xf32>
    %cst_311 = arith.constant 1.000000e+00 : f32
    %967 = vector.broadcast %cst_311 : f32 to vector<8x128xf32>
    %968 = arith.addf %966, %967 : vector<8x128xf32>
    %cst_312 = arith.constant 5.000000e-01 : f32
    %969 = vector.broadcast %cst_312 : f32 to vector<8x128xf32>
    %970 = arith.mulf %969, %968 : vector<8x128xf32>
    %971 = math.tanh %963 : vector<8x128xf32>
    %972 = vector.extract_strided_slice %970 {offsets = [0, 0], sizes = [8, 32], strides = [1, 1]} : vector<8x128xf32> to vector<8x32xf32>
    %973 = vector.extract_strided_slice %970 {offsets = [0, 32], sizes = [8, 32], strides = [1, 1]} : vector<8x128xf32> to vector<8x32xf32>
    %974 = vector.extract_strided_slice %971 {offsets = [0, 64], sizes = [8, 32], strides = [1, 1]} : vector<8x128xf32> to vector<8x32xf32>
    %975 = vector.extract_strided_slice %970 {offsets = [0, 96], sizes = [8, 32], strides = [1, 1]} : vector<8x128xf32> to vector<8x32xf32>
    %976 = arith.mulf %973, %880 : vector<8x32xf32>
    %977 = arith.mulf %972, %974 : vector<8x32xf32>
    %978 = arith.addf %976, %977 : vector<8x32xf32>
    %979 = math.tanh %978 : vector<8x32xf32>
    %980 = arith.mulf %975, %979 : vector<8x32xf32>
    %981 = tpu.concatenate %980, %905 in 1 : vector<8x32xf32>, vector<8x32xf32> -> vector<8x64xf32>
    %c2_313 = arith.constant 2 : index
    %c0_314 = arith.constant 0 : index
    %c0_315 = arith.constant 0 : index
    %982 = vector.load %arg6[%c2_313, %c0_314, %c0_315] : memref<3x64x128xf32, #tpu.memory_space<vmem>>, vector<1x64x128xf32>
    %983 = vector.shape_cast %982 : vector<1x64x128xf32> to vector<64x128xf32>
    %cst_316 = arith.constant dense<0.000000e+00> : vector<8x128xf32>
    %984 = tpu.matmul %981, %983, %cst_316 {dimension_numbers = #tpu.dot_dimension_numbers<[1], [0], [0], [1], [0, 0, 1, 1], [], []>} : vector<8x64xf32>, vector<64x128xf32>, vector<8x128xf32> -> vector<8x128xf32>
    %985 = vector.broadcast %5 : vector<1x128xf32> to vector<8x128xf32>
    %986 = arith.addf %984, %985 : vector<8x128xf32>
    %cst_317 = arith.constant 5.000000e-01 : f32
    %987 = vector.broadcast %cst_317 : f32 to vector<8x128xf32>
    %988 = arith.mulf %987, %986 : vector<8x128xf32>
    %989 = math.tanh %988 : vector<8x128xf32>
    %cst_318 = arith.constant 1.000000e+00 : f32
    %990 = vector.broadcast %cst_318 : f32 to vector<8x128xf32>
    %991 = arith.addf %989, %990 : vector<8x128xf32>
    %cst_319 = arith.constant 5.000000e-01 : f32
    %992 = vector.broadcast %cst_319 : f32 to vector<8x128xf32>
    %993 = arith.mulf %992, %991 : vector<8x128xf32>
    %994 = math.tanh %986 : vector<8x128xf32>
    %995 = vector.extract_strided_slice %993 {offsets = [0, 0], sizes = [8, 32], strides = [1, 1]} : vector<8x128xf32> to vector<8x32xf32>
    %996 = vector.extract_strided_slice %993 {offsets = [0, 32], sizes = [8, 32], strides = [1, 1]} : vector<8x128xf32> to vector<8x32xf32>
    %997 = vector.extract_strided_slice %994 {offsets = [0, 64], sizes = [8, 32], strides = [1, 1]} : vector<8x128xf32> to vector<8x32xf32>
    %998 = vector.extract_strided_slice %993 {offsets = [0, 96], sizes = [8, 32], strides = [1, 1]} : vector<8x128xf32> to vector<8x32xf32>
    %999 = arith.mulf %996, %903 : vector<8x32xf32>
    %1000 = arith.mulf %995, %997 : vector<8x32xf32>
    %1001 = arith.addf %999, %1000 : vector<8x32xf32>
    %1002 = math.tanh %1001 : vector<8x32xf32>
    %1003 = arith.mulf %998, %1002 : vector<8x32xf32>
    %1004 = vector.broadcast %6 : vector<1x32xf32> to vector<8x32xf32>
    %1005 = arith.mulf %1003, %1004 : vector<8x32xf32>
    %cst_320 = arith.constant dense<0.000000e+00> : vector<8xf32>
    %1006 = vector.multi_reduction <add>, %1005, %cst_320 [1] : vector<8x32xf32> to vector<8xf32>
    %1007 = vector.shape_cast %1006 : vector<8xf32> to vector<8x1xf32>
    %1008 = vector.broadcast %7 : vector<1x1xf32> to vector<8x1xf32>
    %1009 = arith.addf %1007, %1008 : vector<8x1xf32>
    %1010 = math.tanh %1009 : vector<8x1xf32>
    %1011 = arith.addf %23, %1010 : vector<8x1xf32>
    %c0_321 = arith.constant 0 : index
    %c7_322 = arith.constant 7 : index
    %1012 = vector.load %arg10[%c0_321, %c7_322] : memref<8x23xf32, #tpu.memory_space<vmem>>, vector<8x1xf32>
    tpu.vector_store %arg10[%c0_321, %c7_322], %1011 {strides = array<i32>} : memref<8x23xf32, #tpu.memory_space<vmem>>, vector<8x1xf32>,
    %c0_323 = arith.constant 0 : index
    %c0_324 = arith.constant 0 : index
    %1013 = vector.load %arg5[%c0_323, %c0_324] : memref<32x128xf32, #tpu.memory_space<vmem>>, vector<32x128xf32>
    %cst_325 = arith.constant dense<0.000000e+00> : vector<8x128xf32>
    %1014 = tpu.matmul %934, %1013, %cst_325 {dimension_numbers = #tpu.dot_dimension_numbers<[1], [0], [0], [1], [0, 0, 1, 1], [], []>} : vector<8x32xf32>, vector<32x128xf32>, vector<8x128xf32> -> vector<8x128xf32>
    %1015 = arith.addf %1014, %120 : vector<8x128xf32>
    %cst_326 = arith.constant 5.000000e-01 : f32
    %1016 = vector.broadcast %cst_326 : f32 to vector<8x128xf32>
    %1017 = arith.mulf %1016, %1015 : vector<8x128xf32>
    %1018 = math.tanh %1017 : vector<8x128xf32>
    %cst_327 = arith.constant 1.000000e+00 : f32
    %1019 = vector.broadcast %cst_327 : f32 to vector<8x128xf32>
    %1020 = arith.addf %1018, %1019 : vector<8x128xf32>
    %cst_328 = arith.constant 5.000000e-01 : f32
    %1021 = vector.broadcast %cst_328 : f32 to vector<8x128xf32>
    %1022 = arith.mulf %1021, %1020 : vector<8x128xf32>
    %1023 = math.tanh %1015 : vector<8x128xf32>
    %1024 = vector.extract_strided_slice %1022 {offsets = [0, 0], sizes = [8, 32], strides = [1, 1]} : vector<8x128xf32> to vector<8x32xf32>
    %1025 = vector.extract_strided_slice %1022 {offsets = [0, 32], sizes = [8, 32], strides = [1, 1]} : vector<8x128xf32> to vector<8x32xf32>
    %1026 = vector.extract_strided_slice %1023 {offsets = [0, 64], sizes = [8, 32], strides = [1, 1]} : vector<8x128xf32> to vector<8x32xf32>
    %1027 = vector.extract_strided_slice %1022 {offsets = [0, 96], sizes = [8, 32], strides = [1, 1]} : vector<8x128xf32> to vector<8x32xf32>
    %1028 = arith.mulf %1025, %932 : vector<8x32xf32>
    %1029 = arith.mulf %1024, %1026 : vector<8x32xf32>
    %1030 = arith.addf %1028, %1029 : vector<8x32xf32>
    %1031 = math.tanh %1030 : vector<8x32xf32>
    %1032 = arith.mulf %1027, %1031 : vector<8x32xf32>
    %1033 = tpu.concatenate %1032, %957 in 1 : vector<8x32xf32>, vector<8x32xf32> -> vector<8x64xf32>
    %c0_329 = arith.constant 0 : index
    %c0_330 = arith.constant 0 : index
    %c0_331 = arith.constant 0 : index
    %1034 = vector.load %arg6[%c0_329, %c0_330, %c0_331] : memref<3x64x128xf32, #tpu.memory_space<vmem>>, vector<1x64x128xf32>
    %1035 = vector.shape_cast %1034 : vector<1x64x128xf32> to vector<64x128xf32>
    %cst_332 = arith.constant dense<0.000000e+00> : vector<8x128xf32>
    %1036 = tpu.matmul %1033, %1035, %cst_332 {dimension_numbers = #tpu.dot_dimension_numbers<[1], [0], [0], [1], [0, 0, 1, 1], [], []>} : vector<8x64xf32>, vector<64x128xf32>, vector<8x128xf32> -> vector<8x128xf32>
    %1037 = vector.broadcast %3 : vector<1x128xf32> to vector<8x128xf32>
    %1038 = arith.addf %1036, %1037 : vector<8x128xf32>
    %cst_333 = arith.constant 5.000000e-01 : f32
    %1039 = vector.broadcast %cst_333 : f32 to vector<8x128xf32>
    %1040 = arith.mulf %1039, %1038 : vector<8x128xf32>
    %1041 = math.tanh %1040 : vector<8x128xf32>
    %cst_334 = arith.constant 1.000000e+00 : f32
    %1042 = vector.broadcast %cst_334 : f32 to vector<8x128xf32>
    %1043 = arith.addf %1041, %1042 : vector<8x128xf32>
    %cst_335 = arith.constant 5.000000e-01 : f32
    %1044 = vector.broadcast %cst_335 : f32 to vector<8x128xf32>
    %1045 = arith.mulf %1044, %1043 : vector<8x128xf32>
    %1046 = math.tanh %1038 : vector<8x128xf32>
    %1047 = vector.extract_strided_slice %1045 {offsets = [0, 0], sizes = [8, 32], strides = [1, 1]} : vector<8x128xf32> to vector<8x32xf32>
    %1048 = vector.extract_strided_slice %1045 {offsets = [0, 32], sizes = [8, 32], strides = [1, 1]} : vector<8x128xf32> to vector<8x32xf32>
    %1049 = vector.extract_strided_slice %1046 {offsets = [0, 64], sizes = [8, 32], strides = [1, 1]} : vector<8x128xf32> to vector<8x32xf32>
    %1050 = vector.extract_strided_slice %1045 {offsets = [0, 96], sizes = [8, 32], strides = [1, 1]} : vector<8x128xf32> to vector<8x32xf32>
    %1051 = arith.mulf %1048, %955 : vector<8x32xf32>
    %1052 = arith.mulf %1047, %1049 : vector<8x32xf32>
    %1053 = arith.addf %1051, %1052 : vector<8x32xf32>
    %1054 = math.tanh %1053 : vector<8x32xf32>
    %1055 = arith.mulf %1050, %1054 : vector<8x32xf32>
    %1056 = tpu.concatenate %1055, %980 in 1 : vector<8x32xf32>, vector<8x32xf32> -> vector<8x64xf32>
    %c1_336 = arith.constant 1 : index
    %c0_337 = arith.constant 0 : index
    %c0_338 = arith.constant 0 : index
    %1057 = vector.load %arg6[%c1_336, %c0_337, %c0_338] : memref<3x64x128xf32, #tpu.memory_space<vmem>>, vector<1x64x128xf32>
    %1058 = vector.shape_cast %1057 : vector<1x64x128xf32> to vector<64x128xf32>
    %cst_339 = arith.constant dense<0.000000e+00> : vector<8x128xf32>
    %1059 = tpu.matmul %1056, %1058, %cst_339 {dimension_numbers = #tpu.dot_dimension_numbers<[1], [0], [0], [1], [0, 0, 1, 1], [], []>} : vector<8x64xf32>, vector<64x128xf32>, vector<8x128xf32> -> vector<8x128xf32>
    %1060 = vector.broadcast %4 : vector<1x128xf32> to vector<8x128xf32>
    %1061 = arith.addf %1059, %1060 : vector<8x128xf32>
    %cst_340 = arith.constant 5.000000e-01 : f32
    %1062 = vector.broadcast %cst_340 : f32 to vector<8x128xf32>
    %1063 = arith.mulf %1062, %1061 : vector<8x128xf32>
    %1064 = math.tanh %1063 : vector<8x128xf32>
    %cst_341 = arith.constant 1.000000e+00 : f32
    %1065 = vector.broadcast %cst_341 : f32 to vector<8x128xf32>
    %1066 = arith.addf %1064, %1065 : vector<8x128xf32>
    %cst_342 = arith.constant 5.000000e-01 : f32
    %1067 = vector.broadcast %cst_342 : f32 to vector<8x128xf32>
    %1068 = arith.mulf %1067, %1066 : vector<8x128xf32>
    %1069 = math.tanh %1061 : vector<8x128xf32>
    %1070 = vector.extract_strided_slice %1068 {offsets = [0, 0], sizes = [8, 32], strides = [1, 1]} : vector<8x128xf32> to vector<8x32xf32>
    %1071 = vector.extract_strided_slice %1068 {offsets = [0, 32], sizes = [8, 32], strides = [1, 1]} : vector<8x128xf32> to vector<8x32xf32>
    %1072 = vector.extract_strided_slice %1069 {offsets = [0, 64], sizes = [8, 32], strides = [1, 1]} : vector<8x128xf32> to vector<8x32xf32>
    %1073 = vector.extract_strided_slice %1068 {offsets = [0, 96], sizes = [8, 32], strides = [1, 1]} : vector<8x128xf32> to vector<8x32xf32>
    %1074 = arith.mulf %1071, %978 : vector<8x32xf32>
    %1075 = arith.mulf %1070, %1072 : vector<8x32xf32>
    %1076 = arith.addf %1074, %1075 : vector<8x32xf32>
    %1077 = math.tanh %1076 : vector<8x32xf32>
    %1078 = arith.mulf %1073, %1077 : vector<8x32xf32>
    %1079 = tpu.concatenate %1078, %1003 in 1 : vector<8x32xf32>, vector<8x32xf32> -> vector<8x64xf32>
    %c2_343 = arith.constant 2 : index
    %c0_344 = arith.constant 0 : index
    %c0_345 = arith.constant 0 : index
    %1080 = vector.load %arg6[%c2_343, %c0_344, %c0_345] : memref<3x64x128xf32, #tpu.memory_space<vmem>>, vector<1x64x128xf32>
    %1081 = vector.shape_cast %1080 : vector<1x64x128xf32> to vector<64x128xf32>
    %cst_346 = arith.constant dense<0.000000e+00> : vector<8x128xf32>
    %1082 = tpu.matmul %1079, %1081, %cst_346 {dimension_numbers = #tpu.dot_dimension_numbers<[1], [0], [0], [1], [0, 0, 1, 1], [], []>} : vector<8x64xf32>, vector<64x128xf32>, vector<8x128xf32> -> vector<8x128xf32>
    %1083 = vector.broadcast %5 : vector<1x128xf32> to vector<8x128xf32>
    %1084 = arith.addf %1082, %1083 : vector<8x128xf32>
    %cst_347 = arith.constant 5.000000e-01 : f32
    %1085 = vector.broadcast %cst_347 : f32 to vector<8x128xf32>
    %1086 = arith.mulf %1085, %1084 : vector<8x128xf32>
    %1087 = math.tanh %1086 : vector<8x128xf32>
    %cst_348 = arith.constant 1.000000e+00 : f32
    %1088 = vector.broadcast %cst_348 : f32 to vector<8x128xf32>
    %1089 = arith.addf %1087, %1088 : vector<8x128xf32>
    %cst_349 = arith.constant 5.000000e-01 : f32
    %1090 = vector.broadcast %cst_349 : f32 to vector<8x128xf32>
    %1091 = arith.mulf %1090, %1089 : vector<8x128xf32>
    %1092 = math.tanh %1084 : vector<8x128xf32>
    %1093 = vector.extract_strided_slice %1091 {offsets = [0, 0], sizes = [8, 32], strides = [1, 1]} : vector<8x128xf32> to vector<8x32xf32>
    %1094 = vector.extract_strided_slice %1091 {offsets = [0, 32], sizes = [8, 32], strides = [1, 1]} : vector<8x128xf32> to vector<8x32xf32>
    %1095 = vector.extract_strided_slice %1092 {offsets = [0, 64], sizes = [8, 32], strides = [1, 1]} : vector<8x128xf32> to vector<8x32xf32>
    %1096 = vector.extract_strided_slice %1091 {offsets = [0, 96], sizes = [8, 32], strides = [1, 1]} : vector<8x128xf32> to vector<8x32xf32>
    %1097 = arith.mulf %1094, %1001 : vector<8x32xf32>
    %1098 = arith.mulf %1093, %1095 : vector<8x32xf32>
    %1099 = arith.addf %1097, %1098 : vector<8x32xf32>
    %1100 = math.tanh %1099 : vector<8x32xf32>
    %1101 = arith.mulf %1096, %1100 : vector<8x32xf32>
    %1102 = vector.broadcast %6 : vector<1x32xf32> to vector<8x32xf32>
    %1103 = arith.mulf %1101, %1102 : vector<8x32xf32>
    %cst_350 = arith.constant dense<0.000000e+00> : vector<8xf32>
    %1104 = vector.multi_reduction <add>, %1103, %cst_350 [1] : vector<8x32xf32> to vector<8xf32>
    %1105 = vector.shape_cast %1104 : vector<8xf32> to vector<8x1xf32>
    %1106 = vector.broadcast %7 : vector<1x1xf32> to vector<8x1xf32>
    %1107 = arith.addf %1105, %1106 : vector<8x1xf32>
    %1108 = math.tanh %1107 : vector<8x1xf32>
    %1109 = arith.addf %24, %1108 : vector<8x1xf32>
    %c0_351 = arith.constant 0 : index
    %c8_352 = arith.constant 8 : index
    %1110 = vector.load %arg10[%c0_351, %c8_352] : memref<8x23xf32, #tpu.memory_space<vmem>>, vector<8x1xf32>
    tpu.vector_store %arg10[%c0_351, %c8_352], %1109 {strides = array<i32>} : memref<8x23xf32, #tpu.memory_space<vmem>>, vector<8x1xf32>,
    %c0_353 = arith.constant 0 : index
    %c0_354 = arith.constant 0 : index
    %1111 = vector.load %arg5[%c0_353, %c0_354] : memref<32x128xf32, #tpu.memory_space<vmem>>, vector<32x128xf32>
    %cst_355 = arith.constant dense<0.000000e+00> : vector<8x128xf32>
    %1112 = tpu.matmul %1032, %1111, %cst_355 {dimension_numbers = #tpu.dot_dimension_numbers<[1], [0], [0], [1], [0, 0, 1, 1], [], []>} : vector<8x32xf32>, vector<32x128xf32>, vector<8x128xf32> -> vector<8x128xf32>
    %1113 = arith.addf %1112, %130 : vector<8x128xf32>
    %cst_356 = arith.constant 5.000000e-01 : f32
    %1114 = vector.broadcast %cst_356 : f32 to vector<8x128xf32>
    %1115 = arith.mulf %1114, %1113 : vector<8x128xf32>
    %1116 = math.tanh %1115 : vector<8x128xf32>
    %cst_357 = arith.constant 1.000000e+00 : f32
    %1117 = vector.broadcast %cst_357 : f32 to vector<8x128xf32>
    %1118 = arith.addf %1116, %1117 : vector<8x128xf32>
    %cst_358 = arith.constant 5.000000e-01 : f32
    %1119 = vector.broadcast %cst_358 : f32 to vector<8x128xf32>
    %1120 = arith.mulf %1119, %1118 : vector<8x128xf32>
    %1121 = math.tanh %1113 : vector<8x128xf32>
    %1122 = vector.extract_strided_slice %1120 {offsets = [0, 0], sizes = [8, 32], strides = [1, 1]} : vector<8x128xf32> to vector<8x32xf32>
    %1123 = vector.extract_strided_slice %1120 {offsets = [0, 32], sizes = [8, 32], strides = [1, 1]} : vector<8x128xf32> to vector<8x32xf32>
    %1124 = vector.extract_strided_slice %1121 {offsets = [0, 64], sizes = [8, 32], strides = [1, 1]} : vector<8x128xf32> to vector<8x32xf32>
    %1125 = vector.extract_strided_slice %1120 {offsets = [0, 96], sizes = [8, 32], strides = [1, 1]} : vector<8x128xf32> to vector<8x32xf32>
    %1126 = arith.mulf %1123, %1030 : vector<8x32xf32>
    %1127 = arith.mulf %1122, %1124 : vector<8x32xf32>
    %1128 = arith.addf %1126, %1127 : vector<8x32xf32>
    %1129 = math.tanh %1128 : vector<8x32xf32>
    %1130 = arith.mulf %1125, %1129 : vector<8x32xf32>
    %1131 = tpu.concatenate %1130, %1055 in 1 : vector<8x32xf32>, vector<8x32xf32> -> vector<8x64xf32>
    %c0_359 = arith.constant 0 : index
    %c0_360 = arith.constant 0 : index
    %c0_361 = arith.constant 0 : index
    %1132 = vector.load %arg6[%c0_359, %c0_360, %c0_361] : memref<3x64x128xf32, #tpu.memory_space<vmem>>, vector<1x64x128xf32>
    %1133 = vector.shape_cast %1132 : vector<1x64x128xf32> to vector<64x128xf32>
    %cst_362 = arith.constant dense<0.000000e+00> : vector<8x128xf32>
    %1134 = tpu.matmul %1131, %1133, %cst_362 {dimension_numbers = #tpu.dot_dimension_numbers<[1], [0], [0], [1], [0, 0, 1, 1], [], []>} : vector<8x64xf32>, vector<64x128xf32>, vector<8x128xf32> -> vector<8x128xf32>
    %1135 = vector.broadcast %3 : vector<1x128xf32> to vector<8x128xf32>
    %1136 = arith.addf %1134, %1135 : vector<8x128xf32>
    %cst_363 = arith.constant 5.000000e-01 : f32
    %1137 = vector.broadcast %cst_363 : f32 to vector<8x128xf32>
    %1138 = arith.mulf %1137, %1136 : vector<8x128xf32>
    %1139 = math.tanh %1138 : vector<8x128xf32>
    %cst_364 = arith.constant 1.000000e+00 : f32
    %1140 = vector.broadcast %cst_364 : f32 to vector<8x128xf32>
    %1141 = arith.addf %1139, %1140 : vector<8x128xf32>
    %cst_365 = arith.constant 5.000000e-01 : f32
    %1142 = vector.broadcast %cst_365 : f32 to vector<8x128xf32>
    %1143 = arith.mulf %1142, %1141 : vector<8x128xf32>
    %1144 = math.tanh %1136 : vector<8x128xf32>
    %1145 = vector.extract_strided_slice %1143 {offsets = [0, 0], sizes = [8, 32], strides = [1, 1]} : vector<8x128xf32> to vector<8x32xf32>
    %1146 = vector.extract_strided_slice %1143 {offsets = [0, 32], sizes = [8, 32], strides = [1, 1]} : vector<8x128xf32> to vector<8x32xf32>
    %1147 = vector.extract_strided_slice %1144 {offsets = [0, 64], sizes = [8, 32], strides = [1, 1]} : vector<8x128xf32> to vector<8x32xf32>
    %1148 = vector.extract_strided_slice %1143 {offsets = [0, 96], sizes = [8, 32], strides = [1, 1]} : vector<8x128xf32> to vector<8x32xf32>
    %1149 = arith.mulf %1146, %1053 : vector<8x32xf32>
    %1150 = arith.mulf %1145, %1147 : vector<8x32xf32>
    %1151 = arith.addf %1149, %1150 : vector<8x32xf32>
    %1152 = math.tanh %1151 : vector<8x32xf32>
    %1153 = arith.mulf %1148, %1152 : vector<8x32xf32>
    %1154 = tpu.concatenate %1153, %1078 in 1 : vector<8x32xf32>, vector<8x32xf32> -> vector<8x64xf32>
    %c1_366 = arith.constant 1 : index
    %c0_367 = arith.constant 0 : index
    %c0_368 = arith.constant 0 : index
    %1155 = vector.load %arg6[%c1_366, %c0_367, %c0_368] : memref<3x64x128xf32, #tpu.memory_space<vmem>>, vector<1x64x128xf32>
    %1156 = vector.shape_cast %1155 : vector<1x64x128xf32> to vector<64x128xf32>
    %cst_369 = arith.constant dense<0.000000e+00> : vector<8x128xf32>
    %1157 = tpu.matmul %1154, %1156, %cst_369 {dimension_numbers = #tpu.dot_dimension_numbers<[1], [0], [0], [1], [0, 0, 1, 1], [], []>} : vector<8x64xf32>, vector<64x128xf32>, vector<8x128xf32> -> vector<8x128xf32>
    %1158 = vector.broadcast %4 : vector<1x128xf32> to vector<8x128xf32>
    %1159 = arith.addf %1157, %1158 : vector<8x128xf32>
    %cst_370 = arith.constant 5.000000e-01 : f32
    %1160 = vector.broadcast %cst_370 : f32 to vector<8x128xf32>
    %1161 = arith.mulf %1160, %1159 : vector<8x128xf32>
    %1162 = math.tanh %1161 : vector<8x128xf32>
    %cst_371 = arith.constant 1.000000e+00 : f32
    %1163 = vector.broadcast %cst_371 : f32 to vector<8x128xf32>
    %1164 = arith.addf %1162, %1163 : vector<8x128xf32>
    %cst_372 = arith.constant 5.000000e-01 : f32
    %1165 = vector.broadcast %cst_372 : f32 to vector<8x128xf32>
    %1166 = arith.mulf %1165, %1164 : vector<8x128xf32>
    %1167 = math.tanh %1159 : vector<8x128xf32>
    %1168 = vector.extract_strided_slice %1166 {offsets = [0, 0], sizes = [8, 32], strides = [1, 1]} : vector<8x128xf32> to vector<8x32xf32>
    %1169 = vector.extract_strided_slice %1166 {offsets = [0, 32], sizes = [8, 32], strides = [1, 1]} : vector<8x128xf32> to vector<8x32xf32>
    %1170 = vector.extract_strided_slice %1167 {offsets = [0, 64], sizes = [8, 32], strides = [1, 1]} : vector<8x128xf32> to vector<8x32xf32>
    %1171 = vector.extract_strided_slice %1166 {offsets = [0, 96], sizes = [8, 32], strides = [1, 1]} : vector<8x128xf32> to vector<8x32xf32>
    %1172 = arith.mulf %1169, %1076 : vector<8x32xf32>
    %1173 = arith.mulf %1168, %1170 : vector<8x32xf32>
    %1174 = arith.addf %1172, %1173 : vector<8x32xf32>
    %1175 = math.tanh %1174 : vector<8x32xf32>
    %1176 = arith.mulf %1171, %1175 : vector<8x32xf32>
    %1177 = tpu.concatenate %1176, %1101 in 1 : vector<8x32xf32>, vector<8x32xf32> -> vector<8x64xf32>
    %c2_373 = arith.constant 2 : index
    %c0_374 = arith.constant 0 : index
    %c0_375 = arith.constant 0 : index
    %1178 = vector.load %arg6[%c2_373, %c0_374, %c0_375] : memref<3x64x128xf32, #tpu.memory_space<vmem>>, vector<1x64x128xf32>
    %1179 = vector.shape_cast %1178 : vector<1x64x128xf32> to vector<64x128xf32>
    %cst_376 = arith.constant dense<0.000000e+00> : vector<8x128xf32>
    %1180 = tpu.matmul %1177, %1179, %cst_376 {dimension_numbers = #tpu.dot_dimension_numbers<[1], [0], [0], [1], [0, 0, 1, 1], [], []>} : vector<8x64xf32>, vector<64x128xf32>, vector<8x128xf32> -> vector<8x128xf32>
    %1181 = vector.broadcast %5 : vector<1x128xf32> to vector<8x128xf32>
    %1182 = arith.addf %1180, %1181 : vector<8x128xf32>
    %cst_377 = arith.constant 5.000000e-01 : f32
    %1183 = vector.broadcast %cst_377 : f32 to vector<8x128xf32>
    %1184 = arith.mulf %1183, %1182 : vector<8x128xf32>
    %1185 = math.tanh %1184 : vector<8x128xf32>
    %cst_378 = arith.constant 1.000000e+00 : f32
    %1186 = vector.broadcast %cst_378 : f32 to vector<8x128xf32>
    %1187 = arith.addf %1185, %1186 : vector<8x128xf32>
    %cst_379 = arith.constant 5.000000e-01 : f32
    %1188 = vector.broadcast %cst_379 : f32 to vector<8x128xf32>
    %1189 = arith.mulf %1188, %1187 : vector<8x128xf32>
    %1190 = math.tanh %1182 : vector<8x128xf32>
    %1191 = vector.extract_strided_slice %1189 {offsets = [0, 0], sizes = [8, 32], strides = [1, 1]} : vector<8x128xf32> to vector<8x32xf32>
    %1192 = vector.extract_strided_slice %1189 {offsets = [0, 32], sizes = [8, 32], strides = [1, 1]} : vector<8x128xf32> to vector<8x32xf32>
    %1193 = vector.extract_strided_slice %1190 {offsets = [0, 64], sizes = [8, 32], strides = [1, 1]} : vector<8x128xf32> to vector<8x32xf32>
    %1194 = vector.extract_strided_slice %1189 {offsets = [0, 96], sizes = [8, 32], strides = [1, 1]} : vector<8x128xf32> to vector<8x32xf32>
    %1195 = arith.mulf %1192, %1099 : vector<8x32xf32>
    %1196 = arith.mulf %1191, %1193 : vector<8x32xf32>
    %1197 = arith.addf %1195, %1196 : vector<8x32xf32>
    %1198 = math.tanh %1197 : vector<8x32xf32>
    %1199 = arith.mulf %1194, %1198 : vector<8x32xf32>
    %1200 = vector.broadcast %6 : vector<1x32xf32> to vector<8x32xf32>
    %1201 = arith.mulf %1199, %1200 : vector<8x32xf32>
    %cst_380 = arith.constant dense<0.000000e+00> : vector<8xf32>
    %1202 = vector.multi_reduction <add>, %1201, %cst_380 [1] : vector<8x32xf32> to vector<8xf32>
    %1203 = vector.shape_cast %1202 : vector<8xf32> to vector<8x1xf32>
    %1204 = vector.broadcast %7 : vector<1x1xf32> to vector<8x1xf32>
    %1205 = arith.addf %1203, %1204 : vector<8x1xf32>
    %1206 = math.tanh %1205 : vector<8x1xf32>
    %1207 = arith.addf %25, %1206 : vector<8x1xf32>
    %c0_381 = arith.constant 0 : index
    %c9_382 = arith.constant 9 : index
    %1208 = vector.load %arg10[%c0_381, %c9_382] : memref<8x23xf32, #tpu.memory_space<vmem>>, vector<8x1xf32>
    tpu.vector_store %arg10[%c0_381, %c9_382], %1207 {strides = array<i32>} : memref<8x23xf32, #tpu.memory_space<vmem>>, vector<8x1xf32>,
    %c0_383 = arith.constant 0 : index
    %c0_384 = arith.constant 0 : index
    %1209 = vector.load %arg5[%c0_383, %c0_384] : memref<32x128xf32, #tpu.memory_space<vmem>>, vector<32x128xf32>
    %cst_385 = arith.constant dense<0.000000e+00> : vector<8x128xf32>
    %1210 = tpu.matmul %1130, %1209, %cst_385 {dimension_numbers = #tpu.dot_dimension_numbers<[1], [0], [0], [1], [0, 0, 1, 1], [], []>} : vector<8x32xf32>, vector<32x128xf32>, vector<8x128xf32> -> vector<8x128xf32>
    %1211 = arith.addf %1210, %140 : vector<8x128xf32>
    %cst_386 = arith.constant 5.000000e-01 : f32
    %1212 = vector.broadcast %cst_386 : f32 to vector<8x128xf32>
    %1213 = arith.mulf %1212, %1211 : vector<8x128xf32>
    %1214 = math.tanh %1213 : vector<8x128xf32>
    %cst_387 = arith.constant 1.000000e+00 : f32
    %1215 = vector.broadcast %cst_387 : f32 to vector<8x128xf32>
    %1216 = arith.addf %1214, %1215 : vector<8x128xf32>
    %cst_388 = arith.constant 5.000000e-01 : f32
    %1217 = vector.broadcast %cst_388 : f32 to vector<8x128xf32>
    %1218 = arith.mulf %1217, %1216 : vector<8x128xf32>
    %1219 = math.tanh %1211 : vector<8x128xf32>
    %1220 = vector.extract_strided_slice %1218 {offsets = [0, 0], sizes = [8, 32], strides = [1, 1]} : vector<8x128xf32> to vector<8x32xf32>
    %1221 = vector.extract_strided_slice %1218 {offsets = [0, 32], sizes = [8, 32], strides = [1, 1]} : vector<8x128xf32> to vector<8x32xf32>
    %1222 = vector.extract_strided_slice %1219 {offsets = [0, 64], sizes = [8, 32], strides = [1, 1]} : vector<8x128xf32> to vector<8x32xf32>
    %1223 = vector.extract_strided_slice %1218 {offsets = [0, 96], sizes = [8, 32], strides = [1, 1]} : vector<8x128xf32> to vector<8x32xf32>
    %1224 = arith.mulf %1221, %1128 : vector<8x32xf32>
    %1225 = arith.mulf %1220, %1222 : vector<8x32xf32>
    %1226 = arith.addf %1224, %1225 : vector<8x32xf32>
    %1227 = math.tanh %1226 : vector<8x32xf32>
    %1228 = arith.mulf %1223, %1227 : vector<8x32xf32>
    %1229 = tpu.concatenate %1228, %1153 in 1 : vector<8x32xf32>, vector<8x32xf32> -> vector<8x64xf32>
    %c0_389 = arith.constant 0 : index
    %c0_390 = arith.constant 0 : index
    %c0_391 = arith.constant 0 : index
    %1230 = vector.load %arg6[%c0_389, %c0_390, %c0_391] : memref<3x64x128xf32, #tpu.memory_space<vmem>>, vector<1x64x128xf32>
    %1231 = vector.shape_cast %1230 : vector<1x64x128xf32> to vector<64x128xf32>
    %cst_392 = arith.constant dense<0.000000e+00> : vector<8x128xf32>
    %1232 = tpu.matmul %1229, %1231, %cst_392 {dimension_numbers = #tpu.dot_dimension_numbers<[1], [0], [0], [1], [0, 0, 1, 1], [], []>} : vector<8x64xf32>, vector<64x128xf32>, vector<8x128xf32> -> vector<8x128xf32>
    %1233 = vector.broadcast %3 : vector<1x128xf32> to vector<8x128xf32>
    %1234 = arith.addf %1232, %1233 : vector<8x128xf32>
    %cst_393 = arith.constant 5.000000e-01 : f32
    %1235 = vector.broadcast %cst_393 : f32 to vector<8x128xf32>
    %1236 = arith.mulf %1235, %1234 : vector<8x128xf32>
    %1237 = math.tanh %1236 : vector<8x128xf32>
    %cst_394 = arith.constant 1.000000e+00 : f32
    %1238 = vector.broadcast %cst_394 : f32 to vector<8x128xf32>
    %1239 = arith.addf %1237, %1238 : vector<8x128xf32>
    %cst_395 = arith.constant 5.000000e-01 : f32
    %1240 = vector.broadcast %cst_395 : f32 to vector<8x128xf32>
    %1241 = arith.mulf %1240, %1239 : vector<8x128xf32>
    %1242 = math.tanh %1234 : vector<8x128xf32>
    %1243 = vector.extract_strided_slice %1241 {offsets = [0, 0], sizes = [8, 32], strides = [1, 1]} : vector<8x128xf32> to vector<8x32xf32>
    %1244 = vector.extract_strided_slice %1241 {offsets = [0, 32], sizes = [8, 32], strides = [1, 1]} : vector<8x128xf32> to vector<8x32xf32>
    %1245 = vector.extract_strided_slice %1242 {offsets = [0, 64], sizes = [8, 32], strides = [1, 1]} : vector<8x128xf32> to vector<8x32xf32>
    %1246 = vector.extract_strided_slice %1241 {offsets = [0, 96], sizes = [8, 32], strides = [1, 1]} : vector<8x128xf32> to vector<8x32xf32>
    %1247 = arith.mulf %1244, %1151 : vector<8x32xf32>
    %1248 = arith.mulf %1243, %1245 : vector<8x32xf32>
    %1249 = arith.addf %1247, %1248 : vector<8x32xf32>
    %1250 = math.tanh %1249 : vector<8x32xf32>
    %1251 = arith.mulf %1246, %1250 : vector<8x32xf32>
    %1252 = tpu.concatenate %1251, %1176 in 1 : vector<8x32xf32>, vector<8x32xf32> -> vector<8x64xf32>
    %c1_396 = arith.constant 1 : index
    %c0_397 = arith.constant 0 : index
    %c0_398 = arith.constant 0 : index
    %1253 = vector.load %arg6[%c1_396, %c0_397, %c0_398] : memref<3x64x128xf32, #tpu.memory_space<vmem>>, vector<1x64x128xf32>
    %1254 = vector.shape_cast %1253 : vector<1x64x128xf32> to vector<64x128xf32>
    %cst_399 = arith.constant dense<0.000000e+00> : vector<8x128xf32>
    %1255 = tpu.matmul %1252, %1254, %cst_399 {dimension_numbers = #tpu.dot_dimension_numbers<[1], [0], [0], [1], [0, 0, 1, 1], [], []>} : vector<8x64xf32>, vector<64x128xf32>, vector<8x128xf32> -> vector<8x128xf32>
    %1256 = vector.broadcast %4 : vector<1x128xf32> to vector<8x128xf32>
    %1257 = arith.addf %1255, %1256 : vector<8x128xf32>
    %cst_400 = arith.constant 5.000000e-01 : f32
    %1258 = vector.broadcast %cst_400 : f32 to vector<8x128xf32>
    %1259 = arith.mulf %1258, %1257 : vector<8x128xf32>
    %1260 = math.tanh %1259 : vector<8x128xf32>
    %cst_401 = arith.constant 1.000000e+00 : f32
    %1261 = vector.broadcast %cst_401 : f32 to vector<8x128xf32>
    %1262 = arith.addf %1260, %1261 : vector<8x128xf32>
    %cst_402 = arith.constant 5.000000e-01 : f32
    %1263 = vector.broadcast %cst_402 : f32 to vector<8x128xf32>
    %1264 = arith.mulf %1263, %1262 : vector<8x128xf32>
    %1265 = math.tanh %1257 : vector<8x128xf32>
    %1266 = vector.extract_strided_slice %1264 {offsets = [0, 0], sizes = [8, 32], strides = [1, 1]} : vector<8x128xf32> to vector<8x32xf32>
    %1267 = vector.extract_strided_slice %1264 {offsets = [0, 32], sizes = [8, 32], strides = [1, 1]} : vector<8x128xf32> to vector<8x32xf32>
    %1268 = vector.extract_strided_slice %1265 {offsets = [0, 64], sizes = [8, 32], strides = [1, 1]} : vector<8x128xf32> to vector<8x32xf32>
    %1269 = vector.extract_strided_slice %1264 {offsets = [0, 96], sizes = [8, 32], strides = [1, 1]} : vector<8x128xf32> to vector<8x32xf32>
    %1270 = arith.mulf %1267, %1174 : vector<8x32xf32>
    %1271 = arith.mulf %1266, %1268 : vector<8x32xf32>
    %1272 = arith.addf %1270, %1271 : vector<8x32xf32>
    %1273 = math.tanh %1272 : vector<8x32xf32>
    %1274 = arith.mulf %1269, %1273 : vector<8x32xf32>
    %1275 = tpu.concatenate %1274, %1199 in 1 : vector<8x32xf32>, vector<8x32xf32> -> vector<8x64xf32>
    %c2_403 = arith.constant 2 : index
    %c0_404 = arith.constant 0 : index
    %c0_405 = arith.constant 0 : index
    %1276 = vector.load %arg6[%c2_403, %c0_404, %c0_405] : memref<3x64x128xf32, #tpu.memory_space<vmem>>, vector<1x64x128xf32>
    %1277 = vector.shape_cast %1276 : vector<1x64x128xf32> to vector<64x128xf32>
    %cst_406 = arith.constant dense<0.000000e+00> : vector<8x128xf32>
    %1278 = tpu.matmul %1275, %1277, %cst_406 {dimension_numbers = #tpu.dot_dimension_numbers<[1], [0], [0], [1], [0, 0, 1, 1], [], []>} : vector<8x64xf32>, vector<64x128xf32>, vector<8x128xf32> -> vector<8x128xf32>
    %1279 = vector.broadcast %5 : vector<1x128xf32> to vector<8x128xf32>
    %1280 = arith.addf %1278, %1279 : vector<8x128xf32>
    %cst_407 = arith.constant 5.000000e-01 : f32
    %1281 = vector.broadcast %cst_407 : f32 to vector<8x128xf32>
    %1282 = arith.mulf %1281, %1280 : vector<8x128xf32>
    %1283 = math.tanh %1282 : vector<8x128xf32>
    %cst_408 = arith.constant 1.000000e+00 : f32
    %1284 = vector.broadcast %cst_408 : f32 to vector<8x128xf32>
    %1285 = arith.addf %1283, %1284 : vector<8x128xf32>
    %cst_409 = arith.constant 5.000000e-01 : f32
    %1286 = vector.broadcast %cst_409 : f32 to vector<8x128xf32>
    %1287 = arith.mulf %1286, %1285 : vector<8x128xf32>
    %1288 = math.tanh %1280 : vector<8x128xf32>
    %1289 = vector.extract_strided_slice %1287 {offsets = [0, 0], sizes = [8, 32], strides = [1, 1]} : vector<8x128xf32> to vector<8x32xf32>
    %1290 = vector.extract_strided_slice %1287 {offsets = [0, 32], sizes = [8, 32], strides = [1, 1]} : vector<8x128xf32> to vector<8x32xf32>
    %1291 = vector.extract_strided_slice %1288 {offsets = [0, 64], sizes = [8, 32], strides = [1, 1]} : vector<8x128xf32> to vector<8x32xf32>
    %1292 = vector.extract_strided_slice %1287 {offsets = [0, 96], sizes = [8, 32], strides = [1, 1]} : vector<8x128xf32> to vector<8x32xf32>
    %1293 = arith.mulf %1290, %1197 : vector<8x32xf32>
    %1294 = arith.mulf %1289, %1291 : vector<8x32xf32>
    %1295 = arith.addf %1293, %1294 : vector<8x32xf32>
    %1296 = math.tanh %1295 : vector<8x32xf32>
    %1297 = arith.mulf %1292, %1296 : vector<8x32xf32>
    %1298 = vector.broadcast %6 : vector<1x32xf32> to vector<8x32xf32>
    %1299 = arith.mulf %1297, %1298 : vector<8x32xf32>
    %cst_410 = arith.constant dense<0.000000e+00> : vector<8xf32>
    %1300 = vector.multi_reduction <add>, %1299, %cst_410 [1] : vector<8x32xf32> to vector<8xf32>
    %1301 = vector.shape_cast %1300 : vector<8xf32> to vector<8x1xf32>
    %1302 = vector.broadcast %7 : vector<1x1xf32> to vector<8x1xf32>
    %1303 = arith.addf %1301, %1302 : vector<8x1xf32>
    %1304 = math.tanh %1303 : vector<8x1xf32>
    %1305 = arith.addf %26, %1304 : vector<8x1xf32>
    %c0_411 = arith.constant 0 : index
    %c10_412 = arith.constant 10 : index
    %1306 = vector.load %arg10[%c0_411, %c10_412] : memref<8x23xf32, #tpu.memory_space<vmem>>, vector<8x1xf32>
    tpu.vector_store %arg10[%c0_411, %c10_412], %1305 {strides = array<i32>} : memref<8x23xf32, #tpu.memory_space<vmem>>, vector<8x1xf32>,
    %c0_413 = arith.constant 0 : index
    %c0_414 = arith.constant 0 : index
    %1307 = vector.load %arg5[%c0_413, %c0_414] : memref<32x128xf32, #tpu.memory_space<vmem>>, vector<32x128xf32>
    %cst_415 = arith.constant dense<0.000000e+00> : vector<8x128xf32>
    %1308 = tpu.matmul %1228, %1307, %cst_415 {dimension_numbers = #tpu.dot_dimension_numbers<[1], [0], [0], [1], [0, 0, 1, 1], [], []>} : vector<8x32xf32>, vector<32x128xf32>, vector<8x128xf32> -> vector<8x128xf32>
    %1309 = arith.addf %1308, %150 : vector<8x128xf32>
    %cst_416 = arith.constant 5.000000e-01 : f32
    %1310 = vector.broadcast %cst_416 : f32 to vector<8x128xf32>
    %1311 = arith.mulf %1310, %1309 : vector<8x128xf32>
    %1312 = math.tanh %1311 : vector<8x128xf32>
    %cst_417 = arith.constant 1.000000e+00 : f32
    %1313 = vector.broadcast %cst_417 : f32 to vector<8x128xf32>
    %1314 = arith.addf %1312, %1313 : vector<8x128xf32>
    %cst_418 = arith.constant 5.000000e-01 : f32
    %1315 = vector.broadcast %cst_418 : f32 to vector<8x128xf32>
    %1316 = arith.mulf %1315, %1314 : vector<8x128xf32>
    %1317 = math.tanh %1309 : vector<8x128xf32>
    %1318 = vector.extract_strided_slice %1316 {offsets = [0, 0], sizes = [8, 32], strides = [1, 1]} : vector<8x128xf32> to vector<8x32xf32>
    %1319 = vector.extract_strided_slice %1316 {offsets = [0, 32], sizes = [8, 32], strides = [1, 1]} : vector<8x128xf32> to vector<8x32xf32>
    %1320 = vector.extract_strided_slice %1317 {offsets = [0, 64], sizes = [8, 32], strides = [1, 1]} : vector<8x128xf32> to vector<8x32xf32>
    %1321 = vector.extract_strided_slice %1316 {offsets = [0, 96], sizes = [8, 32], strides = [1, 1]} : vector<8x128xf32> to vector<8x32xf32>
    %1322 = arith.mulf %1319, %1226 : vector<8x32xf32>
    %1323 = arith.mulf %1318, %1320 : vector<8x32xf32>
    %1324 = arith.addf %1322, %1323 : vector<8x32xf32>
    %1325 = math.tanh %1324 : vector<8x32xf32>
    %1326 = arith.mulf %1321, %1325 : vector<8x32xf32>
    %1327 = tpu.concatenate %1326, %1251 in 1 : vector<8x32xf32>, vector<8x32xf32> -> vector<8x64xf32>
    %c0_419 = arith.constant 0 : index
    %c0_420 = arith.constant 0 : index
    %c0_421 = arith.constant 0 : index
    %1328 = vector.load %arg6[%c0_419, %c0_420, %c0_421] : memref<3x64x128xf32, #tpu.memory_space<vmem>>, vector<1x64x128xf32>
    %1329 = vector.shape_cast %1328 : vector<1x64x128xf32> to vector<64x128xf32>
    %cst_422 = arith.constant dense<0.000000e+00> : vector<8x128xf32>
    %1330 = tpu.matmul %1327, %1329, %cst_422 {dimension_numbers = #tpu.dot_dimension_numbers<[1], [0], [0], [1], [0, 0, 1, 1], [], []>} : vector<8x64xf32>, vector<64x128xf32>, vector<8x128xf32> -> vector<8x128xf32>
    %1331 = vector.broadcast %3 : vector<1x128xf32> to vector<8x128xf32>
    %1332 = arith.addf %1330, %1331 : vector<8x128xf32>
    %cst_423 = arith.constant 5.000000e-01 : f32
    %1333 = vector.broadcast %cst_423 : f32 to vector<8x128xf32>
    %1334 = arith.mulf %1333, %1332 : vector<8x128xf32>
    %1335 = math.tanh %1334 : vector<8x128xf32>
    %cst_424 = arith.constant 1.000000e+00 : f32
    %1336 = vector.broadcast %cst_424 : f32 to vector<8x128xf32>
    %1337 = arith.addf %1335, %1336 : vector<8x128xf32>
    %cst_425 = arith.constant 5.000000e-01 : f32
    %1338 = vector.broadcast %cst_425 : f32 to vector<8x128xf32>
    %1339 = arith.mulf %1338, %1337 : vector<8x128xf32>
    %1340 = math.tanh %1332 : vector<8x128xf32>
    %1341 = vector.extract_strided_slice %1339 {offsets = [0, 0], sizes = [8, 32], strides = [1, 1]} : vector<8x128xf32> to vector<8x32xf32>
    %1342 = vector.extract_strided_slice %1339 {offsets = [0, 32], sizes = [8, 32], strides = [1, 1]} : vector<8x128xf32> to vector<8x32xf32>
    %1343 = vector.extract_strided_slice %1340 {offsets = [0, 64], sizes = [8, 32], strides = [1, 1]} : vector<8x128xf32> to vector<8x32xf32>
    %1344 = vector.extract_strided_slice %1339 {offsets = [0, 96], sizes = [8, 32], strides = [1, 1]} : vector<8x128xf32> to vector<8x32xf32>
    %1345 = arith.mulf %1342, %1249 : vector<8x32xf32>
    %1346 = arith.mulf %1341, %1343 : vector<8x32xf32>
    %1347 = arith.addf %1345, %1346 : vector<8x32xf32>
    %1348 = math.tanh %1347 : vector<8x32xf32>
    %1349 = arith.mulf %1344, %1348 : vector<8x32xf32>
    %1350 = tpu.concatenate %1349, %1274 in 1 : vector<8x32xf32>, vector<8x32xf32> -> vector<8x64xf32>
    %c1_426 = arith.constant 1 : index
    %c0_427 = arith.constant 0 : index
    %c0_428 = arith.constant 0 : index
    %1351 = vector.load %arg6[%c1_426, %c0_427, %c0_428] : memref<3x64x128xf32, #tpu.memory_space<vmem>>, vector<1x64x128xf32>
    %1352 = vector.shape_cast %1351 : vector<1x64x128xf32> to vector<64x128xf32>
    %cst_429 = arith.constant dense<0.000000e+00> : vector<8x128xf32>
    %1353 = tpu.matmul %1350, %1352, %cst_429 {dimension_numbers = #tpu.dot_dimension_numbers<[1], [0], [0], [1], [0, 0, 1, 1], [], []>} : vector<8x64xf32>, vector<64x128xf32>, vector<8x128xf32> -> vector<8x128xf32>
    %1354 = vector.broadcast %4 : vector<1x128xf32> to vector<8x128xf32>
    %1355 = arith.addf %1353, %1354 : vector<8x128xf32>
    %cst_430 = arith.constant 5.000000e-01 : f32
    %1356 = vector.broadcast %cst_430 : f32 to vector<8x128xf32>
    %1357 = arith.mulf %1356, %1355 : vector<8x128xf32>
    %1358 = math.tanh %1357 : vector<8x128xf32>
    %cst_431 = arith.constant 1.000000e+00 : f32
    %1359 = vector.broadcast %cst_431 : f32 to vector<8x128xf32>
    %1360 = arith.addf %1358, %1359 : vector<8x128xf32>
    %cst_432 = arith.constant 5.000000e-01 : f32
    %1361 = vector.broadcast %cst_432 : f32 to vector<8x128xf32>
    %1362 = arith.mulf %1361, %1360 : vector<8x128xf32>
    %1363 = math.tanh %1355 : vector<8x128xf32>
    %1364 = vector.extract_strided_slice %1362 {offsets = [0, 0], sizes = [8, 32], strides = [1, 1]} : vector<8x128xf32> to vector<8x32xf32>
    %1365 = vector.extract_strided_slice %1362 {offsets = [0, 32], sizes = [8, 32], strides = [1, 1]} : vector<8x128xf32> to vector<8x32xf32>
    %1366 = vector.extract_strided_slice %1363 {offsets = [0, 64], sizes = [8, 32], strides = [1, 1]} : vector<8x128xf32> to vector<8x32xf32>
    %1367 = vector.extract_strided_slice %1362 {offsets = [0, 96], sizes = [8, 32], strides = [1, 1]} : vector<8x128xf32> to vector<8x32xf32>
    %1368 = arith.mulf %1365, %1272 : vector<8x32xf32>
    %1369 = arith.mulf %1364, %1366 : vector<8x32xf32>
    %1370 = arith.addf %1368, %1369 : vector<8x32xf32>
    %1371 = math.tanh %1370 : vector<8x32xf32>
    %1372 = arith.mulf %1367, %1371 : vector<8x32xf32>
    %1373 = tpu.concatenate %1372, %1297 in 1 : vector<8x32xf32>, vector<8x32xf32> -> vector<8x64xf32>
    %c2_433 = arith.constant 2 : index
    %c0_434 = arith.constant 0 : index
    %c0_435 = arith.constant 0 : index
    %1374 = vector.load %arg6[%c2_433, %c0_434, %c0_435] : memref<3x64x128xf32, #tpu.memory_space<vmem>>, vector<1x64x128xf32>
    %1375 = vector.shape_cast %1374 : vector<1x64x128xf32> to vector<64x128xf32>
    %cst_436 = arith.constant dense<0.000000e+00> : vector<8x128xf32>
    %1376 = tpu.matmul %1373, %1375, %cst_436 {dimension_numbers = #tpu.dot_dimension_numbers<[1], [0], [0], [1], [0, 0, 1, 1], [], []>} : vector<8x64xf32>, vector<64x128xf32>, vector<8x128xf32> -> vector<8x128xf32>
    %1377 = vector.broadcast %5 : vector<1x128xf32> to vector<8x128xf32>
    %1378 = arith.addf %1376, %1377 : vector<8x128xf32>
    %cst_437 = arith.constant 5.000000e-01 : f32
    %1379 = vector.broadcast %cst_437 : f32 to vector<8x128xf32>
    %1380 = arith.mulf %1379, %1378 : vector<8x128xf32>
    %1381 = math.tanh %1380 : vector<8x128xf32>
    %cst_438 = arith.constant 1.000000e+00 : f32
    %1382 = vector.broadcast %cst_438 : f32 to vector<8x128xf32>
    %1383 = arith.addf %1381, %1382 : vector<8x128xf32>
    %cst_439 = arith.constant 5.000000e-01 : f32
    %1384 = vector.broadcast %cst_439 : f32 to vector<8x128xf32>
    %1385 = arith.mulf %1384, %1383 : vector<8x128xf32>
    %1386 = math.tanh %1378 : vector<8x128xf32>
    %1387 = vector.extract_strided_slice %1385 {offsets = [0, 0], sizes = [8, 32], strides = [1, 1]} : vector<8x128xf32> to vector<8x32xf32>
    %1388 = vector.extract_strided_slice %1385 {offsets = [0, 32], sizes = [8, 32], strides = [1, 1]} : vector<8x128xf32> to vector<8x32xf32>
    %1389 = vector.extract_strided_slice %1386 {offsets = [0, 64], sizes = [8, 32], strides = [1, 1]} : vector<8x128xf32> to vector<8x32xf32>
    %1390 = vector.extract_strided_slice %1385 {offsets = [0, 96], sizes = [8, 32], strides = [1, 1]} : vector<8x128xf32> to vector<8x32xf32>
    %1391 = arith.mulf %1388, %1295 : vector<8x32xf32>
    %1392 = arith.mulf %1387, %1389 : vector<8x32xf32>
    %1393 = arith.addf %1391, %1392 : vector<8x32xf32>
    %1394 = math.tanh %1393 : vector<8x32xf32>
    %1395 = arith.mulf %1390, %1394 : vector<8x32xf32>
    %1396 = vector.broadcast %6 : vector<1x32xf32> to vector<8x32xf32>
    %1397 = arith.mulf %1395, %1396 : vector<8x32xf32>
    %cst_440 = arith.constant dense<0.000000e+00> : vector<8xf32>
    %1398 = vector.multi_reduction <add>, %1397, %cst_440 [1] : vector<8x32xf32> to vector<8xf32>
    %1399 = vector.shape_cast %1398 : vector<8xf32> to vector<8x1xf32>
    %1400 = vector.broadcast %7 : vector<1x1xf32> to vector<8x1xf32>
    %1401 = arith.addf %1399, %1400 : vector<8x1xf32>
    %1402 = math.tanh %1401 : vector<8x1xf32>
    %1403 = arith.addf %27, %1402 : vector<8x1xf32>
    %c0_441 = arith.constant 0 : index
    %c11_442 = arith.constant 11 : index
    %1404 = vector.load %arg10[%c0_441, %c11_442] : memref<8x23xf32, #tpu.memory_space<vmem>>, vector<8x1xf32>
    tpu.vector_store %arg10[%c0_441, %c11_442], %1403 {strides = array<i32>} : memref<8x23xf32, #tpu.memory_space<vmem>>, vector<8x1xf32>,
    %c0_443 = arith.constant 0 : index
    %c0_444 = arith.constant 0 : index
    %1405 = vector.load %arg5[%c0_443, %c0_444] : memref<32x128xf32, #tpu.memory_space<vmem>>, vector<32x128xf32>
    %cst_445 = arith.constant dense<0.000000e+00> : vector<8x128xf32>
    %1406 = tpu.matmul %1326, %1405, %cst_445 {dimension_numbers = #tpu.dot_dimension_numbers<[1], [0], [0], [1], [0, 0, 1, 1], [], []>} : vector<8x32xf32>, vector<32x128xf32>, vector<8x128xf32> -> vector<8x128xf32>
    %1407 = arith.addf %1406, %160 : vector<8x128xf32>
    %cst_446 = arith.constant 5.000000e-01 : f32
    %1408 = vector.broadcast %cst_446 : f32 to vector<8x128xf32>
    %1409 = arith.mulf %1408, %1407 : vector<8x128xf32>
    %1410 = math.tanh %1409 : vector<8x128xf32>
    %cst_447 = arith.constant 1.000000e+00 : f32
    %1411 = vector.broadcast %cst_447 : f32 to vector<8x128xf32>
    %1412 = arith.addf %1410, %1411 : vector<8x128xf32>
    %cst_448 = arith.constant 5.000000e-01 : f32
    %1413 = vector.broadcast %cst_448 : f32 to vector<8x128xf32>
    %1414 = arith.mulf %1413, %1412 : vector<8x128xf32>
    %1415 = math.tanh %1407 : vector<8x128xf32>
    %1416 = vector.extract_strided_slice %1414 {offsets = [0, 0], sizes = [8, 32], strides = [1, 1]} : vector<8x128xf32> to vector<8x32xf32>
    %1417 = vector.extract_strided_slice %1414 {offsets = [0, 32], sizes = [8, 32], strides = [1, 1]} : vector<8x128xf32> to vector<8x32xf32>
    %1418 = vector.extract_strided_slice %1415 {offsets = [0, 64], sizes = [8, 32], strides = [1, 1]} : vector<8x128xf32> to vector<8x32xf32>
    %1419 = vector.extract_strided_slice %1414 {offsets = [0, 96], sizes = [8, 32], strides = [1, 1]} : vector<8x128xf32> to vector<8x32xf32>
    %1420 = arith.mulf %1417, %1324 : vector<8x32xf32>
    %1421 = arith.mulf %1416, %1418 : vector<8x32xf32>
    %1422 = arith.addf %1420, %1421 : vector<8x32xf32>
    %1423 = math.tanh %1422 : vector<8x32xf32>
    %1424 = arith.mulf %1419, %1423 : vector<8x32xf32>
    %1425 = tpu.concatenate %1424, %1349 in 1 : vector<8x32xf32>, vector<8x32xf32> -> vector<8x64xf32>
    %c0_449 = arith.constant 0 : index
    %c0_450 = arith.constant 0 : index
    %c0_451 = arith.constant 0 : index
    %1426 = vector.load %arg6[%c0_449, %c0_450, %c0_451] : memref<3x64x128xf32, #tpu.memory_space<vmem>>, vector<1x64x128xf32>
    %1427 = vector.shape_cast %1426 : vector<1x64x128xf32> to vector<64x128xf32>
    %cst_452 = arith.constant dense<0.000000e+00> : vector<8x128xf32>
    %1428 = tpu.matmul %1425, %1427, %cst_452 {dimension_numbers = #tpu.dot_dimension_numbers<[1], [0], [0], [1], [0, 0, 1, 1], [], []>} : vector<8x64xf32>, vector<64x128xf32>, vector<8x128xf32> -> vector<8x128xf32>
    %1429 = vector.broadcast %3 : vector<1x128xf32> to vector<8x128xf32>
    %1430 = arith.addf %1428, %1429 : vector<8x128xf32>
    %cst_453 = arith.constant 5.000000e-01 : f32
    %1431 = vector.broadcast %cst_453 : f32 to vector<8x128xf32>
    %1432 = arith.mulf %1431, %1430 : vector<8x128xf32>
    %1433 = math.tanh %1432 : vector<8x128xf32>
    %cst_454 = arith.constant 1.000000e+00 : f32
    %1434 = vector.broadcast %cst_454 : f32 to vector<8x128xf32>
    %1435 = arith.addf %1433, %1434 : vector<8x128xf32>
    %cst_455 = arith.constant 5.000000e-01 : f32
    %1436 = vector.broadcast %cst_455 : f32 to vector<8x128xf32>
    %1437 = arith.mulf %1436, %1435 : vector<8x128xf32>
    %1438 = math.tanh %1430 : vector<8x128xf32>
    %1439 = vector.extract_strided_slice %1437 {offsets = [0, 0], sizes = [8, 32], strides = [1, 1]} : vector<8x128xf32> to vector<8x32xf32>
    %1440 = vector.extract_strided_slice %1437 {offsets = [0, 32], sizes = [8, 32], strides = [1, 1]} : vector<8x128xf32> to vector<8x32xf32>
    %1441 = vector.extract_strided_slice %1438 {offsets = [0, 64], sizes = [8, 32], strides = [1, 1]} : vector<8x128xf32> to vector<8x32xf32>
    %1442 = vector.extract_strided_slice %1437 {offsets = [0, 96], sizes = [8, 32], strides = [1, 1]} : vector<8x128xf32> to vector<8x32xf32>
    %1443 = arith.mulf %1440, %1347 : vector<8x32xf32>
    %1444 = arith.mulf %1439, %1441 : vector<8x32xf32>
    %1445 = arith.addf %1443, %1444 : vector<8x32xf32>
    %1446 = math.tanh %1445 : vector<8x32xf32>
    %1447 = arith.mulf %1442, %1446 : vector<8x32xf32>
    %1448 = tpu.concatenate %1447, %1372 in 1 : vector<8x32xf32>, vector<8x32xf32> -> vector<8x64xf32>
    %c1_456 = arith.constant 1 : index
    %c0_457 = arith.constant 0 : index
    %c0_458 = arith.constant 0 : index
    %1449 = vector.load %arg6[%c1_456, %c0_457, %c0_458] : memref<3x64x128xf32, #tpu.memory_space<vmem>>, vector<1x64x128xf32>
    %1450 = vector.shape_cast %1449 : vector<1x64x128xf32> to vector<64x128xf32>
    %cst_459 = arith.constant dense<0.000000e+00> : vector<8x128xf32>
    %1451 = tpu.matmul %1448, %1450, %cst_459 {dimension_numbers = #tpu.dot_dimension_numbers<[1], [0], [0], [1], [0, 0, 1, 1], [], []>} : vector<8x64xf32>, vector<64x128xf32>, vector<8x128xf32> -> vector<8x128xf32>
    %1452 = vector.broadcast %4 : vector<1x128xf32> to vector<8x128xf32>
    %1453 = arith.addf %1451, %1452 : vector<8x128xf32>
    %cst_460 = arith.constant 5.000000e-01 : f32
    %1454 = vector.broadcast %cst_460 : f32 to vector<8x128xf32>
    %1455 = arith.mulf %1454, %1453 : vector<8x128xf32>
    %1456 = math.tanh %1455 : vector<8x128xf32>
    %cst_461 = arith.constant 1.000000e+00 : f32
    %1457 = vector.broadcast %cst_461 : f32 to vector<8x128xf32>
    %1458 = arith.addf %1456, %1457 : vector<8x128xf32>
    %cst_462 = arith.constant 5.000000e-01 : f32
    %1459 = vector.broadcast %cst_462 : f32 to vector<8x128xf32>
    %1460 = arith.mulf %1459, %1458 : vector<8x128xf32>
    %1461 = math.tanh %1453 : vector<8x128xf32>
    %1462 = vector.extract_strided_slice %1460 {offsets = [0, 0], sizes = [8, 32], strides = [1, 1]} : vector<8x128xf32> to vector<8x32xf32>
    %1463 = vector.extract_strided_slice %1460 {offsets = [0, 32], sizes = [8, 32], strides = [1, 1]} : vector<8x128xf32> to vector<8x32xf32>
    %1464 = vector.extract_strided_slice %1461 {offsets = [0, 64], sizes = [8, 32], strides = [1, 1]} : vector<8x128xf32> to vector<8x32xf32>
    %1465 = vector.extract_strided_slice %1460 {offsets = [0, 96], sizes = [8, 32], strides = [1, 1]} : vector<8x128xf32> to vector<8x32xf32>
    %1466 = arith.mulf %1463, %1370 : vector<8x32xf32>
    %1467 = arith.mulf %1462, %1464 : vector<8x32xf32>
    %1468 = arith.addf %1466, %1467 : vector<8x32xf32>
    %1469 = math.tanh %1468 : vector<8x32xf32>
    %1470 = arith.mulf %1465, %1469 : vector<8x32xf32>
    %1471 = tpu.concatenate %1470, %1395 in 1 : vector<8x32xf32>, vector<8x32xf32> -> vector<8x64xf32>
    %c2_463 = arith.constant 2 : index
    %c0_464 = arith.constant 0 : index
    %c0_465 = arith.constant 0 : index
    %1472 = vector.load %arg6[%c2_463, %c0_464, %c0_465] : memref<3x64x128xf32, #tpu.memory_space<vmem>>, vector<1x64x128xf32>
    %1473 = vector.shape_cast %1472 : vector<1x64x128xf32> to vector<64x128xf32>
    %cst_466 = arith.constant dense<0.000000e+00> : vector<8x128xf32>
    %1474 = tpu.matmul %1471, %1473, %cst_466 {dimension_numbers = #tpu.dot_dimension_numbers<[1], [0], [0], [1], [0, 0, 1, 1], [], []>} : vector<8x64xf32>, vector<64x128xf32>, vector<8x128xf32> -> vector<8x128xf32>
    %1475 = vector.broadcast %5 : vector<1x128xf32> to vector<8x128xf32>
    %1476 = arith.addf %1474, %1475 : vector<8x128xf32>
    %cst_467 = arith.constant 5.000000e-01 : f32
    %1477 = vector.broadcast %cst_467 : f32 to vector<8x128xf32>
    %1478 = arith.mulf %1477, %1476 : vector<8x128xf32>
    %1479 = math.tanh %1478 : vector<8x128xf32>
    %cst_468 = arith.constant 1.000000e+00 : f32
    %1480 = vector.broadcast %cst_468 : f32 to vector<8x128xf32>
    %1481 = arith.addf %1479, %1480 : vector<8x128xf32>
    %cst_469 = arith.constant 5.000000e-01 : f32
    %1482 = vector.broadcast %cst_469 : f32 to vector<8x128xf32>
    %1483 = arith.mulf %1482, %1481 : vector<8x128xf32>
    %1484 = math.tanh %1476 : vector<8x128xf32>
    %1485 = vector.extract_strided_slice %1483 {offsets = [0, 0], sizes = [8, 32], strides = [1, 1]} : vector<8x128xf32> to vector<8x32xf32>
    %1486 = vector.extract_strided_slice %1483 {offsets = [0, 32], sizes = [8, 32], strides = [1, 1]} : vector<8x128xf32> to vector<8x32xf32>
    %1487 = vector.extract_strided_slice %1484 {offsets = [0, 64], sizes = [8, 32], strides = [1, 1]} : vector<8x128xf32> to vector<8x32xf32>
    %1488 = vector.extract_strided_slice %1483 {offsets = [0, 96], sizes = [8, 32], strides = [1, 1]} : vector<8x128xf32> to vector<8x32xf32>
    %1489 = arith.mulf %1486, %1393 : vector<8x32xf32>
    %1490 = arith.mulf %1485, %1487 : vector<8x32xf32>
    %1491 = arith.addf %1489, %1490 : vector<8x32xf32>
    %1492 = math.tanh %1491 : vector<8x32xf32>
    %1493 = arith.mulf %1488, %1492 : vector<8x32xf32>
    %1494 = vector.broadcast %6 : vector<1x32xf32> to vector<8x32xf32>
    %1495 = arith.mulf %1493, %1494 : vector<8x32xf32>
    %cst_470 = arith.constant dense<0.000000e+00> : vector<8xf32>
    %1496 = vector.multi_reduction <add>, %1495, %cst_470 [1] : vector<8x32xf32> to vector<8xf32>
    %1497 = vector.shape_cast %1496 : vector<8xf32> to vector<8x1xf32>
    %1498 = vector.broadcast %7 : vector<1x1xf32> to vector<8x1xf32>
    %1499 = arith.addf %1497, %1498 : vector<8x1xf32>
    %1500 = math.tanh %1499 : vector<8x1xf32>
    %1501 = arith.addf %28, %1500 : vector<8x1xf32>
    %c0_471 = arith.constant 0 : index
    %c12_472 = arith.constant 12 : index
    %1502 = vector.load %arg10[%c0_471, %c12_472] : memref<8x23xf32, #tpu.memory_space<vmem>>, vector<8x1xf32>
    tpu.vector_store %arg10[%c0_471, %c12_472], %1501 {strides = array<i32>} : memref<8x23xf32, #tpu.memory_space<vmem>>, vector<8x1xf32>,
    %c0_473 = arith.constant 0 : index
    %c0_474 = arith.constant 0 : index
    %1503 = vector.load %arg5[%c0_473, %c0_474] : memref<32x128xf32, #tpu.memory_space<vmem>>, vector<32x128xf32>
    %cst_475 = arith.constant dense<0.000000e+00> : vector<8x128xf32>
    %1504 = tpu.matmul %1424, %1503, %cst_475 {dimension_numbers = #tpu.dot_dimension_numbers<[1], [0], [0], [1], [0, 0, 1, 1], [], []>} : vector<8x32xf32>, vector<32x128xf32>, vector<8x128xf32> -> vector<8x128xf32>
    %1505 = arith.addf %1504, %170 : vector<8x128xf32>
    %cst_476 = arith.constant 5.000000e-01 : f32
    %1506 = vector.broadcast %cst_476 : f32 to vector<8x128xf32>
    %1507 = arith.mulf %1506, %1505 : vector<8x128xf32>
    %1508 = math.tanh %1507 : vector<8x128xf32>
    %cst_477 = arith.constant 1.000000e+00 : f32
    %1509 = vector.broadcast %cst_477 : f32 to vector<8x128xf32>
    %1510 = arith.addf %1508, %1509 : vector<8x128xf32>
    %cst_478 = arith.constant 5.000000e-01 : f32
    %1511 = vector.broadcast %cst_478 : f32 to vector<8x128xf32>
    %1512 = arith.mulf %1511, %1510 : vector<8x128xf32>
    %1513 = math.tanh %1505 : vector<8x128xf32>
    %1514 = vector.extract_strided_slice %1512 {offsets = [0, 0], sizes = [8, 32], strides = [1, 1]} : vector<8x128xf32> to vector<8x32xf32>
    %1515 = vector.extract_strided_slice %1512 {offsets = [0, 32], sizes = [8, 32], strides = [1, 1]} : vector<8x128xf32> to vector<8x32xf32>
    %1516 = vector.extract_strided_slice %1513 {offsets = [0, 64], sizes = [8, 32], strides = [1, 1]} : vector<8x128xf32> to vector<8x32xf32>
    %1517 = vector.extract_strided_slice %1512 {offsets = [0, 96], sizes = [8, 32], strides = [1, 1]} : vector<8x128xf32> to vector<8x32xf32>
    %1518 = arith.mulf %1515, %1422 : vector<8x32xf32>
    %1519 = arith.mulf %1514, %1516 : vector<8x32xf32>
    %1520 = arith.addf %1518, %1519 : vector<8x32xf32>
    %1521 = math.tanh %1520 : vector<8x32xf32>
    %1522 = arith.mulf %1517, %1521 : vector<8x32xf32>
    %1523 = tpu.concatenate %1522, %1447 in 1 : vector<8x32xf32>, vector<8x32xf32> -> vector<8x64xf32>
    %c0_479 = arith.constant 0 : index
    %c0_480 = arith.constant 0 : index
    %c0_481 = arith.constant 0 : index
    %1524 = vector.load %arg6[%c0_479, %c0_480, %c0_481] : memref<3x64x128xf32, #tpu.memory_space<vmem>>, vector<1x64x128xf32>
    %1525 = vector.shape_cast %1524 : vector<1x64x128xf32> to vector<64x128xf32>
    %cst_482 = arith.constant dense<0.000000e+00> : vector<8x128xf32>
    %1526 = tpu.matmul %1523, %1525, %cst_482 {dimension_numbers = #tpu.dot_dimension_numbers<[1], [0], [0], [1], [0, 0, 1, 1], [], []>} : vector<8x64xf32>, vector<64x128xf32>, vector<8x128xf32> -> vector<8x128xf32>
    %1527 = vector.broadcast %3 : vector<1x128xf32> to vector<8x128xf32>
    %1528 = arith.addf %1526, %1527 : vector<8x128xf32>
    %cst_483 = arith.constant 5.000000e-01 : f32
    %1529 = vector.broadcast %cst_483 : f32 to vector<8x128xf32>
    %1530 = arith.mulf %1529, %1528 : vector<8x128xf32>
    %1531 = math.tanh %1530 : vector<8x128xf32>
    %cst_484 = arith.constant 1.000000e+00 : f32
    %1532 = vector.broadcast %cst_484 : f32 to vector<8x128xf32>
    %1533 = arith.addf %1531, %1532 : vector<8x128xf32>
    %cst_485 = arith.constant 5.000000e-01 : f32
    %1534 = vector.broadcast %cst_485 : f32 to vector<8x128xf32>
    %1535 = arith.mulf %1534, %1533 : vector<8x128xf32>
    %1536 = math.tanh %1528 : vector<8x128xf32>
    %1537 = vector.extract_strided_slice %1535 {offsets = [0, 0], sizes = [8, 32], strides = [1, 1]} : vector<8x128xf32> to vector<8x32xf32>
    %1538 = vector.extract_strided_slice %1535 {offsets = [0, 32], sizes = [8, 32], strides = [1, 1]} : vector<8x128xf32> to vector<8x32xf32>
    %1539 = vector.extract_strided_slice %1536 {offsets = [0, 64], sizes = [8, 32], strides = [1, 1]} : vector<8x128xf32> to vector<8x32xf32>
    %1540 = vector.extract_strided_slice %1535 {offsets = [0, 96], sizes = [8, 32], strides = [1, 1]} : vector<8x128xf32> to vector<8x32xf32>
    %1541 = arith.mulf %1538, %1445 : vector<8x32xf32>
    %1542 = arith.mulf %1537, %1539 : vector<8x32xf32>
    %1543 = arith.addf %1541, %1542 : vector<8x32xf32>
    %1544 = math.tanh %1543 : vector<8x32xf32>
    %1545 = arith.mulf %1540, %1544 : vector<8x32xf32>
    %1546 = tpu.concatenate %1545, %1470 in 1 : vector<8x32xf32>, vector<8x32xf32> -> vector<8x64xf32>
    %c1_486 = arith.constant 1 : index
    %c0_487 = arith.constant 0 : index
    %c0_488 = arith.constant 0 : index
    %1547 = vector.load %arg6[%c1_486, %c0_487, %c0_488] : memref<3x64x128xf32, #tpu.memory_space<vmem>>, vector<1x64x128xf32>
    %1548 = vector.shape_cast %1547 : vector<1x64x128xf32> to vector<64x128xf32>
    %cst_489 = arith.constant dense<0.000000e+00> : vector<8x128xf32>
    %1549 = tpu.matmul %1546, %1548, %cst_489 {dimension_numbers = #tpu.dot_dimension_numbers<[1], [0], [0], [1], [0, 0, 1, 1], [], []>} : vector<8x64xf32>, vector<64x128xf32>, vector<8x128xf32> -> vector<8x128xf32>
    %1550 = vector.broadcast %4 : vector<1x128xf32> to vector<8x128xf32>
    %1551 = arith.addf %1549, %1550 : vector<8x128xf32>
    %cst_490 = arith.constant 5.000000e-01 : f32
    %1552 = vector.broadcast %cst_490 : f32 to vector<8x128xf32>
    %1553 = arith.mulf %1552, %1551 : vector<8x128xf32>
    %1554 = math.tanh %1553 : vector<8x128xf32>
    %cst_491 = arith.constant 1.000000e+00 : f32
    %1555 = vector.broadcast %cst_491 : f32 to vector<8x128xf32>
    %1556 = arith.addf %1554, %1555 : vector<8x128xf32>
    %cst_492 = arith.constant 5.000000e-01 : f32
    %1557 = vector.broadcast %cst_492 : f32 to vector<8x128xf32>
    %1558 = arith.mulf %1557, %1556 : vector<8x128xf32>
    %1559 = math.tanh %1551 : vector<8x128xf32>
    %1560 = vector.extract_strided_slice %1558 {offsets = [0, 0], sizes = [8, 32], strides = [1, 1]} : vector<8x128xf32> to vector<8x32xf32>
    %1561 = vector.extract_strided_slice %1558 {offsets = [0, 32], sizes = [8, 32], strides = [1, 1]} : vector<8x128xf32> to vector<8x32xf32>
    %1562 = vector.extract_strided_slice %1559 {offsets = [0, 64], sizes = [8, 32], strides = [1, 1]} : vector<8x128xf32> to vector<8x32xf32>
    %1563 = vector.extract_strided_slice %1558 {offsets = [0, 96], sizes = [8, 32], strides = [1, 1]} : vector<8x128xf32> to vector<8x32xf32>
    %1564 = arith.mulf %1561, %1468 : vector<8x32xf32>
    %1565 = arith.mulf %1560, %1562 : vector<8x32xf32>
    %1566 = arith.addf %1564, %1565 : vector<8x32xf32>
    %1567 = math.tanh %1566 : vector<8x32xf32>
    %1568 = arith.mulf %1563, %1567 : vector<8x32xf32>
    %1569 = tpu.concatenate %1568, %1493 in 1 : vector<8x32xf32>, vector<8x32xf32> -> vector<8x64xf32>
    %c2_493 = arith.constant 2 : index
    %c0_494 = arith.constant 0 : index
    %c0_495 = arith.constant 0 : index
    %1570 = vector.load %arg6[%c2_493, %c0_494, %c0_495] : memref<3x64x128xf32, #tpu.memory_space<vmem>>, vector<1x64x128xf32>
    %1571 = vector.shape_cast %1570 : vector<1x64x128xf32> to vector<64x128xf32>
    %cst_496 = arith.constant dense<0.000000e+00> : vector<8x128xf32>
    %1572 = tpu.matmul %1569, %1571, %cst_496 {dimension_numbers = #tpu.dot_dimension_numbers<[1], [0], [0], [1], [0, 0, 1, 1], [], []>} : vector<8x64xf32>, vector<64x128xf32>, vector<8x128xf32> -> vector<8x128xf32>
    %1573 = vector.broadcast %5 : vector<1x128xf32> to vector<8x128xf32>
    %1574 = arith.addf %1572, %1573 : vector<8x128xf32>
    %cst_497 = arith.constant 5.000000e-01 : f32
    %1575 = vector.broadcast %cst_497 : f32 to vector<8x128xf32>
    %1576 = arith.mulf %1575, %1574 : vector<8x128xf32>
    %1577 = math.tanh %1576 : vector<8x128xf32>
    %cst_498 = arith.constant 1.000000e+00 : f32
    %1578 = vector.broadcast %cst_498 : f32 to vector<8x128xf32>
    %1579 = arith.addf %1577, %1578 : vector<8x128xf32>
    %cst_499 = arith.constant 5.000000e-01 : f32
    %1580 = vector.broadcast %cst_499 : f32 to vector<8x128xf32>
    %1581 = arith.mulf %1580, %1579 : vector<8x128xf32>
    %1582 = math.tanh %1574 : vector<8x128xf32>
    %1583 = vector.extract_strided_slice %1581 {offsets = [0, 0], sizes = [8, 32], strides = [1, 1]} : vector<8x128xf32> to vector<8x32xf32>
    %1584 = vector.extract_strided_slice %1581 {offsets = [0, 32], sizes = [8, 32], strides = [1, 1]} : vector<8x128xf32> to vector<8x32xf32>
    %1585 = vector.extract_strided_slice %1582 {offsets = [0, 64], sizes = [8, 32], strides = [1, 1]} : vector<8x128xf32> to vector<8x32xf32>
    %1586 = vector.extract_strided_slice %1581 {offsets = [0, 96], sizes = [8, 32], strides = [1, 1]} : vector<8x128xf32> to vector<8x32xf32>
    %1587 = arith.mulf %1584, %1491 : vector<8x32xf32>
    %1588 = arith.mulf %1583, %1585 : vector<8x32xf32>
    %1589 = arith.addf %1587, %1588 : vector<8x32xf32>
    %1590 = math.tanh %1589 : vector<8x32xf32>
    %1591 = arith.mulf %1586, %1590 : vector<8x32xf32>
    %1592 = vector.broadcast %6 : vector<1x32xf32> to vector<8x32xf32>
    %1593 = arith.mulf %1591, %1592 : vector<8x32xf32>
    %cst_500 = arith.constant dense<0.000000e+00> : vector<8xf32>
    %1594 = vector.multi_reduction <add>, %1593, %cst_500 [1] : vector<8x32xf32> to vector<8xf32>
    %1595 = vector.shape_cast %1594 : vector<8xf32> to vector<8x1xf32>
    %1596 = vector.broadcast %7 : vector<1x1xf32> to vector<8x1xf32>
    %1597 = arith.addf %1595, %1596 : vector<8x1xf32>
    %1598 = math.tanh %1597 : vector<8x1xf32>
    %1599 = arith.addf %29, %1598 : vector<8x1xf32>
    %c0_501 = arith.constant 0 : index
    %c13_502 = arith.constant 13 : index
    %1600 = vector.load %arg10[%c0_501, %c13_502] : memref<8x23xf32, #tpu.memory_space<vmem>>, vector<8x1xf32>
    tpu.vector_store %arg10[%c0_501, %c13_502], %1599 {strides = array<i32>} : memref<8x23xf32, #tpu.memory_space<vmem>>, vector<8x1xf32>,
    %c0_503 = arith.constant 0 : index
    %c0_504 = arith.constant 0 : index
    %1601 = vector.load %arg5[%c0_503, %c0_504] : memref<32x128xf32, #tpu.memory_space<vmem>>, vector<32x128xf32>
    %cst_505 = arith.constant dense<0.000000e+00> : vector<8x128xf32>
    %1602 = tpu.matmul %1522, %1601, %cst_505 {dimension_numbers = #tpu.dot_dimension_numbers<[1], [0], [0], [1], [0, 0, 1, 1], [], []>} : vector<8x32xf32>, vector<32x128xf32>, vector<8x128xf32> -> vector<8x128xf32>
    %1603 = arith.addf %1602, %180 : vector<8x128xf32>
    %cst_506 = arith.constant 5.000000e-01 : f32
    %1604 = vector.broadcast %cst_506 : f32 to vector<8x128xf32>
    %1605 = arith.mulf %1604, %1603 : vector<8x128xf32>
    %1606 = math.tanh %1605 : vector<8x128xf32>
    %cst_507 = arith.constant 1.000000e+00 : f32
    %1607 = vector.broadcast %cst_507 : f32 to vector<8x128xf32>
    %1608 = arith.addf %1606, %1607 : vector<8x128xf32>
    %cst_508 = arith.constant 5.000000e-01 : f32
    %1609 = vector.broadcast %cst_508 : f32 to vector<8x128xf32>
    %1610 = arith.mulf %1609, %1608 : vector<8x128xf32>
    %1611 = math.tanh %1603 : vector<8x128xf32>
    %1612 = vector.extract_strided_slice %1610 {offsets = [0, 0], sizes = [8, 32], strides = [1, 1]} : vector<8x128xf32> to vector<8x32xf32>
    %1613 = vector.extract_strided_slice %1610 {offsets = [0, 32], sizes = [8, 32], strides = [1, 1]} : vector<8x128xf32> to vector<8x32xf32>
    %1614 = vector.extract_strided_slice %1611 {offsets = [0, 64], sizes = [8, 32], strides = [1, 1]} : vector<8x128xf32> to vector<8x32xf32>
    %1615 = vector.extract_strided_slice %1610 {offsets = [0, 96], sizes = [8, 32], strides = [1, 1]} : vector<8x128xf32> to vector<8x32xf32>
    %1616 = arith.mulf %1613, %1520 : vector<8x32xf32>
    %1617 = arith.mulf %1612, %1614 : vector<8x32xf32>
    %1618 = arith.addf %1616, %1617 : vector<8x32xf32>
    %1619 = math.tanh %1618 : vector<8x32xf32>
    %1620 = arith.mulf %1615, %1619 : vector<8x32xf32>
    %1621 = tpu.concatenate %1620, %1545 in 1 : vector<8x32xf32>, vector<8x32xf32> -> vector<8x64xf32>
    %c0_509 = arith.constant 0 : index
    %c0_510 = arith.constant 0 : index
    %c0_511 = arith.constant 0 : index
    %1622 = vector.load %arg6[%c0_509, %c0_510, %c0_511] : memref<3x64x128xf32, #tpu.memory_space<vmem>>, vector<1x64x128xf32>
    %1623 = vector.shape_cast %1622 : vector<1x64x128xf32> to vector<64x128xf32>
    %cst_512 = arith.constant dense<0.000000e+00> : vector<8x128xf32>
    %1624 = tpu.matmul %1621, %1623, %cst_512 {dimension_numbers = #tpu.dot_dimension_numbers<[1], [0], [0], [1], [0, 0, 1, 1], [], []>} : vector<8x64xf32>, vector<64x128xf32>, vector<8x128xf32> -> vector<8x128xf32>
    %1625 = vector.broadcast %3 : vector<1x128xf32> to vector<8x128xf32>
    %1626 = arith.addf %1624, %1625 : vector<8x128xf32>
    %cst_513 = arith.constant 5.000000e-01 : f32
    %1627 = vector.broadcast %cst_513 : f32 to vector<8x128xf32>
    %1628 = arith.mulf %1627, %1626 : vector<8x128xf32>
    %1629 = math.tanh %1628 : vector<8x128xf32>
    %cst_514 = arith.constant 1.000000e+00 : f32
    %1630 = vector.broadcast %cst_514 : f32 to vector<8x128xf32>
    %1631 = arith.addf %1629, %1630 : vector<8x128xf32>
    %cst_515 = arith.constant 5.000000e-01 : f32
    %1632 = vector.broadcast %cst_515 : f32 to vector<8x128xf32>
    %1633 = arith.mulf %1632, %1631 : vector<8x128xf32>
    %1634 = math.tanh %1626 : vector<8x128xf32>
    %1635 = vector.extract_strided_slice %1633 {offsets = [0, 0], sizes = [8, 32], strides = [1, 1]} : vector<8x128xf32> to vector<8x32xf32>
    %1636 = vector.extract_strided_slice %1633 {offsets = [0, 32], sizes = [8, 32], strides = [1, 1]} : vector<8x128xf32> to vector<8x32xf32>
    %1637 = vector.extract_strided_slice %1634 {offsets = [0, 64], sizes = [8, 32], strides = [1, 1]} : vector<8x128xf32> to vector<8x32xf32>
    %1638 = vector.extract_strided_slice %1633 {offsets = [0, 96], sizes = [8, 32], strides = [1, 1]} : vector<8x128xf32> to vector<8x32xf32>
    %1639 = arith.mulf %1636, %1543 : vector<8x32xf32>
    %1640 = arith.mulf %1635, %1637 : vector<8x32xf32>
    %1641 = arith.addf %1639, %1640 : vector<8x32xf32>
    %1642 = math.tanh %1641 : vector<8x32xf32>
    %1643 = arith.mulf %1638, %1642 : vector<8x32xf32>
    %1644 = tpu.concatenate %1643, %1568 in 1 : vector<8x32xf32>, vector<8x32xf32> -> vector<8x64xf32>
    %c1_516 = arith.constant 1 : index
    %c0_517 = arith.constant 0 : index
    %c0_518 = arith.constant 0 : index
    %1645 = vector.load %arg6[%c1_516, %c0_517, %c0_518] : memref<3x64x128xf32, #tpu.memory_space<vmem>>, vector<1x64x128xf32>
    %1646 = vector.shape_cast %1645 : vector<1x64x128xf32> to vector<64x128xf32>
    %cst_519 = arith.constant dense<0.000000e+00> : vector<8x128xf32>
    %1647 = tpu.matmul %1644, %1646, %cst_519 {dimension_numbers = #tpu.dot_dimension_numbers<[1], [0], [0], [1], [0, 0, 1, 1], [], []>} : vector<8x64xf32>, vector<64x128xf32>, vector<8x128xf32> -> vector<8x128xf32>
    %1648 = vector.broadcast %4 : vector<1x128xf32> to vector<8x128xf32>
    %1649 = arith.addf %1647, %1648 : vector<8x128xf32>
    %cst_520 = arith.constant 5.000000e-01 : f32
    %1650 = vector.broadcast %cst_520 : f32 to vector<8x128xf32>
    %1651 = arith.mulf %1650, %1649 : vector<8x128xf32>
    %1652 = math.tanh %1651 : vector<8x128xf32>
    %cst_521 = arith.constant 1.000000e+00 : f32
    %1653 = vector.broadcast %cst_521 : f32 to vector<8x128xf32>
    %1654 = arith.addf %1652, %1653 : vector<8x128xf32>
    %cst_522 = arith.constant 5.000000e-01 : f32
    %1655 = vector.broadcast %cst_522 : f32 to vector<8x128xf32>
    %1656 = arith.mulf %1655, %1654 : vector<8x128xf32>
    %1657 = math.tanh %1649 : vector<8x128xf32>
    %1658 = vector.extract_strided_slice %1656 {offsets = [0, 0], sizes = [8, 32], strides = [1, 1]} : vector<8x128xf32> to vector<8x32xf32>
    %1659 = vector.extract_strided_slice %1656 {offsets = [0, 32], sizes = [8, 32], strides = [1, 1]} : vector<8x128xf32> to vector<8x32xf32>
    %1660 = vector.extract_strided_slice %1657 {offsets = [0, 64], sizes = [8, 32], strides = [1, 1]} : vector<8x128xf32> to vector<8x32xf32>
    %1661 = vector.extract_strided_slice %1656 {offsets = [0, 96], sizes = [8, 32], strides = [1, 1]} : vector<8x128xf32> to vector<8x32xf32>
    %1662 = arith.mulf %1659, %1566 : vector<8x32xf32>
    %1663 = arith.mulf %1658, %1660 : vector<8x32xf32>
    %1664 = arith.addf %1662, %1663 : vector<8x32xf32>
    %1665 = math.tanh %1664 : vector<8x32xf32>
    %1666 = arith.mulf %1661, %1665 : vector<8x32xf32>
    %1667 = tpu.concatenate %1666, %1591 in 1 : vector<8x32xf32>, vector<8x32xf32> -> vector<8x64xf32>
    %c2_523 = arith.constant 2 : index
    %c0_524 = arith.constant 0 : index
    %c0_525 = arith.constant 0 : index
    %1668 = vector.load %arg6[%c2_523, %c0_524, %c0_525] : memref<3x64x128xf32, #tpu.memory_space<vmem>>, vector<1x64x128xf32>
    %1669 = vector.shape_cast %1668 : vector<1x64x128xf32> to vector<64x128xf32>
    %cst_526 = arith.constant dense<0.000000e+00> : vector<8x128xf32>
    %1670 = tpu.matmul %1667, %1669, %cst_526 {dimension_numbers = #tpu.dot_dimension_numbers<[1], [0], [0], [1], [0, 0, 1, 1], [], []>} : vector<8x64xf32>, vector<64x128xf32>, vector<8x128xf32> -> vector<8x128xf32>
    %1671 = vector.broadcast %5 : vector<1x128xf32> to vector<8x128xf32>
    %1672 = arith.addf %1670, %1671 : vector<8x128xf32>
    %cst_527 = arith.constant 5.000000e-01 : f32
    %1673 = vector.broadcast %cst_527 : f32 to vector<8x128xf32>
    %1674 = arith.mulf %1673, %1672 : vector<8x128xf32>
    %1675 = math.tanh %1674 : vector<8x128xf32>
    %cst_528 = arith.constant 1.000000e+00 : f32
    %1676 = vector.broadcast %cst_528 : f32 to vector<8x128xf32>
    %1677 = arith.addf %1675, %1676 : vector<8x128xf32>
    %cst_529 = arith.constant 5.000000e-01 : f32
    %1678 = vector.broadcast %cst_529 : f32 to vector<8x128xf32>
    %1679 = arith.mulf %1678, %1677 : vector<8x128xf32>
    %1680 = math.tanh %1672 : vector<8x128xf32>
    %1681 = vector.extract_strided_slice %1679 {offsets = [0, 0], sizes = [8, 32], strides = [1, 1]} : vector<8x128xf32> to vector<8x32xf32>
    %1682 = vector.extract_strided_slice %1679 {offsets = [0, 32], sizes = [8, 32], strides = [1, 1]} : vector<8x128xf32> to vector<8x32xf32>
    %1683 = vector.extract_strided_slice %1680 {offsets = [0, 64], sizes = [8, 32], strides = [1, 1]} : vector<8x128xf32> to vector<8x32xf32>
    %1684 = vector.extract_strided_slice %1679 {offsets = [0, 96], sizes = [8, 32], strides = [1, 1]} : vector<8x128xf32> to vector<8x32xf32>
    %1685 = arith.mulf %1682, %1589 : vector<8x32xf32>
    %1686 = arith.mulf %1681, %1683 : vector<8x32xf32>
    %1687 = arith.addf %1685, %1686 : vector<8x32xf32>
    %1688 = math.tanh %1687 : vector<8x32xf32>
    %1689 = arith.mulf %1684, %1688 : vector<8x32xf32>
    %1690 = vector.broadcast %6 : vector<1x32xf32> to vector<8x32xf32>
    %1691 = arith.mulf %1689, %1690 : vector<8x32xf32>
    %cst_530 = arith.constant dense<0.000000e+00> : vector<8xf32>
    %1692 = vector.multi_reduction <add>, %1691, %cst_530 [1] : vector<8x32xf32> to vector<8xf32>
    %1693 = vector.shape_cast %1692 : vector<8xf32> to vector<8x1xf32>
    %1694 = vector.broadcast %7 : vector<1x1xf32> to vector<8x1xf32>
    %1695 = arith.addf %1693, %1694 : vector<8x1xf32>
    %1696 = math.tanh %1695 : vector<8x1xf32>
    %1697 = arith.addf %30, %1696 : vector<8x1xf32>
    %c0_531 = arith.constant 0 : index
    %c14_532 = arith.constant 14 : index
    %1698 = vector.load %arg10[%c0_531, %c14_532] : memref<8x23xf32, #tpu.memory_space<vmem>>, vector<8x1xf32>
    tpu.vector_store %arg10[%c0_531, %c14_532], %1697 {strides = array<i32>} : memref<8x23xf32, #tpu.memory_space<vmem>>, vector<8x1xf32>,
    %c0_533 = arith.constant 0 : index
    %c15_534 = arith.constant 15 : index
    %1699 = vector.load %arg1[%c0_533, %c15_534] : memref<8x16xf32, #tpu.memory_space<vmem>>, vector<8x1xf32>
    %1700 = vector.broadcast %1699 : vector<8x1xf32> to vector<8x128xf32>
    %1701 = vector.broadcast %0 : vector<1x128xf32> to vector<8x128xf32>
    %1702 = arith.mulf %1700, %1701 : vector<8x128xf32>
    %1703 = arith.addf %1702, %193 : vector<8x128xf32>
    %c0_535 = arith.constant 0 : index
    %c0_536 = arith.constant 0 : index
    %1704 = vector.load %arg5[%c0_535, %c0_536] : memref<32x128xf32, #tpu.memory_space<vmem>>, vector<32x128xf32>
    %cst_537 = arith.constant dense<0.000000e+00> : vector<8x128xf32>
    %1705 = tpu.matmul %1620, %1704, %cst_537 {dimension_numbers = #tpu.dot_dimension_numbers<[1], [0], [0], [1], [0, 0, 1, 1], [], []>} : vector<8x32xf32>, vector<32x128xf32>, vector<8x128xf32> -> vector<8x128xf32>
    %1706 = arith.addf %1705, %1703 : vector<8x128xf32>
    %cst_538 = arith.constant 5.000000e-01 : f32
    %1707 = vector.broadcast %cst_538 : f32 to vector<8x128xf32>
    %1708 = arith.mulf %1707, %1706 : vector<8x128xf32>
    %1709 = math.tanh %1708 : vector<8x128xf32>
    %cst_539 = arith.constant 1.000000e+00 : f32
    %1710 = vector.broadcast %cst_539 : f32 to vector<8x128xf32>
    %1711 = arith.addf %1709, %1710 : vector<8x128xf32>
    %cst_540 = arith.constant 5.000000e-01 : f32
    %1712 = vector.broadcast %cst_540 : f32 to vector<8x128xf32>
    %1713 = arith.mulf %1712, %1711 : vector<8x128xf32>
    %1714 = math.tanh %1706 : vector<8x128xf32>
    %1715 = vector.extract_strided_slice %1713 {offsets = [0, 0], sizes = [8, 32], strides = [1, 1]} : vector<8x128xf32> to vector<8x32xf32>
    %1716 = vector.extract_strided_slice %1713 {offsets = [0, 32], sizes = [8, 32], strides = [1, 1]} : vector<8x128xf32> to vector<8x32xf32>
    %1717 = vector.extract_strided_slice %1714 {offsets = [0, 64], sizes = [8, 32], strides = [1, 1]} : vector<8x128xf32> to vector<8x32xf32>
    %1718 = vector.extract_strided_slice %1713 {offsets = [0, 96], sizes = [8, 32], strides = [1, 1]} : vector<8x128xf32> to vector<8x32xf32>
    %1719 = arith.mulf %1716, %1618 : vector<8x32xf32>
    %1720 = arith.mulf %1715, %1717 : vector<8x32xf32>
    %1721 = arith.addf %1719, %1720 : vector<8x32xf32>
    %1722 = math.tanh %1721 : vector<8x32xf32>
    %1723 = arith.mulf %1718, %1722 : vector<8x32xf32>
    %1724 = tpu.concatenate %1723, %1643 in 1 : vector<8x32xf32>, vector<8x32xf32> -> vector<8x64xf32>
    %c0_541 = arith.constant 0 : index
    %c0_542 = arith.constant 0 : index
    %c0_543 = arith.constant 0 : index
    %1725 = vector.load %arg6[%c0_541, %c0_542, %c0_543] : memref<3x64x128xf32, #tpu.memory_space<vmem>>, vector<1x64x128xf32>
    %1726 = vector.shape_cast %1725 : vector<1x64x128xf32> to vector<64x128xf32>
    %cst_544 = arith.constant dense<0.000000e+00> : vector<8x128xf32>
    %1727 = tpu.matmul %1724, %1726, %cst_544 {dimension_numbers = #tpu.dot_dimension_numbers<[1], [0], [0], [1], [0, 0, 1, 1], [], []>} : vector<8x64xf32>, vector<64x128xf32>, vector<8x128xf32> -> vector<8x128xf32>
    %1728 = vector.broadcast %3 : vector<1x128xf32> to vector<8x128xf32>
    %1729 = arith.addf %1727, %1728 : vector<8x128xf32>
    %cst_545 = arith.constant 5.000000e-01 : f32
    %1730 = vector.broadcast %cst_545 : f32 to vector<8x128xf32>
    %1731 = arith.mulf %1730, %1729 : vector<8x128xf32>
    %1732 = math.tanh %1731 : vector<8x128xf32>
    %cst_546 = arith.constant 1.000000e+00 : f32
    %1733 = vector.broadcast %cst_546 : f32 to vector<8x128xf32>
    %1734 = arith.addf %1732, %1733 : vector<8x128xf32>
    %cst_547 = arith.constant 5.000000e-01 : f32
    %1735 = vector.broadcast %cst_547 : f32 to vector<8x128xf32>
    %1736 = arith.mulf %1735, %1734 : vector<8x128xf32>
    %1737 = math.tanh %1729 : vector<8x128xf32>
    %1738 = vector.extract_strided_slice %1736 {offsets = [0, 0], sizes = [8, 32], strides = [1, 1]} : vector<8x128xf32> to vector<8x32xf32>
    %1739 = vector.extract_strided_slice %1736 {offsets = [0, 32], sizes = [8, 32], strides = [1, 1]} : vector<8x128xf32> to vector<8x32xf32>
    %1740 = vector.extract_strided_slice %1737 {offsets = [0, 64], sizes = [8, 32], strides = [1, 1]} : vector<8x128xf32> to vector<8x32xf32>
    %1741 = vector.extract_strided_slice %1736 {offsets = [0, 96], sizes = [8, 32], strides = [1, 1]} : vector<8x128xf32> to vector<8x32xf32>
    %1742 = arith.mulf %1739, %1641 : vector<8x32xf32>
    %1743 = arith.mulf %1738, %1740 : vector<8x32xf32>
    %1744 = arith.addf %1742, %1743 : vector<8x32xf32>
    %1745 = math.tanh %1744 : vector<8x32xf32>
    %1746 = arith.mulf %1741, %1745 : vector<8x32xf32>
    %1747 = tpu.concatenate %1746, %1666 in 1 : vector<8x32xf32>, vector<8x32xf32> -> vector<8x64xf32>
    %c1_548 = arith.constant 1 : index
    %c0_549 = arith.constant 0 : index
    %c0_550 = arith.constant 0 : index
    %1748 = vector.load %arg6[%c1_548, %c0_549, %c0_550] : memref<3x64x128xf32, #tpu.memory_space<vmem>>, vector<1x64x128xf32>
    %1749 = vector.shape_cast %1748 : vector<1x64x128xf32> to vector<64x128xf32>
    %cst_551 = arith.constant dense<0.000000e+00> : vector<8x128xf32>
    %1750 = tpu.matmul %1747, %1749, %cst_551 {dimension_numbers = #tpu.dot_dimension_numbers<[1], [0], [0], [1], [0, 0, 1, 1], [], []>} : vector<8x64xf32>, vector<64x128xf32>, vector<8x128xf32> -> vector<8x128xf32>
    %1751 = vector.broadcast %4 : vector<1x128xf32> to vector<8x128xf32>
    %1752 = arith.addf %1750, %1751 : vector<8x128xf32>
    %cst_552 = arith.constant 5.000000e-01 : f32
    %1753 = vector.broadcast %cst_552 : f32 to vector<8x128xf32>
    %1754 = arith.mulf %1753, %1752 : vector<8x128xf32>
    %1755 = math.tanh %1754 : vector<8x128xf32>
    %cst_553 = arith.constant 1.000000e+00 : f32
    %1756 = vector.broadcast %cst_553 : f32 to vector<8x128xf32>
    %1757 = arith.addf %1755, %1756 : vector<8x128xf32>
    %cst_554 = arith.constant 5.000000e-01 : f32
    %1758 = vector.broadcast %cst_554 : f32 to vector<8x128xf32>
    %1759 = arith.mulf %1758, %1757 : vector<8x128xf32>
    %1760 = math.tanh %1752 : vector<8x128xf32>
    %1761 = vector.extract_strided_slice %1759 {offsets = [0, 0], sizes = [8, 32], strides = [1, 1]} : vector<8x128xf32> to vector<8x32xf32>
    %1762 = vector.extract_strided_slice %1759 {offsets = [0, 32], sizes = [8, 32], strides = [1, 1]} : vector<8x128xf32> to vector<8x32xf32>
    %1763 = vector.extract_strided_slice %1760 {offsets = [0, 64], sizes = [8, 32], strides = [1, 1]} : vector<8x128xf32> to vector<8x32xf32>
    %1764 = vector.extract_strided_slice %1759 {offsets = [0, 96], sizes = [8, 32], strides = [1, 1]} : vector<8x128xf32> to vector<8x32xf32>
    %1765 = arith.mulf %1762, %1664 : vector<8x32xf32>
    %1766 = arith.mulf %1761, %1763 : vector<8x32xf32>
    %1767 = arith.addf %1765, %1766 : vector<8x32xf32>
    %1768 = math.tanh %1767 : vector<8x32xf32>
    %1769 = arith.mulf %1764, %1768 : vector<8x32xf32>
    %1770 = tpu.concatenate %1769, %1689 in 1 : vector<8x32xf32>, vector<8x32xf32> -> vector<8x64xf32>
    %c2_555 = arith.constant 2 : index
    %c0_556 = arith.constant 0 : index
    %c0_557 = arith.constant 0 : index
    %1771 = vector.load %arg6[%c2_555, %c0_556, %c0_557] : memref<3x64x128xf32, #tpu.memory_space<vmem>>, vector<1x64x128xf32>
    %1772 = vector.shape_cast %1771 : vector<1x64x128xf32> to vector<64x128xf32>
    %cst_558 = arith.constant dense<0.000000e+00> : vector<8x128xf32>
    %1773 = tpu.matmul %1770, %1772, %cst_558 {dimension_numbers = #tpu.dot_dimension_numbers<[1], [0], [0], [1], [0, 0, 1, 1], [], []>} : vector<8x64xf32>, vector<64x128xf32>, vector<8x128xf32> -> vector<8x128xf32>
    %1774 = vector.broadcast %5 : vector<1x128xf32> to vector<8x128xf32>
    %1775 = arith.addf %1773, %1774 : vector<8x128xf32>
    %cst_559 = arith.constant 5.000000e-01 : f32
    %1776 = vector.broadcast %cst_559 : f32 to vector<8x128xf32>
    %1777 = arith.mulf %1776, %1775 : vector<8x128xf32>
    %1778 = math.tanh %1777 : vector<8x128xf32>
    %cst_560 = arith.constant 1.000000e+00 : f32
    %1779 = vector.broadcast %cst_560 : f32 to vector<8x128xf32>
    %1780 = arith.addf %1778, %1779 : vector<8x128xf32>
    %cst_561 = arith.constant 5.000000e-01 : f32
    %1781 = vector.broadcast %cst_561 : f32 to vector<8x128xf32>
    %1782 = arith.mulf %1781, %1780 : vector<8x128xf32>
    %1783 = math.tanh %1775 : vector<8x128xf32>
    %1784 = vector.extract_strided_slice %1782 {offsets = [0, 0], sizes = [8, 32], strides = [1, 1]} : vector<8x128xf32> to vector<8x32xf32>
    %1785 = vector.extract_strided_slice %1782 {offsets = [0, 32], sizes = [8, 32], strides = [1, 1]} : vector<8x128xf32> to vector<8x32xf32>
    %1786 = vector.extract_strided_slice %1783 {offsets = [0, 64], sizes = [8, 32], strides = [1, 1]} : vector<8x128xf32> to vector<8x32xf32>
    %1787 = vector.extract_strided_slice %1782 {offsets = [0, 96], sizes = [8, 32], strides = [1, 1]} : vector<8x128xf32> to vector<8x32xf32>
    %1788 = arith.mulf %1785, %1687 : vector<8x32xf32>
    %1789 = arith.mulf %1784, %1786 : vector<8x32xf32>
    %1790 = arith.addf %1788, %1789 : vector<8x32xf32>
    %1791 = math.tanh %1790 : vector<8x32xf32>
    %1792 = arith.mulf %1787, %1791 : vector<8x32xf32>
    %1793 = vector.broadcast %6 : vector<1x32xf32> to vector<8x32xf32>
    %1794 = arith.mulf %1792, %1793 : vector<8x32xf32>
    %cst_562 = arith.constant dense<0.000000e+00> : vector<8xf32>
    %1795 = vector.multi_reduction <add>, %1794, %cst_562 [1] : vector<8x32xf32> to vector<8xf32>
    %1796 = vector.shape_cast %1795 : vector<8xf32> to vector<8x1xf32>
    %1797 = vector.broadcast %7 : vector<1x1xf32> to vector<8x1xf32>
    %1798 = arith.addf %1796, %1797 : vector<8x1xf32>
    %1799 = math.tanh %1798 : vector<8x1xf32>
    %1800 = arith.addf %181, %1799 : vector<8x1xf32>
    %c0_563 = arith.constant 0 : index
    %c15_564 = arith.constant 15 : index
    %1801 = vector.load %arg10[%c0_563, %c15_564] : memref<8x23xf32, #tpu.memory_space<vmem>>, vector<8x1xf32>
    tpu.vector_store %arg10[%c0_563, %c15_564], %1800 {strides = array<i32>} : memref<8x23xf32, #tpu.memory_space<vmem>>, vector<8x1xf32>,
    %1802 = vector.broadcast %1800 : vector<8x1xf32> to vector<8x128xf32>
    %1803 = vector.broadcast %0 : vector<1x128xf32> to vector<8x128xf32>
    %1804 = arith.mulf %1802, %1803 : vector<8x128xf32>
    %1805 = arith.addf %1804, %198 : vector<8x128xf32>
    %c0_565 = arith.constant 0 : index
    %c0_566 = arith.constant 0 : index
    %1806 = vector.load %arg5[%c0_565, %c0_566] : memref<32x128xf32, #tpu.memory_space<vmem>>, vector<32x128xf32>
    %cst_567 = arith.constant dense<0.000000e+00> : vector<8x128xf32>
    %1807 = tpu.matmul %1723, %1806, %cst_567 {dimension_numbers = #tpu.dot_dimension_numbers<[1], [0], [0], [1], [0, 0, 1, 1], [], []>} : vector<8x32xf32>, vector<32x128xf32>, vector<8x128xf32> -> vector<8x128xf32>
    %1808 = arith.addf %1807, %1805 : vector<8x128xf32>
    %cst_568 = arith.constant 5.000000e-01 : f32
    %1809 = vector.broadcast %cst_568 : f32 to vector<8x128xf32>
    %1810 = arith.mulf %1809, %1808 : vector<8x128xf32>
    %1811 = math.tanh %1810 : vector<8x128xf32>
    %cst_569 = arith.constant 1.000000e+00 : f32
    %1812 = vector.broadcast %cst_569 : f32 to vector<8x128xf32>
    %1813 = arith.addf %1811, %1812 : vector<8x128xf32>
    %cst_570 = arith.constant 5.000000e-01 : f32
    %1814 = vector.broadcast %cst_570 : f32 to vector<8x128xf32>
    %1815 = arith.mulf %1814, %1813 : vector<8x128xf32>
    %1816 = math.tanh %1808 : vector<8x128xf32>
    %1817 = vector.extract_strided_slice %1815 {offsets = [0, 0], sizes = [8, 32], strides = [1, 1]} : vector<8x128xf32> to vector<8x32xf32>
    %1818 = vector.extract_strided_slice %1815 {offsets = [0, 32], sizes = [8, 32], strides = [1, 1]} : vector<8x128xf32> to vector<8x32xf32>
    %1819 = vector.extract_strided_slice %1816 {offsets = [0, 64], sizes = [8, 32], strides = [1, 1]} : vector<8x128xf32> to vector<8x32xf32>
    %1820 = vector.extract_strided_slice %1815 {offsets = [0, 96], sizes = [8, 32], strides = [1, 1]} : vector<8x128xf32> to vector<8x32xf32>
    %1821 = arith.mulf %1818, %1721 : vector<8x32xf32>
    %1822 = arith.mulf %1817, %1819 : vector<8x32xf32>
    %1823 = arith.addf %1821, %1822 : vector<8x32xf32>
    %1824 = math.tanh %1823 : vector<8x32xf32>
    %1825 = arith.mulf %1820, %1824 : vector<8x32xf32>
    %1826 = tpu.concatenate %1825, %1746 in 1 : vector<8x32xf32>, vector<8x32xf32> -> vector<8x64xf32>
    %c0_571 = arith.constant 0 : index
    %c0_572 = arith.constant 0 : index
    %c0_573 = arith.constant 0 : index
    %1827 = vector.load %arg6[%c0_571, %c0_572, %c0_573] : memref<3x64x128xf32, #tpu.memory_space<vmem>>, vector<1x64x128xf32>
    %1828 = vector.shape_cast %1827 : vector<1x64x128xf32> to vector<64x128xf32>
    %cst_574 = arith.constant dense<0.000000e+00> : vector<8x128xf32>
    %1829 = tpu.matmul %1826, %1828, %cst_574 {dimension_numbers = #tpu.dot_dimension_numbers<[1], [0], [0], [1], [0, 0, 1, 1], [], []>} : vector<8x64xf32>, vector<64x128xf32>, vector<8x128xf32> -> vector<8x128xf32>
    %1830 = vector.broadcast %3 : vector<1x128xf32> to vector<8x128xf32>
    %1831 = arith.addf %1829, %1830 : vector<8x128xf32>
    %cst_575 = arith.constant 5.000000e-01 : f32
    %1832 = vector.broadcast %cst_575 : f32 to vector<8x128xf32>
    %1833 = arith.mulf %1832, %1831 : vector<8x128xf32>
    %1834 = math.tanh %1833 : vector<8x128xf32>
    %cst_576 = arith.constant 1.000000e+00 : f32
    %1835 = vector.broadcast %cst_576 : f32 to vector<8x128xf32>
    %1836 = arith.addf %1834, %1835 : vector<8x128xf32>
    %cst_577 = arith.constant 5.000000e-01 : f32
    %1837 = vector.broadcast %cst_577 : f32 to vector<8x128xf32>
    %1838 = arith.mulf %1837, %1836 : vector<8x128xf32>
    %1839 = math.tanh %1831 : vector<8x128xf32>
    %1840 = vector.extract_strided_slice %1838 {offsets = [0, 0], sizes = [8, 32], strides = [1, 1]} : vector<8x128xf32> to vector<8x32xf32>
    %1841 = vector.extract_strided_slice %1838 {offsets = [0, 32], sizes = [8, 32], strides = [1, 1]} : vector<8x128xf32> to vector<8x32xf32>
    %1842 = vector.extract_strided_slice %1839 {offsets = [0, 64], sizes = [8, 32], strides = [1, 1]} : vector<8x128xf32> to vector<8x32xf32>
    %1843 = vector.extract_strided_slice %1838 {offsets = [0, 96], sizes = [8, 32], strides = [1, 1]} : vector<8x128xf32> to vector<8x32xf32>
    %1844 = arith.mulf %1841, %1744 : vector<8x32xf32>
    %1845 = arith.mulf %1840, %1842 : vector<8x32xf32>
    %1846 = arith.addf %1844, %1845 : vector<8x32xf32>
    %1847 = math.tanh %1846 : vector<8x32xf32>
    %1848 = arith.mulf %1843, %1847 : vector<8x32xf32>
    %1849 = tpu.concatenate %1848, %1769 in 1 : vector<8x32xf32>, vector<8x32xf32> -> vector<8x64xf32>
    %c1_578 = arith.constant 1 : index
    %c0_579 = arith.constant 0 : index
    %c0_580 = arith.constant 0 : index
    %1850 = vector.load %arg6[%c1_578, %c0_579, %c0_580] : memref<3x64x128xf32, #tpu.memory_space<vmem>>, vector<1x64x128xf32>
    %1851 = vector.shape_cast %1850 : vector<1x64x128xf32> to vector<64x128xf32>
    %cst_581 = arith.constant dense<0.000000e+00> : vector<8x128xf32>
    %1852 = tpu.matmul %1849, %1851, %cst_581 {dimension_numbers = #tpu.dot_dimension_numbers<[1], [0], [0], [1], [0, 0, 1, 1], [], []>} : vector<8x64xf32>, vector<64x128xf32>, vector<8x128xf32> -> vector<8x128xf32>
    %1853 = vector.broadcast %4 : vector<1x128xf32> to vector<8x128xf32>
    %1854 = arith.addf %1852, %1853 : vector<8x128xf32>
    %cst_582 = arith.constant 5.000000e-01 : f32
    %1855 = vector.broadcast %cst_582 : f32 to vector<8x128xf32>
    %1856 = arith.mulf %1855, %1854 : vector<8x128xf32>
    %1857 = math.tanh %1856 : vector<8x128xf32>
    %cst_583 = arith.constant 1.000000e+00 : f32
    %1858 = vector.broadcast %cst_583 : f32 to vector<8x128xf32>
    %1859 = arith.addf %1857, %1858 : vector<8x128xf32>
    %cst_584 = arith.constant 5.000000e-01 : f32
    %1860 = vector.broadcast %cst_584 : f32 to vector<8x128xf32>
    %1861 = arith.mulf %1860, %1859 : vector<8x128xf32>
    %1862 = math.tanh %1854 : vector<8x128xf32>
    %1863 = vector.extract_strided_slice %1861 {offsets = [0, 0], sizes = [8, 32], strides = [1, 1]} : vector<8x128xf32> to vector<8x32xf32>
    %1864 = vector.extract_strided_slice %1861 {offsets = [0, 32], sizes = [8, 32], strides = [1, 1]} : vector<8x128xf32> to vector<8x32xf32>
    %1865 = vector.extract_strided_slice %1862 {offsets = [0, 64], sizes = [8, 32], strides = [1, 1]} : vector<8x128xf32> to vector<8x32xf32>
    %1866 = vector.extract_strided_slice %1861 {offsets = [0, 96], sizes = [8, 32], strides = [1, 1]} : vector<8x128xf32> to vector<8x32xf32>
    %1867 = arith.mulf %1864, %1767 : vector<8x32xf32>
    %1868 = arith.mulf %1863, %1865 : vector<8x32xf32>
    %1869 = arith.addf %1867, %1868 : vector<8x32xf32>
    %1870 = math.tanh %1869 : vector<8x32xf32>
    %1871 = arith.mulf %1866, %1870 : vector<8x32xf32>
    %1872 = tpu.concatenate %1871, %1792 in 1 : vector<8x32xf32>, vector<8x32xf32> -> vector<8x64xf32>
    %c2_585 = arith.constant 2 : index
    %c0_586 = arith.constant 0 : index
    %c0_587 = arith.constant 0 : index
    %1873 = vector.load %arg6[%c2_585, %c0_586, %c0_587] : memref<3x64x128xf32, #tpu.memory_space<vmem>>, vector<1x64x128xf32>
    %1874 = vector.shape_cast %1873 : vector<1x64x128xf32> to vector<64x128xf32>
    %cst_588 = arith.constant dense<0.000000e+00> : vector<8x128xf32>
    %1875 = tpu.matmul %1872, %1874, %cst_588 {dimension_numbers = #tpu.dot_dimension_numbers<[1], [0], [0], [1], [0, 0, 1, 1], [], []>} : vector<8x64xf32>, vector<64x128xf32>, vector<8x128xf32> -> vector<8x128xf32>
    %1876 = vector.broadcast %5 : vector<1x128xf32> to vector<8x128xf32>
    %1877 = arith.addf %1875, %1876 : vector<8x128xf32>
    %cst_589 = arith.constant 5.000000e-01 : f32
    %1878 = vector.broadcast %cst_589 : f32 to vector<8x128xf32>
    %1879 = arith.mulf %1878, %1877 : vector<8x128xf32>
    %1880 = math.tanh %1879 : vector<8x128xf32>
    %cst_590 = arith.constant 1.000000e+00 : f32
    %1881 = vector.broadcast %cst_590 : f32 to vector<8x128xf32>
    %1882 = arith.addf %1880, %1881 : vector<8x128xf32>
    %cst_591 = arith.constant 5.000000e-01 : f32
    %1883 = vector.broadcast %cst_591 : f32 to vector<8x128xf32>
    %1884 = arith.mulf %1883, %1882 : vector<8x128xf32>
    %1885 = math.tanh %1877 : vector<8x128xf32>
    %1886 = vector.extract_strided_slice %1884 {offsets = [0, 0], sizes = [8, 32], strides = [1, 1]} : vector<8x128xf32> to vector<8x32xf32>
    %1887 = vector.extract_strided_slice %1884 {offsets = [0, 32], sizes = [8, 32], strides = [1, 1]} : vector<8x128xf32> to vector<8x32xf32>
    %1888 = vector.extract_strided_slice %1885 {offsets = [0, 64], sizes = [8, 32], strides = [1, 1]} : vector<8x128xf32> to vector<8x32xf32>
    %1889 = vector.extract_strided_slice %1884 {offsets = [0, 96], sizes = [8, 32], strides = [1, 1]} : vector<8x128xf32> to vector<8x32xf32>
    %1890 = arith.mulf %1887, %1790 : vector<8x32xf32>
    %1891 = arith.mulf %1886, %1888 : vector<8x32xf32>
    %1892 = arith.addf %1890, %1891 : vector<8x32xf32>
    %1893 = math.tanh %1892 : vector<8x32xf32>
    %1894 = arith.mulf %1889, %1893 : vector<8x32xf32>
    %1895 = vector.broadcast %6 : vector<1x32xf32> to vector<8x32xf32>
    %1896 = arith.mulf %1894, %1895 : vector<8x32xf32>
    %cst_592 = arith.constant dense<0.000000e+00> : vector<8xf32>
    %1897 = vector.multi_reduction <add>, %1896, %cst_592 [1] : vector<8x32xf32> to vector<8xf32>
    %1898 = vector.shape_cast %1897 : vector<8xf32> to vector<8x1xf32>
    %1899 = vector.broadcast %7 : vector<1x1xf32> to vector<8x1xf32>
    %1900 = arith.addf %1898, %1899 : vector<8x1xf32>
    %1901 = math.tanh %1900 : vector<8x1xf32>
    %1902 = arith.addf %182, %1901 : vector<8x1xf32>
    %c0_593 = arith.constant 0 : index
    %c16 = arith.constant 16 : index
    %1903 = vector.load %arg10[%c0_593, %c16] : memref<8x23xf32, #tpu.memory_space<vmem>>, vector<8x1xf32>
    tpu.vector_store %arg10[%c0_593, %c16], %1902 {strides = array<i32>} : memref<8x23xf32, #tpu.memory_space<vmem>>, vector<8x1xf32>,
    %1904 = vector.broadcast %1902 : vector<8x1xf32> to vector<8x128xf32>
    %1905 = vector.broadcast %0 : vector<1x128xf32> to vector<8x128xf32>
    %1906 = arith.mulf %1904, %1905 : vector<8x128xf32>
    %1907 = arith.addf %1906, %203 : vector<8x128xf32>
    %c0_594 = arith.constant 0 : index
    %c0_595 = arith.constant 0 : index
    %1908 = vector.load %arg5[%c0_594, %c0_595] : memref<32x128xf32, #tpu.memory_space<vmem>>, vector<32x128xf32>
    %cst_596 = arith.constant dense<0.000000e+00> : vector<8x128xf32>
    %1909 = tpu.matmul %1825, %1908, %cst_596 {dimension_numbers = #tpu.dot_dimension_numbers<[1], [0], [0], [1], [0, 0, 1, 1], [], []>} : vector<8x32xf32>, vector<32x128xf32>, vector<8x128xf32> -> vector<8x128xf32>
    %1910 = arith.addf %1909, %1907 : vector<8x128xf32>
    %cst_597 = arith.constant 5.000000e-01 : f32
    %1911 = vector.broadcast %cst_597 : f32 to vector<8x128xf32>
    %1912 = arith.mulf %1911, %1910 : vector<8x128xf32>
    %1913 = math.tanh %1912 : vector<8x128xf32>
    %cst_598 = arith.constant 1.000000e+00 : f32
    %1914 = vector.broadcast %cst_598 : f32 to vector<8x128xf32>
    %1915 = arith.addf %1913, %1914 : vector<8x128xf32>
    %cst_599 = arith.constant 5.000000e-01 : f32
    %1916 = vector.broadcast %cst_599 : f32 to vector<8x128xf32>
    %1917 = arith.mulf %1916, %1915 : vector<8x128xf32>
    %1918 = math.tanh %1910 : vector<8x128xf32>
    %1919 = vector.extract_strided_slice %1917 {offsets = [0, 0], sizes = [8, 32], strides = [1, 1]} : vector<8x128xf32> to vector<8x32xf32>
    %1920 = vector.extract_strided_slice %1917 {offsets = [0, 32], sizes = [8, 32], strides = [1, 1]} : vector<8x128xf32> to vector<8x32xf32>
    %1921 = vector.extract_strided_slice %1918 {offsets = [0, 64], sizes = [8, 32], strides = [1, 1]} : vector<8x128xf32> to vector<8x32xf32>
    %1922 = vector.extract_strided_slice %1917 {offsets = [0, 96], sizes = [8, 32], strides = [1, 1]} : vector<8x128xf32> to vector<8x32xf32>
    %1923 = arith.mulf %1920, %1823 : vector<8x32xf32>
    %1924 = arith.mulf %1919, %1921 : vector<8x32xf32>
    %1925 = arith.addf %1923, %1924 : vector<8x32xf32>
    %1926 = math.tanh %1925 : vector<8x32xf32>
    %1927 = arith.mulf %1922, %1926 : vector<8x32xf32>
    %1928 = tpu.concatenate %1927, %1848 in 1 : vector<8x32xf32>, vector<8x32xf32> -> vector<8x64xf32>
    %c0_600 = arith.constant 0 : index
    %c0_601 = arith.constant 0 : index
    %c0_602 = arith.constant 0 : index
    %1929 = vector.load %arg6[%c0_600, %c0_601, %c0_602] : memref<3x64x128xf32, #tpu.memory_space<vmem>>, vector<1x64x128xf32>
    %1930 = vector.shape_cast %1929 : vector<1x64x128xf32> to vector<64x128xf32>
    %cst_603 = arith.constant dense<0.000000e+00> : vector<8x128xf32>
    %1931 = tpu.matmul %1928, %1930, %cst_603 {dimension_numbers = #tpu.dot_dimension_numbers<[1], [0], [0], [1], [0, 0, 1, 1], [], []>} : vector<8x64xf32>, vector<64x128xf32>, vector<8x128xf32> -> vector<8x128xf32>
    %1932 = vector.broadcast %3 : vector<1x128xf32> to vector<8x128xf32>
    %1933 = arith.addf %1931, %1932 : vector<8x128xf32>
    %cst_604 = arith.constant 5.000000e-01 : f32
    %1934 = vector.broadcast %cst_604 : f32 to vector<8x128xf32>
    %1935 = arith.mulf %1934, %1933 : vector<8x128xf32>
    %1936 = math.tanh %1935 : vector<8x128xf32>
    %cst_605 = arith.constant 1.000000e+00 : f32
    %1937 = vector.broadcast %cst_605 : f32 to vector<8x128xf32>
    %1938 = arith.addf %1936, %1937 : vector<8x128xf32>
    %cst_606 = arith.constant 5.000000e-01 : f32
    %1939 = vector.broadcast %cst_606 : f32 to vector<8x128xf32>
    %1940 = arith.mulf %1939, %1938 : vector<8x128xf32>
    %1941 = math.tanh %1933 : vector<8x128xf32>
    %1942 = vector.extract_strided_slice %1940 {offsets = [0, 0], sizes = [8, 32], strides = [1, 1]} : vector<8x128xf32> to vector<8x32xf32>
    %1943 = vector.extract_strided_slice %1940 {offsets = [0, 32], sizes = [8, 32], strides = [1, 1]} : vector<8x128xf32> to vector<8x32xf32>
    %1944 = vector.extract_strided_slice %1941 {offsets = [0, 64], sizes = [8, 32], strides = [1, 1]} : vector<8x128xf32> to vector<8x32xf32>
    %1945 = vector.extract_strided_slice %1940 {offsets = [0, 96], sizes = [8, 32], strides = [1, 1]} : vector<8x128xf32> to vector<8x32xf32>
    %1946 = arith.mulf %1943, %1846 : vector<8x32xf32>
    %1947 = arith.mulf %1942, %1944 : vector<8x32xf32>
    %1948 = arith.addf %1946, %1947 : vector<8x32xf32>
    %1949 = math.tanh %1948 : vector<8x32xf32>
    %1950 = arith.mulf %1945, %1949 : vector<8x32xf32>
    %1951 = tpu.concatenate %1950, %1871 in 1 : vector<8x32xf32>, vector<8x32xf32> -> vector<8x64xf32>
    %c1_607 = arith.constant 1 : index
    %c0_608 = arith.constant 0 : index
    %c0_609 = arith.constant 0 : index
    %1952 = vector.load %arg6[%c1_607, %c0_608, %c0_609] : memref<3x64x128xf32, #tpu.memory_space<vmem>>, vector<1x64x128xf32>
    %1953 = vector.shape_cast %1952 : vector<1x64x128xf32> to vector<64x128xf32>
    %cst_610 = arith.constant dense<0.000000e+00> : vector<8x128xf32>
    %1954 = tpu.matmul %1951, %1953, %cst_610 {dimension_numbers = #tpu.dot_dimension_numbers<[1], [0], [0], [1], [0, 0, 1, 1], [], []>} : vector<8x64xf32>, vector<64x128xf32>, vector<8x128xf32> -> vector<8x128xf32>
    %1955 = vector.broadcast %4 : vector<1x128xf32> to vector<8x128xf32>
    %1956 = arith.addf %1954, %1955 : vector<8x128xf32>
    %cst_611 = arith.constant 5.000000e-01 : f32
    %1957 = vector.broadcast %cst_611 : f32 to vector<8x128xf32>
    %1958 = arith.mulf %1957, %1956 : vector<8x128xf32>
    %1959 = math.tanh %1958 : vector<8x128xf32>
    %cst_612 = arith.constant 1.000000e+00 : f32
    %1960 = vector.broadcast %cst_612 : f32 to vector<8x128xf32>
    %1961 = arith.addf %1959, %1960 : vector<8x128xf32>
    %cst_613 = arith.constant 5.000000e-01 : f32
    %1962 = vector.broadcast %cst_613 : f32 to vector<8x128xf32>
    %1963 = arith.mulf %1962, %1961 : vector<8x128xf32>
    %1964 = math.tanh %1956 : vector<8x128xf32>
    %1965 = vector.extract_strided_slice %1963 {offsets = [0, 0], sizes = [8, 32], strides = [1, 1]} : vector<8x128xf32> to vector<8x32xf32>
    %1966 = vector.extract_strided_slice %1963 {offsets = [0, 32], sizes = [8, 32], strides = [1, 1]} : vector<8x128xf32> to vector<8x32xf32>
    %1967 = vector.extract_strided_slice %1964 {offsets = [0, 64], sizes = [8, 32], strides = [1, 1]} : vector<8x128xf32> to vector<8x32xf32>
    %1968 = vector.extract_strided_slice %1963 {offsets = [0, 96], sizes = [8, 32], strides = [1, 1]} : vector<8x128xf32> to vector<8x32xf32>
    %1969 = arith.mulf %1966, %1869 : vector<8x32xf32>
    %1970 = arith.mulf %1965, %1967 : vector<8x32xf32>
    %1971 = arith.addf %1969, %1970 : vector<8x32xf32>
    %1972 = math.tanh %1971 : vector<8x32xf32>
    %1973 = arith.mulf %1968, %1972 : vector<8x32xf32>
    %1974 = tpu.concatenate %1973, %1894 in 1 : vector<8x32xf32>, vector<8x32xf32> -> vector<8x64xf32>
    %c2_614 = arith.constant 2 : index
    %c0_615 = arith.constant 0 : index
    %c0_616 = arith.constant 0 : index
    %1975 = vector.load %arg6[%c2_614, %c0_615, %c0_616] : memref<3x64x128xf32, #tpu.memory_space<vmem>>, vector<1x64x128xf32>
    %1976 = vector.shape_cast %1975 : vector<1x64x128xf32> to vector<64x128xf32>
    %cst_617 = arith.constant dense<0.000000e+00> : vector<8x128xf32>
    %1977 = tpu.matmul %1974, %1976, %cst_617 {dimension_numbers = #tpu.dot_dimension_numbers<[1], [0], [0], [1], [0, 0, 1, 1], [], []>} : vector<8x64xf32>, vector<64x128xf32>, vector<8x128xf32> -> vector<8x128xf32>
    %1978 = vector.broadcast %5 : vector<1x128xf32> to vector<8x128xf32>
    %1979 = arith.addf %1977, %1978 : vector<8x128xf32>
    %cst_618 = arith.constant 5.000000e-01 : f32
    %1980 = vector.broadcast %cst_618 : f32 to vector<8x128xf32>
    %1981 = arith.mulf %1980, %1979 : vector<8x128xf32>
    %1982 = math.tanh %1981 : vector<8x128xf32>
    %cst_619 = arith.constant 1.000000e+00 : f32
    %1983 = vector.broadcast %cst_619 : f32 to vector<8x128xf32>
    %1984 = arith.addf %1982, %1983 : vector<8x128xf32>
    %cst_620 = arith.constant 5.000000e-01 : f32
    %1985 = vector.broadcast %cst_620 : f32 to vector<8x128xf32>
    %1986 = arith.mulf %1985, %1984 : vector<8x128xf32>
    %1987 = math.tanh %1979 : vector<8x128xf32>
    %1988 = vector.extract_strided_slice %1986 {offsets = [0, 0], sizes = [8, 32], strides = [1, 1]} : vector<8x128xf32> to vector<8x32xf32>
    %1989 = vector.extract_strided_slice %1986 {offsets = [0, 32], sizes = [8, 32], strides = [1, 1]} : vector<8x128xf32> to vector<8x32xf32>
    %1990 = vector.extract_strided_slice %1987 {offsets = [0, 64], sizes = [8, 32], strides = [1, 1]} : vector<8x128xf32> to vector<8x32xf32>
    %1991 = vector.extract_strided_slice %1986 {offsets = [0, 96], sizes = [8, 32], strides = [1, 1]} : vector<8x128xf32> to vector<8x32xf32>
    %1992 = arith.mulf %1989, %1892 : vector<8x32xf32>
    %1993 = arith.mulf %1988, %1990 : vector<8x32xf32>
    %1994 = arith.addf %1992, %1993 : vector<8x32xf32>
    %1995 = math.tanh %1994 : vector<8x32xf32>
    %1996 = arith.mulf %1991, %1995 : vector<8x32xf32>
    %1997 = vector.broadcast %6 : vector<1x32xf32> to vector<8x32xf32>
    %1998 = arith.mulf %1996, %1997 : vector<8x32xf32>
    %cst_621 = arith.constant dense<0.000000e+00> : vector<8xf32>
    %1999 = vector.multi_reduction <add>, %1998, %cst_621 [1] : vector<8x32xf32> to vector<8xf32>
    %2000 = vector.shape_cast %1999 : vector<8xf32> to vector<8x1xf32>
    %2001 = vector.broadcast %7 : vector<1x1xf32> to vector<8x1xf32>
    %2002 = arith.addf %2000, %2001 : vector<8x1xf32>
    %2003 = math.tanh %2002 : vector<8x1xf32>
    %2004 = arith.addf %183, %2003 : vector<8x1xf32>
    %c0_622 = arith.constant 0 : index
    %c17 = arith.constant 17 : index
    %2005 = vector.load %arg10[%c0_622, %c17] : memref<8x23xf32, #tpu.memory_space<vmem>>, vector<8x1xf32>
    tpu.vector_store %arg10[%c0_622, %c17], %2004 {strides = array<i32>} : memref<8x23xf32, #tpu.memory_space<vmem>>, vector<8x1xf32>,
    %2006 = vector.broadcast %2004 : vector<8x1xf32> to vector<8x128xf32>
    %2007 = vector.broadcast %0 : vector<1x128xf32> to vector<8x128xf32>
    %2008 = arith.mulf %2006, %2007 : vector<8x128xf32>
    %2009 = arith.addf %2008, %208 : vector<8x128xf32>
    %c0_623 = arith.constant 0 : index
    %c0_624 = arith.constant 0 : index
    %2010 = vector.load %arg5[%c0_623, %c0_624] : memref<32x128xf32, #tpu.memory_space<vmem>>, vector<32x128xf32>
    %cst_625 = arith.constant dense<0.000000e+00> : vector<8x128xf32>
    %2011 = tpu.matmul %1927, %2010, %cst_625 {dimension_numbers = #tpu.dot_dimension_numbers<[1], [0], [0], [1], [0, 0, 1, 1], [], []>} : vector<8x32xf32>, vector<32x128xf32>, vector<8x128xf32> -> vector<8x128xf32>
    %2012 = arith.addf %2011, %2009 : vector<8x128xf32>
    %cst_626 = arith.constant 5.000000e-01 : f32
    %2013 = vector.broadcast %cst_626 : f32 to vector<8x128xf32>
    %2014 = arith.mulf %2013, %2012 : vector<8x128xf32>
    %2015 = math.tanh %2014 : vector<8x128xf32>
    %cst_627 = arith.constant 1.000000e+00 : f32
    %2016 = vector.broadcast %cst_627 : f32 to vector<8x128xf32>
    %2017 = arith.addf %2015, %2016 : vector<8x128xf32>
    %cst_628 = arith.constant 5.000000e-01 : f32
    %2018 = vector.broadcast %cst_628 : f32 to vector<8x128xf32>
    %2019 = arith.mulf %2018, %2017 : vector<8x128xf32>
    %2020 = math.tanh %2012 : vector<8x128xf32>
    %2021 = vector.extract_strided_slice %2019 {offsets = [0, 0], sizes = [8, 32], strides = [1, 1]} : vector<8x128xf32> to vector<8x32xf32>
    %2022 = vector.extract_strided_slice %2019 {offsets = [0, 32], sizes = [8, 32], strides = [1, 1]} : vector<8x128xf32> to vector<8x32xf32>
    %2023 = vector.extract_strided_slice %2020 {offsets = [0, 64], sizes = [8, 32], strides = [1, 1]} : vector<8x128xf32> to vector<8x32xf32>
    %2024 = vector.extract_strided_slice %2019 {offsets = [0, 96], sizes = [8, 32], strides = [1, 1]} : vector<8x128xf32> to vector<8x32xf32>
    %2025 = arith.mulf %2022, %1925 : vector<8x32xf32>
    %2026 = arith.mulf %2021, %2023 : vector<8x32xf32>
    %2027 = arith.addf %2025, %2026 : vector<8x32xf32>
    %2028 = math.tanh %2027 : vector<8x32xf32>
    %2029 = arith.mulf %2024, %2028 : vector<8x32xf32>
    %2030 = tpu.concatenate %2029, %1950 in 1 : vector<8x32xf32>, vector<8x32xf32> -> vector<8x64xf32>
    %c0_629 = arith.constant 0 : index
    %c0_630 = arith.constant 0 : index
    %c0_631 = arith.constant 0 : index
    %2031 = vector.load %arg6[%c0_629, %c0_630, %c0_631] : memref<3x64x128xf32, #tpu.memory_space<vmem>>, vector<1x64x128xf32>
    %2032 = vector.shape_cast %2031 : vector<1x64x128xf32> to vector<64x128xf32>
    %cst_632 = arith.constant dense<0.000000e+00> : vector<8x128xf32>
    %2033 = tpu.matmul %2030, %2032, %cst_632 {dimension_numbers = #tpu.dot_dimension_numbers<[1], [0], [0], [1], [0, 0, 1, 1], [], []>} : vector<8x64xf32>, vector<64x128xf32>, vector<8x128xf32> -> vector<8x128xf32>
    %2034 = vector.broadcast %3 : vector<1x128xf32> to vector<8x128xf32>
    %2035 = arith.addf %2033, %2034 : vector<8x128xf32>
    %cst_633 = arith.constant 5.000000e-01 : f32
    %2036 = vector.broadcast %cst_633 : f32 to vector<8x128xf32>
    %2037 = arith.mulf %2036, %2035 : vector<8x128xf32>
    %2038 = math.tanh %2037 : vector<8x128xf32>
    %cst_634 = arith.constant 1.000000e+00 : f32
    %2039 = vector.broadcast %cst_634 : f32 to vector<8x128xf32>
    %2040 = arith.addf %2038, %2039 : vector<8x128xf32>
    %cst_635 = arith.constant 5.000000e-01 : f32
    %2041 = vector.broadcast %cst_635 : f32 to vector<8x128xf32>
    %2042 = arith.mulf %2041, %2040 : vector<8x128xf32>
    %2043 = math.tanh %2035 : vector<8x128xf32>
    %2044 = vector.extract_strided_slice %2042 {offsets = [0, 0], sizes = [8, 32], strides = [1, 1]} : vector<8x128xf32> to vector<8x32xf32>
    %2045 = vector.extract_strided_slice %2042 {offsets = [0, 32], sizes = [8, 32], strides = [1, 1]} : vector<8x128xf32> to vector<8x32xf32>
    %2046 = vector.extract_strided_slice %2043 {offsets = [0, 64], sizes = [8, 32], strides = [1, 1]} : vector<8x128xf32> to vector<8x32xf32>
    %2047 = vector.extract_strided_slice %2042 {offsets = [0, 96], sizes = [8, 32], strides = [1, 1]} : vector<8x128xf32> to vector<8x32xf32>
    %2048 = arith.mulf %2045, %1948 : vector<8x32xf32>
    %2049 = arith.mulf %2044, %2046 : vector<8x32xf32>
    %2050 = arith.addf %2048, %2049 : vector<8x32xf32>
    %2051 = math.tanh %2050 : vector<8x32xf32>
    %2052 = arith.mulf %2047, %2051 : vector<8x32xf32>
    %2053 = tpu.concatenate %2052, %1973 in 1 : vector<8x32xf32>, vector<8x32xf32> -> vector<8x64xf32>
    %c1_636 = arith.constant 1 : index
    %c0_637 = arith.constant 0 : index
    %c0_638 = arith.constant 0 : index
    %2054 = vector.load %arg6[%c1_636, %c0_637, %c0_638] : memref<3x64x128xf32, #tpu.memory_space<vmem>>, vector<1x64x128xf32>
    %2055 = vector.shape_cast %2054 : vector<1x64x128xf32> to vector<64x128xf32>
    %cst_639 = arith.constant dense<0.000000e+00> : vector<8x128xf32>
    %2056 = tpu.matmul %2053, %2055, %cst_639 {dimension_numbers = #tpu.dot_dimension_numbers<[1], [0], [0], [1], [0, 0, 1, 1], [], []>} : vector<8x64xf32>, vector<64x128xf32>, vector<8x128xf32> -> vector<8x128xf32>
    %2057 = vector.broadcast %4 : vector<1x128xf32> to vector<8x128xf32>
    %2058 = arith.addf %2056, %2057 : vector<8x128xf32>
    %cst_640 = arith.constant 5.000000e-01 : f32
    %2059 = vector.broadcast %cst_640 : f32 to vector<8x128xf32>
    %2060 = arith.mulf %2059, %2058 : vector<8x128xf32>
    %2061 = math.tanh %2060 : vector<8x128xf32>
    %cst_641 = arith.constant 1.000000e+00 : f32
    %2062 = vector.broadcast %cst_641 : f32 to vector<8x128xf32>
    %2063 = arith.addf %2061, %2062 : vector<8x128xf32>
    %cst_642 = arith.constant 5.000000e-01 : f32
    %2064 = vector.broadcast %cst_642 : f32 to vector<8x128xf32>
    %2065 = arith.mulf %2064, %2063 : vector<8x128xf32>
    %2066 = math.tanh %2058 : vector<8x128xf32>
    %2067 = vector.extract_strided_slice %2065 {offsets = [0, 0], sizes = [8, 32], strides = [1, 1]} : vector<8x128xf32> to vector<8x32xf32>
    %2068 = vector.extract_strided_slice %2065 {offsets = [0, 32], sizes = [8, 32], strides = [1, 1]} : vector<8x128xf32> to vector<8x32xf32>
    %2069 = vector.extract_strided_slice %2066 {offsets = [0, 64], sizes = [8, 32], strides = [1, 1]} : vector<8x128xf32> to vector<8x32xf32>
    %2070 = vector.extract_strided_slice %2065 {offsets = [0, 96], sizes = [8, 32], strides = [1, 1]} : vector<8x128xf32> to vector<8x32xf32>
    %2071 = arith.mulf %2068, %1971 : vector<8x32xf32>
    %2072 = arith.mulf %2067, %2069 : vector<8x32xf32>
    %2073 = arith.addf %2071, %2072 : vector<8x32xf32>
    %2074 = math.tanh %2073 : vector<8x32xf32>
    %2075 = arith.mulf %2070, %2074 : vector<8x32xf32>
    %2076 = tpu.concatenate %2075, %1996 in 1 : vector<8x32xf32>, vector<8x32xf32> -> vector<8x64xf32>
    %c2_643 = arith.constant 2 : index
    %c0_644 = arith.constant 0 : index
    %c0_645 = arith.constant 0 : index
    %2077 = vector.load %arg6[%c2_643, %c0_644, %c0_645] : memref<3x64x128xf32, #tpu.memory_space<vmem>>, vector<1x64x128xf32>
    %2078 = vector.shape_cast %2077 : vector<1x64x128xf32> to vector<64x128xf32>
    %cst_646 = arith.constant dense<0.000000e+00> : vector<8x128xf32>
    %2079 = tpu.matmul %2076, %2078, %cst_646 {dimension_numbers = #tpu.dot_dimension_numbers<[1], [0], [0], [1], [0, 0, 1, 1], [], []>} : vector<8x64xf32>, vector<64x128xf32>, vector<8x128xf32> -> vector<8x128xf32>
    %2080 = vector.broadcast %5 : vector<1x128xf32> to vector<8x128xf32>
    %2081 = arith.addf %2079, %2080 : vector<8x128xf32>
    %cst_647 = arith.constant 5.000000e-01 : f32
    %2082 = vector.broadcast %cst_647 : f32 to vector<8x128xf32>
    %2083 = arith.mulf %2082, %2081 : vector<8x128xf32>
    %2084 = math.tanh %2083 : vector<8x128xf32>
    %cst_648 = arith.constant 1.000000e+00 : f32
    %2085 = vector.broadcast %cst_648 : f32 to vector<8x128xf32>
    %2086 = arith.addf %2084, %2085 : vector<8x128xf32>
    %cst_649 = arith.constant 5.000000e-01 : f32
    %2087 = vector.broadcast %cst_649 : f32 to vector<8x128xf32>
    %2088 = arith.mulf %2087, %2086 : vector<8x128xf32>
    %2089 = math.tanh %2081 : vector<8x128xf32>
    %2090 = vector.extract_strided_slice %2088 {offsets = [0, 0], sizes = [8, 32], strides = [1, 1]} : vector<8x128xf32> to vector<8x32xf32>
    %2091 = vector.extract_strided_slice %2088 {offsets = [0, 32], sizes = [8, 32], strides = [1, 1]} : vector<8x128xf32> to vector<8x32xf32>
    %2092 = vector.extract_strided_slice %2089 {offsets = [0, 64], sizes = [8, 32], strides = [1, 1]} : vector<8x128xf32> to vector<8x32xf32>
    %2093 = vector.extract_strided_slice %2088 {offsets = [0, 96], sizes = [8, 32], strides = [1, 1]} : vector<8x128xf32> to vector<8x32xf32>
    %2094 = arith.mulf %2091, %1994 : vector<8x32xf32>
    %2095 = arith.mulf %2090, %2092 : vector<8x32xf32>
    %2096 = arith.addf %2094, %2095 : vector<8x32xf32>
    %2097 = math.tanh %2096 : vector<8x32xf32>
    %2098 = arith.mulf %2093, %2097 : vector<8x32xf32>
    %2099 = vector.broadcast %6 : vector<1x32xf32> to vector<8x32xf32>
    %2100 = arith.mulf %2098, %2099 : vector<8x32xf32>
    %cst_650 = arith.constant dense<0.000000e+00> : vector<8xf32>
    %2101 = vector.multi_reduction <add>, %2100, %cst_650 [1] : vector<8x32xf32> to vector<8xf32>
    %2102 = vector.shape_cast %2101 : vector<8xf32> to vector<8x1xf32>
    %2103 = vector.broadcast %7 : vector<1x1xf32> to vector<8x1xf32>
    %2104 = arith.addf %2102, %2103 : vector<8x1xf32>
    %2105 = math.tanh %2104 : vector<8x1xf32>
    %2106 = arith.addf %184, %2105 : vector<8x1xf32>
    %c0_651 = arith.constant 0 : index
    %c18 = arith.constant 18 : index
    %2107 = vector.load %arg10[%c0_651, %c18] : memref<8x23xf32, #tpu.memory_space<vmem>>, vector<8x1xf32>
    tpu.vector_store %arg10[%c0_651, %c18], %2106 {strides = array<i32>} : memref<8x23xf32, #tpu.memory_space<vmem>>, vector<8x1xf32>,
    %2108 = vector.broadcast %2106 : vector<8x1xf32> to vector<8x128xf32>
    %2109 = vector.broadcast %0 : vector<1x128xf32> to vector<8x128xf32>
    %2110 = arith.mulf %2108, %2109 : vector<8x128xf32>
    %2111 = arith.addf %2110, %213 : vector<8x128xf32>
    %c0_652 = arith.constant 0 : index
    %c0_653 = arith.constant 0 : index
    %2112 = vector.load %arg5[%c0_652, %c0_653] : memref<32x128xf32, #tpu.memory_space<vmem>>, vector<32x128xf32>
    %cst_654 = arith.constant dense<0.000000e+00> : vector<8x128xf32>
    %2113 = tpu.matmul %2029, %2112, %cst_654 {dimension_numbers = #tpu.dot_dimension_numbers<[1], [0], [0], [1], [0, 0, 1, 1], [], []>} : vector<8x32xf32>, vector<32x128xf32>, vector<8x128xf32> -> vector<8x128xf32>
    %2114 = arith.addf %2113, %2111 : vector<8x128xf32>
    %cst_655 = arith.constant 5.000000e-01 : f32
    %2115 = vector.broadcast %cst_655 : f32 to vector<8x128xf32>
    %2116 = arith.mulf %2115, %2114 : vector<8x128xf32>
    %2117 = math.tanh %2116 : vector<8x128xf32>
    %cst_656 = arith.constant 1.000000e+00 : f32
    %2118 = vector.broadcast %cst_656 : f32 to vector<8x128xf32>
    %2119 = arith.addf %2117, %2118 : vector<8x128xf32>
    %cst_657 = arith.constant 5.000000e-01 : f32
    %2120 = vector.broadcast %cst_657 : f32 to vector<8x128xf32>
    %2121 = arith.mulf %2120, %2119 : vector<8x128xf32>
    %2122 = math.tanh %2114 : vector<8x128xf32>
    %2123 = vector.extract_strided_slice %2121 {offsets = [0, 0], sizes = [8, 32], strides = [1, 1]} : vector<8x128xf32> to vector<8x32xf32>
    %2124 = vector.extract_strided_slice %2121 {offsets = [0, 32], sizes = [8, 32], strides = [1, 1]} : vector<8x128xf32> to vector<8x32xf32>
    %2125 = vector.extract_strided_slice %2122 {offsets = [0, 64], sizes = [8, 32], strides = [1, 1]} : vector<8x128xf32> to vector<8x32xf32>
    %2126 = vector.extract_strided_slice %2121 {offsets = [0, 96], sizes = [8, 32], strides = [1, 1]} : vector<8x128xf32> to vector<8x32xf32>
    %2127 = arith.mulf %2124, %2027 : vector<8x32xf32>
    %2128 = arith.mulf %2123, %2125 : vector<8x32xf32>
    %2129 = arith.addf %2127, %2128 : vector<8x32xf32>
    %2130 = math.tanh %2129 : vector<8x32xf32>
    %2131 = arith.mulf %2126, %2130 : vector<8x32xf32>
    %2132 = tpu.concatenate %2131, %2052 in 1 : vector<8x32xf32>, vector<8x32xf32> -> vector<8x64xf32>
    %c0_658 = arith.constant 0 : index
    %c0_659 = arith.constant 0 : index
    %c0_660 = arith.constant 0 : index
    %2133 = vector.load %arg6[%c0_658, %c0_659, %c0_660] : memref<3x64x128xf32, #tpu.memory_space<vmem>>, vector<1x64x128xf32>
    %2134 = vector.shape_cast %2133 : vector<1x64x128xf32> to vector<64x128xf32>
    %cst_661 = arith.constant dense<0.000000e+00> : vector<8x128xf32>
    %2135 = tpu.matmul %2132, %2134, %cst_661 {dimension_numbers = #tpu.dot_dimension_numbers<[1], [0], [0], [1], [0, 0, 1, 1], [], []>} : vector<8x64xf32>, vector<64x128xf32>, vector<8x128xf32> -> vector<8x128xf32>
    %2136 = vector.broadcast %3 : vector<1x128xf32> to vector<8x128xf32>
    %2137 = arith.addf %2135, %2136 : vector<8x128xf32>
    %cst_662 = arith.constant 5.000000e-01 : f32
    %2138 = vector.broadcast %cst_662 : f32 to vector<8x128xf32>
    %2139 = arith.mulf %2138, %2137 : vector<8x128xf32>
    %2140 = math.tanh %2139 : vector<8x128xf32>
    %cst_663 = arith.constant 1.000000e+00 : f32
    %2141 = vector.broadcast %cst_663 : f32 to vector<8x128xf32>
    %2142 = arith.addf %2140, %2141 : vector<8x128xf32>
    %cst_664 = arith.constant 5.000000e-01 : f32
    %2143 = vector.broadcast %cst_664 : f32 to vector<8x128xf32>
    %2144 = arith.mulf %2143, %2142 : vector<8x128xf32>
    %2145 = math.tanh %2137 : vector<8x128xf32>
    %2146 = vector.extract_strided_slice %2144 {offsets = [0, 0], sizes = [8, 32], strides = [1, 1]} : vector<8x128xf32> to vector<8x32xf32>
    %2147 = vector.extract_strided_slice %2144 {offsets = [0, 32], sizes = [8, 32], strides = [1, 1]} : vector<8x128xf32> to vector<8x32xf32>
    %2148 = vector.extract_strided_slice %2145 {offsets = [0, 64], sizes = [8, 32], strides = [1, 1]} : vector<8x128xf32> to vector<8x32xf32>
    %2149 = vector.extract_strided_slice %2144 {offsets = [0, 96], sizes = [8, 32], strides = [1, 1]} : vector<8x128xf32> to vector<8x32xf32>
    %2150 = arith.mulf %2147, %2050 : vector<8x32xf32>
    %2151 = arith.mulf %2146, %2148 : vector<8x32xf32>
    %2152 = arith.addf %2150, %2151 : vector<8x32xf32>
    %2153 = math.tanh %2152 : vector<8x32xf32>
    %2154 = arith.mulf %2149, %2153 : vector<8x32xf32>
    %2155 = tpu.concatenate %2154, %2075 in 1 : vector<8x32xf32>, vector<8x32xf32> -> vector<8x64xf32>
    %c1_665 = arith.constant 1 : index
    %c0_666 = arith.constant 0 : index
    %c0_667 = arith.constant 0 : index
    %2156 = vector.load %arg6[%c1_665, %c0_666, %c0_667] : memref<3x64x128xf32, #tpu.memory_space<vmem>>, vector<1x64x128xf32>
    %2157 = vector.shape_cast %2156 : vector<1x64x128xf32> to vector<64x128xf32>
    %cst_668 = arith.constant dense<0.000000e+00> : vector<8x128xf32>
    %2158 = tpu.matmul %2155, %2157, %cst_668 {dimension_numbers = #tpu.dot_dimension_numbers<[1], [0], [0], [1], [0, 0, 1, 1], [], []>} : vector<8x64xf32>, vector<64x128xf32>, vector<8x128xf32> -> vector<8x128xf32>
    %2159 = vector.broadcast %4 : vector<1x128xf32> to vector<8x128xf32>
    %2160 = arith.addf %2158, %2159 : vector<8x128xf32>
    %cst_669 = arith.constant 5.000000e-01 : f32
    %2161 = vector.broadcast %cst_669 : f32 to vector<8x128xf32>
    %2162 = arith.mulf %2161, %2160 : vector<8x128xf32>
    %2163 = math.tanh %2162 : vector<8x128xf32>
    %cst_670 = arith.constant 1.000000e+00 : f32
    %2164 = vector.broadcast %cst_670 : f32 to vector<8x128xf32>
    %2165 = arith.addf %2163, %2164 : vector<8x128xf32>
    %cst_671 = arith.constant 5.000000e-01 : f32
    %2166 = vector.broadcast %cst_671 : f32 to vector<8x128xf32>
    %2167 = arith.mulf %2166, %2165 : vector<8x128xf32>
    %2168 = math.tanh %2160 : vector<8x128xf32>
    %2169 = vector.extract_strided_slice %2167 {offsets = [0, 0], sizes = [8, 32], strides = [1, 1]} : vector<8x128xf32> to vector<8x32xf32>
    %2170 = vector.extract_strided_slice %2167 {offsets = [0, 32], sizes = [8, 32], strides = [1, 1]} : vector<8x128xf32> to vector<8x32xf32>
    %2171 = vector.extract_strided_slice %2168 {offsets = [0, 64], sizes = [8, 32], strides = [1, 1]} : vector<8x128xf32> to vector<8x32xf32>
    %2172 = vector.extract_strided_slice %2167 {offsets = [0, 96], sizes = [8, 32], strides = [1, 1]} : vector<8x128xf32> to vector<8x32xf32>
    %2173 = arith.mulf %2170, %2073 : vector<8x32xf32>
    %2174 = arith.mulf %2169, %2171 : vector<8x32xf32>
    %2175 = arith.addf %2173, %2174 : vector<8x32xf32>
    %2176 = math.tanh %2175 : vector<8x32xf32>
    %2177 = arith.mulf %2172, %2176 : vector<8x32xf32>
    %2178 = tpu.concatenate %2177, %2098 in 1 : vector<8x32xf32>, vector<8x32xf32> -> vector<8x64xf32>
    %c2_672 = arith.constant 2 : index
    %c0_673 = arith.constant 0 : index
    %c0_674 = arith.constant 0 : index
    %2179 = vector.load %arg6[%c2_672, %c0_673, %c0_674] : memref<3x64x128xf32, #tpu.memory_space<vmem>>, vector<1x64x128xf32>
    %2180 = vector.shape_cast %2179 : vector<1x64x128xf32> to vector<64x128xf32>
    %cst_675 = arith.constant dense<0.000000e+00> : vector<8x128xf32>
    %2181 = tpu.matmul %2178, %2180, %cst_675 {dimension_numbers = #tpu.dot_dimension_numbers<[1], [0], [0], [1], [0, 0, 1, 1], [], []>} : vector<8x64xf32>, vector<64x128xf32>, vector<8x128xf32> -> vector<8x128xf32>
    %2182 = vector.broadcast %5 : vector<1x128xf32> to vector<8x128xf32>
    %2183 = arith.addf %2181, %2182 : vector<8x128xf32>
    %cst_676 = arith.constant 5.000000e-01 : f32
    %2184 = vector.broadcast %cst_676 : f32 to vector<8x128xf32>
    %2185 = arith.mulf %2184, %2183 : vector<8x128xf32>
    %2186 = math.tanh %2185 : vector<8x128xf32>
    %cst_677 = arith.constant 1.000000e+00 : f32
    %2187 = vector.broadcast %cst_677 : f32 to vector<8x128xf32>
    %2188 = arith.addf %2186, %2187 : vector<8x128xf32>
    %cst_678 = arith.constant 5.000000e-01 : f32
    %2189 = vector.broadcast %cst_678 : f32 to vector<8x128xf32>
    %2190 = arith.mulf %2189, %2188 : vector<8x128xf32>
    %2191 = math.tanh %2183 : vector<8x128xf32>
    %2192 = vector.extract_strided_slice %2190 {offsets = [0, 0], sizes = [8, 32], strides = [1, 1]} : vector<8x128xf32> to vector<8x32xf32>
    %2193 = vector.extract_strided_slice %2190 {offsets = [0, 32], sizes = [8, 32], strides = [1, 1]} : vector<8x128xf32> to vector<8x32xf32>
    %2194 = vector.extract_strided_slice %2191 {offsets = [0, 64], sizes = [8, 32], strides = [1, 1]} : vector<8x128xf32> to vector<8x32xf32>
    %2195 = vector.extract_strided_slice %2190 {offsets = [0, 96], sizes = [8, 32], strides = [1, 1]} : vector<8x128xf32> to vector<8x32xf32>
    %2196 = arith.mulf %2193, %2096 : vector<8x32xf32>
    %2197 = arith.mulf %2192, %2194 : vector<8x32xf32>
    %2198 = arith.addf %2196, %2197 : vector<8x32xf32>
    %2199 = math.tanh %2198 : vector<8x32xf32>
    %2200 = arith.mulf %2195, %2199 : vector<8x32xf32>
    %2201 = vector.broadcast %6 : vector<1x32xf32> to vector<8x32xf32>
    %2202 = arith.mulf %2200, %2201 : vector<8x32xf32>
    %cst_679 = arith.constant dense<0.000000e+00> : vector<8xf32>
    %2203 = vector.multi_reduction <add>, %2202, %cst_679 [1] : vector<8x32xf32> to vector<8xf32>
    %2204 = vector.shape_cast %2203 : vector<8xf32> to vector<8x1xf32>
    %2205 = vector.broadcast %7 : vector<1x1xf32> to vector<8x1xf32>
    %2206 = arith.addf %2204, %2205 : vector<8x1xf32>
    %2207 = math.tanh %2206 : vector<8x1xf32>
    %2208 = arith.addf %185, %2207 : vector<8x1xf32>
    %c0_680 = arith.constant 0 : index
    %c19 = arith.constant 19 : index
    %2209 = vector.load %arg10[%c0_680, %c19] : memref<8x23xf32, #tpu.memory_space<vmem>>, vector<8x1xf32>
    tpu.vector_store %arg10[%c0_680, %c19], %2208 {strides = array<i32>} : memref<8x23xf32, #tpu.memory_space<vmem>>, vector<8x1xf32>,
    %2210 = vector.broadcast %2208 : vector<8x1xf32> to vector<8x128xf32>
    %2211 = vector.broadcast %0 : vector<1x128xf32> to vector<8x128xf32>
    %2212 = arith.mulf %2210, %2211 : vector<8x128xf32>
    %2213 = arith.addf %2212, %218 : vector<8x128xf32>
    %c0_681 = arith.constant 0 : index
    %c0_682 = arith.constant 0 : index
    %2214 = vector.load %arg5[%c0_681, %c0_682] : memref<32x128xf32, #tpu.memory_space<vmem>>, vector<32x128xf32>
    %cst_683 = arith.constant dense<0.000000e+00> : vector<8x128xf32>
    %2215 = tpu.matmul %2131, %2214, %cst_683 {dimension_numbers = #tpu.dot_dimension_numbers<[1], [0], [0], [1], [0, 0, 1, 1], [], []>} : vector<8x32xf32>, vector<32x128xf32>, vector<8x128xf32> -> vector<8x128xf32>
    %2216 = arith.addf %2215, %2213 : vector<8x128xf32>
    %cst_684 = arith.constant 5.000000e-01 : f32
    %2217 = vector.broadcast %cst_684 : f32 to vector<8x128xf32>
    %2218 = arith.mulf %2217, %2216 : vector<8x128xf32>
    %2219 = math.tanh %2218 : vector<8x128xf32>
    %cst_685 = arith.constant 1.000000e+00 : f32
    %2220 = vector.broadcast %cst_685 : f32 to vector<8x128xf32>
    %2221 = arith.addf %2219, %2220 : vector<8x128xf32>
    %cst_686 = arith.constant 5.000000e-01 : f32
    %2222 = vector.broadcast %cst_686 : f32 to vector<8x128xf32>
    %2223 = arith.mulf %2222, %2221 : vector<8x128xf32>
    %2224 = math.tanh %2216 : vector<8x128xf32>
    %2225 = vector.extract_strided_slice %2223 {offsets = [0, 0], sizes = [8, 32], strides = [1, 1]} : vector<8x128xf32> to vector<8x32xf32>
    %2226 = vector.extract_strided_slice %2223 {offsets = [0, 32], sizes = [8, 32], strides = [1, 1]} : vector<8x128xf32> to vector<8x32xf32>
    %2227 = vector.extract_strided_slice %2224 {offsets = [0, 64], sizes = [8, 32], strides = [1, 1]} : vector<8x128xf32> to vector<8x32xf32>
    %2228 = vector.extract_strided_slice %2223 {offsets = [0, 96], sizes = [8, 32], strides = [1, 1]} : vector<8x128xf32> to vector<8x32xf32>
    %2229 = arith.mulf %2226, %2129 : vector<8x32xf32>
    %2230 = arith.mulf %2225, %2227 : vector<8x32xf32>
    %2231 = arith.addf %2229, %2230 : vector<8x32xf32>
    %2232 = math.tanh %2231 : vector<8x32xf32>
    %2233 = arith.mulf %2228, %2232 : vector<8x32xf32>
    %2234 = tpu.concatenate %2233, %2154 in 1 : vector<8x32xf32>, vector<8x32xf32> -> vector<8x64xf32>
    %c0_687 = arith.constant 0 : index
    %c0_688 = arith.constant 0 : index
    %c0_689 = arith.constant 0 : index
    %2235 = vector.load %arg6[%c0_687, %c0_688, %c0_689] : memref<3x64x128xf32, #tpu.memory_space<vmem>>, vector<1x64x128xf32>
    %2236 = vector.shape_cast %2235 : vector<1x64x128xf32> to vector<64x128xf32>
    %cst_690 = arith.constant dense<0.000000e+00> : vector<8x128xf32>
    %2237 = tpu.matmul %2234, %2236, %cst_690 {dimension_numbers = #tpu.dot_dimension_numbers<[1], [0], [0], [1], [0, 0, 1, 1], [], []>} : vector<8x64xf32>, vector<64x128xf32>, vector<8x128xf32> -> vector<8x128xf32>
    %2238 = vector.broadcast %3 : vector<1x128xf32> to vector<8x128xf32>
    %2239 = arith.addf %2237, %2238 : vector<8x128xf32>
    %cst_691 = arith.constant 5.000000e-01 : f32
    %2240 = vector.broadcast %cst_691 : f32 to vector<8x128xf32>
    %2241 = arith.mulf %2240, %2239 : vector<8x128xf32>
    %2242 = math.tanh %2241 : vector<8x128xf32>
    %cst_692 = arith.constant 1.000000e+00 : f32
    %2243 = vector.broadcast %cst_692 : f32 to vector<8x128xf32>
    %2244 = arith.addf %2242, %2243 : vector<8x128xf32>
    %cst_693 = arith.constant 5.000000e-01 : f32
    %2245 = vector.broadcast %cst_693 : f32 to vector<8x128xf32>
    %2246 = arith.mulf %2245, %2244 : vector<8x128xf32>
    %2247 = math.tanh %2239 : vector<8x128xf32>
    %2248 = vector.extract_strided_slice %2246 {offsets = [0, 0], sizes = [8, 32], strides = [1, 1]} : vector<8x128xf32> to vector<8x32xf32>
    %2249 = vector.extract_strided_slice %2246 {offsets = [0, 32], sizes = [8, 32], strides = [1, 1]} : vector<8x128xf32> to vector<8x32xf32>
    %2250 = vector.extract_strided_slice %2247 {offsets = [0, 64], sizes = [8, 32], strides = [1, 1]} : vector<8x128xf32> to vector<8x32xf32>
    %2251 = vector.extract_strided_slice %2246 {offsets = [0, 96], sizes = [8, 32], strides = [1, 1]} : vector<8x128xf32> to vector<8x32xf32>
    %2252 = arith.mulf %2249, %2152 : vector<8x32xf32>
    %2253 = arith.mulf %2248, %2250 : vector<8x32xf32>
    %2254 = arith.addf %2252, %2253 : vector<8x32xf32>
    %2255 = math.tanh %2254 : vector<8x32xf32>
    %2256 = arith.mulf %2251, %2255 : vector<8x32xf32>
    %2257 = tpu.concatenate %2256, %2177 in 1 : vector<8x32xf32>, vector<8x32xf32> -> vector<8x64xf32>
    %c1_694 = arith.constant 1 : index
    %c0_695 = arith.constant 0 : index
    %c0_696 = arith.constant 0 : index
    %2258 = vector.load %arg6[%c1_694, %c0_695, %c0_696] : memref<3x64x128xf32, #tpu.memory_space<vmem>>, vector<1x64x128xf32>
    %2259 = vector.shape_cast %2258 : vector<1x64x128xf32> to vector<64x128xf32>
    %cst_697 = arith.constant dense<0.000000e+00> : vector<8x128xf32>
    %2260 = tpu.matmul %2257, %2259, %cst_697 {dimension_numbers = #tpu.dot_dimension_numbers<[1], [0], [0], [1], [0, 0, 1, 1], [], []>} : vector<8x64xf32>, vector<64x128xf32>, vector<8x128xf32> -> vector<8x128xf32>
    %2261 = vector.broadcast %4 : vector<1x128xf32> to vector<8x128xf32>
    %2262 = arith.addf %2260, %2261 : vector<8x128xf32>
    %cst_698 = arith.constant 5.000000e-01 : f32
    %2263 = vector.broadcast %cst_698 : f32 to vector<8x128xf32>
    %2264 = arith.mulf %2263, %2262 : vector<8x128xf32>
    %2265 = math.tanh %2264 : vector<8x128xf32>
    %cst_699 = arith.constant 1.000000e+00 : f32
    %2266 = vector.broadcast %cst_699 : f32 to vector<8x128xf32>
    %2267 = arith.addf %2265, %2266 : vector<8x128xf32>
    %cst_700 = arith.constant 5.000000e-01 : f32
    %2268 = vector.broadcast %cst_700 : f32 to vector<8x128xf32>
    %2269 = arith.mulf %2268, %2267 : vector<8x128xf32>
    %2270 = math.tanh %2262 : vector<8x128xf32>
    %2271 = vector.extract_strided_slice %2269 {offsets = [0, 0], sizes = [8, 32], strides = [1, 1]} : vector<8x128xf32> to vector<8x32xf32>
    %2272 = vector.extract_strided_slice %2269 {offsets = [0, 32], sizes = [8, 32], strides = [1, 1]} : vector<8x128xf32> to vector<8x32xf32>
    %2273 = vector.extract_strided_slice %2270 {offsets = [0, 64], sizes = [8, 32], strides = [1, 1]} : vector<8x128xf32> to vector<8x32xf32>
    %2274 = vector.extract_strided_slice %2269 {offsets = [0, 96], sizes = [8, 32], strides = [1, 1]} : vector<8x128xf32> to vector<8x32xf32>
    %2275 = arith.mulf %2272, %2175 : vector<8x32xf32>
    %2276 = arith.mulf %2271, %2273 : vector<8x32xf32>
    %2277 = arith.addf %2275, %2276 : vector<8x32xf32>
    %2278 = math.tanh %2277 : vector<8x32xf32>
    %2279 = arith.mulf %2274, %2278 : vector<8x32xf32>
    %2280 = tpu.concatenate %2279, %2200 in 1 : vector<8x32xf32>, vector<8x32xf32> -> vector<8x64xf32>
    %c2_701 = arith.constant 2 : index
    %c0_702 = arith.constant 0 : index
    %c0_703 = arith.constant 0 : index
    %2281 = vector.load %arg6[%c2_701, %c0_702, %c0_703] : memref<3x64x128xf32, #tpu.memory_space<vmem>>, vector<1x64x128xf32>
    %2282 = vector.shape_cast %2281 : vector<1x64x128xf32> to vector<64x128xf32>
    %cst_704 = arith.constant dense<0.000000e+00> : vector<8x128xf32>
    %2283 = tpu.matmul %2280, %2282, %cst_704 {dimension_numbers = #tpu.dot_dimension_numbers<[1], [0], [0], [1], [0, 0, 1, 1], [], []>} : vector<8x64xf32>, vector<64x128xf32>, vector<8x128xf32> -> vector<8x128xf32>
    %2284 = vector.broadcast %5 : vector<1x128xf32> to vector<8x128xf32>
    %2285 = arith.addf %2283, %2284 : vector<8x128xf32>
    %cst_705 = arith.constant 5.000000e-01 : f32
    %2286 = vector.broadcast %cst_705 : f32 to vector<8x128xf32>
    %2287 = arith.mulf %2286, %2285 : vector<8x128xf32>
    %2288 = math.tanh %2287 : vector<8x128xf32>
    %cst_706 = arith.constant 1.000000e+00 : f32
    %2289 = vector.broadcast %cst_706 : f32 to vector<8x128xf32>
    %2290 = arith.addf %2288, %2289 : vector<8x128xf32>
    %cst_707 = arith.constant 5.000000e-01 : f32
    %2291 = vector.broadcast %cst_707 : f32 to vector<8x128xf32>
    %2292 = arith.mulf %2291, %2290 : vector<8x128xf32>
    %2293 = math.tanh %2285 : vector<8x128xf32>
    %2294 = vector.extract_strided_slice %2292 {offsets = [0, 0], sizes = [8, 32], strides = [1, 1]} : vector<8x128xf32> to vector<8x32xf32>
    %2295 = vector.extract_strided_slice %2292 {offsets = [0, 32], sizes = [8, 32], strides = [1, 1]} : vector<8x128xf32> to vector<8x32xf32>
    %2296 = vector.extract_strided_slice %2293 {offsets = [0, 64], sizes = [8, 32], strides = [1, 1]} : vector<8x128xf32> to vector<8x32xf32>
    %2297 = vector.extract_strided_slice %2292 {offsets = [0, 96], sizes = [8, 32], strides = [1, 1]} : vector<8x128xf32> to vector<8x32xf32>
    %2298 = arith.mulf %2295, %2198 : vector<8x32xf32>
    %2299 = arith.mulf %2294, %2296 : vector<8x32xf32>
    %2300 = arith.addf %2298, %2299 : vector<8x32xf32>
    %2301 = math.tanh %2300 : vector<8x32xf32>
    %2302 = arith.mulf %2297, %2301 : vector<8x32xf32>
    %2303 = vector.broadcast %6 : vector<1x32xf32> to vector<8x32xf32>
    %2304 = arith.mulf %2302, %2303 : vector<8x32xf32>
    %cst_708 = arith.constant dense<0.000000e+00> : vector<8xf32>
    %2305 = vector.multi_reduction <add>, %2304, %cst_708 [1] : vector<8x32xf32> to vector<8xf32>
    %2306 = vector.shape_cast %2305 : vector<8xf32> to vector<8x1xf32>
    %2307 = vector.broadcast %7 : vector<1x1xf32> to vector<8x1xf32>
    %2308 = arith.addf %2306, %2307 : vector<8x1xf32>
    %2309 = math.tanh %2308 : vector<8x1xf32>
    %2310 = arith.addf %186, %2309 : vector<8x1xf32>
    %c0_709 = arith.constant 0 : index
    %c20 = arith.constant 20 : index
    %2311 = vector.load %arg10[%c0_709, %c20] : memref<8x23xf32, #tpu.memory_space<vmem>>, vector<8x1xf32>
    tpu.vector_store %arg10[%c0_709, %c20], %2310 {strides = array<i32>} : memref<8x23xf32, #tpu.memory_space<vmem>>, vector<8x1xf32>,
    %2312 = vector.broadcast %2310 : vector<8x1xf32> to vector<8x128xf32>
    %2313 = vector.broadcast %0 : vector<1x128xf32> to vector<8x128xf32>
    %2314 = arith.mulf %2312, %2313 : vector<8x128xf32>
    %2315 = arith.addf %2314, %223 : vector<8x128xf32>
    %c0_710 = arith.constant 0 : index
    %c0_711 = arith.constant 0 : index
    %2316 = vector.load %arg5[%c0_710, %c0_711] : memref<32x128xf32, #tpu.memory_space<vmem>>, vector<32x128xf32>
    %cst_712 = arith.constant dense<0.000000e+00> : vector<8x128xf32>
    %2317 = tpu.matmul %2233, %2316, %cst_712 {dimension_numbers = #tpu.dot_dimension_numbers<[1], [0], [0], [1], [0, 0, 1, 1], [], []>} : vector<8x32xf32>, vector<32x128xf32>, vector<8x128xf32> -> vector<8x128xf32>
    %2318 = arith.addf %2317, %2315 : vector<8x128xf32>
    %cst_713 = arith.constant 5.000000e-01 : f32
    %2319 = vector.broadcast %cst_713 : f32 to vector<8x128xf32>
    %2320 = arith.mulf %2319, %2318 : vector<8x128xf32>
    %2321 = math.tanh %2320 : vector<8x128xf32>
    %cst_714 = arith.constant 1.000000e+00 : f32
    %2322 = vector.broadcast %cst_714 : f32 to vector<8x128xf32>
    %2323 = arith.addf %2321, %2322 : vector<8x128xf32>
    %cst_715 = arith.constant 5.000000e-01 : f32
    %2324 = vector.broadcast %cst_715 : f32 to vector<8x128xf32>
    %2325 = arith.mulf %2324, %2323 : vector<8x128xf32>
    %2326 = math.tanh %2318 : vector<8x128xf32>
    %2327 = vector.extract_strided_slice %2325 {offsets = [0, 0], sizes = [8, 32], strides = [1, 1]} : vector<8x128xf32> to vector<8x32xf32>
    %2328 = vector.extract_strided_slice %2325 {offsets = [0, 32], sizes = [8, 32], strides = [1, 1]} : vector<8x128xf32> to vector<8x32xf32>
    %2329 = vector.extract_strided_slice %2326 {offsets = [0, 64], sizes = [8, 32], strides = [1, 1]} : vector<8x128xf32> to vector<8x32xf32>
    %2330 = vector.extract_strided_slice %2325 {offsets = [0, 96], sizes = [8, 32], strides = [1, 1]} : vector<8x128xf32> to vector<8x32xf32>
    %2331 = arith.mulf %2328, %2231 : vector<8x32xf32>
    %2332 = arith.mulf %2327, %2329 : vector<8x32xf32>
    %2333 = arith.addf %2331, %2332 : vector<8x32xf32>
    %2334 = math.tanh %2333 : vector<8x32xf32>
    %2335 = arith.mulf %2330, %2334 : vector<8x32xf32>
    %2336 = tpu.concatenate %2335, %2256 in 1 : vector<8x32xf32>, vector<8x32xf32> -> vector<8x64xf32>
    %c0_716 = arith.constant 0 : index
    %c0_717 = arith.constant 0 : index
    %c0_718 = arith.constant 0 : index
    %2337 = vector.load %arg6[%c0_716, %c0_717, %c0_718] : memref<3x64x128xf32, #tpu.memory_space<vmem>>, vector<1x64x128xf32>
    %2338 = vector.shape_cast %2337 : vector<1x64x128xf32> to vector<64x128xf32>
    %cst_719 = arith.constant dense<0.000000e+00> : vector<8x128xf32>
    %2339 = tpu.matmul %2336, %2338, %cst_719 {dimension_numbers = #tpu.dot_dimension_numbers<[1], [0], [0], [1], [0, 0, 1, 1], [], []>} : vector<8x64xf32>, vector<64x128xf32>, vector<8x128xf32> -> vector<8x128xf32>
    %2340 = vector.broadcast %3 : vector<1x128xf32> to vector<8x128xf32>
    %2341 = arith.addf %2339, %2340 : vector<8x128xf32>
    %cst_720 = arith.constant 5.000000e-01 : f32
    %2342 = vector.broadcast %cst_720 : f32 to vector<8x128xf32>
    %2343 = arith.mulf %2342, %2341 : vector<8x128xf32>
    %2344 = math.tanh %2343 : vector<8x128xf32>
    %cst_721 = arith.constant 1.000000e+00 : f32
    %2345 = vector.broadcast %cst_721 : f32 to vector<8x128xf32>
    %2346 = arith.addf %2344, %2345 : vector<8x128xf32>
    %cst_722 = arith.constant 5.000000e-01 : f32
    %2347 = vector.broadcast %cst_722 : f32 to vector<8x128xf32>
    %2348 = arith.mulf %2347, %2346 : vector<8x128xf32>
    %2349 = math.tanh %2341 : vector<8x128xf32>
    %2350 = vector.extract_strided_slice %2348 {offsets = [0, 0], sizes = [8, 32], strides = [1, 1]} : vector<8x128xf32> to vector<8x32xf32>
    %2351 = vector.extract_strided_slice %2348 {offsets = [0, 32], sizes = [8, 32], strides = [1, 1]} : vector<8x128xf32> to vector<8x32xf32>
    %2352 = vector.extract_strided_slice %2349 {offsets = [0, 64], sizes = [8, 32], strides = [1, 1]} : vector<8x128xf32> to vector<8x32xf32>
    %2353 = vector.extract_strided_slice %2348 {offsets = [0, 96], sizes = [8, 32], strides = [1, 1]} : vector<8x128xf32> to vector<8x32xf32>
    %2354 = arith.mulf %2351, %2254 : vector<8x32xf32>
    %2355 = arith.mulf %2350, %2352 : vector<8x32xf32>
    %2356 = arith.addf %2354, %2355 : vector<8x32xf32>
    %2357 = math.tanh %2356 : vector<8x32xf32>
    %2358 = arith.mulf %2353, %2357 : vector<8x32xf32>
    %2359 = tpu.concatenate %2358, %2279 in 1 : vector<8x32xf32>, vector<8x32xf32> -> vector<8x64xf32>
    %c1_723 = arith.constant 1 : index
    %c0_724 = arith.constant 0 : index
    %c0_725 = arith.constant 0 : index
    %2360 = vector.load %arg6[%c1_723, %c0_724, %c0_725] : memref<3x64x128xf32, #tpu.memory_space<vmem>>, vector<1x64x128xf32>
    %2361 = vector.shape_cast %2360 : vector<1x64x128xf32> to vector<64x128xf32>
    %cst_726 = arith.constant dense<0.000000e+00> : vector<8x128xf32>
    %2362 = tpu.matmul %2359, %2361, %cst_726 {dimension_numbers = #tpu.dot_dimension_numbers<[1], [0], [0], [1], [0, 0, 1, 1], [], []>} : vector<8x64xf32>, vector<64x128xf32>, vector<8x128xf32> -> vector<8x128xf32>
    %2363 = vector.broadcast %4 : vector<1x128xf32> to vector<8x128xf32>
    %2364 = arith.addf %2362, %2363 : vector<8x128xf32>
    %cst_727 = arith.constant 5.000000e-01 : f32
    %2365 = vector.broadcast %cst_727 : f32 to vector<8x128xf32>
    %2366 = arith.mulf %2365, %2364 : vector<8x128xf32>
    %2367 = math.tanh %2366 : vector<8x128xf32>
    %cst_728 = arith.constant 1.000000e+00 : f32
    %2368 = vector.broadcast %cst_728 : f32 to vector<8x128xf32>
    %2369 = arith.addf %2367, %2368 : vector<8x128xf32>
    %cst_729 = arith.constant 5.000000e-01 : f32
    %2370 = vector.broadcast %cst_729 : f32 to vector<8x128xf32>
    %2371 = arith.mulf %2370, %2369 : vector<8x128xf32>
    %2372 = math.tanh %2364 : vector<8x128xf32>
    %2373 = vector.extract_strided_slice %2371 {offsets = [0, 0], sizes = [8, 32], strides = [1, 1]} : vector<8x128xf32> to vector<8x32xf32>
    %2374 = vector.extract_strided_slice %2371 {offsets = [0, 32], sizes = [8, 32], strides = [1, 1]} : vector<8x128xf32> to vector<8x32xf32>
    %2375 = vector.extract_strided_slice %2372 {offsets = [0, 64], sizes = [8, 32], strides = [1, 1]} : vector<8x128xf32> to vector<8x32xf32>
    %2376 = vector.extract_strided_slice %2371 {offsets = [0, 96], sizes = [8, 32], strides = [1, 1]} : vector<8x128xf32> to vector<8x32xf32>
    %2377 = arith.mulf %2374, %2277 : vector<8x32xf32>
    %2378 = arith.mulf %2373, %2375 : vector<8x32xf32>
    %2379 = arith.addf %2377, %2378 : vector<8x32xf32>
    %2380 = math.tanh %2379 : vector<8x32xf32>
    %2381 = arith.mulf %2376, %2380 : vector<8x32xf32>
    %2382 = tpu.concatenate %2381, %2302 in 1 : vector<8x32xf32>, vector<8x32xf32> -> vector<8x64xf32>
    %c2_730 = arith.constant 2 : index
    %c0_731 = arith.constant 0 : index
    %c0_732 = arith.constant 0 : index
    %2383 = vector.load %arg6[%c2_730, %c0_731, %c0_732] : memref<3x64x128xf32, #tpu.memory_space<vmem>>, vector<1x64x128xf32>
    %2384 = vector.shape_cast %2383 : vector<1x64x128xf32> to vector<64x128xf32>
    %cst_733 = arith.constant dense<0.000000e+00> : vector<8x128xf32>
    %2385 = tpu.matmul %2382, %2384, %cst_733 {dimension_numbers = #tpu.dot_dimension_numbers<[1], [0], [0], [1], [0, 0, 1, 1], [], []>} : vector<8x64xf32>, vector<64x128xf32>, vector<8x128xf32> -> vector<8x128xf32>
    %2386 = vector.broadcast %5 : vector<1x128xf32> to vector<8x128xf32>
    %2387 = arith.addf %2385, %2386 : vector<8x128xf32>
    %cst_734 = arith.constant 5.000000e-01 : f32
    %2388 = vector.broadcast %cst_734 : f32 to vector<8x128xf32>
    %2389 = arith.mulf %2388, %2387 : vector<8x128xf32>
    %2390 = math.tanh %2389 : vector<8x128xf32>
    %cst_735 = arith.constant 1.000000e+00 : f32
    %2391 = vector.broadcast %cst_735 : f32 to vector<8x128xf32>
    %2392 = arith.addf %2390, %2391 : vector<8x128xf32>
    %cst_736 = arith.constant 5.000000e-01 : f32
    %2393 = vector.broadcast %cst_736 : f32 to vector<8x128xf32>
    %2394 = arith.mulf %2393, %2392 : vector<8x128xf32>
    %2395 = math.tanh %2387 : vector<8x128xf32>
    %2396 = vector.extract_strided_slice %2394 {offsets = [0, 0], sizes = [8, 32], strides = [1, 1]} : vector<8x128xf32> to vector<8x32xf32>
    %2397 = vector.extract_strided_slice %2394 {offsets = [0, 32], sizes = [8, 32], strides = [1, 1]} : vector<8x128xf32> to vector<8x32xf32>
    %2398 = vector.extract_strided_slice %2395 {offsets = [0, 64], sizes = [8, 32], strides = [1, 1]} : vector<8x128xf32> to vector<8x32xf32>
    %2399 = vector.extract_strided_slice %2394 {offsets = [0, 96], sizes = [8, 32], strides = [1, 1]} : vector<8x128xf32> to vector<8x32xf32>
    %2400 = arith.mulf %2397, %2300 : vector<8x32xf32>
    %2401 = arith.mulf %2396, %2398 : vector<8x32xf32>
    %2402 = arith.addf %2400, %2401 : vector<8x32xf32>
    %2403 = math.tanh %2402 : vector<8x32xf32>
    %2404 = arith.mulf %2399, %2403 : vector<8x32xf32>
    %2405 = vector.broadcast %6 : vector<1x32xf32> to vector<8x32xf32>
    %2406 = arith.mulf %2404, %2405 : vector<8x32xf32>
    %cst_737 = arith.constant dense<0.000000e+00> : vector<8xf32>
    %2407 = vector.multi_reduction <add>, %2406, %cst_737 [1] : vector<8x32xf32> to vector<8xf32>
    %2408 = vector.shape_cast %2407 : vector<8xf32> to vector<8x1xf32>
    %2409 = vector.broadcast %7 : vector<1x1xf32> to vector<8x1xf32>
    %2410 = arith.addf %2408, %2409 : vector<8x1xf32>
    %2411 = math.tanh %2410 : vector<8x1xf32>
    %2412 = arith.addf %187, %2411 : vector<8x1xf32>
    %c0_738 = arith.constant 0 : index
    %c21 = arith.constant 21 : index
    %2413 = vector.load %arg10[%c0_738, %c21] : memref<8x23xf32, #tpu.memory_space<vmem>>, vector<8x1xf32>
    tpu.vector_store %arg10[%c0_738, %c21], %2412 {strides = array<i32>} : memref<8x23xf32, #tpu.memory_space<vmem>>, vector<8x1xf32>,
    %2414 = vector.broadcast %2412 : vector<8x1xf32> to vector<8x128xf32>
    %2415 = vector.broadcast %0 : vector<1x128xf32> to vector<8x128xf32>
    %2416 = arith.mulf %2414, %2415 : vector<8x128xf32>
    %2417 = arith.addf %2416, %228 : vector<8x128xf32>
    %c0_739 = arith.constant 0 : index
    %c0_740 = arith.constant 0 : index
    %2418 = vector.load %arg5[%c0_739, %c0_740] : memref<32x128xf32, #tpu.memory_space<vmem>>, vector<32x128xf32>
    %cst_741 = arith.constant dense<0.000000e+00> : vector<8x128xf32>
    %2419 = tpu.matmul %2335, %2418, %cst_741 {dimension_numbers = #tpu.dot_dimension_numbers<[1], [0], [0], [1], [0, 0, 1, 1], [], []>} : vector<8x32xf32>, vector<32x128xf32>, vector<8x128xf32> -> vector<8x128xf32>
    %2420 = arith.addf %2419, %2417 : vector<8x128xf32>
    %cst_742 = arith.constant 5.000000e-01 : f32
    %2421 = vector.broadcast %cst_742 : f32 to vector<8x128xf32>
    %2422 = arith.mulf %2421, %2420 : vector<8x128xf32>
    %2423 = math.tanh %2422 : vector<8x128xf32>
    %cst_743 = arith.constant 1.000000e+00 : f32
    %2424 = vector.broadcast %cst_743 : f32 to vector<8x128xf32>
    %2425 = arith.addf %2423, %2424 : vector<8x128xf32>
    %cst_744 = arith.constant 5.000000e-01 : f32
    %2426 = vector.broadcast %cst_744 : f32 to vector<8x128xf32>
    %2427 = arith.mulf %2426, %2425 : vector<8x128xf32>
    %2428 = math.tanh %2420 : vector<8x128xf32>
    %2429 = vector.extract_strided_slice %2427 {offsets = [0, 0], sizes = [8, 32], strides = [1, 1]} : vector<8x128xf32> to vector<8x32xf32>
    %2430 = vector.extract_strided_slice %2427 {offsets = [0, 32], sizes = [8, 32], strides = [1, 1]} : vector<8x128xf32> to vector<8x32xf32>
    %2431 = vector.extract_strided_slice %2428 {offsets = [0, 64], sizes = [8, 32], strides = [1, 1]} : vector<8x128xf32> to vector<8x32xf32>
    %2432 = vector.extract_strided_slice %2427 {offsets = [0, 96], sizes = [8, 32], strides = [1, 1]} : vector<8x128xf32> to vector<8x32xf32>
    %2433 = arith.mulf %2430, %2333 : vector<8x32xf32>
    %2434 = arith.mulf %2429, %2431 : vector<8x32xf32>
    %2435 = arith.addf %2433, %2434 : vector<8x32xf32>
    %2436 = math.tanh %2435 : vector<8x32xf32>
    %2437 = arith.mulf %2432, %2436 : vector<8x32xf32>
    %2438 = tpu.concatenate %2437, %2358 in 1 : vector<8x32xf32>, vector<8x32xf32> -> vector<8x64xf32>
    %c0_745 = arith.constant 0 : index
    %c0_746 = arith.constant 0 : index
    %c0_747 = arith.constant 0 : index
    %2439 = vector.load %arg6[%c0_745, %c0_746, %c0_747] : memref<3x64x128xf32, #tpu.memory_space<vmem>>, vector<1x64x128xf32>
    %2440 = vector.shape_cast %2439 : vector<1x64x128xf32> to vector<64x128xf32>
    %cst_748 = arith.constant dense<0.000000e+00> : vector<8x128xf32>
    %2441 = tpu.matmul %2438, %2440, %cst_748 {dimension_numbers = #tpu.dot_dimension_numbers<[1], [0], [0], [1], [0, 0, 1, 1], [], []>} : vector<8x64xf32>, vector<64x128xf32>, vector<8x128xf32> -> vector<8x128xf32>
    %2442 = vector.broadcast %3 : vector<1x128xf32> to vector<8x128xf32>
    %2443 = arith.addf %2441, %2442 : vector<8x128xf32>
    %cst_749 = arith.constant 5.000000e-01 : f32
    %2444 = vector.broadcast %cst_749 : f32 to vector<8x128xf32>
    %2445 = arith.mulf %2444, %2443 : vector<8x128xf32>
    %2446 = math.tanh %2445 : vector<8x128xf32>
    %cst_750 = arith.constant 1.000000e+00 : f32
    %2447 = vector.broadcast %cst_750 : f32 to vector<8x128xf32>
    %2448 = arith.addf %2446, %2447 : vector<8x128xf32>
    %cst_751 = arith.constant 5.000000e-01 : f32
    %2449 = vector.broadcast %cst_751 : f32 to vector<8x128xf32>
    %2450 = arith.mulf %2449, %2448 : vector<8x128xf32>
    %2451 = math.tanh %2443 : vector<8x128xf32>
    %2452 = vector.extract_strided_slice %2450 {offsets = [0, 0], sizes = [8, 32], strides = [1, 1]} : vector<8x128xf32> to vector<8x32xf32>
    %2453 = vector.extract_strided_slice %2450 {offsets = [0, 32], sizes = [8, 32], strides = [1, 1]} : vector<8x128xf32> to vector<8x32xf32>
    %2454 = vector.extract_strided_slice %2451 {offsets = [0, 64], sizes = [8, 32], strides = [1, 1]} : vector<8x128xf32> to vector<8x32xf32>
    %2455 = vector.extract_strided_slice %2450 {offsets = [0, 96], sizes = [8, 32], strides = [1, 1]} : vector<8x128xf32> to vector<8x32xf32>
    %2456 = arith.mulf %2453, %2356 : vector<8x32xf32>
    %2457 = arith.mulf %2452, %2454 : vector<8x32xf32>
    %2458 = arith.addf %2456, %2457 : vector<8x32xf32>
    %2459 = math.tanh %2458 : vector<8x32xf32>
    %2460 = arith.mulf %2455, %2459 : vector<8x32xf32>
    %2461 = tpu.concatenate %2460, %2381 in 1 : vector<8x32xf32>, vector<8x32xf32> -> vector<8x64xf32>
    %c1_752 = arith.constant 1 : index
    %c0_753 = arith.constant 0 : index
    %c0_754 = arith.constant 0 : index
    %2462 = vector.load %arg6[%c1_752, %c0_753, %c0_754] : memref<3x64x128xf32, #tpu.memory_space<vmem>>, vector<1x64x128xf32>
    %2463 = vector.shape_cast %2462 : vector<1x64x128xf32> to vector<64x128xf32>
    %cst_755 = arith.constant dense<0.000000e+00> : vector<8x128xf32>
    %2464 = tpu.matmul %2461, %2463, %cst_755 {dimension_numbers = #tpu.dot_dimension_numbers<[1], [0], [0], [1], [0, 0, 1, 1], [], []>} : vector<8x64xf32>, vector<64x128xf32>, vector<8x128xf32> -> vector<8x128xf32>
    %2465 = vector.broadcast %4 : vector<1x128xf32> to vector<8x128xf32>
    %2466 = arith.addf %2464, %2465 : vector<8x128xf32>
    %cst_756 = arith.constant 5.000000e-01 : f32
    %2467 = vector.broadcast %cst_756 : f32 to vector<8x128xf32>
    %2468 = arith.mulf %2467, %2466 : vector<8x128xf32>
    %2469 = math.tanh %2468 : vector<8x128xf32>
    %cst_757 = arith.constant 1.000000e+00 : f32
    %2470 = vector.broadcast %cst_757 : f32 to vector<8x128xf32>
    %2471 = arith.addf %2469, %2470 : vector<8x128xf32>
    %cst_758 = arith.constant 5.000000e-01 : f32
    %2472 = vector.broadcast %cst_758 : f32 to vector<8x128xf32>
    %2473 = arith.mulf %2472, %2471 : vector<8x128xf32>
    %2474 = math.tanh %2466 : vector<8x128xf32>
    %2475 = vector.extract_strided_slice %2473 {offsets = [0, 0], sizes = [8, 32], strides = [1, 1]} : vector<8x128xf32> to vector<8x32xf32>
    %2476 = vector.extract_strided_slice %2473 {offsets = [0, 32], sizes = [8, 32], strides = [1, 1]} : vector<8x128xf32> to vector<8x32xf32>
    %2477 = vector.extract_strided_slice %2474 {offsets = [0, 64], sizes = [8, 32], strides = [1, 1]} : vector<8x128xf32> to vector<8x32xf32>
    %2478 = vector.extract_strided_slice %2473 {offsets = [0, 96], sizes = [8, 32], strides = [1, 1]} : vector<8x128xf32> to vector<8x32xf32>
    %2479 = arith.mulf %2476, %2379 : vector<8x32xf32>
    %2480 = arith.mulf %2475, %2477 : vector<8x32xf32>
    %2481 = arith.addf %2479, %2480 : vector<8x32xf32>
    %2482 = math.tanh %2481 : vector<8x32xf32>
    %2483 = arith.mulf %2478, %2482 : vector<8x32xf32>
    %2484 = tpu.concatenate %2483, %2404 in 1 : vector<8x32xf32>, vector<8x32xf32> -> vector<8x64xf32>
    %c2_759 = arith.constant 2 : index
    %c0_760 = arith.constant 0 : index
    %c0_761 = arith.constant 0 : index
    %2485 = vector.load %arg6[%c2_759, %c0_760, %c0_761] : memref<3x64x128xf32, #tpu.memory_space<vmem>>, vector<1x64x128xf32>
    %2486 = vector.shape_cast %2485 : vector<1x64x128xf32> to vector<64x128xf32>
    %cst_762 = arith.constant dense<0.000000e+00> : vector<8x128xf32>
    %2487 = tpu.matmul %2484, %2486, %cst_762 {dimension_numbers = #tpu.dot_dimension_numbers<[1], [0], [0], [1], [0, 0, 1, 1], [], []>} : vector<8x64xf32>, vector<64x128xf32>, vector<8x128xf32> -> vector<8x128xf32>
    %2488 = vector.broadcast %5 : vector<1x128xf32> to vector<8x128xf32>
    %2489 = arith.addf %2487, %2488 : vector<8x128xf32>
    %cst_763 = arith.constant 5.000000e-01 : f32
    %2490 = vector.broadcast %cst_763 : f32 to vector<8x128xf32>
    %2491 = arith.mulf %2490, %2489 : vector<8x128xf32>
    %2492 = math.tanh %2491 : vector<8x128xf32>
    %cst_764 = arith.constant 1.000000e+00 : f32
    %2493 = vector.broadcast %cst_764 : f32 to vector<8x128xf32>
    %2494 = arith.addf %2492, %2493 : vector<8x128xf32>
    %cst_765 = arith.constant 5.000000e-01 : f32
    %2495 = vector.broadcast %cst_765 : f32 to vector<8x128xf32>
    %2496 = arith.mulf %2495, %2494 : vector<8x128xf32>
    %2497 = math.tanh %2489 : vector<8x128xf32>
    %2498 = vector.extract_strided_slice %2496 {offsets = [0, 0], sizes = [8, 32], strides = [1, 1]} : vector<8x128xf32> to vector<8x32xf32>
    %2499 = vector.extract_strided_slice %2496 {offsets = [0, 32], sizes = [8, 32], strides = [1, 1]} : vector<8x128xf32> to vector<8x32xf32>
    %2500 = vector.extract_strided_slice %2497 {offsets = [0, 64], sizes = [8, 32], strides = [1, 1]} : vector<8x128xf32> to vector<8x32xf32>
    %2501 = vector.extract_strided_slice %2496 {offsets = [0, 96], sizes = [8, 32], strides = [1, 1]} : vector<8x128xf32> to vector<8x32xf32>
    %2502 = arith.mulf %2499, %2402 : vector<8x32xf32>
    %2503 = arith.mulf %2498, %2500 : vector<8x32xf32>
    %2504 = arith.addf %2502, %2503 : vector<8x32xf32>
    %2505 = math.tanh %2504 : vector<8x32xf32>
    %2506 = arith.mulf %2501, %2505 : vector<8x32xf32>
    %2507 = vector.broadcast %6 : vector<1x32xf32> to vector<8x32xf32>
    %2508 = arith.mulf %2506, %2507 : vector<8x32xf32>
    %cst_766 = arith.constant dense<0.000000e+00> : vector<8xf32>
    %2509 = vector.multi_reduction <add>, %2508, %cst_766 [1] : vector<8x32xf32> to vector<8xf32>
    %2510 = vector.shape_cast %2509 : vector<8xf32> to vector<8x1xf32>
    %2511 = vector.broadcast %7 : vector<1x1xf32> to vector<8x1xf32>
    %2512 = arith.addf %2510, %2511 : vector<8x1xf32>
    %2513 = math.tanh %2512 : vector<8x1xf32>
    %2514 = arith.addf %188, %2513 : vector<8x1xf32>
    %c0_767 = arith.constant 0 : index
    %c22 = arith.constant 22 : index
    %2515 = vector.load %arg10[%c0_767, %c22] : memref<8x23xf32, #tpu.memory_space<vmem>>, vector<8x1xf32>
    tpu.vector_store %arg10[%c0_767, %c22], %2514 {strides = array<i32>} : memref<8x23xf32, #tpu.memory_space<vmem>>, vector<8x1xf32>,
    return
  }
  func.func @transform_0(%arg0: i32) -> (i32, i32) {
    %c0_i32 = arith.constant 0 : i32
    %c0_i32_0 = arith.constant 0 : i32
    return %arg0, %c0_i32 : i32, i32
  }
  func.func @transform_1(%arg0: i32) -> (i32, i32) {
    %c0_i32 = arith.constant 0 : i32
    %c0_i32_0 = arith.constant 0 : i32
    return %arg0, %c0_i32 : i32, i32
  }
  func.func @transform_2(%arg0: i32) -> (i32, i32) {
    %c0_i32 = arith.constant 0 : i32
    %c0_i32_0 = arith.constant 0 : i32
    return %arg0, %c0_i32 : i32, i32
  }
  func.func @transform_3(%arg0: i32) -> (i32, i32) {
    %c0_i32 = arith.constant 0 : i32
    %c0_i32_0 = arith.constant 0 : i32
    %c0_i32_1 = arith.constant 0 : i32
    return %c0_i32, %c0_i32_0 : i32, i32
  }
  func.func @transform_4(%arg0: i32) -> (i32, i32) {
    %c0_i32 = arith.constant 0 : i32
    %c0_i32_0 = arith.constant 0 : i32
    %c0_i32_1 = arith.constant 0 : i32
    return %c0_i32, %c0_i32_0 : i32, i32
  }
  func.func @transform_5(%arg0: i32) -> (i32, i32, i32) {
    %c0_i32 = arith.constant 0 : i32
    %c0_i32_0 = arith.constant 0 : i32
    %c0_i32_1 = arith.constant 0 : i32
    %c0_i32_2 = arith.constant 0 : i32
    return %c0_i32, %c0_i32_0, %c0_i32_1 : i32, i32, i32
  }
  func.func @transform_6(%arg0: i32) -> (i32, i32) {
    %c0_i32 = arith.constant 0 : i32
    %c0_i32_0 = arith.constant 0 : i32
    %c0_i32_1 = arith.constant 0 : i32
    return %c0_i32, %c0_i32_0 : i32, i32
  }
  func.func @transform_7(%arg0: i32) -> (i32, i32) {
    %c0_i32 = arith.constant 0 : i32
    %c0_i32_0 = arith.constant 0 : i32
    %c0_i32_1 = arith.constant 0 : i32
    return %c0_i32, %c0_i32_0 : i32, i32
  }
  func.func @transform_8(%arg0: i32) -> (i32, i32) {
    %c0_i32 = arith.constant 0 : i32
    %c0_i32_0 = arith.constant 0 : i32
    %c0_i32_1 = arith.constant 0 : i32
    return %c0_i32, %c0_i32_0 : i32, i32
  }
  func.func @transform_9(%arg0: i32) -> (i32, i32) {
    %c0_i32 = arith.constant 0 : i32
    %c0_i32_0 = arith.constant 0 : i32
    return %arg0, %c0_i32 : i32, i32
  }
}

</mosaic_0001>

<llo_original>
// kernel: tpu_custom_call.1
$region0: #{tpu_custom_call.1}
  #allocation0 [shape = 'u32[]', space=smem, size = 0x4, offset = 0x4, fixed_abs, tag = 'smem constant byte address 0x4 - core index']
  #allocation1 [shape = 'u32[72,128]{1,0:T(1,128)}', space=vmem, size = 0x9000, scoped, tag = 'internal scratch']
  #allocation2 [shape = 'f32[1,1]{1,0:T(1,128)S(1)}', space=vmem, size = 0x200, scoped, tag = 'scoped memory for tpu_custom_call.1']
  %s0 = inlined_call_operand.hbm [shape: f32[8,16], index: 0, kind: input, shape index: {}]
  %s1 = inlined_call_operand.hbm [shape: f32[8,16], index: 1, kind: input, shape index: {}]
  %s2 = inlined_call_operand.hbm [shape: f32[8,8], index: 2, kind: input, shape index: {}]
  %s3 = inlined_call_operand.vmem [shape: f32[2,128], index: 3, kind: input, shape index: {}]
  %s4 = inlined_call_operand.hbm [shape: f32[32,128], index: 4, kind: input, shape index: {}]
  %s5 = inlined_call_operand.hbm [shape: f32[3,64,128], index: 5, kind: input, shape index: {}]
  %s6 = inlined_call_operand.vmem [shape: f32[4,128], index: 6, kind: input, shape index: {}]
  %s7 = inlined_call_operand.vmem [shape: f32[1,32], index: 7, kind: input, shape index: {}]
  %s8 = inlined_call_operand.<no memory space> [shape: f32[1,1], index: 8, kind: input, shape index: {}]
  %s9 = inlined_call_operand.hbm [shape: f32[8,23], index: 9, kind: output, shape index: {}]
  %s10 = sld [smem:[#allocation0]]
  $region66: #{tpu_custom_call.1} parent=0
    _
  %s12 = ssub.s32 1, %s10
  %s13 = scalar_select 0, %s12, %s10
  %v14 = vstv %s8
  %15 = vst [vmem:[#allocation2] sm:$0x1] %v14
  $region1: #{tpu_custom_call.1} parent=0
    #allocation3 [shape = 'u8[4096]{0}', space=vmem, size = 0x1000, scoped, tag = 'input window, operand 0, single buffered']
    #allocation4 [shape = 's32[1]{0}', space=sflag, size = 0x4, scoped, tag = 'scoped memory for tpu_custom_call.1']
    #allocation5 [shape = 's32[1]{0}', space=sflag, size = 0x4, scoped, tag = 'scoped memory for tpu_custom_call.1']
    #allocation6 [shape = 'u8[4096]{0}', space=vmem, size = 0x1000, scoped, tag = 'input window, operand 1, single buffered']
    #allocation7 [shape = 's32[1]{0}', space=sflag, size = 0x4, scoped, tag = 'scoped memory for tpu_custom_call.1']
    #allocation8 [shape = 'u8[4096]{0}', space=vmem, size = 0x1000, scoped, tag = 'input window, operand 2, single buffered']
    #allocation9 [shape = 'u8[16384]{0}', space=vmem, size = 0x4000, scoped, tag = 'input window, operand 4, single buffered']
    #allocation10 [shape = 's32[1]{0}', space=sflag, size = 0x4, scoped, tag = 'scoped memory for tpu_custom_call.1']
    #allocation11 [shape = 'u8[98304]{0}', space=vmem, size = 0x18000, scoped, tag = 'input window, operand 5, single buffered']
    #allocation12 [shape = 'u8[4096]{0}', space=vmem, size = 0x1000, scoped, tag = 'output window, operand 0, single buffered']
    %16 = vsyncpa [#allocation4], 0
    %17 = vsyncpa [#allocation7], 0
    %18 = vsyncpa [#allocation10], 0
    %19 = vsyncpa [#allocation5], 0
    // Predicated region
    $region2: #{tpu_custom_call.1} parent=1 // pred_check
      _
    $region3: #{tpu_custom_call.1} parent=1 // pred_check_branch
      %21 = sbr.rel (0) target = $region5
    $region4: #{tpu_custom_call.1} parent=1 // pred_region
      %23 = vsyncadd [#allocation4], 0
      %s25 = sshll.u32 %s0, 4
      %s26 = int_to_ptr.hbm [resolvable:$true] %s25
      %s27 = sshll.u32 [#allocation3], 4
      %s28 = int_to_ptr.vmem [resolvable:$true] %s27
      %30 = dma.hbm_to_vmem [thread:$0]  %s26, 128, %s28, [#allocation4]
    $region5: #{tpu_custom_call.1} parent=1 // pred_fallthru
      _
    // Predicated region
    $region6: #{tpu_custom_call.1} parent=1 // pred_check
      _
    $region7: #{tpu_custom_call.1} parent=1 // pred_check_branch
      %32 = sbr.rel (0) target = $region9
    $region8: #{tpu_custom_call.1} parent=1 // pred_region
      %34 = vsyncadd [#allocation7], 0
      %s36 = sshll.u32 %s1, 4
      %s37 = int_to_ptr.hbm [resolvable:$true] %s36
      %s38 = sshll.u32 [#allocation6], 4
      %s39 = int_to_ptr.vmem [resolvable:$true] %s38
      %41 = dma.hbm_to_vmem [thread:$0]  %s37, 128, %s39, [#allocation7]
    $region9: #{tpu_custom_call.1} parent=1 // pred_fallthru
      _
    // Predicated region
    $region10: #{tpu_custom_call.1} parent=1 // pred_check
      _
    $region11: #{tpu_custom_call.1} parent=1 // pred_check_branch
      %43 = sbr.rel (0) target = $region13
    $region12: #{tpu_custom_call.1} parent=1 // pred_region
      %45 = vsyncadd [#allocation7], 0
      %s47 = sshll.u32 %s2, 4
      %s48 = int_to_ptr.hbm [resolvable:$true] %s47
      %s49 = sshll.u32 [#allocation8], 4
      %s50 = int_to_ptr.vmem [resolvable:$true] %s49
      %52 = dma.hbm_to_vmem [thread:$0]  %s48, 128, %s50, [#allocation7]
    $region13: #{tpu_custom_call.1} parent=1 // pred_fallthru
      _
    // Predicated region
    $region14: #{tpu_custom_call.1} parent=1 // pred_check
      _
    $region15: #{tpu_custom_call.1} parent=1 // pred_check_branch
      %54 = sbr.rel (0) target = $region17
    $region16: #{tpu_custom_call.1} parent=1 // pred_region
      _
    $region17: #{tpu_custom_call.1} parent=1 // pred_fallthru
      _
    // Predicated region
    $region18: #{tpu_custom_call.1} parent=1 // pred_check
      _
    $region19: #{tpu_custom_call.1} parent=1 // pred_check_branch
      %56 = sbr.rel (0) target = $region21
    $region20: #{tpu_custom_call.1} parent=1 // pred_region
      %58 = vsyncadd [#allocation10], 0
      %s59 = sshll.u32 %s4, 4
      %s60 = int_to_ptr.hbm [resolvable:$true] %s59
      %s61 = sshll.u32 [#allocation9], 4
      %s62 = int_to_ptr.vmem [resolvable:$true] %s61
      %67 = dma.hbm_to_vmem [thread:$0]  %s60, 512, %s62, [#allocation10], 128, 128, 8
    $region21: #{tpu_custom_call.1} parent=1 // pred_fallthru
      _
    // Predicated region
    $region22: #{tpu_custom_call.1} parent=1 // pred_check
      _
    $region23: #{tpu_custom_call.1} parent=1 // pred_check_branch
      %69 = sbr.rel (0) target = $region25
    $region24: #{tpu_custom_call.1} parent=1 // pred_region
      %71 = vsyncadd [#allocation10], 0
      %s72 = sshll.u32 %s5, 4
      %s73 = int_to_ptr.hbm [resolvable:$true] %s72
      %s74 = sshll.u32 [#allocation11], 4
      %s75 = int_to_ptr.vmem [resolvable:$true] %s74
      %80 = dma.hbm_to_vmem [thread:$0]  %s73, 3072, %s75, [#allocation10], 128, 128, 8
    $region25: #{tpu_custom_call.1} parent=1 // pred_fallthru
      _
    // Predicated region
    $region26: #{tpu_custom_call.1} parent=1 // pred_check
      _
    $region27: #{tpu_custom_call.1} parent=1 // pred_check_branch
      %82 = sbr.rel (0) target = $region29
    $region28: #{tpu_custom_call.1} parent=1 // pred_region
      _
    $region29: #{tpu_custom_call.1} parent=1 // pred_fallthru
      _
    // Predicated region
    $region30: #{tpu_custom_call.1} parent=1 // pred_check
      _
    $region31: #{tpu_custom_call.1} parent=1 // pred_check_branch
      %84 = sbr.rel (0) target = $region33
    $region32: #{tpu_custom_call.1} parent=1 // pred_region
      _
    $region33: #{tpu_custom_call.1} parent=1 // pred_fallthru
      _
    // Predicated region
    $region34: #{tpu_custom_call.1} parent=1 // pred_check
      _
    $region35: #{tpu_custom_call.1} parent=1 // pred_check_branch
      %86 = sbr.rel (0) target = $region37
    $region36: #{tpu_custom_call.1} parent=1 // pred_region
      _
    $region37: #{tpu_custom_call.1} parent=1 // pred_fallthru
      _
    // Predicated region
    $region38: #{tpu_custom_call.1} parent=1 // pred_check
      _
    $region39: #{tpu_custom_call.1} parent=1 // pred_check_branch
      %88 = sbr.rel (0) target = $region41
    $region40: #{tpu_custom_call.1} parent=1 // pred_region
      %90 = dma.done [#allocation4], 128
    $region41: #{tpu_custom_call.1} parent=1 // pred_fallthru
      _
    // Predicated region
    $region42: #{tpu_custom_call.1} parent=1 // pred_check
      _
    $region43: #{tpu_custom_call.1} parent=1 // pred_check_branch
      %92 = sbr.rel (0) target = $region45
    $region44: #{tpu_custom_call.1} parent=1 // pred_region
      %94 = dma.done [#allocation7], 128
    $region45: #{tpu_custom_call.1} parent=1 // pred_fallthru
      _
    // Predicated region
    $region46: #{tpu_custom_call.1} parent=1 // pred_check
      _
    $region47: #{tpu_custom_call.1} parent=1 // pred_check_branch
      %96 = sbr.rel (0) target = $region49
    $region48: #{tpu_custom_call.1} parent=1 // pred_region
      %98 = dma.done [#allocation7], 128
    $region49: #{tpu_custom_call.1} parent=1 // pred_fallthru
      _
    // Predicated region
    $region50: #{tpu_custom_call.1} parent=1 // pred_check
      _
    $region51: #{tpu_custom_call.1} parent=1 // pred_check_branch
      %100 = sbr.rel (0) target = $region53
    $region52: #{tpu_custom_call.1} parent=1 // pred_region
      %102 = dma.done [#allocation10], 512
    $region53: #{tpu_custom_call.1} parent=1 // pred_fallthru
      _
    // Predicated region
    $region54: #{tpu_custom_call.1} parent=1 // pred_check
      _
    $region55: #{tpu_custom_call.1} parent=1 // pred_check_branch
      %104 = sbr.rel (0) target = $region57
    $region56: #{tpu_custom_call.1} parent=1 // pred_region
      %106 = dma.done [#allocation10], 3072
    $region57: #{tpu_custom_call.1} parent=1 // pred_fallthru
      _
    %v107 = vld [vmem:[%s3] sm:$0x1]
    %v108 = vld [vmem:[%s3 + $0x1] sm:$0x1]
    %v109 = vld [vmem:[%s6] sm:$0x1]
    %v110 = vld [vmem:[%s6 + $0x1] sm:$0x1]
    %v111 = vld [vmem:[%s6 + $0x2] sm:$0x1]
    %v112 = vld [vmem:[%s6 + $0x3] sm:$0x1]
    %v113 = vld [vmem:[%s7] sm:$0x1]
    %v114 = vld [vmem:[#allocation2] sm:$0x1]
    %v115 = vld [vmem:[#allocation6] sm:$0xff]
    %v116 = vld [vmem:[#allocation3] sm:$0xff]
    %118 = vset.pattern.permute.xlu0 0
    %119 = vperm.xlu0 %118, %v116
    %v120 = vpop.permute.xlu0 %119
    %v122 = vperm.slane %v107, 0
    %v123 = vmul.f32 %v120, %v122
    %125 = vset.pattern.permute.xlu0 1
    %126 = vperm.xlu0 %125, %v115
    %v127 = vpop.permute.xlu0 %126
    %v129 = vperm.slane %v108, 0
    %v130 = vmul.f32 %v127, %v129
    %v131 = vadd.f32 %v123, %v130
    %v132 = vperm.slane %v109, 0
    %v133 = vadd.f32 %v131, %v132
    %134 = vset.pattern.permute.xlu0 1
    %135 = vperm.xlu0 %134, %v116
    %v136 = vpop.permute.xlu0 %135
    %v138 = vmul.f32 %v136, %v122
    %139 = vset.pattern.permute.xlu0 2
    %140 = vperm.xlu0 %139, %v115
    %v141 = vpop.permute.xlu0 %140
    %v143 = vmul.f32 %v141, %v129
    %v144 = vadd.f32 %v138, %v143
    %v145 = vadd.f32 %v144, %v132
    %146 = vset.pattern.permute.xlu0 2
    %147 = vperm.xlu0 %146, %v116
    %v148 = vpop.permute.xlu0 %147
    %v150 = vmul.f32 %v148, %v122
    %151 = vset.pattern.permute.xlu0 3
    %152 = vperm.xlu0 %151, %v115
    %v153 = vpop.permute.xlu0 %152
    %v155 = vmul.f32 %v153, %v129
    %v156 = vadd.f32 %v150, %v155
    %v157 = vadd.f32 %v156, %v132
    %158 = vset.pattern.permute.xlu0 3
    %159 = vperm.xlu0 %158, %v116
    %v160 = vpop.permute.xlu0 %159
    %v162 = vmul.f32 %v160, %v122
    %163 = vset.pattern.permute.xlu0 4
    %164 = vperm.xlu0 %163, %v115
    %v165 = vpop.permute.xlu0 %164
    %v167 = vmul.f32 %v165, %v129
    %v168 = vadd.f32 %v162, %v167
    %v169 = vadd.f32 %v168, %v132
    %170 = vset.pattern.permute.xlu0 4
    %171 = vperm.xlu0 %170, %v116
    %v172 = vpop.permute.xlu0 %171
    %v174 = vmul.f32 %v172, %v122
    %175 = vset.pattern.permute.xlu0 5
    %176 = vperm.xlu0 %175, %v115
    %v177 = vpop.permute.xlu0 %176
    %v179 = vmul.f32 %v177, %v129
    %v180 = vadd.f32 %v174, %v179
    %v181 = vadd.f32 %v180, %v132
    %182 = vset.pattern.permute.xlu0 5
    %183 = vperm.xlu0 %182, %v116
    %v184 = vpop.permute.xlu0 %183
    %v186 = vmul.f32 %v184, %v122
    %187 = vset.pattern.permute.xlu0 6
    %188 = vperm.xlu0 %187, %v115
    %v189 = vpop.permute.xlu0 %188
    %v191 = vmul.f32 %v189, %v129
    %v192 = vadd.f32 %v186, %v191
    %v193 = vadd.f32 %v192, %v132
    %194 = vset.pattern.permute.xlu0 6
    %195 = vperm.xlu0 %194, %v116
    %v196 = vpop.permute.xlu0 %195
    %v198 = vmul.f32 %v196, %v122
    %199 = vset.pattern.permute.xlu0 7
    %200 = vperm.xlu0 %199, %v115
    %v201 = vpop.permute.xlu0 %200
    %v203 = vmul.f32 %v201, %v129
    %v204 = vadd.f32 %v198, %v203
    %v205 = vadd.f32 %v204, %v132
    %206 = vset.pattern.permute.xlu0 7
    %207 = vperm.xlu0 %206, %v116
    %v208 = vpop.permute.xlu0 %207
    %v210 = vmul.f32 %v208, %v122
    %211 = vset.pattern.permute.xlu0 8
    %212 = vperm.xlu0 %211, %v115
    %v213 = vpop.permute.xlu0 %212
    %v215 = vmul.f32 %v213, %v129
    %v216 = vadd.f32 %v210, %v215
    %v217 = vadd.f32 %v216, %v132
    %218 = vset.pattern.permute.xlu0 8
    %219 = vperm.xlu0 %218, %v116
    %v220 = vpop.permute.xlu0 %219
    %v222 = vmul.f32 %v220, %v122
    %223 = vset.pattern.permute.xlu0 9
    %224 = vperm.xlu0 %223, %v115
    %v225 = vpop.permute.xlu0 %224
    %v227 = vmul.f32 %v225, %v129
    %v228 = vadd.f32 %v222, %v227
    %v229 = vadd.f32 %v228, %v132
    %230 = vset.pattern.permute.xlu0 9
    %231 = vperm.xlu0 %230, %v116
    %v232 = vpop.permute.xlu0 %231
    %v234 = vmul.f32 %v232, %v122
    %235 = vset.pattern.permute.xlu0 10
    %236 = vperm.xlu0 %235, %v115
    %v237 = vpop.permute.xlu0 %236
    %v239 = vmul.f32 %v237, %v129
    %v240 = vadd.f32 %v234, %v239
    %v241 = vadd.f32 %v240, %v132
    %242 = vset.pattern.permute.xlu0 10
    %243 = vperm.xlu0 %242, %v116
    %v244 = vpop.permute.xlu0 %243
    %v246 = vmul.f32 %v244, %v122
    %247 = vset.pattern.permute.xlu0 11
    %248 = vperm.xlu0 %247, %v115
    %v249 = vpop.permute.xlu0 %248
    %v251 = vmul.f32 %v249, %v129
    %v252 = vadd.f32 %v246, %v251
    %v253 = vadd.f32 %v252, %v132
    %254 = vset.pattern.permute.xlu0 11
    %255 = vperm.xlu0 %254, %v116
    %v256 = vpop.permute.xlu0 %255
    %v258 = vmul.f32 %v256, %v122
    %259 = vset.pattern.permute.xlu0 12
    %260 = vperm.xlu0 %259, %v115
    %v261 = vpop.permute.xlu0 %260
    %v263 = vmul.f32 %v261, %v129
    %v264 = vadd.f32 %v258, %v263
    %v265 = vadd.f32 %v264, %v132
    %266 = vset.pattern.permute.xlu0 12
    %267 = vperm.xlu0 %266, %v116
    %v268 = vpop.permute.xlu0 %267
    %v270 = vmul.f32 %v268, %v122
    %271 = vset.pattern.permute.xlu0 13
    %272 = vperm.xlu0 %271, %v115
    %v273 = vpop.permute.xlu0 %272
    %v275 = vmul.f32 %v273, %v129
    %v276 = vadd.f32 %v270, %v275
    %v277 = vadd.f32 %v276, %v132
    %278 = vset.pattern.permute.xlu0 13
    %279 = vperm.xlu0 %278, %v116
    %v280 = vpop.permute.xlu0 %279
    %v282 = vmul.f32 %v280, %v122
    %283 = vset.pattern.permute.xlu0 14
    %284 = vperm.xlu0 %283, %v115
    %v285 = vpop.permute.xlu0 %284
    %v287 = vmul.f32 %v285, %v129
    %v288 = vadd.f32 %v282, %v287
    %v289 = vadd.f32 %v288, %v132
    %290 = vset.pattern.permute.xlu0 14
    %291 = vperm.xlu0 %290, %v116
    %v292 = vpop.permute.xlu0 %291
    %v294 = vmul.f32 %v292, %v122
    %295 = vset.pattern.permute.xlu0 15
    %296 = vperm.xlu0 %295, %v115
    %v297 = vpop.permute.xlu0 %296
    %v299 = vmul.f32 %v297, %v129
    %v300 = vadd.f32 %v294, %v299
    %v301 = vadd.f32 %v300, %v132
    %v302 = vld [vmem:[#allocation8] sm:$0xff]
    %304 = vset.pattern.permute.xlu0 0
    %305 = vperm.xlu0 %304, %v302
    %v306 = vpop.permute.xlu0 %305
    %v308 = vmul.f32 %v306, %v129
    %v309 = vadd.f32 %v308, %v132
    %310 = vset.pattern.permute.xlu0 1
    %311 = vperm.xlu0 %310, %v302
    %v312 = vpop.permute.xlu0 %311
    %v314 = vmul.f32 %v312, %v129
    %v315 = vadd.f32 %v314, %v132
    %316 = vset.pattern.permute.xlu0 2
    %317 = vperm.xlu0 %316, %v302
    %v318 = vpop.permute.xlu0 %317
    %v320 = vmul.f32 %v318, %v129
    %v321 = vadd.f32 %v320, %v132
    %322 = vset.pattern.permute.xlu0 3
    %323 = vperm.xlu0 %322, %v302
    %v324 = vpop.permute.xlu0 %323
    %v326 = vmul.f32 %v324, %v129
    %v327 = vadd.f32 %v326, %v132
    %328 = vset.pattern.permute.xlu0 4
    %329 = vperm.xlu0 %328, %v302
    %v330 = vpop.permute.xlu0 %329
    %v332 = vmul.f32 %v330, %v129
    %v333 = vadd.f32 %v332, %v132
    %334 = vset.pattern.permute.xlu0 5
    %335 = vperm.xlu0 %334, %v302
    %v336 = vpop.permute.xlu0 %335
    %v338 = vmul.f32 %v336, %v129
    %v339 = vadd.f32 %v338, %v132
    %340 = vset.pattern.permute.xlu0 6
    %341 = vperm.xlu0 %340, %v302
    %v342 = vpop.permute.xlu0 %341
    %v344 = vmul.f32 %v342, %v129
    %v345 = vadd.f32 %v344, %v132
    %346 = vset.pattern.permute.xlu0 7
    %347 = vperm.xlu0 %346, %v302
    %v348 = vpop.permute.xlu0 %347
    %v350 = vmul.f32 %v348, %v129
    %v351 = vadd.f32 %v350, %v132
    %v352 = vld [vmem:[#allocation9] sm:$0xff]
    %v353 = vld [vmem:[#allocation9 + $0x8] sm:$0xff]
    %v354 = vld [vmem:[#allocation9 + $0x10] sm:$0xff]
    %v355 = vld [vmem:[#allocation9 + $0x18] sm:$0xff]
    %vm356 = vcmask 261120
    %v358 = vsel %vm356, 0.0, 0
    %360 = vmatpush.msra.mxu0 0.0
    %361 = vmatpush.msra.mxu0 0.0
    %362 = vmatpush.msra.mxu0 0.0
    %363 = vmatpush.msra.mxu0 0.0
    %364 = vmatpush.msra.mxu0 0.0
    %365 = vmatpush.msra.mxu0 0.0
    %366 = vmatpush.msra.mxu0 0.0
    %367 = vmatpush.msra.mxu0 0.0
    %368 = vmatpush.msra.mxu0 0.0
    %369 = vmatpush.msra.mxu0 0.0
    %370 = vmatpush.msra.mxu0 0.0
    %371 = vmatpush.msra.mxu0 0.0
    %372 = vmatpush.msra.mxu0 %v355
    %373 = vmatpush.msra.mxu0 %v354
    %374 = vmatpush.msra.mxu0 %v353
    %375 = vmatpush.msra.mxu0 %v352
    %376 = vmatmul.f32.gmra.mxu0 %v358
    %v377 = vpop.f32.mrf.mxu0
    %v378 = vadd.f32 %v133, %v377
    %379 = vdwg.mxu0
    %v380 = vmul.f32 %v378, 0.5
    %v381 = vtanh.pop %v380
    %v382 = vadd.f32 %v381, 1.0
    %v383 = vmul.f32 %v382, 0.5
    %v384 = vtanh.pop %v378
    %v385 = vmul.f32 %v383, 0.0
    %387 = vrot.lane.b32.xlu0 %v384, 64
    %v388 = vpop.permute.xlu0 %387
    %v390 = vmul.f32 %v383, %v388
    %392 = vrot.lane.b32.xlu0 %v390, 32
    %v393 = vpop.permute.xlu0 %392
    %v395 = vadd.f32 %v385, %v393
    %v396 = vtanh.pop %v395
    %398 = vrot.lane.b32.xlu0 %v396, 64
    %v399 = vpop.permute.xlu0 %398
    %v401 = vmul.f32 %v383, %v399
    %403 = vrot.lane.b32.xlu0 %v401, 32
    %v404 = vpop.permute.xlu0 %403
    %v406 = vsel %vm356, %v404, 0.0
    %v407 = vld [vmem:[#allocation11] sm:$0xff]
    %v408 = vld [vmem:[#allocation11 + $0x8] sm:$0xff]
    %v409 = vld [vmem:[#allocation11 + $0x10] sm:$0xff]
    %v410 = vld [vmem:[#allocation11 + $0x18] sm:$0xff]
    %v411 = vld [vmem:[#allocation11 + $0x20] sm:$0xff]
    %v412 = vld [vmem:[#allocation11 + $0x28] sm:$0xff]
    %v413 = vld [vmem:[#allocation11 + $0x30] sm:$0xff]
    %v414 = vld [vmem:[#allocation11 + $0x38] sm:$0xff]
    %v415 = vperm.slane %v110, 0
    %vm416 = vcmask 523264
    %v418 = vsel %vm416, %v406, 0
    %420 = vmatpush.msra.mxu0 0.0
    %421 = vmatpush.msra.mxu0 0.0
    %422 = vmatpush.msra.mxu0 0.0
    %423 = vmatpush.msra.mxu0 0.0
    %424 = vmatpush.msra.mxu0 0.0
    %425 = vmatpush.msra.mxu0 0.0
    %426 = vmatpush.msra.mxu0 0.0
    %427 = vmatpush.msra.mxu0 0.0
    %428 = vmatpush.msra.mxu0 %v414
    %429 = vmatpush.msra.mxu0 %v413
    %430 = vmatpush.msra.mxu0 %v412
    %431 = vmatpush.msra.mxu0 %v411
    %432 = vmatpush.msra.mxu0 %v410
    %433 = vmatpush.msra.mxu0 %v409
    %434 = vmatpush.msra.mxu0 %v408
    %435 = vmatpush.msra.mxu0 %v407
    %436 = vmatmul.f32.gmra.mxu0 %v418
    %v437 = vpop.f32.mrf.mxu0
    %v438 = vadd.f32 %v415, %v437
    %439 = vdwg.mxu0
    %v440 = vmul.f32 %v438, 0.5
    %v441 = vtanh.pop %v440
    %v442 = vadd.f32 %v441, 1.0
    %v443 = vmul.f32 %v442, 0.5
    %v444 = vtanh.pop %v438
    %v445 = vmul.f32 %v443, 0.0
    %447 = vrot.lane.b32.xlu0 %v444, 64
    %v448 = vpop.permute.xlu0 %447
    %v450 = vmul.f32 %v443, %v448
    %452 = vrot.lane.b32.xlu0 %v450, 32
    %v453 = vpop.permute.xlu0 %452
    %v455 = vadd.f32 %v445, %v453
    %v456 = vtanh.pop %v455
    %458 = vrot.lane.b32.xlu0 %v456, 64
    %v459 = vpop.permute.xlu0 %458
    %v461 = vmul.f32 %v443, %v459
    %463 = vrot.lane.b32.xlu0 %v461, 32
    %v464 = vpop.permute.xlu0 %463
    %v466 = vsel %vm356, %v464, 0.0
    %s467 = scalar_lea.vmem [#allocation11], 64
    %v468 = vld [vmem:[%s467] sm:$0xff]
    %v469 = vld [vmem:[%s467 + $0x8] sm:$0xff]
    %v470 = vld [vmem:[%s467 + $0x10] sm:$0xff]
    %v471 = vld [vmem:[%s467 + $0x18] sm:$0xff]
    %v472 = vld [vmem:[%s467 + $0x20] sm:$0xff]
    %v473 = vld [vmem:[%s467 + $0x28] sm:$0xff]
    %v474 = vld [vmem:[%s467 + $0x30] sm:$0xff]
    %v475 = vld [vmem:[%s467 + $0x38] sm:$0xff]
    %v476 = vperm.slane %v111, 0
    %v478 = vsel %vm416, %v466, 0
    %480 = vmatpush.msra.mxu0 0.0
    %481 = vmatpush.msra.mxu0 0.0
    %482 = vmatpush.msra.mxu0 0.0
    %483 = vmatpush.msra.mxu0 0.0
    %484 = vmatpush.msra.mxu0 0.0
    %485 = vmatpush.msra.mxu0 0.0
    %486 = vmatpush.msra.mxu0 0.0
    %487 = vmatpush.msra.mxu0 0.0
    %488 = vmatpush.msra.mxu0 %v475
    %489 = vmatpush.msra.mxu0 %v474
    %490 = vmatpush.msra.mxu0 %v473
    %491 = vmatpush.msra.mxu0 %v472
    %492 = vmatpush.msra.mxu0 %v471
    %493 = vmatpush.msra.mxu0 %v470
    %494 = vmatpush.msra.mxu0 %v469
    %495 = vmatpush.msra.mxu0 %v468
    %496 = vmatmul.f32.gmra.mxu0 %v478
    %v497 = vpop.f32.mrf.mxu0
    %v498 = vadd.f32 %v476, %v497
    %499 = vdwg.mxu0
    %v500 = vmul.f32 %v498, 0.5
    %v501 = vtanh.pop %v500
    %v502 = vadd.f32 %v501, 1.0
    %v503 = vmul.f32 %v502, 0.5
    %v504 = vtanh.pop %v498
    %v505 = vmul.f32 %v503, 0.0
    %507 = vrot.lane.b32.xlu0 %v504, 64
    %v508 = vpop.permute.xlu0 %507
    %v510 = vmul.f32 %v503, %v508
    %512 = vrot.lane.b32.xlu0 %v510, 32
    %v513 = vpop.permute.xlu0 %512
    %v515 = vadd.f32 %v505, %v513
    %v516 = vtanh.pop %v515
    %518 = vrot.lane.b32.xlu0 %v516, 64
    %v519 = vpop.permute.xlu0 %518
    %v521 = vmul.f32 %v503, %v519
    %523 = vrot.lane.b32.xlu0 %v521, 32
    %v524 = vpop.permute.xlu0 %523
    %v526 = vsel %vm356, %v524, 0.0
    %s527 = scalar_lea.vmem [#allocation11], 128
    %v528 = vld [vmem:[%s527] sm:$0xff]
    %v529 = vld [vmem:[%s527 + $0x8] sm:$0xff]
    %v530 = vld [vmem:[%s527 + $0x10] sm:$0xff]
    %v531 = vld [vmem:[%s527 + $0x18] sm:$0xff]
    %v532 = vld [vmem:[%s527 + $0x20] sm:$0xff]
    %v533 = vld [vmem:[%s527 + $0x28] sm:$0xff]
    %v534 = vld [vmem:[%s527 + $0x30] sm:$0xff]
    %v535 = vld [vmem:[%s527 + $0x38] sm:$0xff]
    %v536 = vperm.slane %v112, 0
    %v538 = vsel %vm416, %v526, 0
    %540 = vmatpush.msra.mxu0 0.0
    %541 = vmatpush.msra.mxu0 0.0
    %542 = vmatpush.msra.mxu0 0.0
    %543 = vmatpush.msra.mxu0 0.0
    %544 = vmatpush.msra.mxu0 0.0
    %545 = vmatpush.msra.mxu0 0.0
    %546 = vmatpush.msra.mxu0 0.0
    %547 = vmatpush.msra.mxu0 0.0
    %548 = vmatpush.msra.mxu0 %v535
    %549 = vmatpush.msra.mxu0 %v534
    %550 = vmatpush.msra.mxu0 %v533
    %551 = vmatpush.msra.mxu0 %v532
    %552 = vmatpush.msra.mxu0 %v531
    %553 = vmatpush.msra.mxu0 %v530
    %554 = vmatpush.msra.mxu0 %v529
    %555 = vmatpush.msra.mxu0 %v528
    %556 = vmatmul.f32.gmra.mxu0 %v538
    %v557 = vpop.f32.mrf.mxu0
    %v558 = vadd.f32 %v536, %v557
    %559 = vdwg.mxu0
    %v560 = vmul.f32 %v558, 0.5
    %v561 = vtanh.pop %v560
    %v562 = vadd.f32 %v561, 1.0
    %v563 = vmul.f32 %v562, 0.5
    %v564 = vtanh.pop %v558
    %v565 = vmul.f32 %v563, 0.0
    %567 = vrot.lane.b32.xlu0 %v564, 64
    %v568 = vpop.permute.xlu0 %567
    %v570 = vmul.f32 %v563, %v568
    %572 = vrot.lane.b32.xlu0 %v570, 32
    %v573 = vpop.permute.xlu0 %572
    %v575 = vadd.f32 %v565, %v573
    %v576 = vtanh.pop %v575
    %578 = vrot.lane.b32.xlu0 %v576, 64
    %v579 = vpop.permute.xlu0 %578
    %v581 = vmul.f32 %v563, %v579
    %v583 = vperm.slane %v113, 0
    %584 = vrot.lane.b32.xlu0 %v583, 96
    %v585 = vpop.permute.xlu0 %584
    %v587 = vmul.f32 %v581, %v585
    %589 = vrot.lane.b32.xlu0 %v587, 32
    %v590 = vpop.permute.xlu0 %589
    %v592 = vsel %vm356, %v590, 0.0
    %593 = vadd.xlane.f32.xlu0 %v592
    %v594 = vpop.xlane.xlu0 %593
    %v596 = vperm.slane %v114, 0
    %v598 = vadd.f32 %v594, %v596
    %v599 = vtanh.pop %v598
    %601 = vrot.lane.b32.xlu0 %v599, 1
    %v602 = vpop.permute.xlu0 %601
    %v604 = vadd.f32 %v115, %v602
    %606 = vrot.lane.b32.xlu0 %v604, 127
    %v607 = vpop.permute.xlu0 %606
    %vm609 = vcmask 7168
    %610 = vst.msk [vmem:[#allocation12] sm:$0xff] %vm609, %v607
    %v611 = vld [vmem:[#allocation9] sm:$0xff]
    %v612 = vld [vmem:[#allocation9 + $0x8] sm:$0xff]
    %v613 = vld [vmem:[#allocation9 + $0x10] sm:$0xff]
    %v614 = vld [vmem:[#allocation9 + $0x18] sm:$0xff]
    %v615 = vsel %vm356, %v404, 0
    %617 = vmatpush.msra.mxu0 0.0
    %618 = vmatpush.msra.mxu0 0.0
    %619 = vmatpush.msra.mxu0 0.0
    %620 = vmatpush.msra.mxu0 0.0
    %621 = vmatpush.msra.mxu0 0.0
    %622 = vmatpush.msra.mxu0 0.0
    %623 = vmatpush.msra.mxu0 0.0
    %624 = vmatpush.msra.mxu0 0.0
    %625 = vmatpush.msra.mxu0 0.0
    %626 = vmatpush.msra.mxu0 0.0
    %627 = vmatpush.msra.mxu0 0.0
    %628 = vmatpush.msra.mxu0 0.0
    %629 = vmatpush.msra.mxu0 %v614
    %630 = vmatpush.msra.mxu0 %v613
    %631 = vmatpush.msra.mxu0 %v612
    %632 = vmatpush.msra.mxu0 %v611
    %633 = vmatmul.f32.gmra.mxu0 %v615
    %v634 = vpop.f32.mrf.mxu0
    %v635 = vadd.f32 %v145, %v634
    %636 = vdwg.mxu0
    %v637 = vmul.f32 %v635, 0.5
    %v638 = vtanh.pop %v637
    %v639 = vadd.f32 %v638, 1.0
    %v640 = vmul.f32 %v639, 0.5
    %v641 = vtanh.pop %v635
    %v642 = vmul.f32 %v640, %v395
    %644 = vrot.lane.b32.xlu0 %v641, 64
    %v645 = vpop.permute.xlu0 %644
    %v647 = vmul.f32 %v640, %v645
    %649 = vrot.lane.b32.xlu0 %v647, 32
    %v650 = vpop.permute.xlu0 %649
    %v652 = vadd.f32 %v642, %v650
    %v653 = vtanh.pop %v652
    %655 = vrot.lane.b32.xlu0 %v653, 64
    %v656 = vpop.permute.xlu0 %655
    %v658 = vmul.f32 %v640, %v656
    %660 = vrot.lane.b32.xlu0 %v658, 32
    %v661 = vpop.permute.xlu0 %660
    %663 = vrot.lane.b32.xlu0 %v461, 64
    %v664 = vpop.permute.xlu0 %663
    %v666 = vsel %vm356, %v661, %v664
    %v667 = vld [vmem:[#allocation11] sm:$0xff]
    %v668 = vld [vmem:[#allocation11 + $0x8] sm:$0xff]
    %v669 = vld [vmem:[#allocation11 + $0x10] sm:$0xff]
    %v670 = vld [vmem:[#allocation11 + $0x18] sm:$0xff]
    %v671 = vld [vmem:[#allocation11 + $0x20] sm:$0xff]
    %v672 = vld [vmem:[#allocation11 + $0x28] sm:$0xff]
    %v673 = vld [vmem:[#allocation11 + $0x30] sm:$0xff]
    %v674 = vld [vmem:[#allocation11 + $0x38] sm:$0xff]
    %v676 = vsel %vm416, %v666, 0
    %678 = vmatpush.msra.mxu0 0.0
    %679 = vmatpush.msra.mxu0 0.0
    %680 = vmatpush.msra.mxu0 0.0
    %681 = vmatpush.msra.mxu0 0.0
    %682 = vmatpush.msra.mxu0 0.0
    %683 = vmatpush.msra.mxu0 0.0
    %684 = vmatpush.msra.mxu0 0.0
    %685 = vmatpush.msra.mxu0 0.0
    %686 = vmatpush.msra.mxu0 %v674
    %687 = vmatpush.msra.mxu0 %v673
    %688 = vmatpush.msra.mxu0 %v672
    %689 = vmatpush.msra.mxu0 %v671
    %690 = vmatpush.msra.mxu0 %v670
    %691 = vmatpush.msra.mxu0 %v669
    %692 = vmatpush.msra.mxu0 %v668
    %693 = vmatpush.msra.mxu0 %v667
    %694 = vmatmul.f32.gmra.mxu0 %v676
    %v695 = vpop.f32.mrf.mxu0
    %v696 = vadd.f32 %v415, %v695
    %697 = vdwg.mxu0
    %v698 = vmul.f32 %v696, 0.5
    %v699 = vtanh.pop %v698
    %v700 = vadd.f32 %v699, 1.0
    %v701 = vmul.f32 %v700, 0.5
    %v702 = vtanh.pop %v696
    %v703 = vmul.f32 %v701, %v455
    %705 = vrot.lane.b32.xlu0 %v702, 64
    %v706 = vpop.permute.xlu0 %705
    %v708 = vmul.f32 %v701, %v706
    %710 = vrot.lane.b32.xlu0 %v708, 32
    %v711 = vpop.permute.xlu0 %710
    %v713 = vadd.f32 %v703, %v711
    %v714 = vtanh.pop %v713
    %716 = vrot.lane.b32.xlu0 %v714, 64
    %v717 = vpop.permute.xlu0 %716
    %v719 = vmul.f32 %v701, %v717
    %721 = vrot.lane.b32.xlu0 %v719, 32
    %v722 = vpop.permute.xlu0 %721
    %724 = vrot.lane.b32.xlu0 %v521, 64
    %v725 = vpop.permute.xlu0 %724
    %v727 = vsel %vm356, %v722, %v725
    %v728 = vld [vmem:[%s467] sm:$0xff]
    %v729 = vld [vmem:[%s467 + $0x8] sm:$0xff]
    %v730 = vld [vmem:[%s467 + $0x10] sm:$0xff]
    %v731 = vld [vmem:[%s467 + $0x18] sm:$0xff]
    %v732 = vld [vmem:[%s467 + $0x20] sm:$0xff]
    %v733 = vld [vmem:[%s467 + $0x28] sm:$0xff]
    %v734 = vld [vmem:[%s467 + $0x30] sm:$0xff]
    %v735 = vld [vmem:[%s467 + $0x38] sm:$0xff]
    %v737 = vsel %vm416, %v727, 0
    %739 = vmatpush.msra.mxu0 0.0
    %740 = vmatpush.msra.mxu0 0.0
    %741 = vmatpush.msra.mxu0 0.0
    %742 = vmatpush.msra.mxu0 0.0
    %743 = vmatpush.msra.mxu0 0.0
    %744 = vmatpush.msra.mxu0 0.0
    %745 = vmatpush.msra.mxu0 0.0
    %746 = vmatpush.msra.mxu0 0.0
    %747 = vmatpush.msra.mxu0 %v735
    %748 = vmatpush.msra.mxu0 %v734
    %749 = vmatpush.msra.mxu0 %v733
    %750 = vmatpush.msra.mxu0 %v732
    %751 = vmatpush.msra.mxu0 %v731
    %752 = vmatpush.msra.mxu0 %v730
    %753 = vmatpush.msra.mxu0 %v729
    %754 = vmatpush.msra.mxu0 %v728
    %755 = vmatmul.f32.gmra.mxu0 %v737
    %v756 = vpop.f32.mrf.mxu0
    %v757 = vadd.f32 %v476, %v756
    %758 = vdwg.mxu0
    %v759 = vmul.f32 %v757, 0.5
    %v760 = vtanh.pop %v759
    %v761 = vadd.f32 %v760, 1.0
    %v762 = vmul.f32 %v761, 0.5
    %v763 = vtanh.pop %v757
    %v764 = vmul.f32 %v762, %v515
    %766 = vrot.lane.b32.xlu0 %v763, 64
    %v767 = vpop.permute.xlu0 %766
    %v769 = vmul.f32 %v762, %v767
    %771 = vrot.lane.b32.xlu0 %v769, 32
    %v772 = vpop.permute.xlu0 %771
    %v774 = vadd.f32 %v764, %v772
    %v775 = vtanh.pop %v774
    %777 = vrot.lane.b32.xlu0 %v775, 64
    %v778 = vpop.permute.xlu0 %777
    %v780 = vmul.f32 %v762, %v778
    %782 = vrot.lane.b32.xlu0 %v780, 32
    %v783 = vpop.permute.xlu0 %782
    %786 = vrot.lane.b32.xlu0 %v581, 64
    %v787 = vpop.permute.xlu0 %786
    %v789 = vsel %vm356, %v783, %v787
    %v790 = vld [vmem:[%s527] sm:$0xff]
    %v791 = vld [vmem:[%s527 + $0x8] sm:$0xff]
    %v792 = vld [vmem:[%s527 + $0x10] sm:$0xff]
    %v793 = vld [vmem:[%s527 + $0x18] sm:$0xff]
    %v794 = vld [vmem:[%s527 + $0x20] sm:$0xff]
    %v795 = vld [vmem:[%s527 + $0x28] sm:$0xff]
    %v796 = vld [vmem:[%s527 + $0x30] sm:$0xff]
    %v797 = vld [vmem:[%s527 + $0x38] sm:$0xff]
    %v799 = vsel %vm416, %v789, 0
    %801 = vmatpush.msra.mxu0 0.0
    %802 = vmatpush.msra.mxu0 0.0
    %803 = vmatpush.msra.mxu0 0.0
    %804 = vmatpush.msra.mxu0 0.0
    %805 = vmatpush.msra.mxu0 0.0
    %806 = vmatpush.msra.mxu0 0.0
    %807 = vmatpush.msra.mxu0 0.0
    %808 = vmatpush.msra.mxu0 0.0
    %809 = vmatpush.msra.mxu0 %v797
    %810 = vmatpush.msra.mxu0 %v796
    %811 = vmatpush.msra.mxu0 %v795
    %812 = vmatpush.msra.mxu0 %v794
    %813 = vmatpush.msra.mxu0 %v793
    %814 = vmatpush.msra.mxu0 %v792
    %815 = vmatpush.msra.mxu0 %v791
    %816 = vmatpush.msra.mxu0 %v790
    %817 = vmatmul.f32.gmra.mxu0 %v799
    %v818 = vpop.f32.mrf.mxu0
    %v819 = vadd.f32 %v536, %v818
    %820 = vdwg.mxu0
    %v821 = vmul.f32 %v819, 0.5
    %v822 = vtanh.pop %v821
    %v823 = vadd.f32 %v822, 1.0
    %v824 = vmul.f32 %v823, 0.5
    %v825 = vtanh.pop %v819
    %v826 = vmul.f32 %v824, %v575
    %828 = vrot.lane.b32.xlu0 %v825, 64
    %v829 = vpop.permute.xlu0 %828
    %v831 = vmul.f32 %v824, %v829
    %833 = vrot.lane.b32.xlu0 %v831, 32
    %v834 = vpop.permute.xlu0 %833
    %v836 = vadd.f32 %v826, %v834
    %v837 = vtanh.pop %v836
    %839 = vrot.lane.b32.xlu0 %v837, 64
    %v840 = vpop.permute.xlu0 %839
    %v842 = vmul.f32 %v824, %v840
    %v843 = vmul.f32 %v842, %v585
    %845 = vrot.lane.b32.xlu0 %v843, 32
    %v846 = vpop.permute.xlu0 %845
    %v848 = vsel %vm356, %v846, 0.0
    %849 = vadd.xlane.f32.xlu0 %v848
    %v850 = vpop.xlane.xlu0 %849
    %v851 = vadd.f32 %v850, %v596
    %v852 = vtanh.pop %v851
    %854 = vrot.lane.b32.xlu0 %v852, 2
    %v855 = vpop.permute.xlu0 %854
    %v857 = vadd.f32 %v115, %v855
    %859 = vrot.lane.b32.xlu0 %v857, 127
    %v860 = vpop.permute.xlu0 %859
    %vm862 = vcmask 15368
    %863 = vst.msk [vmem:[#allocation12] sm:$0xff] %vm862, %v860
    %v864 = vld [vmem:[#allocation9] sm:$0xff]
    %v865 = vld [vmem:[#allocation9 + $0x8] sm:$0xff]
    %v866 = vld [vmem:[#allocation9 + $0x10] sm:$0xff]
    %v867 = vld [vmem:[#allocation9 + $0x18] sm:$0xff]
    %v868 = vsel %vm356, %v661, 0
    %870 = vmatpush.msra.mxu0 0.0
    %871 = vmatpush.msra.mxu0 0.0
    %872 = vmatpush.msra.mxu0 0.0
    %873 = vmatpush.msra.mxu0 0.0
    %874 = vmatpush.msra.mxu0 0.0
    %875 = vmatpush.msra.mxu0 0.0
    %876 = vmatpush.msra.mxu0 0.0
    %877 = vmatpush.msra.mxu0 0.0
    %878 = vmatpush.msra.mxu0 0.0
    %879 = vmatpush.msra.mxu0 0.0
    %880 = vmatpush.msra.mxu0 0.0
    %881 = vmatpush.msra.mxu0 0.0
    %882 = vmatpush.msra.mxu0 %v867
    %883 = vmatpush.msra.mxu0 %v866
    %884 = vmatpush.msra.mxu0 %v865
    %885 = vmatpush.msra.mxu0 %v864
    %886 = vmatmul.f32.gmra.mxu0 %v868
    %v887 = vpop.f32.mrf.mxu0
    %v888 = vadd.f32 %v157, %v887
    %889 = vdwg.mxu0
    %v890 = vmul.f32 %v888, 0.5
    %v891 = vtanh.pop %v890
    %v892 = vadd.f32 %v891, 1.0
    %v893 = vmul.f32 %v892, 0.5
    %v894 = vtanh.pop %v888
    %v895 = vmul.f32 %v893, %v652
    %897 = vrot.lane.b32.xlu0 %v894, 64
    %v898 = vpop.permute.xlu0 %897
    %v900 = vmul.f32 %v893, %v898
    %902 = vrot.lane.b32.xlu0 %v900, 32
    %v903 = vpop.permute.xlu0 %902
    %v905 = vadd.f32 %v895, %v903
    %v906 = vtanh.pop %v905
    %908 = vrot.lane.b32.xlu0 %v906, 64
    %v909 = vpop.permute.xlu0 %908
    %v911 = vmul.f32 %v893, %v909
    %913 = vrot.lane.b32.xlu0 %v911, 32
    %v914 = vpop.permute.xlu0 %913
    %916 = vrot.lane.b32.xlu0 %v719, 64
    %v917 = vpop.permute.xlu0 %916
    %v919 = vsel %vm356, %v914, %v917
    %v920 = vld [vmem:[#allocation11] sm:$0xff]
    %v921 = vld [vmem:[#allocation11 + $0x8] sm:$0xff]
    %v922 = vld [vmem:[#allocation11 + $0x10] sm:$0xff]
    %v923 = vld [vmem:[#allocation11 + $0x18] sm:$0xff]
    %v924 = vld [vmem:[#allocation11 + $0x20] sm:$0xff]
    %v925 = vld [vmem:[#allocation11 + $0x28] sm:$0xff]
    %v926 = vld [vmem:[#allocation11 + $0x30] sm:$0xff]
    %v927 = vld [vmem:[#allocation11 + $0x38] sm:$0xff]
    %v929 = vsel %vm416, %v919, 0
    %931 = vmatpush.msra.mxu0 0.0
    %932 = vmatpush.msra.mxu0 0.0
    %933 = vmatpush.msra.mxu0 0.0
    %934 = vmatpush.msra.mxu0 0.0
    %935 = vmatpush.msra.mxu0 0.0
    %936 = vmatpush.msra.mxu0 0.0
    %937 = vmatpush.msra.mxu0 0.0
    %938 = vmatpush.msra.mxu0 0.0
    %939 = vmatpush.msra.mxu0 %v927
    %940 = vmatpush.msra.mxu0 %v926
    %941 = vmatpush.msra.mxu0 %v925
    %942 = vmatpush.msra.mxu0 %v924
    %943 = vmatpush.msra.mxu0 %v923
    %944 = vmatpush.msra.mxu0 %v922
    %945 = vmatpush.msra.mxu0 %v921
    %946 = vmatpush.msra.mxu0 %v920
    %947 = vmatmul.f32.gmra.mxu0 %v929
    %v948 = vpop.f32.mrf.mxu0
    %v949 = vadd.f32 %v415, %v948
    %950 = vdwg.mxu0
    %v951 = vmul.f32 %v949, 0.5
    %v952 = vtanh.pop %v951
    %v953 = vadd.f32 %v952, 1.0
    %v954 = vmul.f32 %v953, 0.5
    %v955 = vtanh.pop %v949
    %v956 = vmul.f32 %v954, %v713
    %958 = vrot.lane.b32.xlu0 %v955, 64
    %v959 = vpop.permute.xlu0 %958
    %v961 = vmul.f32 %v954, %v959
    %963 = vrot.lane.b32.xlu0 %v961, 32
    %v964 = vpop.permute.xlu0 %963
    %v966 = vadd.f32 %v956, %v964
    %v967 = vtanh.pop %v966
    %969 = vrot.lane.b32.xlu0 %v967, 64
    %v970 = vpop.permute.xlu0 %969
    %v972 = vmul.f32 %v954, %v970
    %974 = vrot.lane.b32.xlu0 %v972, 32
    %v975 = vpop.permute.xlu0 %974
    %977 = vrot.lane.b32.xlu0 %v780, 64
    %v978 = vpop.permute.xlu0 %977
    %v980 = vsel %vm356, %v975, %v978
    %v981 = vld [vmem:[%s467] sm:$0xff]
    %v982 = vld [vmem:[%s467 + $0x8] sm:$0xff]
    %v983 = vld [vmem:[%s467 + $0x10] sm:$0xff]
    %v984 = vld [vmem:[%s467 + $0x18] sm:$0xff]
    %v985 = vld [vmem:[%s467 + $0x20] sm:$0xff]
    %v986 = vld [vmem:[%s467 + $0x28] sm:$0xff]
    %v987 = vld [vmem:[%s467 + $0x30] sm:$0xff]
    %v988 = vld [vmem:[%s467 + $0x38] sm:$0xff]
    %v990 = vsel %vm416, %v980, 0
    %992 = vmatpush.msra.mxu0 0.0
    %993 = vmatpush.msra.mxu0 0.0
    %994 = vmatpush.msra.mxu0 0.0
    %995 = vmatpush.msra.mxu0 0.0
    %996 = vmatpush.msra.mxu0 0.0
    %997 = vmatpush.msra.mxu0 0.0
    %998 = vmatpush.msra.mxu0 0.0
    %999 = vmatpush.msra.mxu0 0.0
    %1000 = vmatpush.msra.mxu0 %v988
    %1001 = vmatpush.msra.mxu0 %v987
    %1002 = vmatpush.msra.mxu0 %v986
    %1003 = vmatpush.msra.mxu0 %v985
    %1004 = vmatpush.msra.mxu0 %v984
    %1005 = vmatpush.msra.mxu0 %v983
    %1006 = vmatpush.msra.mxu0 %v982
    %1007 = vmatpush.msra.mxu0 %v981
    %1008 = vmatmul.f32.gmra.mxu0 %v990
    %v1009 = vpop.f32.mrf.mxu0
    %v1010 = vadd.f32 %v476, %v1009
    %1011 = vdwg.mxu0
    %v1012 = vmul.f32 %v1010, 0.5
    %v1013 = vtanh.pop %v1012
    %v1014 = vadd.f32 %v1013, 1.0
    %v1015 = vmul.f32 %v1014, 0.5
    %v1016 = vtanh.pop %v1010
    %v1017 = vmul.f32 %v1015, %v774
    %1019 = vrot.lane.b32.xlu0 %v1016, 64
    %v1020 = vpop.permute.xlu0 %1019
    %v1022 = vmul.f32 %v1015, %v1020
    %1024 = vrot.lane.b32.xlu0 %v1022, 32
    %v1025 = vpop.permute.xlu0 %1024
    %v1027 = vadd.f32 %v1017, %v1025
    %v1028 = vtanh.pop %v1027
    %1030 = vrot.lane.b32.xlu0 %v1028, 64
    %v1031 = vpop.permute.xlu0 %1030
    %v1033 = vmul.f32 %v1015, %v1031
    %1035 = vrot.lane.b32.xlu0 %v1033, 32
    %v1036 = vpop.permute.xlu0 %1035
    %1039 = vrot.lane.b32.xlu0 %v842, 64
    %v1040 = vpop.permute.xlu0 %1039
    %v1042 = vsel %vm356, %v1036, %v1040
    %v1043 = vld [vmem:[%s527] sm:$0xff]
    %v1044 = vld [vmem:[%s527 + $0x8] sm:$0xff]
    %v1045 = vld [vmem:[%s527 + $0x10] sm:$0xff]
    %v1046 = vld [vmem:[%s527 + $0x18] sm:$0xff]
    %v1047 = vld [vmem:[%s527 + $0x20] sm:$0xff]
    %v1048 = vld [vmem:[%s527 + $0x28] sm:$0xff]
    %v1049 = vld [vmem:[%s527 + $0x30] sm:$0xff]
    %v1050 = vld [vmem:[%s527 + $0x38] sm:$0xff]
    %v1052 = vsel %vm416, %v1042, 0
    %1054 = vmatpush.msra.mxu0 0.0
    %1055 = vmatpush.msra.mxu0 0.0
    %1056 = vmatpush.msra.mxu0 0.0
    %1057 = vmatpush.msra.mxu0 0.0
    %1058 = vmatpush.msra.mxu0 0.0
    %1059 = vmatpush.msra.mxu0 0.0
    %1060 = vmatpush.msra.mxu0 0.0
    %1061 = vmatpush.msra.mxu0 0.0
    %1062 = vmatpush.msra.mxu0 %v1050
    %1063 = vmatpush.msra.mxu0 %v1049
    %1064 = vmatpush.msra.mxu0 %v1048
    %1065 = vmatpush.msra.mxu0 %v1047
    %1066 = vmatpush.msra.mxu0 %v1046
    %1067 = vmatpush.msra.mxu0 %v1045
    %1068 = vmatpush.msra.mxu0 %v1044
    %1069 = vmatpush.msra.mxu0 %v1043
    %1070 = vmatmul.f32.gmra.mxu0 %v1052
    %v1071 = vpop.f32.mrf.mxu0
    %v1072 = vadd.f32 %v536, %v1071
    %1073 = vdwg.mxu0
    %v1074 = vmul.f32 %v1072, 0.5
    %v1075 = vtanh.pop %v1074
    %v1076 = vadd.f32 %v1075, 1.0
    %v1077 = vmul.f32 %v1076, 0.5
    %v1078 = vtanh.pop %v1072
    %v1079 = vmul.f32 %v1077, %v836
    %1081 = vrot.lane.b32.xlu0 %v1078, 64
    %v1082 = vpop.permute.xlu0 %1081
    %v1084 = vmul.f32 %v1077, %v1082
    %1086 = vrot.lane.b32.xlu0 %v1084, 32
    %v1087 = vpop.permute.xlu0 %1086
    %v1089 = vadd.f32 %v1079, %v1087
    %v1090 = vtanh.pop %v1089
    %1092 = vrot.lane.b32.xlu0 %v1090, 64
    %v1093 = vpop.permute.xlu0 %1092
    %v1095 = vmul.f32 %v1077, %v1093
    %v1096 = vmul.f32 %v1095, %v585
    %1098 = vrot.lane.b32.xlu0 %v1096, 32
    %v1099 = vpop.permute.xlu0 %1098
    %v1101 = vsel %vm356, %v1099, 0.0
    %1102 = vadd.xlane.f32.xlu0 %v1101
    %v1103 = vpop.xlane.xlu0 %1102
    %v1104 = vadd.f32 %v1103, %v596
    %v1105 = vtanh.pop %v1104
    %1107 = vrot.lane.b32.xlu0 %v1105, 3
    %v1108 = vpop.permute.xlu0 %1107
    %v1110 = vadd.f32 %v115, %v1108
    %1112 = vrot.lane.b32.xlu0 %v1110, 127
    %v1113 = vpop.permute.xlu0 %1112
    %vm1115 = vcmask 23568
    %1116 = vst.msk [vmem:[#allocation12] sm:$0xff] %vm1115, %v1113
    %v1117 = vld [vmem:[#allocation9] sm:$0xff]
    %v1118 = vld [vmem:[#allocation9 + $0x8] sm:$0xff]
    %v1119 = vld [vmem:[#allocation9 + $0x10] sm:$0xff]
    %v1120 = vld [vmem:[#allocation9 + $0x18] sm:$0xff]
    %v1121 = vsel %vm356, %v914, 0
    %1123 = vmatpush.msra.mxu0 0.0
    %1124 = vmatpush.msra.mxu0 0.0
    %1125 = vmatpush.msra.mxu0 0.0
    %1126 = vmatpush.msra.mxu0 0.0
    %1127 = vmatpush.msra.mxu0 0.0
    %1128 = vmatpush.msra.mxu0 0.0
    %1129 = vmatpush.msra.mxu0 0.0
    %1130 = vmatpush.msra.mxu0 0.0
    %1131 = vmatpush.msra.mxu0 0.0
    %1132 = vmatpush.msra.mxu0 0.0
    %1133 = vmatpush.msra.mxu0 0.0
    %1134 = vmatpush.msra.mxu0 0.0
    %1135 = vmatpush.msra.mxu0 %v1120
    %1136 = vmatpush.msra.mxu0 %v1119
    %1137 = vmatpush.msra.mxu0 %v1118
    %1138 = vmatpush.msra.mxu0 %v1117
    %1139 = vmatmul.f32.gmra.mxu0 %v1121
    %v1140 = vpop.f32.mrf.mxu0
    %v1141 = vadd.f32 %v169, %v1140
    %1142 = vdwg.mxu0
    %v1143 = vmul.f32 %v1141, 0.5
    %v1144 = vtanh.pop %v1143
    %v1145 = vadd.f32 %v1144, 1.0
    %v1146 = vmul.f32 %v1145, 0.5
    %v1147 = vtanh.pop %v1141
    %v1148 = vmul.f32 %v1146, %v905
    %1150 = vrot.lane.b32.xlu0 %v1147, 64
    %v1151 = vpop.permute.xlu0 %1150
    %v1153 = vmul.f32 %v1146, %v1151
    %1155 = vrot.lane.b32.xlu0 %v1153, 32
    %v1156 = vpop.permute.xlu0 %1155
    %v1158 = vadd.f32 %v1148, %v1156
    %v1159 = vtanh.pop %v1158
    %1161 = vrot.lane.b32.xlu0 %v1159, 64
    %v1162 = vpop.permute.xlu0 %1161
    %v1164 = vmul.f32 %v1146, %v1162
    %1166 = vrot.lane.b32.xlu0 %v1164, 32
    %v1167 = vpop.permute.xlu0 %1166
    %1169 = vrot.lane.b32.xlu0 %v972, 64
    %v1170 = vpop.permute.xlu0 %1169
    %v1172 = vsel %vm356, %v1167, %v1170
    %v1173 = vld [vmem:[#allocation11] sm:$0xff]
    %v1174 = vld [vmem:[#allocation11 + $0x8] sm:$0xff]
    %v1175 = vld [vmem:[#allocation11 + $0x10] sm:$0xff]
    %v1176 = vld [vmem:[#allocation11 + $0x18] sm:$0xff]
    %v1177 = vld [vmem:[#allocation11 + $0x20] sm:$0xff]
    %v1178 = vld [vmem:[#allocation11 + $0x28] sm:$0xff]
    %v1179 = vld [vmem:[#allocation11 + $0x30] sm:$0xff]
    %v1180 = vld [vmem:[#allocation11 + $0x38] sm:$0xff]
    %v1182 = vsel %vm416, %v1172, 0
    %1184 = vmatpush.msra.mxu0 0.0
    %1185 = vmatpush.msra.mxu0 0.0
    %1186 = vmatpush.msra.mxu0 0.0
    %1187 = vmatpush.msra.mxu0 0.0
    %1188 = vmatpush.msra.mxu0 0.0
    %1189 = vmatpush.msra.mxu0 0.0
    %1190 = vmatpush.msra.mxu0 0.0
    %1191 = vmatpush.msra.mxu0 0.0
    %1192 = vmatpush.msra.mxu0 %v1180
    %1193 = vmatpush.msra.mxu0 %v1179
    %1194 = vmatpush.msra.mxu0 %v1178
    %1195 = vmatpush.msra.mxu0 %v1177
    %1196 = vmatpush.msra.mxu0 %v1176
    %1197 = vmatpush.msra.mxu0 %v1175
    %1198 = vmatpush.msra.mxu0 %v1174
    %1199 = vmatpush.msra.mxu0 %v1173
    %1200 = vmatmul.f32.gmra.mxu0 %v1182
    %v1201 = vpop.f32.mrf.mxu0
    %v1202 = vadd.f32 %v415, %v1201
    %1203 = vdwg.mxu0
    %v1204 = vmul.f32 %v1202, 0.5
    %v1205 = vtanh.pop %v1204
    %v1206 = vadd.f32 %v1205, 1.0
    %v1207 = vmul.f32 %v1206, 0.5
    %v1208 = vtanh.pop %v1202
    %v1209 = vmul.f32 %v1207, %v966
    %1211 = vrot.lane.b32.xlu0 %v1208, 64
    %v1212 = vpop.permute.xlu0 %1211
    %v1214 = vmul.f32 %v1207, %v1212
    %1216 = vrot.lane.b32.xlu0 %v1214, 32
    %v1217 = vpop.permute.xlu0 %1216
    %v1219 = vadd.f32 %v1209, %v1217
    %v1220 = vtanh.pop %v1219
    %1222 = vrot.lane.b32.xlu0 %v1220, 64
    %v1223 = vpop.permute.xlu0 %1222
    %v1225 = vmul.f32 %v1207, %v1223
    %1227 = vrot.lane.b32.xlu0 %v1225, 32
    %v1228 = vpop.permute.xlu0 %1227
    %1230 = vrot.lane.b32.xlu0 %v1033, 64
    %v1231 = vpop.permute.xlu0 %1230
    %v1233 = vsel %vm356, %v1228, %v1231
    %v1234 = vld [vmem:[%s467] sm:$0xff]
    %v1235 = vld [vmem:[%s467 + $0x8] sm:$0xff]
    %v1236 = vld [vmem:[%s467 + $0x10] sm:$0xff]
    %v1237 = vld [vmem:[%s467 + $0x18] sm:$0xff]
    %v1238 = vld [vmem:[%s467 + $0x20] sm:$0xff]
    %v1239 = vld [vmem:[%s467 + $0x28] sm:$0xff]
    %v1240 = vld [vmem:[%s467 + $0x30] sm:$0xff]
    %v1241 = vld [vmem:[%s467 + $0x38] sm:$0xff]
    %v1243 = vsel %vm416, %v1233, 0
    %1245 = vmatpush.msra.mxu0 0.0
    %1246 = vmatpush.msra.mxu0 0.0
    %1247 = vmatpush.msra.mxu0 0.0
    %1248 = vmatpush.msra.mxu0 0.0
    %1249 = vmatpush.msra.mxu0 0.0
    %1250 = vmatpush.msra.mxu0 0.0
    %1251 = vmatpush.msra.mxu0 0.0
    %1252 = vmatpush.msra.mxu0 0.0
    %1253 = vmatpush.msra.mxu0 %v1241
    %1254 = vmatpush.msra.mxu0 %v1240
    %1255 = vmatpush.msra.mxu0 %v1239
    %1256 = vmatpush.msra.mxu0 %v1238
    %1257 = vmatpush.msra.mxu0 %v1237
    %1258 = vmatpush.msra.mxu0 %v1236
    %1259 = vmatpush.msra.mxu0 %v1235
    %1260 = vmatpush.msra.mxu0 %v1234
    %1261 = vmatmul.f32.gmra.mxu0 %v1243
    %v1262 = vpop.f32.mrf.mxu0
    %v1263 = vadd.f32 %v476, %v1262
    %1264 = vdwg.mxu0
    %v1265 = vmul.f32 %v1263, 0.5
    %v1266 = vtanh.pop %v1265
    %v1267 = vadd.f32 %v1266, 1.0
    %v1268 = vmul.f32 %v1267, 0.5
    %v1269 = vtanh.pop %v1263
    %v1270 = vmul.f32 %v1268, %v1027
    %1272 = vrot.lane.b32.xlu0 %v1269, 64
    %v1273 = vpop.permute.xlu0 %1272
    %v1275 = vmul.f32 %v1268, %v1273
    %1277 = vrot.lane.b32.xlu0 %v1275, 32
    %v1278 = vpop.permute.xlu0 %1277
    %v1280 = vadd.f32 %v1270, %v1278
    %v1281 = vtanh.pop %v1280
    %1283 = vrot.lane.b32.xlu0 %v1281, 64
    %v1284 = vpop.permute.xlu0 %1283
    %v1286 = vmul.f32 %v1268, %v1284
    %1288 = vrot.lane.b32.xlu0 %v1286, 32
    %v1289 = vpop.permute.xlu0 %1288
    %1292 = vrot.lane.b32.xlu0 %v1095, 64
    %v1293 = vpop.permute.xlu0 %1292
    %v1295 = vsel %vm356, %v1289, %v1293
    %v1296 = vld [vmem:[%s527] sm:$0xff]
    %v1297 = vld [vmem:[%s527 + $0x8] sm:$0xff]
    %v1298 = vld [vmem:[%s527 + $0x10] sm:$0xff]
    %v1299 = vld [vmem:[%s527 + $0x18] sm:$0xff]
    %v1300 = vld [vmem:[%s527 + $0x20] sm:$0xff]
    %v1301 = vld [vmem:[%s527 + $0x28] sm:$0xff]
    %v1302 = vld [vmem:[%s527 + $0x30] sm:$0xff]
    %v1303 = vld [vmem:[%s527 + $0x38] sm:$0xff]
    %v1305 = vsel %vm416, %v1295, 0
    %1307 = vmatpush.msra.mxu0 0.0
    %1308 = vmatpush.msra.mxu0 0.0
    %1309 = vmatpush.msra.mxu0 0.0
    %1310 = vmatpush.msra.mxu0 0.0
    %1311 = vmatpush.msra.mxu0 0.0
    %1312 = vmatpush.msra.mxu0 0.0
    %1313 = vmatpush.msra.mxu0 0.0
    %1314 = vmatpush.msra.mxu0 0.0
    %1315 = vmatpush.msra.mxu0 %v1303
    %1316 = vmatpush.msra.mxu0 %v1302
    %1317 = vmatpush.msra.mxu0 %v1301
    %1318 = vmatpush.msra.mxu0 %v1300
    %1319 = vmatpush.msra.mxu0 %v1299
    %1320 = vmatpush.msra.mxu0 %v1298
    %1321 = vmatpush.msra.mxu0 %v1297
    %1322 = vmatpush.msra.mxu0 %v1296
    %1323 = vmatmul.f32.gmra.mxu0 %v1305
    %v1324 = vpop.f32.mrf.mxu0
    %v1325 = vadd.f32 %v536, %v1324
    %1326 = vdwg.mxu0
    %v1327 = vmul.f32 %v1325, 0.5
    %v1328 = vtanh.pop %v1327
    %v1329 = vadd.f32 %v1328, 1.0
    %v1330 = vmul.f32 %v1329, 0.5
    %v1331 = vtanh.pop %v1325
    %v1332 = vmul.f32 %v1330, %v1089
    %1334 = vrot.lane.b32.xlu0 %v1331, 64
    %v1335 = vpop.permute.xlu0 %1334
    %v1337 = vmul.f32 %v1330, %v1335
    %1339 = vrot.lane.b32.xlu0 %v1337, 32
    %v1340 = vpop.permute.xlu0 %1339
    %v1342 = vadd.f32 %v1332, %v1340
    %v1343 = vtanh.pop %v1342
    %1345 = vrot.lane.b32.xlu0 %v1343, 64
    %v1346 = vpop.permute.xlu0 %1345
    %v1348 = vmul.f32 %v1330, %v1346
    %v1349 = vmul.f32 %v1348, %v585
    %1351 = vrot.lane.b32.xlu0 %v1349, 32
    %v1352 = vpop.permute.xlu0 %1351
    %v1354 = vsel %vm356, %v1352, 0.0
    %1355 = vadd.xlane.f32.xlu0 %v1354
    %v1356 = vpop.xlane.xlu0 %1355
    %v1357 = vadd.f32 %v1356, %v596
    %v1358 = vtanh.pop %v1357
    %1360 = vrot.lane.b32.xlu0 %v1358, 4
    %v1361 = vpop.permute.xlu0 %1360
    %v1363 = vadd.f32 %v115, %v1361
    %1365 = vrot.lane.b32.xlu0 %v1363, 127
    %v1366 = vpop.permute.xlu0 %1365
    %vm1368 = vcmask 31768
    %1369 = vst.msk [vmem:[#allocation12] sm:$0xff] %vm1368, %v1366
    %v1370 = vld [vmem:[#allocation9] sm:$0xff]
    %v1371 = vld [vmem:[#allocation9 + $0x8] sm:$0xff]
    %v1372 = vld [vmem:[#allocation9 + $0x10] sm:$0xff]
    %v1373 = vld [vmem:[#allocation9 + $0x18] sm:$0xff]
    %v1374 = vsel %vm356, %v1167, 0
    %1376 = vmatpush.msra.mxu0 0.0
    %1377 = vmatpush.msra.mxu0 0.0
    %1378 = vmatpush.msra.mxu0 0.0
    %1379 = vmatpush.msra.mxu0 0.0
    %1380 = vmatpush.msra.mxu0 0.0
    %1381 = vmatpush.msra.mxu0 0.0
    %1382 = vmatpush.msra.mxu0 0.0
    %1383 = vmatpush.msra.mxu0 0.0
    %1384 = vmatpush.msra.mxu0 0.0
    %1385 = vmatpush.msra.mxu0 0.0
    %1386 = vmatpush.msra.mxu0 0.0
    %1387 = vmatpush.msra.mxu0 0.0
    %1388 = vmatpush.msra.mxu0 %v1373
    %1389 = vmatpush.msra.mxu0 %v1372
    %1390 = vmatpush.msra.mxu0 %v1371
    %1391 = vmatpush.msra.mxu0 %v1370
    %1392 = vmatmul.f32.gmra.mxu0 %v1374
    %v1393 = vpop.f32.mrf.mxu0
    %v1394 = vadd.f32 %v181, %v1393
    %1395 = vdwg.mxu0
    %v1396 = vmul.f32 %v1394, 0.5
    %v1397 = vtanh.pop %v1396
    %v1398 = vadd.f32 %v1397, 1.0
    %v1399 = vmul.f32 %v1398, 0.5
    %v1400 = vtanh.pop %v1394
    %v1401 = vmul.f32 %v1399, %v1158
    %1403 = vrot.lane.b32.xlu0 %v1400, 64
    %v1404 = vpop.permute.xlu0 %1403
    %v1406 = vmul.f32 %v1399, %v1404
    %1408 = vrot.lane.b32.xlu0 %v1406, 32
    %v1409 = vpop.permute.xlu0 %1408
    %v1411 = vadd.f32 %v1401, %v1409
    %v1412 = vtanh.pop %v1411
    %1414 = vrot.lane.b32.xlu0 %v1412, 64
    %v1415 = vpop.permute.xlu0 %1414
    %v1417 = vmul.f32 %v1399, %v1415
    %1419 = vrot.lane.b32.xlu0 %v1417, 32
    %v1420 = vpop.permute.xlu0 %1419
    %1422 = vrot.lane.b32.xlu0 %v1225, 64
    %v1423 = vpop.permute.xlu0 %1422
    %v1425 = vsel %vm356, %v1420, %v1423
    %v1426 = vld [vmem:[#allocation11] sm:$0xff]
    %v1427 = vld [vmem:[#allocation11 + $0x8] sm:$0xff]
    %v1428 = vld [vmem:[#allocation11 + $0x10] sm:$0xff]
    %v1429 = vld [vmem:[#allocation11 + $0x18] sm:$0xff]
    %v1430 = vld [vmem:[#allocation11 + $0x20] sm:$0xff]
    %v1431 = vld [vmem:[#allocation11 + $0x28] sm:$0xff]
    %v1432 = vld [vmem:[#allocation11 + $0x30] sm:$0xff]
    %v1433 = vld [vmem:[#allocation11 + $0x38] sm:$0xff]
    %v1435 = vsel %vm416, %v1425, 0
    %1437 = vmatpush.msra.mxu0 0.0
    %1438 = vmatpush.msra.mxu0 0.0
    %1439 = vmatpush.msra.mxu0 0.0
    %1440 = vmatpush.msra.mxu0 0.0
    %1441 = vmatpush.msra.mxu0 0.0
    %1442 = vmatpush.msra.mxu0 0.0
    %1443 = vmatpush.msra.mxu0 0.0
    %1444 = vmatpush.msra.mxu0 0.0
    %1445 = vmatpush.msra.mxu0 %v1433
    %1446 = vmatpush.msra.mxu0 %v1432
    %1447 = vmatpush.msra.mxu0 %v1431
    %1448 = vmatpush.msra.mxu0 %v1430
    %1449 = vmatpush.msra.mxu0 %v1429
    %1450 = vmatpush.msra.mxu0 %v1428
    %1451 = vmatpush.msra.mxu0 %v1427
    %1452 = vmatpush.msra.mxu0 %v1426
    %1453 = vmatmul.f32.gmra.mxu0 %v1435
    %v1454 = vpop.f32.mrf.mxu0
    %v1455 = vadd.f32 %v415, %v1454
    %1456 = vdwg.mxu0
    %v1457 = vmul.f32 %v1455, 0.5
    %v1458 = vtanh.pop %v1457
    %v1459 = vadd.f32 %v1458, 1.0
    %v1460 = vmul.f32 %v1459, 0.5
    %v1461 = vtanh.pop %v1455
    %v1462 = vmul.f32 %v1460, %v1219
    %1464 = vrot.lane.b32.xlu0 %v1461, 64
    %v1465 = vpop.permute.xlu0 %1464
    %v1467 = vmul.f32 %v1460, %v1465
    %1469 = vrot.lane.b32.xlu0 %v1467, 32
    %v1470 = vpop.permute.xlu0 %1469
    %v1472 = vadd.f32 %v1462, %v1470
    %v1473 = vtanh.pop %v1472
    %1475 = vrot.lane.b32.xlu0 %v1473, 64
    %v1476 = vpop.permute.xlu0 %1475
    %v1478 = vmul.f32 %v1460, %v1476
    %1480 = vrot.lane.b32.xlu0 %v1478, 32
    %v1481 = vpop.permute.xlu0 %1480
    %1483 = vrot.lane.b32.xlu0 %v1286, 64
    %v1484 = vpop.permute.xlu0 %1483
    %v1486 = vsel %vm356, %v1481, %v1484
    %v1487 = vld [vmem:[%s467] sm:$0xff]
    %v1488 = vld [vmem:[%s467 + $0x8] sm:$0xff]
    %v1489 = vld [vmem:[%s467 + $0x10] sm:$0xff]
    %v1490 = vld [vmem:[%s467 + $0x18] sm:$0xff]
    %v1491 = vld [vmem:[%s467 + $0x20] sm:$0xff]
    %v1492 = vld [vmem:[%s467 + $0x28] sm:$0xff]
    %v1493 = vld [vmem:[%s467 + $0x30] sm:$0xff]
    %v1494 = vld [vmem:[%s467 + $0x38] sm:$0xff]
    %v1496 = vsel %vm416, %v1486, 0
    %1498 = vmatpush.msra.mxu0 0.0
    %1499 = vmatpush.msra.mxu0 0.0
    %1500 = vmatpush.msra.mxu0 0.0
    %1501 = vmatpush.msra.mxu0 0.0
    %1502 = vmatpush.msra.mxu0 0.0
    %1503 = vmatpush.msra.mxu0 0.0
    %1504 = vmatpush.msra.mxu0 0.0
    %1505 = vmatpush.msra.mxu0 0.0
    %1506 = vmatpush.msra.mxu0 %v1494
    %1507 = vmatpush.msra.mxu0 %v1493
    %1508 = vmatpush.msra.mxu0 %v1492
    %1509 = vmatpush.msra.mxu0 %v1491
    %1510 = vmatpush.msra.mxu0 %v1490
    %1511 = vmatpush.msra.mxu0 %v1489
    %1512 = vmatpush.msra.mxu0 %v1488
    %1513 = vmatpush.msra.mxu0 %v1487
    %1514 = vmatmul.f32.gmra.mxu0 %v1496
    %v1515 = vpop.f32.mrf.mxu0
    %v1516 = vadd.f32 %v476, %v1515
    %1517 = vdwg.mxu0
    %v1518 = vmul.f32 %v1516, 0.5
    %v1519 = vtanh.pop %v1518
    %v1520 = vadd.f32 %v1519, 1.0
    %v1521 = vmul.f32 %v1520, 0.5
    %v1522 = vtanh.pop %v1516
    %v1523 = vmul.f32 %v1521, %v1280
    %1525 = vrot.lane.b32.xlu0 %v1522, 64
    %v1526 = vpop.permute.xlu0 %1525
    %v1528 = vmul.f32 %v1521, %v1526
    %1530 = vrot.lane.b32.xlu0 %v1528, 32
    %v1531 = vpop.permute.xlu0 %1530
    %v1533 = vadd.f32 %v1523, %v1531
    %v1534 = vtanh.pop %v1533
    %1536 = vrot.lane.b32.xlu0 %v1534, 64
    %v1537 = vpop.permute.xlu0 %1536
    %v1539 = vmul.f32 %v1521, %v1537
    %1541 = vrot.lane.b32.xlu0 %v1539, 32
    %v1542 = vpop.permute.xlu0 %1541
    %1545 = vrot.lane.b32.xlu0 %v1348, 64
    %v1546 = vpop.permute.xlu0 %1545
    %v1548 = vsel %vm356, %v1542, %v1546
    %v1549 = vld [vmem:[%s527] sm:$0xff]
    %v1550 = vld [vmem:[%s527 + $0x8] sm:$0xff]
    %v1551 = vld [vmem:[%s527 + $0x10] sm:$0xff]
    %v1552 = vld [vmem:[%s527 + $0x18] sm:$0xff]
    %v1553 = vld [vmem:[%s527 + $0x20] sm:$0xff]
    %v1554 = vld [vmem:[%s527 + $0x28] sm:$0xff]
    %v1555 = vld [vmem:[%s527 + $0x30] sm:$0xff]
    %v1556 = vld [vmem:[%s527 + $0x38] sm:$0xff]
    %v1558 = vsel %vm416, %v1548, 0
    %1560 = vmatpush.msra.mxu0 0.0
    %1561 = vmatpush.msra.mxu0 0.0
    %1562 = vmatpush.msra.mxu0 0.0
    %1563 = vmatpush.msra.mxu0 0.0
    %1564 = vmatpush.msra.mxu0 0.0
    %1565 = vmatpush.msra.mxu0 0.0
    %1566 = vmatpush.msra.mxu0 0.0
    %1567 = vmatpush.msra.mxu0 0.0
    %1568 = vmatpush.msra.mxu0 %v1556
    %1569 = vmatpush.msra.mxu0 %v1555
    %1570 = vmatpush.msra.mxu0 %v1554
    %1571 = vmatpush.msra.mxu0 %v1553
    %1572 = vmatpush.msra.mxu0 %v1552
    %1573 = vmatpush.msra.mxu0 %v1551
    %1574 = vmatpush.msra.mxu0 %v1550
    %1575 = vmatpush.msra.mxu0 %v1549
    %1576 = vmatmul.f32.gmra.mxu0 %v1558
    %v1577 = vpop.f32.mrf.mxu0
    %v1578 = vadd.f32 %v536, %v1577
    %1579 = vdwg.mxu0
    %v1580 = vmul.f32 %v1578, 0.5
    %v1581 = vtanh.pop %v1580
    %v1582 = vadd.f32 %v1581, 1.0
    %v1583 = vmul.f32 %v1582, 0.5
    %v1584 = vtanh.pop %v1578
    %v1585 = vmul.f32 %v1583, %v1342
    %1587 = vrot.lane.b32.xlu0 %v1584, 64
    %v1588 = vpop.permute.xlu0 %1587
    %v1590 = vmul.f32 %v1583, %v1588
    %1592 = vrot.lane.b32.xlu0 %v1590, 32
    %v1593 = vpop.permute.xlu0 %1592
    %v1595 = vadd.f32 %v1585, %v1593
    %v1596 = vtanh.pop %v1595
    %1598 = vrot.lane.b32.xlu0 %v1596, 64
    %v1599 = vpop.permute.xlu0 %1598
    %v1601 = vmul.f32 %v1583, %v1599
    %v1602 = vmul.f32 %v1601, %v585
    %1604 = vrot.lane.b32.xlu0 %v1602, 32
    %v1605 = vpop.permute.xlu0 %1604
    %v1607 = vsel %vm356, %v1605, 0.0
    %1608 = vadd.xlane.f32.xlu0 %v1607
    %v1609 = vpop.xlane.xlu0 %1608
    %v1610 = vadd.f32 %v1609, %v596
    %v1611 = vtanh.pop %v1610
    %1613 = vrot.lane.b32.xlu0 %v1611, 5
    %v1614 = vpop.permute.xlu0 %1613
    %v1616 = vadd.f32 %v115, %v1614
    %1618 = vrot.lane.b32.xlu0 %v1616, 127
    %v1619 = vpop.permute.xlu0 %1618
    %vm1621 = vcmask 39968
    %1622 = vst.msk [vmem:[#allocation12] sm:$0xff] %vm1621, %v1619
    %v1623 = vld [vmem:[#allocation9] sm:$0xff]
    %v1624 = vld [vmem:[#allocation9 + $0x8] sm:$0xff]
    %v1625 = vld [vmem:[#allocation9 + $0x10] sm:$0xff]
    %v1626 = vld [vmem:[#allocation9 + $0x18] sm:$0xff]
    %v1627 = vsel %vm356, %v1420, 0
    %1629 = vmatpush.msra.mxu0 0.0
    %1630 = vmatpush.msra.mxu0 0.0
    %1631 = vmatpush.msra.mxu0 0.0
    %1632 = vmatpush.msra.mxu0 0.0
    %1633 = vmatpush.msra.mxu0 0.0
    %1634 = vmatpush.msra.mxu0 0.0
    %1635 = vmatpush.msra.mxu0 0.0
    %1636 = vmatpush.msra.mxu0 0.0
    %1637 = vmatpush.msra.mxu0 0.0
    %1638 = vmatpush.msra.mxu0 0.0
    %1639 = vmatpush.msra.mxu0 0.0
    %1640 = vmatpush.msra.mxu0 0.0
    %1641 = vmatpush.msra.mxu0 %v1626
    %1642 = vmatpush.msra.mxu0 %v1625
    %1643 = vmatpush.msra.mxu0 %v1624
    %1644 = vmatpush.msra.mxu0 %v1623
    %1645 = vmatmul.f32.gmra.mxu0 %v1627
    %v1646 = vpop.f32.mrf.mxu0
    %v1647 = vadd.f32 %v193, %v1646
    %1648 = vdwg.mxu0
    %v1649 = vmul.f32 %v1647, 0.5
    %v1650 = vtanh.pop %v1649
    %v1651 = vadd.f32 %v1650, 1.0
    %v1652 = vmul.f32 %v1651, 0.5
    %v1653 = vtanh.pop %v1647
    %v1654 = vmul.f32 %v1652, %v1411
    %1656 = vrot.lane.b32.xlu0 %v1653, 64
    %v1657 = vpop.permute.xlu0 %1656
    %v1659 = vmul.f32 %v1652, %v1657
    %1661 = vrot.lane.b32.xlu0 %v1659, 32
    %v1662 = vpop.permute.xlu0 %1661
    %v1664 = vadd.f32 %v1654, %v1662
    %v1665 = vtanh.pop %v1664
    %1667 = vrot.lane.b32.xlu0 %v1665, 64
    %v1668 = vpop.permute.xlu0 %1667
    %v1670 = vmul.f32 %v1652, %v1668
    %1672 = vrot.lane.b32.xlu0 %v1670, 32
    %v1673 = vpop.permute.xlu0 %1672
    %1675 = vrot.lane.b32.xlu0 %v1478, 64
    %v1676 = vpop.permute.xlu0 %1675
    %v1678 = vsel %vm356, %v1673, %v1676
    %v1679 = vld [vmem:[#allocation11] sm:$0xff]
    %v1680 = vld [vmem:[#allocation11 + $0x8] sm:$0xff]
    %v1681 = vld [vmem:[#allocation11 + $0x10] sm:$0xff]
    %v1682 = vld [vmem:[#allocation11 + $0x18] sm:$0xff]
    %v1683 = vld [vmem:[#allocation11 + $0x20] sm:$0xff]
    %v1684 = vld [vmem:[#allocation11 + $0x28] sm:$0xff]
    %v1685 = vld [vmem:[#allocation11 + $0x30] sm:$0xff]
    %v1686 = vld [vmem:[#allocation11 + $0x38] sm:$0xff]
    %v1688 = vsel %vm416, %v1678, 0
    %1690 = vmatpush.msra.mxu0 0.0
    %1691 = vmatpush.msra.mxu0 0.0
    %1692 = vmatpush.msra.mxu0 0.0
    %1693 = vmatpush.msra.mxu0 0.0
    %1694 = vmatpush.msra.mxu0 0.0
    %1695 = vmatpush.msra.mxu0 0.0
    %1696 = vmatpush.msra.mxu0 0.0
    %1697 = vmatpush.msra.mxu0 0.0
    %1698 = vmatpush.msra.mxu0 %v1686
    %1699 = vmatpush.msra.mxu0 %v1685
    %1700 = vmatpush.msra.mxu0 %v1684
    %1701 = vmatpush.msra.mxu0 %v1683
    %1702 = vmatpush.msra.mxu0 %v1682
    %1703 = vmatpush.msra.mxu0 %v1681
    %1704 = vmatpush.msra.mxu0 %v1680
    %1705 = vmatpush.msra.mxu0 %v1679
    %1706 = vmatmul.f32.gmra.mxu0 %v1688
    %v1707 = vpop.f32.mrf.mxu0
    %v1708 = vadd.f32 %v415, %v1707
    %1709 = vdwg.mxu0
    %v1710 = vmul.f32 %v1708, 0.5
    %v1711 = vtanh.pop %v1710
    %v1712 = vadd.f32 %v1711, 1.0
    %v1713 = vmul.f32 %v1712, 0.5
    %v1714 = vtanh.pop %v1708
    %v1715 = vmul.f32 %v1713, %v1472
    %1717 = vrot.lane.b32.xlu0 %v1714, 64
    %v1718 = vpop.permute.xlu0 %1717
    %v1720 = vmul.f32 %v1713, %v1718
    %1722 = vrot.lane.b32.xlu0 %v1720, 32
    %v1723 = vpop.permute.xlu0 %1722
    %v1725 = vadd.f32 %v1715, %v1723
    %v1726 = vtanh.pop %v1725
    %1728 = vrot.lane.b32.xlu0 %v1726, 64
    %v1729 = vpop.permute.xlu0 %1728
    %v1731 = vmul.f32 %v1713, %v1729
    %1733 = vrot.lane.b32.xlu0 %v1731, 32
    %v1734 = vpop.permute.xlu0 %1733
    %1736 = vrot.lane.b32.xlu0 %v1539, 64
    %v1737 = vpop.permute.xlu0 %1736
    %v1739 = vsel %vm356, %v1734, %v1737
    %v1740 = vld [vmem:[%s467] sm:$0xff]
    %v1741 = vld [vmem:[%s467 + $0x8] sm:$0xff]
    %v1742 = vld [vmem:[%s467 + $0x10] sm:$0xff]
    %v1743 = vld [vmem:[%s467 + $0x18] sm:$0xff]
    %v1744 = vld [vmem:[%s467 + $0x20] sm:$0xff]
    %v1745 = vld [vmem:[%s467 + $0x28] sm:$0xff]
    %v1746 = vld [vmem:[%s467 + $0x30] sm:$0xff]
    %v1747 = vld [vmem:[%s467 + $0x38] sm:$0xff]
    %v1749 = vsel %vm416, %v1739, 0
    %1751 = vmatpush.msra.mxu0 0.0
    %1752 = vmatpush.msra.mxu0 0.0
    %1753 = vmatpush.msra.mxu0 0.0
    %1754 = vmatpush.msra.mxu0 0.0
    %1755 = vmatpush.msra.mxu0 0.0
    %1756 = vmatpush.msra.mxu0 0.0
    %1757 = vmatpush.msra.mxu0 0.0
    %1758 = vmatpush.msra.mxu0 0.0
    %1759 = vmatpush.msra.mxu0 %v1747
    %1760 = vmatpush.msra.mxu0 %v1746
    %1761 = vmatpush.msra.mxu0 %v1745
    %1762 = vmatpush.msra.mxu0 %v1744
    %1763 = vmatpush.msra.mxu0 %v1743
    %1764 = vmatpush.msra.mxu0 %v1742
    %1765 = vmatpush.msra.mxu0 %v1741
    %1766 = vmatpush.msra.mxu0 %v1740
    %1767 = vmatmul.f32.gmra.mxu0 %v1749
    %v1768 = vpop.f32.mrf.mxu0
    %v1769 = vadd.f32 %v476, %v1768
    %1770 = vdwg.mxu0
    %v1771 = vmul.f32 %v1769, 0.5
    %v1772 = vtanh.pop %v1771
    %v1773 = vadd.f32 %v1772, 1.0
    %v1774 = vmul.f32 %v1773, 0.5
    %v1775 = vtanh.pop %v1769
    %v1776 = vmul.f32 %v1774, %v1533
    %1778 = vrot.lane.b32.xlu0 %v1775, 64
    %v1779 = vpop.permute.xlu0 %1778
    %v1781 = vmul.f32 %v1774, %v1779
    %1783 = vrot.lane.b32.xlu0 %v1781, 32
    %v1784 = vpop.permute.xlu0 %1783
    %v1786 = vadd.f32 %v1776, %v1784
    %v1787 = vtanh.pop %v1786
    %1789 = vrot.lane.b32.xlu0 %v1787, 64
    %v1790 = vpop.permute.xlu0 %1789
    %v1792 = vmul.f32 %v1774, %v1790
    %1794 = vrot.lane.b32.xlu0 %v1792, 32
    %v1795 = vpop.permute.xlu0 %1794
    %1798 = vrot.lane.b32.xlu0 %v1601, 64
    %v1799 = vpop.permute.xlu0 %1798
    %v1801 = vsel %vm356, %v1795, %v1799
    %v1802 = vld [vmem:[%s527] sm:$0xff]
    %v1803 = vld [vmem:[%s527 + $0x8] sm:$0xff]
    %v1804 = vld [vmem:[%s527 + $0x10] sm:$0xff]
    %v1805 = vld [vmem:[%s527 + $0x18] sm:$0xff]
    %v1806 = vld [vmem:[%s527 + $0x20] sm:$0xff]
    %v1807 = vld [vmem:[%s527 + $0x28] sm:$0xff]
    %v1808 = vld [vmem:[%s527 + $0x30] sm:$0xff]
    %v1809 = vld [vmem:[%s527 + $0x38] sm:$0xff]
    %v1811 = vsel %vm416, %v1801, 0
    %1813 = vmatpush.msra.mxu0 0.0
    %1814 = vmatpush.msra.mxu0 0.0
    %1815 = vmatpush.msra.mxu0 0.0
    %1816 = vmatpush.msra.mxu0 0.0
    %1817 = vmatpush.msra.mxu0 0.0
    %1818 = vmatpush.msra.mxu0 0.0
    %1819 = vmatpush.msra.mxu0 0.0
    %1820 = vmatpush.msra.mxu0 0.0
    %1821 = vmatpush.msra.mxu0 %v1809
    %1822 = vmatpush.msra.mxu0 %v1808
    %1823 = vmatpush.msra.mxu0 %v1807
    %1824 = vmatpush.msra.mxu0 %v1806
    %1825 = vmatpush.msra.mxu0 %v1805
    %1826 = vmatpush.msra.mxu0 %v1804
    %1827 = vmatpush.msra.mxu0 %v1803
    %1828 = vmatpush.msra.mxu0 %v1802
    %1829 = vmatmul.f32.gmra.mxu0 %v1811
    %v1830 = vpop.f32.mrf.mxu0
    %v1831 = vadd.f32 %v536, %v1830
    %1832 = vdwg.mxu0
    %v1833 = vmul.f32 %v1831, 0.5
    %v1834 = vtanh.pop %v1833
    %v1835 = vadd.f32 %v1834, 1.0
    %v1836 = vmul.f32 %v1835, 0.5
    %v1837 = vtanh.pop %v1831
    %v1838 = vmul.f32 %v1836, %v1595
    %1840 = vrot.lane.b32.xlu0 %v1837, 64
    %v1841 = vpop.permute.xlu0 %1840
    %v1843 = vmul.f32 %v1836, %v1841
    %1845 = vrot.lane.b32.xlu0 %v1843, 32
    %v1846 = vpop.permute.xlu0 %1845
    %v1848 = vadd.f32 %v1838, %v1846
    %v1849 = vtanh.pop %v1848
    %1851 = vrot.lane.b32.xlu0 %v1849, 64
    %v1852 = vpop.permute.xlu0 %1851
    %v1854 = vmul.f32 %v1836, %v1852
    %v1855 = vmul.f32 %v1854, %v585
    %1857 = vrot.lane.b32.xlu0 %v1855, 32
    %v1858 = vpop.permute.xlu0 %1857
    %v1860 = vsel %vm356, %v1858, 0.0
    %1861 = vadd.xlane.f32.xlu0 %v1860
    %v1862 = vpop.xlane.xlu0 %1861
    %v1863 = vadd.f32 %v1862, %v596
    %v1864 = vtanh.pop %v1863
    %1866 = vrot.lane.b32.xlu0 %v1864, 6
    %v1867 = vpop.permute.xlu0 %1866
    %v1869 = vadd.f32 %v115, %v1867
    %1871 = vrot.lane.b32.xlu0 %v1869, 127
    %v1872 = vpop.permute.xlu0 %1871
    %vm1874 = vcmask 48168
    %1875 = vst.msk [vmem:[#allocation12] sm:$0xff] %vm1874, %v1872
    %v1876 = vld [vmem:[#allocation9] sm:$0xff]
    %v1877 = vld [vmem:[#allocation9 + $0x8] sm:$0xff]
    %v1878 = vld [vmem:[#allocation9 + $0x10] sm:$0xff]
    %v1879 = vld [vmem:[#allocation9 + $0x18] sm:$0xff]
    %v1880 = vsel %vm356, %v1673, 0
    %1882 = vmatpush.msra.mxu0 0.0
    %1883 = vmatpush.msra.mxu0 0.0
    %1884 = vmatpush.msra.mxu0 0.0
    %1885 = vmatpush.msra.mxu0 0.0
    %1886 = vmatpush.msra.mxu0 0.0
    %1887 = vmatpush.msra.mxu0 0.0
    %1888 = vmatpush.msra.mxu0 0.0
    %1889 = vmatpush.msra.mxu0 0.0
    %1890 = vmatpush.msra.mxu0 0.0
    %1891 = vmatpush.msra.mxu0 0.0
    %1892 = vmatpush.msra.mxu0 0.0
    %1893 = vmatpush.msra.mxu0 0.0
    %1894 = vmatpush.msra.mxu0 %v1879
    %1895 = vmatpush.msra.mxu0 %v1878
    %1896 = vmatpush.msra.mxu0 %v1877
    %1897 = vmatpush.msra.mxu0 %v1876
    %1898 = vmatmul.f32.gmra.mxu0 %v1880
    %v1899 = vpop.f32.mrf.mxu0
    %v1900 = vadd.f32 %v205, %v1899
    %1901 = vdwg.mxu0
    %v1902 = vmul.f32 %v1900, 0.5
    %v1903 = vtanh.pop %v1902
    %v1904 = vadd.f32 %v1903, 1.0
    %v1905 = vmul.f32 %v1904, 0.5
    %v1906 = vtanh.pop %v1900
    %v1907 = vmul.f32 %v1905, %v1664
    %1909 = vrot.lane.b32.xlu0 %v1906, 64
    %v1910 = vpop.permute.xlu0 %1909
    %v1912 = vmul.f32 %v1905, %v1910
    %1914 = vrot.lane.b32.xlu0 %v1912, 32
    %v1915 = vpop.permute.xlu0 %1914
    %v1917 = vadd.f32 %v1907, %v1915
    %v1918 = vtanh.pop %v1917
    %1920 = vrot.lane.b32.xlu0 %v1918, 64
    %v1921 = vpop.permute.xlu0 %1920
    %v1923 = vmul.f32 %v1905, %v1921
    %1925 = vrot.lane.b32.xlu0 %v1923, 32
    %v1926 = vpop.permute.xlu0 %1925
    %1928 = vrot.lane.b32.xlu0 %v1731, 64
    %v1929 = vpop.permute.xlu0 %1928
    %v1931 = vsel %vm356, %v1926, %v1929
    %v1932 = vld [vmem:[#allocation11] sm:$0xff]
    %v1933 = vld [vmem:[#allocation11 + $0x8] sm:$0xff]
    %v1934 = vld [vmem:[#allocation11 + $0x10] sm:$0xff]
    %v1935 = vld [vmem:[#allocation11 + $0x18] sm:$0xff]
    %v1936 = vld [vmem:[#allocation11 + $0x20] sm:$0xff]
    %v1937 = vld [vmem:[#allocation11 + $0x28] sm:$0xff]
    %v1938 = vld [vmem:[#allocation11 + $0x30] sm:$0xff]
    %v1939 = vld [vmem:[#allocation11 + $0x38] sm:$0xff]
    %v1941 = vsel %vm416, %v1931, 0
    %1943 = vmatpush.msra.mxu0 0.0
    %1944 = vmatpush.msra.mxu0 0.0
    %1945 = vmatpush.msra.mxu0 0.0
    %1946 = vmatpush.msra.mxu0 0.0
    %1947 = vmatpush.msra.mxu0 0.0
    %1948 = vmatpush.msra.mxu0 0.0
    %1949 = vmatpush.msra.mxu0 0.0
    %1950 = vmatpush.msra.mxu0 0.0
    %1951 = vmatpush.msra.mxu0 %v1939
    %1952 = vmatpush.msra.mxu0 %v1938
    %1953 = vmatpush.msra.mxu0 %v1937
    %1954 = vmatpush.msra.mxu0 %v1936
    %1955 = vmatpush.msra.mxu0 %v1935
    %1956 = vmatpush.msra.mxu0 %v1934
    %1957 = vmatpush.msra.mxu0 %v1933
    %1958 = vmatpush.msra.mxu0 %v1932
    %1959 = vmatmul.f32.gmra.mxu0 %v1941
    %v1960 = vpop.f32.mrf.mxu0
    %v1961 = vadd.f32 %v415, %v1960
    %1962 = vdwg.mxu0
    %v1963 = vmul.f32 %v1961, 0.5
    %v1964 = vtanh.pop %v1963
    %v1965 = vadd.f32 %v1964, 1.0
    %v1966 = vmul.f32 %v1965, 0.5
    %v1967 = vtanh.pop %v1961
    %v1968 = vmul.f32 %v1966, %v1725
    %1970 = vrot.lane.b32.xlu0 %v1967, 64
    %v1971 = vpop.permute.xlu0 %1970
    %v1973 = vmul.f32 %v1966, %v1971
    %1975 = vrot.lane.b32.xlu0 %v1973, 32
    %v1976 = vpop.permute.xlu0 %1975
    %v1978 = vadd.f32 %v1968, %v1976
    %v1979 = vtanh.pop %v1978
    %1981 = vrot.lane.b32.xlu0 %v1979, 64
    %v1982 = vpop.permute.xlu0 %1981
    %v1984 = vmul.f32 %v1966, %v1982
    %1986 = vrot.lane.b32.xlu0 %v1984, 32
    %v1987 = vpop.permute.xlu0 %1986
    %1989 = vrot.lane.b32.xlu0 %v1792, 64
    %v1990 = vpop.permute.xlu0 %1989
    %v1992 = vsel %vm356, %v1987, %v1990
    %v1993 = vld [vmem:[%s467] sm:$0xff]
    %v1994 = vld [vmem:[%s467 + $0x8] sm:$0xff]
    %v1995 = vld [vmem:[%s467 + $0x10] sm:$0xff]
    %v1996 = vld [vmem:[%s467 + $0x18] sm:$0xff]
    %v1997 = vld [vmem:[%s467 + $0x20] sm:$0xff]
    %v1998 = vld [vmem:[%s467 + $0x28] sm:$0xff]
    %v1999 = vld [vmem:[%s467 + $0x30] sm:$0xff]
    %v2000 = vld [vmem:[%s467 + $0x38] sm:$0xff]
    %v2002 = vsel %vm416, %v1992, 0
    %2004 = vmatpush.msra.mxu0 0.0
    %2005 = vmatpush.msra.mxu0 0.0
    %2006 = vmatpush.msra.mxu0 0.0
    %2007 = vmatpush.msra.mxu0 0.0
    %2008 = vmatpush.msra.mxu0 0.0
    %2009 = vmatpush.msra.mxu0 0.0
    %2010 = vmatpush.msra.mxu0 0.0
    %2011 = vmatpush.msra.mxu0 0.0
    %2012 = vmatpush.msra.mxu0 %v2000
    %2013 = vmatpush.msra.mxu0 %v1999
    %2014 = vmatpush.msra.mxu0 %v1998
    %2015 = vmatpush.msra.mxu0 %v1997
    %2016 = vmatpush.msra.mxu0 %v1996
    %2017 = vmatpush.msra.mxu0 %v1995
    %2018 = vmatpush.msra.mxu0 %v1994
    %2019 = vmatpush.msra.mxu0 %v1993
    %2020 = vmatmul.f32.gmra.mxu0 %v2002
    %v2021 = vpop.f32.mrf.mxu0
    %v2022 = vadd.f32 %v476, %v2021
    %2023 = vdwg.mxu0
    %v2024 = vmul.f32 %v2022, 0.5
    %v2025 = vtanh.pop %v2024
    %v2026 = vadd.f32 %v2025, 1.0
    %v2027 = vmul.f32 %v2026, 0.5
    %v2028 = vtanh.pop %v2022
    %v2029 = vmul.f32 %v2027, %v1786
    %2031 = vrot.lane.b32.xlu0 %v2028, 64
    %v2032 = vpop.permute.xlu0 %2031
    %v2034 = vmul.f32 %v2027, %v2032
    %2036 = vrot.lane.b32.xlu0 %v2034, 32
    %v2037 = vpop.permute.xlu0 %2036
    %v2039 = vadd.f32 %v2029, %v2037
    %v2040 = vtanh.pop %v2039
    %2042 = vrot.lane.b32.xlu0 %v2040, 64
    %v2043 = vpop.permute.xlu0 %2042
    %v2045 = vmul.f32 %v2027, %v2043
    %2047 = vrot.lane.b32.xlu0 %v2045, 32
    %v2048 = vpop.permute.xlu0 %2047
    %2051 = vrot.lane.b32.xlu0 %v1854, 64
    %v2052 = vpop.permute.xlu0 %2051
    %v2054 = vsel %vm356, %v2048, %v2052
    %v2055 = vld [vmem:[%s527] sm:$0xff]
    %v2056 = vld [vmem:[%s527 + $0x8] sm:$0xff]
    %v2057 = vld [vmem:[%s527 + $0x10] sm:$0xff]
    %v2058 = vld [vmem:[%s527 + $0x18] sm:$0xff]
    %v2059 = vld [vmem:[%s527 + $0x20] sm:$0xff]
    %v2060 = vld [vmem:[%s527 + $0x28] sm:$0xff]
    %v2061 = vld [vmem:[%s527 + $0x30] sm:$0xff]
    %v2062 = vld [vmem:[%s527 + $0x38] sm:$0xff]
    %v2064 = vsel %vm416, %v2054, 0
    %2066 = vmatpush.msra.mxu0 0.0
    %2067 = vmatpush.msra.mxu0 0.0
    %2068 = vmatpush.msra.mxu0 0.0
    %2069 = vmatpush.msra.mxu0 0.0
    %2070 = vmatpush.msra.mxu0 0.0
    %2071 = vmatpush.msra.mxu0 0.0
    %2072 = vmatpush.msra.mxu0 0.0
    %2073 = vmatpush.msra.mxu0 0.0
    %2074 = vmatpush.msra.mxu0 %v2062
    %2075 = vmatpush.msra.mxu0 %v2061
    %2076 = vmatpush.msra.mxu0 %v2060
    %2077 = vmatpush.msra.mxu0 %v2059
    %2078 = vmatpush.msra.mxu0 %v2058
    %2079 = vmatpush.msra.mxu0 %v2057
    %2080 = vmatpush.msra.mxu0 %v2056
    %2081 = vmatpush.msra.mxu0 %v2055
    %2082 = vmatmul.f32.gmra.mxu0 %v2064
    %v2083 = vpop.f32.mrf.mxu0
    %v2084 = vadd.f32 %v536, %v2083
    %2085 = vdwg.mxu0
    %v2086 = vmul.f32 %v2084, 0.5
    %v2087 = vtanh.pop %v2086
    %v2088 = vadd.f32 %v2087, 1.0
    %v2089 = vmul.f32 %v2088, 0.5
    %v2090 = vtanh.pop %v2084
    %v2091 = vmul.f32 %v2089, %v1848
    %2093 = vrot.lane.b32.xlu0 %v2090, 64
    %v2094 = vpop.permute.xlu0 %2093
    %v2096 = vmul.f32 %v2089, %v2094
    %2098 = vrot.lane.b32.xlu0 %v2096, 32
    %v2099 = vpop.permute.xlu0 %2098
    %v2101 = vadd.f32 %v2091, %v2099
    %v2102 = vtanh.pop %v2101
    %2104 = vrot.lane.b32.xlu0 %v2102, 64
    %v2105 = vpop.permute.xlu0 %2104
    %v2107 = vmul.f32 %v2089, %v2105
    %v2108 = vmul.f32 %v2107, %v585
    %2110 = vrot.lane.b32.xlu0 %v2108, 32
    %v2111 = vpop.permute.xlu0 %2110
    %v2113 = vsel %vm356, %v2111, 0.0
    %2114 = vadd.xlane.f32.xlu0 %v2113
    %v2115 = vpop.xlane.xlu0 %2114
    %v2116 = vadd.f32 %v2115, %v596
    %v2117 = vtanh.pop %v2116
    %2119 = vrot.lane.b32.xlu0 %v2117, 7
    %v2120 = vpop.permute.xlu0 %2119
    %v2122 = vadd.f32 %v115, %v2120
    %2124 = vrot.lane.b32.xlu0 %v2122, 127
    %v2125 = vpop.permute.xlu0 %2124
    %vm2127 = vcmask 56368
    %2128 = vst.msk [vmem:[#allocation12] sm:$0xff] %vm2127, %v2125
    %v2129 = vld [vmem:[#allocation9] sm:$0xff]
    %v2130 = vld [vmem:[#allocation9 + $0x8] sm:$0xff]
    %v2131 = vld [vmem:[#allocation9 + $0x10] sm:$0xff]
    %v2132 = vld [vmem:[#allocation9 + $0x18] sm:$0xff]
    %v2133 = vsel %vm356, %v1926, 0
    %2135 = vmatpush.msra.mxu0 0.0
    %2136 = vmatpush.msra.mxu0 0.0
    %2137 = vmatpush.msra.mxu0 0.0
    %2138 = vmatpush.msra.mxu0 0.0
    %2139 = vmatpush.msra.mxu0 0.0
    %2140 = vmatpush.msra.mxu0 0.0
    %2141 = vmatpush.msra.mxu0 0.0
    %2142 = vmatpush.msra.mxu0 0.0
    %2143 = vmatpush.msra.mxu0 0.0
    %2144 = vmatpush.msra.mxu0 0.0
    %2145 = vmatpush.msra.mxu0 0.0
    %2146 = vmatpush.msra.mxu0 0.0
    %2147 = vmatpush.msra.mxu0 %v2132
    %2148 = vmatpush.msra.mxu0 %v2131
    %2149 = vmatpush.msra.mxu0 %v2130
    %2150 = vmatpush.msra.mxu0 %v2129
    %2151 = vmatmul.f32.gmra.mxu0 %v2133
    %v2152 = vpop.f32.mrf.mxu0
    %v2153 = vadd.f32 %v217, %v2152
    %2154 = vdwg.mxu0
    %v2155 = vmul.f32 %v2153, 0.5
    %v2156 = vtanh.pop %v2155
    %v2157 = vadd.f32 %v2156, 1.0
    %v2158 = vmul.f32 %v2157, 0.5
    %v2159 = vtanh.pop %v2153
    %v2160 = vmul.f32 %v2158, %v1917
    %2162 = vrot.lane.b32.xlu0 %v2159, 64
    %v2163 = vpop.permute.xlu0 %2162
    %v2165 = vmul.f32 %v2158, %v2163
    %2167 = vrot.lane.b32.xlu0 %v2165, 32
    %v2168 = vpop.permute.xlu0 %2167
    %v2170 = vadd.f32 %v2160, %v2168
    %v2171 = vtanh.pop %v2170
    %2173 = vrot.lane.b32.xlu0 %v2171, 64
    %v2174 = vpop.permute.xlu0 %2173
    %v2176 = vmul.f32 %v2158, %v2174
    %2178 = vrot.lane.b32.xlu0 %v2176, 32
    %v2179 = vpop.permute.xlu0 %2178
    %2181 = vrot.lane.b32.xlu0 %v1984, 64
    %v2182 = vpop.permute.xlu0 %2181
    %v2184 = vsel %vm356, %v2179, %v2182
    %v2185 = vld [vmem:[#allocation11] sm:$0xff]
    %v2186 = vld [vmem:[#allocation11 + $0x8] sm:$0xff]
    %v2187 = vld [vmem:[#allocation11 + $0x10] sm:$0xff]
    %v2188 = vld [vmem:[#allocation11 + $0x18] sm:$0xff]
    %v2189 = vld [vmem:[#allocation11 + $0x20] sm:$0xff]
    %v2190 = vld [vmem:[#allocation11 + $0x28] sm:$0xff]
    %v2191 = vld [vmem:[#allocation11 + $0x30] sm:$0xff]
    %v2192 = vld [vmem:[#allocation11 + $0x38] sm:$0xff]
    %v2194 = vsel %vm416, %v2184, 0
    %2196 = vmatpush.msra.mxu0 0.0
    %2197 = vmatpush.msra.mxu0 0.0
    %2198 = vmatpush.msra.mxu0 0.0
    %2199 = vmatpush.msra.mxu0 0.0
    %2200 = vmatpush.msra.mxu0 0.0
    %2201 = vmatpush.msra.mxu0 0.0
    %2202 = vmatpush.msra.mxu0 0.0
    %2203 = vmatpush.msra.mxu0 0.0
    %2204 = vmatpush.msra.mxu0 %v2192
    %2205 = vmatpush.msra.mxu0 %v2191
    %2206 = vmatpush.msra.mxu0 %v2190
    %2207 = vmatpush.msra.mxu0 %v2189
    %2208 = vmatpush.msra.mxu0 %v2188
    %2209 = vmatpush.msra.mxu0 %v2187
    %2210 = vmatpush.msra.mxu0 %v2186
    %2211 = vmatpush.msra.mxu0 %v2185
    %2212 = vmatmul.f32.gmra.mxu0 %v2194
    %v2213 = vpop.f32.mrf.mxu0
    %v2214 = vadd.f32 %v415, %v2213
    %2215 = vdwg.mxu0
    %v2216 = vmul.f32 %v2214, 0.5
    %v2217 = vtanh.pop %v2216
    %v2218 = vadd.f32 %v2217, 1.0
    %v2219 = vmul.f32 %v2218, 0.5
    %v2220 = vtanh.pop %v2214
    %v2221 = vmul.f32 %v2219, %v1978
    %2223 = vrot.lane.b32.xlu0 %v2220, 64
    %v2224 = vpop.permute.xlu0 %2223
    %v2226 = vmul.f32 %v2219, %v2224
    %2228 = vrot.lane.b32.xlu0 %v2226, 32
    %v2229 = vpop.permute.xlu0 %2228
    %v2231 = vadd.f32 %v2221, %v2229
    %v2232 = vtanh.pop %v2231
    %2234 = vrot.lane.b32.xlu0 %v2232, 64
    %v2235 = vpop.permute.xlu0 %2234
    %v2237 = vmul.f32 %v2219, %v2235
    %2239 = vrot.lane.b32.xlu0 %v2237, 32
    %v2240 = vpop.permute.xlu0 %2239
    %2242 = vrot.lane.b32.xlu0 %v2045, 64
    %v2243 = vpop.permute.xlu0 %2242
    %v2245 = vsel %vm356, %v2240, %v2243
    %v2246 = vld [vmem:[%s467] sm:$0xff]
    %v2247 = vld [vmem:[%s467 + $0x8] sm:$0xff]
    %v2248 = vld [vmem:[%s467 + $0x10] sm:$0xff]
    %v2249 = vld [vmem:[%s467 + $0x18] sm:$0xff]
    %v2250 = vld [vmem:[%s467 + $0x20] sm:$0xff]
    %v2251 = vld [vmem:[%s467 + $0x28] sm:$0xff]
    %v2252 = vld [vmem:[%s467 + $0x30] sm:$0xff]
    %v2253 = vld [vmem:[%s467 + $0x38] sm:$0xff]
    %v2255 = vsel %vm416, %v2245, 0
    %2257 = vmatpush.msra.mxu0 0.0
    %2258 = vmatpush.msra.mxu0 0.0
    %2259 = vmatpush.msra.mxu0 0.0
    %2260 = vmatpush.msra.mxu0 0.0
    %2261 = vmatpush.msra.mxu0 0.0
    %2262 = vmatpush.msra.mxu0 0.0
    %2263 = vmatpush.msra.mxu0 0.0
    %2264 = vmatpush.msra.mxu0 0.0
    %2265 = vmatpush.msra.mxu0 %v2253
    %2266 = vmatpush.msra.mxu0 %v2252
    %2267 = vmatpush.msra.mxu0 %v2251
    %2268 = vmatpush.msra.mxu0 %v2250
    %2269 = vmatpush.msra.mxu0 %v2249
    %2270 = vmatpush.msra.mxu0 %v2248
    %2271 = vmatpush.msra.mxu0 %v2247
    %2272 = vmatpush.msra.mxu0 %v2246
    %2273 = vmatmul.f32.gmra.mxu0 %v2255
    %v2274 = vpop.f32.mrf.mxu0
    %v2275 = vadd.f32 %v476, %v2274
    %2276 = vdwg.mxu0
    %v2277 = vmul.f32 %v2275, 0.5
    %v2278 = vtanh.pop %v2277
    %v2279 = vadd.f32 %v2278, 1.0
    %v2280 = vmul.f32 %v2279, 0.5
    %v2281 = vtanh.pop %v2275
    %v2282 = vmul.f32 %v2280, %v2039
    %2284 = vrot.lane.b32.xlu0 %v2281, 64
    %v2285 = vpop.permute.xlu0 %2284
    %v2287 = vmul.f32 %v2280, %v2285
    %2289 = vrot.lane.b32.xlu0 %v2287, 32
    %v2290 = vpop.permute.xlu0 %2289
    %v2292 = vadd.f32 %v2282, %v2290
    %v2293 = vtanh.pop %v2292
    %2295 = vrot.lane.b32.xlu0 %v2293, 64
    %v2296 = vpop.permute.xlu0 %2295
    %v2298 = vmul.f32 %v2280, %v2296
    %2300 = vrot.lane.b32.xlu0 %v2298, 32
    %v2301 = vpop.permute.xlu0 %2300
    %2304 = vrot.lane.b32.xlu0 %v2107, 64
    %v2305 = vpop.permute.xlu0 %2304
    %v2307 = vsel %vm356, %v2301, %v2305
    %v2308 = vld [vmem:[%s527] sm:$0xff]
    %v2309 = vld [vmem:[%s527 + $0x8] sm:$0xff]
    %v2310 = vld [vmem:[%s527 + $0x10] sm:$0xff]
    %v2311 = vld [vmem:[%s527 + $0x18] sm:$0xff]
    %v2312 = vld [vmem:[%s527 + $0x20] sm:$0xff]
    %v2313 = vld [vmem:[%s527 + $0x28] sm:$0xff]
    %v2314 = vld [vmem:[%s527 + $0x30] sm:$0xff]
    %v2315 = vld [vmem:[%s527 + $0x38] sm:$0xff]
    %v2317 = vsel %vm416, %v2307, 0
    %2319 = vmatpush.msra.mxu0 0.0
    %2320 = vmatpush.msra.mxu0 0.0
    %2321 = vmatpush.msra.mxu0 0.0
    %2322 = vmatpush.msra.mxu0 0.0
    %2323 = vmatpush.msra.mxu0 0.0
    %2324 = vmatpush.msra.mxu0 0.0
    %2325 = vmatpush.msra.mxu0 0.0
    %2326 = vmatpush.msra.mxu0 0.0
    %2327 = vmatpush.msra.mxu0 %v2315
    %2328 = vmatpush.msra.mxu0 %v2314
    %2329 = vmatpush.msra.mxu0 %v2313
    %2330 = vmatpush.msra.mxu0 %v2312
    %2331 = vmatpush.msra.mxu0 %v2311
    %2332 = vmatpush.msra.mxu0 %v2310
    %2333 = vmatpush.msra.mxu0 %v2309
    %2334 = vmatpush.msra.mxu0 %v2308
    %2335 = vmatmul.f32.gmra.mxu0 %v2317
    %v2336 = vpop.f32.mrf.mxu0
    %v2337 = vadd.f32 %v536, %v2336
    %2338 = vdwg.mxu0
    %v2339 = vmul.f32 %v2337, 0.5
    %v2340 = vtanh.pop %v2339
    %v2341 = vadd.f32 %v2340, 1.0
    %v2342 = vmul.f32 %v2341, 0.5
    %v2343 = vtanh.pop %v2337
    %v2344 = vmul.f32 %v2342, %v2101
    %2346 = vrot.lane.b32.xlu0 %v2343, 64
    %v2347 = vpop.permute.xlu0 %2346
    %v2349 = vmul.f32 %v2342, %v2347
    %2351 = vrot.lane.b32.xlu0 %v2349, 32
    %v2352 = vpop.permute.xlu0 %2351
    %v2354 = vadd.f32 %v2344, %v2352
    %v2355 = vtanh.pop %v2354
    %2357 = vrot.lane.b32.xlu0 %v2355, 64
    %v2358 = vpop.permute.xlu0 %2357
    %v2360 = vmul.f32 %v2342, %v2358
    %v2361 = vmul.f32 %v2360, %v585
    %2363 = vrot.lane.b32.xlu0 %v2361, 32
    %v2364 = vpop.permute.xlu0 %2363
    %v2366 = vsel %vm356, %v2364, 0.0
    %2367 = vadd.xlane.f32.xlu0 %v2366
    %v2368 = vpop.xlane.xlu0 %2367
    %v2369 = vadd.f32 %v2368, %v596
    %v2370 = vtanh.pop %v2369
    %2372 = vrot.lane.b32.xlu0 %v2370, 8
    %v2373 = vpop.permute.xlu0 %2372
    %v2375 = vadd.f32 %v115, %v2373
    %2377 = vrot.lane.b32.xlu0 %v2375, 127
    %v2378 = vpop.permute.xlu0 %2377
    %vm2380 = vcmask 64568
    %2381 = vst.msk [vmem:[#allocation12] sm:$0xff] %vm2380, %v2378
    %v2382 = vld [vmem:[#allocation9] sm:$0xff]
    %v2383 = vld [vmem:[#allocation9 + $0x8] sm:$0xff]
    %v2384 = vld [vmem:[#allocation9 + $0x10] sm:$0xff]
    %v2385 = vld [vmem:[#allocation9 + $0x18] sm:$0xff]
    %v2386 = vsel %vm356, %v2179, 0
    %2388 = vmatpush.msra.mxu0 0.0
    %2389 = vmatpush.msra.mxu0 0.0
    %2390 = vmatpush.msra.mxu0 0.0
    %2391 = vmatpush.msra.mxu0 0.0
    %2392 = vmatpush.msra.mxu0 0.0
    %2393 = vmatpush.msra.mxu0 0.0
    %2394 = vmatpush.msra.mxu0 0.0
    %2395 = vmatpush.msra.mxu0 0.0
    %2396 = vmatpush.msra.mxu0 0.0
    %2397 = vmatpush.msra.mxu0 0.0
    %2398 = vmatpush.msra.mxu0 0.0
    %2399 = vmatpush.msra.mxu0 0.0
    %2400 = vmatpush.msra.mxu0 %v2385
    %2401 = vmatpush.msra.mxu0 %v2384
    %2402 = vmatpush.msra.mxu0 %v2383
    %2403 = vmatpush.msra.mxu0 %v2382
    %2404 = vmatmul.f32.gmra.mxu0 %v2386
    %v2405 = vpop.f32.mrf.mxu0
    %v2406 = vadd.f32 %v229, %v2405
    %2407 = vdwg.mxu0
    %v2408 = vmul.f32 %v2406, 0.5
    %v2409 = vtanh.pop %v2408
    %v2410 = vadd.f32 %v2409, 1.0
    %v2411 = vmul.f32 %v2410, 0.5
    %v2412 = vtanh.pop %v2406
    %v2413 = vmul.f32 %v2411, %v2170
    %2415 = vrot.lane.b32.xlu0 %v2412, 64
    %v2416 = vpop.permute.xlu0 %2415
    %v2418 = vmul.f32 %v2411, %v2416
    %2420 = vrot.lane.b32.xlu0 %v2418, 32
    %v2421 = vpop.permute.xlu0 %2420
    %v2423 = vadd.f32 %v2413, %v2421
    %v2424 = vtanh.pop %v2423
    %2426 = vrot.lane.b32.xlu0 %v2424, 64
    %v2427 = vpop.permute.xlu0 %2426
    %v2429 = vmul.f32 %v2411, %v2427
    %2431 = vrot.lane.b32.xlu0 %v2429, 32
    %v2432 = vpop.permute.xlu0 %2431
    %2434 = vrot.lane.b32.xlu0 %v2237, 64
    %v2435 = vpop.permute.xlu0 %2434
    %v2437 = vsel %vm356, %v2432, %v2435
    %v2438 = vld [vmem:[#allocation11] sm:$0xff]
    %v2439 = vld [vmem:[#allocation11 + $0x8] sm:$0xff]
    %v2440 = vld [vmem:[#allocation11 + $0x10] sm:$0xff]
    %v2441 = vld [vmem:[#allocation11 + $0x18] sm:$0xff]
    %v2442 = vld [vmem:[#allocation11 + $0x20] sm:$0xff]
    %v2443 = vld [vmem:[#allocation11 + $0x28] sm:$0xff]
    %v2444 = vld [vmem:[#allocation11 + $0x30] sm:$0xff]
    %v2445 = vld [vmem:[#allocation11 + $0x38] sm:$0xff]
    %v2447 = vsel %vm416, %v2437, 0
    %2449 = vmatpush.msra.mxu0 0.0
    %2450 = vmatpush.msra.mxu0 0.0
    %2451 = vmatpush.msra.mxu0 0.0
    %2452 = vmatpush.msra.mxu0 0.0
    %2453 = vmatpush.msra.mxu0 0.0
    %2454 = vmatpush.msra.mxu0 0.0
    %2455 = vmatpush.msra.mxu0 0.0
    %2456 = vmatpush.msra.mxu0 0.0
    %2457 = vmatpush.msra.mxu0 %v2445
    %2458 = vmatpush.msra.mxu0 %v2444
    %2459 = vmatpush.msra.mxu0 %v2443
    %2460 = vmatpush.msra.mxu0 %v2442
    %2461 = vmatpush.msra.mxu0 %v2441
    %2462 = vmatpush.msra.mxu0 %v2440
    %2463 = vmatpush.msra.mxu0 %v2439
    %2464 = vmatpush.msra.mxu0 %v2438
    %2465 = vmatmul.f32.gmra.mxu0 %v2447
    %v2466 = vpop.f32.mrf.mxu0
    %v2467 = vadd.f32 %v415, %v2466
    %2468 = vdwg.mxu0
    %v2469 = vmul.f32 %v2467, 0.5
    %v2470 = vtanh.pop %v2469
    %v2471 = vadd.f32 %v2470, 1.0
    %v2472 = vmul.f32 %v2471, 0.5
    %v2473 = vtanh.pop %v2467
    %v2474 = vmul.f32 %v2472, %v2231
    %2476 = vrot.lane.b32.xlu0 %v2473, 64
    %v2477 = vpop.permute.xlu0 %2476
    %v2479 = vmul.f32 %v2472, %v2477
    %2481 = vrot.lane.b32.xlu0 %v2479, 32
    %v2482 = vpop.permute.xlu0 %2481
    %v2484 = vadd.f32 %v2474, %v2482
    %v2485 = vtanh.pop %v2484
    %2487 = vrot.lane.b32.xlu0 %v2485, 64
    %v2488 = vpop.permute.xlu0 %2487
    %v2490 = vmul.f32 %v2472, %v2488
    %2492 = vrot.lane.b32.xlu0 %v2490, 32
    %v2493 = vpop.permute.xlu0 %2492
    %2495 = vrot.lane.b32.xlu0 %v2298, 64
    %v2496 = vpop.permute.xlu0 %2495
    %v2498 = vsel %vm356, %v2493, %v2496
    %v2499 = vld [vmem:[%s467] sm:$0xff]
    %v2500 = vld [vmem:[%s467 + $0x8] sm:$0xff]
    %v2501 = vld [vmem:[%s467 + $0x10] sm:$0xff]
    %v2502 = vld [vmem:[%s467 + $0x18] sm:$0xff]
    %v2503 = vld [vmem:[%s467 + $0x20] sm:$0xff]
    %v2504 = vld [vmem:[%s467 + $0x28] sm:$0xff]
    %v2505 = vld [vmem:[%s467 + $0x30] sm:$0xff]
    %v2506 = vld [vmem:[%s467 + $0x38] sm:$0xff]
    %v2508 = vsel %vm416, %v2498, 0
    %2510 = vmatpush.msra.mxu0 0.0
    %2511 = vmatpush.msra.mxu0 0.0
    %2512 = vmatpush.msra.mxu0 0.0
    %2513 = vmatpush.msra.mxu0 0.0
    %2514 = vmatpush.msra.mxu0 0.0
    %2515 = vmatpush.msra.mxu0 0.0
    %2516 = vmatpush.msra.mxu0 0.0
    %2517 = vmatpush.msra.mxu0 0.0
    %2518 = vmatpush.msra.mxu0 %v2506
    %2519 = vmatpush.msra.mxu0 %v2505
    %2520 = vmatpush.msra.mxu0 %v2504
    %2521 = vmatpush.msra.mxu0 %v2503
    %2522 = vmatpush.msra.mxu0 %v2502
    %2523 = vmatpush.msra.mxu0 %v2501
    %2524 = vmatpush.msra.mxu0 %v2500
    %2525 = vmatpush.msra.mxu0 %v2499
    %2526 = vmatmul.f32.gmra.mxu0 %v2508
    %v2527 = vpop.f32.mrf.mxu0
    %v2528 = vadd.f32 %v476, %v2527
    %2529 = vdwg.mxu0
    %v2530 = vmul.f32 %v2528, 0.5
    %v2531 = vtanh.pop %v2530
    %v2532 = vadd.f32 %v2531, 1.0
    %v2533 = vmul.f32 %v2532, 0.5
    %v2534 = vtanh.pop %v2528
    %v2535 = vmul.f32 %v2533, %v2292
    %2537 = vrot.lane.b32.xlu0 %v2534, 64
    %v2538 = vpop.permute.xlu0 %2537
    %v2540 = vmul.f32 %v2533, %v2538
    %2542 = vrot.lane.b32.xlu0 %v2540, 32
    %v2543 = vpop.permute.xlu0 %2542
    %v2545 = vadd.f32 %v2535, %v2543
    %v2546 = vtanh.pop %v2545
    %2548 = vrot.lane.b32.xlu0 %v2546, 64
    %v2549 = vpop.permute.xlu0 %2548
    %v2551 = vmul.f32 %v2533, %v2549
    %2553 = vrot.lane.b32.xlu0 %v2551, 32
    %v2554 = vpop.permute.xlu0 %2553
    %2557 = vrot.lane.b32.xlu0 %v2360, 64
    %v2558 = vpop.permute.xlu0 %2557
    %v2560 = vsel %vm356, %v2554, %v2558
    %v2561 = vld [vmem:[%s527] sm:$0xff]
    %v2562 = vld [vmem:[%s527 + $0x8] sm:$0xff]
    %v2563 = vld [vmem:[%s527 + $0x10] sm:$0xff]
    %v2564 = vld [vmem:[%s527 + $0x18] sm:$0xff]
    %v2565 = vld [vmem:[%s527 + $0x20] sm:$0xff]
    %v2566 = vld [vmem:[%s527 + $0x28] sm:$0xff]
    %v2567 = vld [vmem:[%s527 + $0x30] sm:$0xff]
    %v2568 = vld [vmem:[%s527 + $0x38] sm:$0xff]
    %v2570 = vsel %vm416, %v2560, 0
    %2572 = vmatpush.msra.mxu0 0.0
    %2573 = vmatpush.msra.mxu0 0.0
    %2574 = vmatpush.msra.mxu0 0.0
    %2575 = vmatpush.msra.mxu0 0.0
    %2576 = vmatpush.msra.mxu0 0.0
    %2577 = vmatpush.msra.mxu0 0.0
    %2578 = vmatpush.msra.mxu0 0.0
    %2579 = vmatpush.msra.mxu0 0.0
    %2580 = vmatpush.msra.mxu0 %v2568
    %2581 = vmatpush.msra.mxu0 %v2567
    %2582 = vmatpush.msra.mxu0 %v2566
    %2583 = vmatpush.msra.mxu0 %v2565
    %2584 = vmatpush.msra.mxu0 %v2564
    %2585 = vmatpush.msra.mxu0 %v2563
    %2586 = vmatpush.msra.mxu0 %v2562
    %2587 = vmatpush.msra.mxu0 %v2561
    %2588 = vmatmul.f32.gmra.mxu0 %v2570
    %v2589 = vpop.f32.mrf.mxu0
    %v2590 = vadd.f32 %v536, %v2589
    %2591 = vdwg.mxu0
    %v2592 = vmul.f32 %v2590, 0.5
    %v2593 = vtanh.pop %v2592
    %v2594 = vadd.f32 %v2593, 1.0
    %v2595 = vmul.f32 %v2594, 0.5
    %v2596 = vtanh.pop %v2590
    %v2597 = vmul.f32 %v2595, %v2354
    %2599 = vrot.lane.b32.xlu0 %v2596, 64
    %v2600 = vpop.permute.xlu0 %2599
    %v2602 = vmul.f32 %v2595, %v2600
    %2604 = vrot.lane.b32.xlu0 %v2602, 32
    %v2605 = vpop.permute.xlu0 %2604
    %v2607 = vadd.f32 %v2597, %v2605
    %v2608 = vtanh.pop %v2607
    %2610 = vrot.lane.b32.xlu0 %v2608, 64
    %v2611 = vpop.permute.xlu0 %2610
    %v2613 = vmul.f32 %v2595, %v2611
    %v2614 = vmul.f32 %v2613, %v585
    %2616 = vrot.lane.b32.xlu0 %v2614, 32
    %v2617 = vpop.permute.xlu0 %2616
    %v2619 = vsel %vm356, %v2617, 0.0
    %2620 = vadd.xlane.f32.xlu0 %v2619
    %v2621 = vpop.xlane.xlu0 %2620
    %v2622 = vadd.f32 %v2621, %v596
    %v2623 = vtanh.pop %v2622
    %2625 = vrot.lane.b32.xlu0 %v2623, 9
    %v2626 = vpop.permute.xlu0 %2625
    %v2628 = vadd.f32 %v115, %v2626
    %2630 = vrot.lane.b32.xlu0 %v2628, 127
    %v2631 = vpop.permute.xlu0 %2630
    %vm2633 = vcmask 72768
    %2634 = vst.msk [vmem:[#allocation12] sm:$0xff] %vm2633, %v2631
    %v2635 = vld [vmem:[#allocation9] sm:$0xff]
    %v2636 = vld [vmem:[#allocation9 + $0x8] sm:$0xff]
    %v2637 = vld [vmem:[#allocation9 + $0x10] sm:$0xff]
    %v2638 = vld [vmem:[#allocation9 + $0x18] sm:$0xff]
    %v2639 = vsel %vm356, %v2432, 0
    %2641 = vmatpush.msra.mxu0 0.0
    %2642 = vmatpush.msra.mxu0 0.0
    %2643 = vmatpush.msra.mxu0 0.0
    %2644 = vmatpush.msra.mxu0 0.0
    %2645 = vmatpush.msra.mxu0 0.0
    %2646 = vmatpush.msra.mxu0 0.0
    %2647 = vmatpush.msra.mxu0 0.0
    %2648 = vmatpush.msra.mxu0 0.0
    %2649 = vmatpush.msra.mxu0 0.0
    %2650 = vmatpush.msra.mxu0 0.0
    %2651 = vmatpush.msra.mxu0 0.0
    %2652 = vmatpush.msra.mxu0 0.0
    %2653 = vmatpush.msra.mxu0 %v2638
    %2654 = vmatpush.msra.mxu0 %v2637
    %2655 = vmatpush.msra.mxu0 %v2636
    %2656 = vmatpush.msra.mxu0 %v2635
    %2657 = vmatmul.f32.gmra.mxu0 %v2639
    %v2658 = vpop.f32.mrf.mxu0
    %v2659 = vadd.f32 %v241, %v2658
    %2660 = vdwg.mxu0
    %v2661 = vmul.f32 %v2659, 0.5
    %v2662 = vtanh.pop %v2661
    %v2663 = vadd.f32 %v2662, 1.0
    %v2664 = vmul.f32 %v2663, 0.5
    %v2665 = vtanh.pop %v2659
    %v2666 = vmul.f32 %v2664, %v2423
    %2668 = vrot.lane.b32.xlu0 %v2665, 64
    %v2669 = vpop.permute.xlu0 %2668
    %v2671 = vmul.f32 %v2664, %v2669
    %2673 = vrot.lane.b32.xlu0 %v2671, 32
    %v2674 = vpop.permute.xlu0 %2673
    %v2676 = vadd.f32 %v2666, %v2674
    %v2677 = vtanh.pop %v2676
    %2679 = vrot.lane.b32.xlu0 %v2677, 64
    %v2680 = vpop.permute.xlu0 %2679
    %v2682 = vmul.f32 %v2664, %v2680
    %2684 = vrot.lane.b32.xlu0 %v2682, 32
    %v2685 = vpop.permute.xlu0 %2684
    %2687 = vrot.lane.b32.xlu0 %v2490, 64
    %v2688 = vpop.permute.xlu0 %2687
    %v2690 = vsel %vm356, %v2685, %v2688
    %v2691 = vld [vmem:[#allocation11] sm:$0xff]
    %v2692 = vld [vmem:[#allocation11 + $0x8] sm:$0xff]
    %v2693 = vld [vmem:[#allocation11 + $0x10] sm:$0xff]
    %v2694 = vld [vmem:[#allocation11 + $0x18] sm:$0xff]
    %v2695 = vld [vmem:[#allocation11 + $0x20] sm:$0xff]
    %v2696 = vld [vmem:[#allocation11 + $0x28] sm:$0xff]
    %v2697 = vld [vmem:[#allocation11 + $0x30] sm:$0xff]
    %v2698 = vld [vmem:[#allocation11 + $0x38] sm:$0xff]
    %v2700 = vsel %vm416, %v2690, 0
    %2702 = vmatpush.msra.mxu0 0.0
    %2703 = vmatpush.msra.mxu0 0.0
    %2704 = vmatpush.msra.mxu0 0.0
    %2705 = vmatpush.msra.mxu0 0.0
    %2706 = vmatpush.msra.mxu0 0.0
    %2707 = vmatpush.msra.mxu0 0.0
    %2708 = vmatpush.msra.mxu0 0.0
    %2709 = vmatpush.msra.mxu0 0.0
    %2710 = vmatpush.msra.mxu0 %v2698
    %2711 = vmatpush.msra.mxu0 %v2697
    %2712 = vmatpush.msra.mxu0 %v2696
    %2713 = vmatpush.msra.mxu0 %v2695
    %2714 = vmatpush.msra.mxu0 %v2694
    %2715 = vmatpush.msra.mxu0 %v2693
    %2716 = vmatpush.msra.mxu0 %v2692
    %2717 = vmatpush.msra.mxu0 %v2691
    %2718 = vmatmul.f32.gmra.mxu0 %v2700
    %v2719 = vpop.f32.mrf.mxu0
    %v2720 = vadd.f32 %v415, %v2719
    %2721 = vdwg.mxu0
    %v2722 = vmul.f32 %v2720, 0.5
    %v2723 = vtanh.pop %v2722
    %v2724 = vadd.f32 %v2723, 1.0
    %v2725 = vmul.f32 %v2724, 0.5
    %v2726 = vtanh.pop %v2720
    %v2727 = vmul.f32 %v2725, %v2484
    %2729 = vrot.lane.b32.xlu0 %v2726, 64
    %v2730 = vpop.permute.xlu0 %2729
    %v2732 = vmul.f32 %v2725, %v2730
    %2734 = vrot.lane.b32.xlu0 %v2732, 32
    %v2735 = vpop.permute.xlu0 %2734
    %v2737 = vadd.f32 %v2727, %v2735
    %v2738 = vtanh.pop %v2737
    %2740 = vrot.lane.b32.xlu0 %v2738, 64
    %v2741 = vpop.permute.xlu0 %2740
    %v2743 = vmul.f32 %v2725, %v2741
    %2745 = vrot.lane.b32.xlu0 %v2743, 32
    %v2746 = vpop.permute.xlu0 %2745
    %2748 = vrot.lane.b32.xlu0 %v2551, 64
    %v2749 = vpop.permute.xlu0 %2748
    %v2751 = vsel %vm356, %v2746, %v2749
    %v2752 = vld [vmem:[%s467] sm:$0xff]
    %v2753 = vld [vmem:[%s467 + $0x8] sm:$0xff]
    %v2754 = vld [vmem:[%s467 + $0x10] sm:$0xff]
    %v2755 = vld [vmem:[%s467 + $0x18] sm:$0xff]
    %v2756 = vld [vmem:[%s467 + $0x20] sm:$0xff]
    %v2757 = vld [vmem:[%s467 + $0x28] sm:$0xff]
    %v2758 = vld [vmem:[%s467 + $0x30] sm:$0xff]
    %v2759 = vld [vmem:[%s467 + $0x38] sm:$0xff]
    %v2761 = vsel %vm416, %v2751, 0
    %2763 = vmatpush.msra.mxu0 0.0
    %2764 = vmatpush.msra.mxu0 0.0
    %2765 = vmatpush.msra.mxu0 0.0
    %2766 = vmatpush.msra.mxu0 0.0
    %2767 = vmatpush.msra.mxu0 0.0
    %2768 = vmatpush.msra.mxu0 0.0
    %2769 = vmatpush.msra.mxu0 0.0
    %2770 = vmatpush.msra.mxu0 0.0
    %2771 = vmatpush.msra.mxu0 %v2759
    %2772 = vmatpush.msra.mxu0 %v2758
    %2773 = vmatpush.msra.mxu0 %v2757
    %2774 = vmatpush.msra.mxu0 %v2756
    %2775 = vmatpush.msra.mxu0 %v2755
    %2776 = vmatpush.msra.mxu0 %v2754
    %2777 = vmatpush.msra.mxu0 %v2753
    %2778 = vmatpush.msra.mxu0 %v2752
    %2779 = vmatmul.f32.gmra.mxu0 %v2761
    %v2780 = vpop.f32.mrf.mxu0
    %v2781 = vadd.f32 %v476, %v2780
    %2782 = vdwg.mxu0
    %v2783 = vmul.f32 %v2781, 0.5
    %v2784 = vtanh.pop %v2783
    %v2785 = vadd.f32 %v2784, 1.0
    %v2786 = vmul.f32 %v2785, 0.5
    %v2787 = vtanh.pop %v2781
    %v2788 = vmul.f32 %v2786, %v2545
    %2790 = vrot.lane.b32.xlu0 %v2787, 64
    %v2791 = vpop.permute.xlu0 %2790
    %v2793 = vmul.f32 %v2786, %v2791
    %2795 = vrot.lane.b32.xlu0 %v2793, 32
    %v2796 = vpop.permute.xlu0 %2795
    %v2798 = vadd.f32 %v2788, %v2796
    %v2799 = vtanh.pop %v2798
    %2801 = vrot.lane.b32.xlu0 %v2799, 64
    %v2802 = vpop.permute.xlu0 %2801
    %v2804 = vmul.f32 %v2786, %v2802
    %2806 = vrot.lane.b32.xlu0 %v2804, 32
    %v2807 = vpop.permute.xlu0 %2806
    %2810 = vrot.lane.b32.xlu0 %v2613, 64
    %v2811 = vpop.permute.xlu0 %2810
    %v2813 = vsel %vm356, %v2807, %v2811
    %v2814 = vld [vmem:[%s527] sm:$0xff]
    %v2815 = vld [vmem:[%s527 + $0x8] sm:$0xff]
    %v2816 = vld [vmem:[%s527 + $0x10] sm:$0xff]
    %v2817 = vld [vmem:[%s527 + $0x18] sm:$0xff]
    %v2818 = vld [vmem:[%s527 + $0x20] sm:$0xff]
    %v2819 = vld [vmem:[%s527 + $0x28] sm:$0xff]
    %v2820 = vld [vmem:[%s527 + $0x30] sm:$0xff]
    %v2821 = vld [vmem:[%s527 + $0x38] sm:$0xff]
    %v2823 = vsel %vm416, %v2813, 0
    %2825 = vmatpush.msra.mxu0 0.0
    %2826 = vmatpush.msra.mxu0 0.0
    %2827 = vmatpush.msra.mxu0 0.0
    %2828 = vmatpush.msra.mxu0 0.0
    %2829 = vmatpush.msra.mxu0 0.0
    %2830 = vmatpush.msra.mxu0 0.0
    %2831 = vmatpush.msra.mxu0 0.0
    %2832 = vmatpush.msra.mxu0 0.0
    %2833 = vmatpush.msra.mxu0 %v2821
    %2834 = vmatpush.msra.mxu0 %v2820
    %2835 = vmatpush.msra.mxu0 %v2819
    %2836 = vmatpush.msra.mxu0 %v2818
    %2837 = vmatpush.msra.mxu0 %v2817
    %2838 = vmatpush.msra.mxu0 %v2816
    %2839 = vmatpush.msra.mxu0 %v2815
    %2840 = vmatpush.msra.mxu0 %v2814
    %2841 = vmatmul.f32.gmra.mxu0 %v2823
    %v2842 = vpop.f32.mrf.mxu0
    %v2843 = vadd.f32 %v536, %v2842
    %2844 = vdwg.mxu0
    %v2845 = vmul.f32 %v2843, 0.5
    %v2846 = vtanh.pop %v2845
    %v2847 = vadd.f32 %v2846, 1.0
    %v2848 = vmul.f32 %v2847, 0.5
    %v2849 = vtanh.pop %v2843
    %v2850 = vmul.f32 %v2848, %v2607
    %2852 = vrot.lane.b32.xlu0 %v2849, 64
    %v2853 = vpop.permute.xlu0 %2852
    %v2855 = vmul.f32 %v2848, %v2853
    %2857 = vrot.lane.b32.xlu0 %v2855, 32
    %v2858 = vpop.permute.xlu0 %2857
    %v2860 = vadd.f32 %v2850, %v2858
    %v2861 = vtanh.pop %v2860
    %2863 = vrot.lane.b32.xlu0 %v2861, 64
    %v2864 = vpop.permute.xlu0 %2863
    %v2866 = vmul.f32 %v2848, %v2864
    %v2867 = vmul.f32 %v2866, %v585
    %2869 = vrot.lane.b32.xlu0 %v2867, 32
    %v2870 = vpop.permute.xlu0 %2869
    %v2872 = vsel %vm356, %v2870, 0.0
    %2873 = vadd.xlane.f32.xlu0 %v2872
    %v2874 = vpop.xlane.xlu0 %2873
    %v2875 = vadd.f32 %v2874, %v596
    %v2876 = vtanh.pop %v2875
    %2878 = vrot.lane.b32.xlu0 %v2876, 10
    %v2879 = vpop.permute.xlu0 %2878
    %v2881 = vadd.f32 %v115, %v2879
    %2883 = vrot.lane.b32.xlu0 %v2881, 127
    %v2884 = vpop.permute.xlu0 %2883
    %vm2886 = vcmask 80968
    %2887 = vst.msk [vmem:[#allocation12] sm:$0xff] %vm2886, %v2884
    %v2888 = vld [vmem:[#allocation9] sm:$0xff]
    %v2889 = vld [vmem:[#allocation9 + $0x8] sm:$0xff]
    %v2890 = vld [vmem:[#allocation9 + $0x10] sm:$0xff]
    %v2891 = vld [vmem:[#allocation9 + $0x18] sm:$0xff]
    %v2892 = vsel %vm356, %v2685, 0
    %2894 = vmatpush.msra.mxu0 0.0
    %2895 = vmatpush.msra.mxu0 0.0
    %2896 = vmatpush.msra.mxu0 0.0
    %2897 = vmatpush.msra.mxu0 0.0
    %2898 = vmatpush.msra.mxu0 0.0
    %2899 = vmatpush.msra.mxu0 0.0
    %2900 = vmatpush.msra.mxu0 0.0
    %2901 = vmatpush.msra.mxu0 0.0
    %2902 = vmatpush.msra.mxu0 0.0
    %2903 = vmatpush.msra.mxu0 0.0
    %2904 = vmatpush.msra.mxu0 0.0
    %2905 = vmatpush.msra.mxu0 0.0
    %2906 = vmatpush.msra.mxu0 %v2891
    %2907 = vmatpush.msra.mxu0 %v2890
    %2908 = vmatpush.msra.mxu0 %v2889
    %2909 = vmatpush.msra.mxu0 %v2888
    %2910 = vmatmul.f32.gmra.mxu0 %v2892
    %v2911 = vpop.f32.mrf.mxu0
    %v2912 = vadd.f32 %v253, %v2911
    %2913 = vdwg.mxu0
    %v2914 = vmul.f32 %v2912, 0.5
    %v2915 = vtanh.pop %v2914
    %v2916 = vadd.f32 %v2915, 1.0
    %v2917 = vmul.f32 %v2916, 0.5
    %v2918 = vtanh.pop %v2912
    %v2919 = vmul.f32 %v2917, %v2676
    %2921 = vrot.lane.b32.xlu0 %v2918, 64
    %v2922 = vpop.permute.xlu0 %2921
    %v2924 = vmul.f32 %v2917, %v2922
    %2926 = vrot.lane.b32.xlu0 %v2924, 32
    %v2927 = vpop.permute.xlu0 %2926
    %v2929 = vadd.f32 %v2919, %v2927
    %v2930 = vtanh.pop %v2929
    %2932 = vrot.lane.b32.xlu0 %v2930, 64
    %v2933 = vpop.permute.xlu0 %2932
    %v2935 = vmul.f32 %v2917, %v2933
    %2937 = vrot.lane.b32.xlu0 %v2935, 32
    %v2938 = vpop.permute.xlu0 %2937
    %2940 = vrot.lane.b32.xlu0 %v2743, 64
    %v2941 = vpop.permute.xlu0 %2940
    %v2943 = vsel %vm356, %v2938, %v2941
    %v2944 = vld [vmem:[#allocation11] sm:$0xff]
    %v2945 = vld [vmem:[#allocation11 + $0x8] sm:$0xff]
    %v2946 = vld [vmem:[#allocation11 + $0x10] sm:$0xff]
    %v2947 = vld [vmem:[#allocation11 + $0x18] sm:$0xff]
    %v2948 = vld [vmem:[#allocation11 + $0x20] sm:$0xff]
    %v2949 = vld [vmem:[#allocation11 + $0x28] sm:$0xff]
    %v2950 = vld [vmem:[#allocation11 + $0x30] sm:$0xff]
    %v2951 = vld [vmem:[#allocation11 + $0x38] sm:$0xff]
    %v2953 = vsel %vm416, %v2943, 0
    %2955 = vmatpush.msra.mxu0 0.0
    %2956 = vmatpush.msra.mxu0 0.0
    %2957 = vmatpush.msra.mxu0 0.0
    %2958 = vmatpush.msra.mxu0 0.0
    %2959 = vmatpush.msra.mxu0 0.0
    %2960 = vmatpush.msra.mxu0 0.0
    %2961 = vmatpush.msra.mxu0 0.0
    %2962 = vmatpush.msra.mxu0 0.0
    %2963 = vmatpush.msra.mxu0 %v2951
    %2964 = vmatpush.msra.mxu0 %v2950
    %2965 = vmatpush.msra.mxu0 %v2949
    %2966 = vmatpush.msra.mxu0 %v2948
    %2967 = vmatpush.msra.mxu0 %v2947
    %2968 = vmatpush.msra.mxu0 %v2946
    %2969 = vmatpush.msra.mxu0 %v2945
    %2970 = vmatpush.msra.mxu0 %v2944
    %2971 = vmatmul.f32.gmra.mxu0 %v2953
    %v2972 = vpop.f32.mrf.mxu0
    %v2973 = vadd.f32 %v415, %v2972
    %2974 = vdwg.mxu0
    %v2975 = vmul.f32 %v2973, 0.5
    %v2976 = vtanh.pop %v2975
    %v2977 = vadd.f32 %v2976, 1.0
    %v2978 = vmul.f32 %v2977, 0.5
    %v2979 = vtanh.pop %v2973
    %v2980 = vmul.f32 %v2978, %v2737
    %2982 = vrot.lane.b32.xlu0 %v2979, 64
    %v2983 = vpop.permute.xlu0 %2982
    %v2985 = vmul.f32 %v2978, %v2983
    %2987 = vrot.lane.b32.xlu0 %v2985, 32
    %v2988 = vpop.permute.xlu0 %2987
    %v2990 = vadd.f32 %v2980, %v2988
    %v2991 = vtanh.pop %v2990
    %2993 = vrot.lane.b32.xlu0 %v2991, 64
    %v2994 = vpop.permute.xlu0 %2993
    %v2996 = vmul.f32 %v2978, %v2994
    %2998 = vrot.lane.b32.xlu0 %v2996, 32
    %v2999 = vpop.permute.xlu0 %2998
    %3001 = vrot.lane.b32.xlu0 %v2804, 64
    %v3002 = vpop.permute.xlu0 %3001
    %v3004 = vsel %vm356, %v2999, %v3002
    %v3005 = vld [vmem:[%s467] sm:$0xff]
    %v3006 = vld [vmem:[%s467 + $0x8] sm:$0xff]
    %v3007 = vld [vmem:[%s467 + $0x10] sm:$0xff]
    %v3008 = vld [vmem:[%s467 + $0x18] sm:$0xff]
    %v3009 = vld [vmem:[%s467 + $0x20] sm:$0xff]
    %v3010 = vld [vmem:[%s467 + $0x28] sm:$0xff]
    %v3011 = vld [vmem:[%s467 + $0x30] sm:$0xff]
    %v3012 = vld [vmem:[%s467 + $0x38] sm:$0xff]
    %v3014 = vsel %vm416, %v3004, 0
    %3016 = vmatpush.msra.mxu0 0.0
    %3017 = vmatpush.msra.mxu0 0.0
    %3018 = vmatpush.msra.mxu0 0.0
    %3019 = vmatpush.msra.mxu0 0.0
    %3020 = vmatpush.msra.mxu0 0.0
    %3021 = vmatpush.msra.mxu0 0.0
    %3022 = vmatpush.msra.mxu0 0.0
    %3023 = vmatpush.msra.mxu0 0.0
    %3024 = vmatpush.msra.mxu0 %v3012
    %3025 = vmatpush.msra.mxu0 %v3011
    %3026 = vmatpush.msra.mxu0 %v3010
    %3027 = vmatpush.msra.mxu0 %v3009
    %3028 = vmatpush.msra.mxu0 %v3008
    %3029 = vmatpush.msra.mxu0 %v3007
    %3030 = vmatpush.msra.mxu0 %v3006
    %3031 = vmatpush.msra.mxu0 %v3005
    %3032 = vmatmul.f32.gmra.mxu0 %v3014
    %v3033 = vpop.f32.mrf.mxu0
    %v3034 = vadd.f32 %v476, %v3033
    %3035 = vdwg.mxu0
    %v3036 = vmul.f32 %v3034, 0.5
    %v3037 = vtanh.pop %v3036
    %v3038 = vadd.f32 %v3037, 1.0
    %v3039 = vmul.f32 %v3038, 0.5
    %v3040 = vtanh.pop %v3034
    %v3041 = vmul.f32 %v3039, %v2798
    %3043 = vrot.lane.b32.xlu0 %v3040, 64
    %v3044 = vpop.permute.xlu0 %3043
    %v3046 = vmul.f32 %v3039, %v3044
    %3048 = vrot.lane.b32.xlu0 %v3046, 32
    %v3049 = vpop.permute.xlu0 %3048
    %v3051 = vadd.f32 %v3041, %v3049
    %v3052 = vtanh.pop %v3051
    %3054 = vrot.lane.b32.xlu0 %v3052, 64
    %v3055 = vpop.permute.xlu0 %3054
    %v3057 = vmul.f32 %v3039, %v3055
    %3059 = vrot.lane.b32.xlu0 %v3057, 32
    %v3060 = vpop.permute.xlu0 %3059
    %3063 = vrot.lane.b32.xlu0 %v2866, 64
    %v3064 = vpop.permute.xlu0 %3063
    %v3066 = vsel %vm356, %v3060, %v3064
    %v3067 = vld [vmem:[%s527] sm:$0xff]
    %v3068 = vld [vmem:[%s527 + $0x8] sm:$0xff]
    %v3069 = vld [vmem:[%s527 + $0x10] sm:$0xff]
    %v3070 = vld [vmem:[%s527 + $0x18] sm:$0xff]
    %v3071 = vld [vmem:[%s527 + $0x20] sm:$0xff]
    %v3072 = vld [vmem:[%s527 + $0x28] sm:$0xff]
    %v3073 = vld [vmem:[%s527 + $0x30] sm:$0xff]
    %v3074 = vld [vmem:[%s527 + $0x38] sm:$0xff]
    %v3076 = vsel %vm416, %v3066, 0
    %3078 = vmatpush.msra.mxu0 0.0
    %3079 = vmatpush.msra.mxu0 0.0
    %3080 = vmatpush.msra.mxu0 0.0
    %3081 = vmatpush.msra.mxu0 0.0
    %3082 = vmatpush.msra.mxu0 0.0
    %3083 = vmatpush.msra.mxu0 0.0
    %3084 = vmatpush.msra.mxu0 0.0
    %3085 = vmatpush.msra.mxu0 0.0
    %3086 = vmatpush.msra.mxu0 %v3074
    %3087 = vmatpush.msra.mxu0 %v3073
    %3088 = vmatpush.msra.mxu0 %v3072
    %3089 = vmatpush.msra.mxu0 %v3071
    %3090 = vmatpush.msra.mxu0 %v3070
    %3091 = vmatpush.msra.mxu0 %v3069
    %3092 = vmatpush.msra.mxu0 %v3068
    %3093 = vmatpush.msra.mxu0 %v3067
    %3094 = vmatmul.f32.gmra.mxu0 %v3076
    %v3095 = vpop.f32.mrf.mxu0
    %v3096 = vadd.f32 %v536, %v3095
    %3097 = vdwg.mxu0
    %v3098 = vmul.f32 %v3096, 0.5
    %v3099 = vtanh.pop %v3098
    %v3100 = vadd.f32 %v3099, 1.0
    %v3101 = vmul.f32 %v3100, 0.5
    %v3102 = vtanh.pop %v3096
    %v3103 = vmul.f32 %v3101, %v2860
    %3105 = vrot.lane.b32.xlu0 %v3102, 64
    %v3106 = vpop.permute.xlu0 %3105
    %v3108 = vmul.f32 %v3101, %v3106
    %3110 = vrot.lane.b32.xlu0 %v3108, 32
    %v3111 = vpop.permute.xlu0 %3110
    %v3113 = vadd.f32 %v3103, %v3111
    %v3114 = vtanh.pop %v3113
    %3116 = vrot.lane.b32.xlu0 %v3114, 64
    %v3117 = vpop.permute.xlu0 %3116
    %v3119 = vmul.f32 %v3101, %v3117
    %v3120 = vmul.f32 %v3119, %v585
    %3122 = vrot.lane.b32.xlu0 %v3120, 32
    %v3123 = vpop.permute.xlu0 %3122
    %v3125 = vsel %vm356, %v3123, 0.0
    %3126 = vadd.xlane.f32.xlu0 %v3125
    %v3127 = vpop.xlane.xlu0 %3126
    %v3128 = vadd.f32 %v3127, %v596
    %v3129 = vtanh.pop %v3128
    %3131 = vrot.lane.b32.xlu0 %v3129, 11
    %v3132 = vpop.permute.xlu0 %3131
    %v3134 = vadd.f32 %v115, %v3132
    %3136 = vrot.lane.b32.xlu0 %v3134, 127
    %v3137 = vpop.permute.xlu0 %3136
    %vm3139 = vcmask 89168
    %3140 = vst.msk [vmem:[#allocation12] sm:$0xff] %vm3139, %v3137
    %v3141 = vld [vmem:[#allocation9] sm:$0xff]
    %v3142 = vld [vmem:[#allocation9 + $0x8] sm:$0xff]
    %v3143 = vld [vmem:[#allocation9 + $0x10] sm:$0xff]
    %v3144 = vld [vmem:[#allocation9 + $0x18] sm:$0xff]
    %v3145 = vsel %vm356, %v2938, 0
    %3147 = vmatpush.msra.mxu0 0.0
    %3148 = vmatpush.msra.mxu0 0.0
    %3149 = vmatpush.msra.mxu0 0.0
    %3150 = vmatpush.msra.mxu0 0.0
    %3151 = vmatpush.msra.mxu0 0.0
    %3152 = vmatpush.msra.mxu0 0.0
    %3153 = vmatpush.msra.mxu0 0.0
    %3154 = vmatpush.msra.mxu0 0.0
    %3155 = vmatpush.msra.mxu0 0.0
    %3156 = vmatpush.msra.mxu0 0.0
    %3157 = vmatpush.msra.mxu0 0.0
    %3158 = vmatpush.msra.mxu0 0.0
    %3159 = vmatpush.msra.mxu0 %v3144
    %3160 = vmatpush.msra.mxu0 %v3143
    %3161 = vmatpush.msra.mxu0 %v3142
    %3162 = vmatpush.msra.mxu0 %v3141
    %3163 = vmatmul.f32.gmra.mxu0 %v3145
    %v3164 = vpop.f32.mrf.mxu0
    %v3165 = vadd.f32 %v265, %v3164
    %3166 = vdwg.mxu0
    %v3167 = vmul.f32 %v3165, 0.5
    %v3168 = vtanh.pop %v3167
    %v3169 = vadd.f32 %v3168, 1.0
    %v3170 = vmul.f32 %v3169, 0.5
    %v3171 = vtanh.pop %v3165
    %v3172 = vmul.f32 %v3170, %v2929
    %3174 = vrot.lane.b32.xlu0 %v3171, 64
    %v3175 = vpop.permute.xlu0 %3174
    %v3177 = vmul.f32 %v3170, %v3175
    %3179 = vrot.lane.b32.xlu0 %v3177, 32
    %v3180 = vpop.permute.xlu0 %3179
    %v3182 = vadd.f32 %v3172, %v3180
    %v3183 = vtanh.pop %v3182
    %3185 = vrot.lane.b32.xlu0 %v3183, 64
    %v3186 = vpop.permute.xlu0 %3185
    %v3188 = vmul.f32 %v3170, %v3186
    %3190 = vrot.lane.b32.xlu0 %v3188, 32
    %v3191 = vpop.permute.xlu0 %3190
    %3193 = vrot.lane.b32.xlu0 %v2996, 64
    %v3194 = vpop.permute.xlu0 %3193
    %v3196 = vsel %vm356, %v3191, %v3194
    %v3197 = vld [vmem:[#allocation11] sm:$0xff]
    %v3198 = vld [vmem:[#allocation11 + $0x8] sm:$0xff]
    %v3199 = vld [vmem:[#allocation11 + $0x10] sm:$0xff]
    %v3200 = vld [vmem:[#allocation11 + $0x18] sm:$0xff]
    %v3201 = vld [vmem:[#allocation11 + $0x20] sm:$0xff]
    %v3202 = vld [vmem:[#allocation11 + $0x28] sm:$0xff]
    %v3203 = vld [vmem:[#allocation11 + $0x30] sm:$0xff]
    %v3204 = vld [vmem:[#allocation11 + $0x38] sm:$0xff]
    %v3206 = vsel %vm416, %v3196, 0
    %3208 = vmatpush.msra.mxu0 0.0
    %3209 = vmatpush.msra.mxu0 0.0
    %3210 = vmatpush.msra.mxu0 0.0
    %3211 = vmatpush.msra.mxu0 0.0
    %3212 = vmatpush.msra.mxu0 0.0
    %3213 = vmatpush.msra.mxu0 0.0
    %3214 = vmatpush.msra.mxu0 0.0
    %3215 = vmatpush.msra.mxu0 0.0
    %3216 = vmatpush.msra.mxu0 %v3204
    %3217 = vmatpush.msra.mxu0 %v3203
    %3218 = vmatpush.msra.mxu0 %v3202
    %3219 = vmatpush.msra.mxu0 %v3201
    %3220 = vmatpush.msra.mxu0 %v3200
    %3221 = vmatpush.msra.mxu0 %v3199
    %3222 = vmatpush.msra.mxu0 %v3198
    %3223 = vmatpush.msra.mxu0 %v3197
    %3224 = vmatmul.f32.gmra.mxu0 %v3206
    %v3225 = vpop.f32.mrf.mxu0
    %v3226 = vadd.f32 %v415, %v3225
    %3227 = vdwg.mxu0
    %v3228 = vmul.f32 %v3226, 0.5
    %v3229 = vtanh.pop %v3228
    %v3230 = vadd.f32 %v3229, 1.0
    %v3231 = vmul.f32 %v3230, 0.5
    %v3232 = vtanh.pop %v3226
    %v3233 = vmul.f32 %v3231, %v2990
    %3235 = vrot.lane.b32.xlu0 %v3232, 64
    %v3236 = vpop.permute.xlu0 %3235
    %v3238 = vmul.f32 %v3231, %v3236
    %3240 = vrot.lane.b32.xlu0 %v3238, 32
    %v3241 = vpop.permute.xlu0 %3240
    %v3243 = vadd.f32 %v3233, %v3241
    %v3244 = vtanh.pop %v3243
    %3246 = vrot.lane.b32.xlu0 %v3244, 64
    %v3247 = vpop.permute.xlu0 %3246
    %v3249 = vmul.f32 %v3231, %v3247
    %3251 = vrot.lane.b32.xlu0 %v3249, 32
    %v3252 = vpop.permute.xlu0 %3251
    %3254 = vrot.lane.b32.xlu0 %v3057, 64
    %v3255 = vpop.permute.xlu0 %3254
    %v3257 = vsel %vm356, %v3252, %v3255
    %v3258 = vld [vmem:[%s467] sm:$0xff]
    %v3259 = vld [vmem:[%s467 + $0x8] sm:$0xff]
    %v3260 = vld [vmem:[%s467 + $0x10] sm:$0xff]
    %v3261 = vld [vmem:[%s467 + $0x18] sm:$0xff]
    %v3262 = vld [vmem:[%s467 + $0x20] sm:$0xff]
    %v3263 = vld [vmem:[%s467 + $0x28] sm:$0xff]
    %v3264 = vld [vmem:[%s467 + $0x30] sm:$0xff]
    %v3265 = vld [vmem:[%s467 + $0x38] sm:$0xff]
    %v3267 = vsel %vm416, %v3257, 0
    %3269 = vmatpush.msra.mxu0 0.0
    %3270 = vmatpush.msra.mxu0 0.0
    %3271 = vmatpush.msra.mxu0 0.0
    %3272 = vmatpush.msra.mxu0 0.0
    %3273 = vmatpush.msra.mxu0 0.0
    %3274 = vmatpush.msra.mxu0 0.0
    %3275 = vmatpush.msra.mxu0 0.0
    %3276 = vmatpush.msra.mxu0 0.0
    %3277 = vmatpush.msra.mxu0 %v3265
    %3278 = vmatpush.msra.mxu0 %v3264
    %3279 = vmatpush.msra.mxu0 %v3263
    %3280 = vmatpush.msra.mxu0 %v3262
    %3281 = vmatpush.msra.mxu0 %v3261
    %3282 = vmatpush.msra.mxu0 %v3260
    %3283 = vmatpush.msra.mxu0 %v3259
    %3284 = vmatpush.msra.mxu0 %v3258
    %3285 = vmatmul.f32.gmra.mxu0 %v3267
    %v3286 = vpop.f32.mrf.mxu0
    %v3287 = vadd.f32 %v476, %v3286
    %3288 = vdwg.mxu0
    %v3289 = vmul.f32 %v3287, 0.5
    %v3290 = vtanh.pop %v3289
    %v3291 = vadd.f32 %v3290, 1.0
    %v3292 = vmul.f32 %v3291, 0.5
    %v3293 = vtanh.pop %v3287
    %v3294 = vmul.f32 %v3292, %v3051
    %3296 = vrot.lane.b32.xlu0 %v3293, 64
    %v3297 = vpop.permute.xlu0 %3296
    %v3299 = vmul.f32 %v3292, %v3297
    %3301 = vrot.lane.b32.xlu0 %v3299, 32
    %v3302 = vpop.permute.xlu0 %3301
    %v3304 = vadd.f32 %v3294, %v3302
    %v3305 = vtanh.pop %v3304
    %3307 = vrot.lane.b32.xlu0 %v3305, 64
    %v3308 = vpop.permute.xlu0 %3307
    %v3310 = vmul.f32 %v3292, %v3308
    %3312 = vrot.lane.b32.xlu0 %v3310, 32
    %v3313 = vpop.permute.xlu0 %3312
    %3316 = vrot.lane.b32.xlu0 %v3119, 64
    %v3317 = vpop.permute.xlu0 %3316
    %v3319 = vsel %vm356, %v3313, %v3317
    %v3320 = vld [vmem:[%s527] sm:$0xff]
    %v3321 = vld [vmem:[%s527 + $0x8] sm:$0xff]
    %v3322 = vld [vmem:[%s527 + $0x10] sm:$0xff]
    %v3323 = vld [vmem:[%s527 + $0x18] sm:$0xff]
    %v3324 = vld [vmem:[%s527 + $0x20] sm:$0xff]
    %v3325 = vld [vmem:[%s527 + $0x28] sm:$0xff]
    %v3326 = vld [vmem:[%s527 + $0x30] sm:$0xff]
    %v3327 = vld [vmem:[%s527 + $0x38] sm:$0xff]
    %v3329 = vsel %vm416, %v3319, 0
    %3331 = vmatpush.msra.mxu0 0.0
    %3332 = vmatpush.msra.mxu0 0.0
    %3333 = vmatpush.msra.mxu0 0.0
    %3334 = vmatpush.msra.mxu0 0.0
    %3335 = vmatpush.msra.mxu0 0.0
    %3336 = vmatpush.msra.mxu0 0.0
    %3337 = vmatpush.msra.mxu0 0.0
    %3338 = vmatpush.msra.mxu0 0.0
    %3339 = vmatpush.msra.mxu0 %v3327
    %3340 = vmatpush.msra.mxu0 %v3326
    %3341 = vmatpush.msra.mxu0 %v3325
    %3342 = vmatpush.msra.mxu0 %v3324
    %3343 = vmatpush.msra.mxu0 %v3323
    %3344 = vmatpush.msra.mxu0 %v3322
    %3345 = vmatpush.msra.mxu0 %v3321
    %3346 = vmatpush.msra.mxu0 %v3320
    %3347 = vmatmul.f32.gmra.mxu0 %v3329
    %v3348 = vpop.f32.mrf.mxu0
    %v3349 = vadd.f32 %v536, %v3348
    %3350 = vdwg.mxu0
    %v3351 = vmul.f32 %v3349, 0.5
    %v3352 = vtanh.pop %v3351
    %v3353 = vadd.f32 %v3352, 1.0
    %v3354 = vmul.f32 %v3353, 0.5
    %v3355 = vtanh.pop %v3349
    %v3356 = vmul.f32 %v3354, %v3113
    %3358 = vrot.lane.b32.xlu0 %v3355, 64
    %v3359 = vpop.permute.xlu0 %3358
    %v3361 = vmul.f32 %v3354, %v3359
    %3363 = vrot.lane.b32.xlu0 %v3361, 32
    %v3364 = vpop.permute.xlu0 %3363
    %v3366 = vadd.f32 %v3356, %v3364
    %v3367 = vtanh.pop %v3366
    %3369 = vrot.lane.b32.xlu0 %v3367, 64
    %v3370 = vpop.permute.xlu0 %3369
    %v3372 = vmul.f32 %v3354, %v3370
    %v3373 = vmul.f32 %v3372, %v585
    %3375 = vrot.lane.b32.xlu0 %v3373, 32
    %v3376 = vpop.permute.xlu0 %3375
    %v3378 = vsel %vm356, %v3376, 0.0
    %3379 = vadd.xlane.f32.xlu0 %v3378
    %v3380 = vpop.xlane.xlu0 %3379
    %v3381 = vadd.f32 %v3380, %v596
    %v3382 = vtanh.pop %v3381
    %3384 = vrot.lane.b32.xlu0 %v3382, 12
    %v3385 = vpop.permute.xlu0 %3384
    %v3387 = vadd.f32 %v115, %v3385
    %3389 = vrot.lane.b32.xlu0 %v3387, 127
    %v3390 = vpop.permute.xlu0 %3389
    %vm3392 = vcmask 97368
    %3393 = vst.msk [vmem:[#allocation12] sm:$0xff] %vm3392, %v3390
    %v3394 = vld [vmem:[#allocation9] sm:$0xff]
    %v3395 = vld [vmem:[#allocation9 + $0x8] sm:$0xff]
    %v3396 = vld [vmem:[#allocation9 + $0x10] sm:$0xff]
    %v3397 = vld [vmem:[#allocation9 + $0x18] sm:$0xff]
    %v3398 = vsel %vm356, %v3191, 0
    %3400 = vmatpush.msra.mxu0 0.0
    %3401 = vmatpush.msra.mxu0 0.0
    %3402 = vmatpush.msra.mxu0 0.0
    %3403 = vmatpush.msra.mxu0 0.0
    %3404 = vmatpush.msra.mxu0 0.0
    %3405 = vmatpush.msra.mxu0 0.0
    %3406 = vmatpush.msra.mxu0 0.0
    %3407 = vmatpush.msra.mxu0 0.0
    %3408 = vmatpush.msra.mxu0 0.0
    %3409 = vmatpush.msra.mxu0 0.0
    %3410 = vmatpush.msra.mxu0 0.0
    %3411 = vmatpush.msra.mxu0 0.0
    %3412 = vmatpush.msra.mxu0 %v3397
    %3413 = vmatpush.msra.mxu0 %v3396
    %3414 = vmatpush.msra.mxu0 %v3395
    %3415 = vmatpush.msra.mxu0 %v3394
    %3416 = vmatmul.f32.gmra.mxu0 %v3398
    %v3417 = vpop.f32.mrf.mxu0
    %v3418 = vadd.f32 %v277, %v3417
    %3419 = vdwg.mxu0
    %v3420 = vmul.f32 %v3418, 0.5
    %v3421 = vtanh.pop %v3420
    %v3422 = vadd.f32 %v3421, 1.0
    %v3423 = vmul.f32 %v3422, 0.5
    %v3424 = vtanh.pop %v3418
    %v3425 = vmul.f32 %v3423, %v3182
    %3427 = vrot.lane.b32.xlu0 %v3424, 64
    %v3428 = vpop.permute.xlu0 %3427
    %v3430 = vmul.f32 %v3423, %v3428
    %3432 = vrot.lane.b32.xlu0 %v3430, 32
    %v3433 = vpop.permute.xlu0 %3432
    %v3435 = vadd.f32 %v3425, %v3433
    %v3436 = vtanh.pop %v3435
    %3438 = vrot.lane.b32.xlu0 %v3436, 64
    %v3439 = vpop.permute.xlu0 %3438
    %v3441 = vmul.f32 %v3423, %v3439
    %3443 = vrot.lane.b32.xlu0 %v3441, 32
    %v3444 = vpop.permute.xlu0 %3443
    %3446 = vrot.lane.b32.xlu0 %v3249, 64
    %v3447 = vpop.permute.xlu0 %3446
    %v3449 = vsel %vm356, %v3444, %v3447
    %v3450 = vld [vmem:[#allocation11] sm:$0xff]
    %v3451 = vld [vmem:[#allocation11 + $0x8] sm:$0xff]
    %v3452 = vld [vmem:[#allocation11 + $0x10] sm:$0xff]
    %v3453 = vld [vmem:[#allocation11 + $0x18] sm:$0xff]
    %v3454 = vld [vmem:[#allocation11 + $0x20] sm:$0xff]
    %v3455 = vld [vmem:[#allocation11 + $0x28] sm:$0xff]
    %v3456 = vld [vmem:[#allocation11 + $0x30] sm:$0xff]
    %v3457 = vld [vmem:[#allocation11 + $0x38] sm:$0xff]
    %v3459 = vsel %vm416, %v3449, 0
    %3461 = vmatpush.msra.mxu0 0.0
    %3462 = vmatpush.msra.mxu0 0.0
    %3463 = vmatpush.msra.mxu0 0.0
    %3464 = vmatpush.msra.mxu0 0.0
    %3465 = vmatpush.msra.mxu0 0.0
    %3466 = vmatpush.msra.mxu0 0.0
    %3467 = vmatpush.msra.mxu0 0.0
    %3468 = vmatpush.msra.mxu0 0.0
    %3469 = vmatpush.msra.mxu0 %v3457
    %3470 = vmatpush.msra.mxu0 %v3456
    %3471 = vmatpush.msra.mxu0 %v3455
    %3472 = vmatpush.msra.mxu0 %v3454
    %3473 = vmatpush.msra.mxu0 %v3453
    %3474 = vmatpush.msra.mxu0 %v3452
    %3475 = vmatpush.msra.mxu0 %v3451
    %3476 = vmatpush.msra.mxu0 %v3450
    %3477 = vmatmul.f32.gmra.mxu0 %v3459
    %v3478 = vpop.f32.mrf.mxu0
    %v3479 = vadd.f32 %v415, %v3478
    %3480 = vdwg.mxu0
    %v3481 = vmul.f32 %v3479, 0.5
    %v3482 = vtanh.pop %v3481
    %v3483 = vadd.f32 %v3482, 1.0
    %v3484 = vmul.f32 %v3483, 0.5
    %v3485 = vtanh.pop %v3479
    %v3486 = vmul.f32 %v3484, %v3243
    %3488 = vrot.lane.b32.xlu0 %v3485, 64
    %v3489 = vpop.permute.xlu0 %3488
    %v3491 = vmul.f32 %v3484, %v3489
    %3493 = vrot.lane.b32.xlu0 %v3491, 32
    %v3494 = vpop.permute.xlu0 %3493
    %v3496 = vadd.f32 %v3486, %v3494
    %v3497 = vtanh.pop %v3496
    %3499 = vrot.lane.b32.xlu0 %v3497, 64
    %v3500 = vpop.permute.xlu0 %3499
    %v3502 = vmul.f32 %v3484, %v3500
    %3504 = vrot.lane.b32.xlu0 %v3502, 32
    %v3505 = vpop.permute.xlu0 %3504
    %3507 = vrot.lane.b32.xlu0 %v3310, 64
    %v3508 = vpop.permute.xlu0 %3507
    %v3510 = vsel %vm356, %v3505, %v3508
    %v3511 = vld [vmem:[%s467] sm:$0xff]
    %v3512 = vld [vmem:[%s467 + $0x8] sm:$0xff]
    %v3513 = vld [vmem:[%s467 + $0x10] sm:$0xff]
    %v3514 = vld [vmem:[%s467 + $0x18] sm:$0xff]
    %v3515 = vld [vmem:[%s467 + $0x20] sm:$0xff]
    %v3516 = vld [vmem:[%s467 + $0x28] sm:$0xff]
    %v3517 = vld [vmem:[%s467 + $0x30] sm:$0xff]
    %v3518 = vld [vmem:[%s467 + $0x38] sm:$0xff]
    %v3520 = vsel %vm416, %v3510, 0
    %3522 = vmatpush.msra.mxu0 0.0
    %3523 = vmatpush.msra.mxu0 0.0
    %3524 = vmatpush.msra.mxu0 0.0
    %3525 = vmatpush.msra.mxu0 0.0
    %3526 = vmatpush.msra.mxu0 0.0
    %3527 = vmatpush.msra.mxu0 0.0
    %3528 = vmatpush.msra.mxu0 0.0
    %3529 = vmatpush.msra.mxu0 0.0
    %3530 = vmatpush.msra.mxu0 %v3518
    %3531 = vmatpush.msra.mxu0 %v3517
    %3532 = vmatpush.msra.mxu0 %v3516
    %3533 = vmatpush.msra.mxu0 %v3515
    %3534 = vmatpush.msra.mxu0 %v3514
    %3535 = vmatpush.msra.mxu0 %v3513
    %3536 = vmatpush.msra.mxu0 %v3512
    %3537 = vmatpush.msra.mxu0 %v3511
    %3538 = vmatmul.f32.gmra.mxu0 %v3520
    %v3539 = vpop.f32.mrf.mxu0
    %v3540 = vadd.f32 %v476, %v3539
    %3541 = vdwg.mxu0
    %v3542 = vmul.f32 %v3540, 0.5
    %v3543 = vtanh.pop %v3542
    %v3544 = vadd.f32 %v3543, 1.0
    %v3545 = vmul.f32 %v3544, 0.5
    %v3546 = vtanh.pop %v3540
    %v3547 = vmul.f32 %v3545, %v3304
    %3549 = vrot.lane.b32.xlu0 %v3546, 64
    %v3550 = vpop.permute.xlu0 %3549
    %v3552 = vmul.f32 %v3545, %v3550
    %3554 = vrot.lane.b32.xlu0 %v3552, 32
    %v3555 = vpop.permute.xlu0 %3554
    %v3557 = vadd.f32 %v3547, %v3555
    %v3558 = vtanh.pop %v3557
    %3560 = vrot.lane.b32.xlu0 %v3558, 64
    %v3561 = vpop.permute.xlu0 %3560
    %v3563 = vmul.f32 %v3545, %v3561
    %3565 = vrot.lane.b32.xlu0 %v3563, 32
    %v3566 = vpop.permute.xlu0 %3565
    %3569 = vrot.lane.b32.xlu0 %v3372, 64
    %v3570 = vpop.permute.xlu0 %3569
    %v3572 = vsel %vm356, %v3566, %v3570
    %v3573 = vld [vmem:[%s527] sm:$0xff]
    %v3574 = vld [vmem:[%s527 + $0x8] sm:$0xff]
    %v3575 = vld [vmem:[%s527 + $0x10] sm:$0xff]
    %v3576 = vld [vmem:[%s527 + $0x18] sm:$0xff]
    %v3577 = vld [vmem:[%s527 + $0x20] sm:$0xff]
    %v3578 = vld [vmem:[%s527 + $0x28] sm:$0xff]
    %v3579 = vld [vmem:[%s527 + $0x30] sm:$0xff]
    %v3580 = vld [vmem:[%s527 + $0x38] sm:$0xff]
    %v3582 = vsel %vm416, %v3572, 0
    %3584 = vmatpush.msra.mxu0 0.0
    %3585 = vmatpush.msra.mxu0 0.0
    %3586 = vmatpush.msra.mxu0 0.0
    %3587 = vmatpush.msra.mxu0 0.0
    %3588 = vmatpush.msra.mxu0 0.0
    %3589 = vmatpush.msra.mxu0 0.0
    %3590 = vmatpush.msra.mxu0 0.0
    %3591 = vmatpush.msra.mxu0 0.0
    %3592 = vmatpush.msra.mxu0 %v3580
    %3593 = vmatpush.msra.mxu0 %v3579
    %3594 = vmatpush.msra.mxu0 %v3578
    %3595 = vmatpush.msra.mxu0 %v3577
    %3596 = vmatpush.msra.mxu0 %v3576
    %3597 = vmatpush.msra.mxu0 %v3575
    %3598 = vmatpush.msra.mxu0 %v3574
    %3599 = vmatpush.msra.mxu0 %v3573
    %3600 = vmatmul.f32.gmra.mxu0 %v3582
    %v3601 = vpop.f32.mrf.mxu0
    %v3602 = vadd.f32 %v536, %v3601
    %3603 = vdwg.mxu0
    %v3604 = vmul.f32 %v3602, 0.5
    %v3605 = vtanh.pop %v3604
    %v3606 = vadd.f32 %v3605, 1.0
    %v3607 = vmul.f32 %v3606, 0.5
    %v3608 = vtanh.pop %v3602
    %v3609 = vmul.f32 %v3607, %v3366
    %3611 = vrot.lane.b32.xlu0 %v3608, 64
    %v3612 = vpop.permute.xlu0 %3611
    %v3614 = vmul.f32 %v3607, %v3612
    %3616 = vrot.lane.b32.xlu0 %v3614, 32
    %v3617 = vpop.permute.xlu0 %3616
    %v3619 = vadd.f32 %v3609, %v3617
    %v3620 = vtanh.pop %v3619
    %3622 = vrot.lane.b32.xlu0 %v3620, 64
    %v3623 = vpop.permute.xlu0 %3622
    %v3625 = vmul.f32 %v3607, %v3623
    %v3626 = vmul.f32 %v3625, %v585
    %3628 = vrot.lane.b32.xlu0 %v3626, 32
    %v3629 = vpop.permute.xlu0 %3628
    %v3631 = vsel %vm356, %v3629, 0.0
    %3632 = vadd.xlane.f32.xlu0 %v3631
    %v3633 = vpop.xlane.xlu0 %3632
    %v3634 = vadd.f32 %v3633, %v596
    %v3635 = vtanh.pop %v3634
    %3637 = vrot.lane.b32.xlu0 %v3635, 13
    %v3638 = vpop.permute.xlu0 %3637
    %v3640 = vadd.f32 %v115, %v3638
    %3642 = vrot.lane.b32.xlu0 %v3640, 127
    %v3643 = vpop.permute.xlu0 %3642
    %vm3645 = vcmask 105568
    %3646 = vst.msk [vmem:[#allocation12] sm:$0xff] %vm3645, %v3643
    %v3647 = vld [vmem:[#allocation9] sm:$0xff]
    %v3648 = vld [vmem:[#allocation9 + $0x8] sm:$0xff]
    %v3649 = vld [vmem:[#allocation9 + $0x10] sm:$0xff]
    %v3650 = vld [vmem:[#allocation9 + $0x18] sm:$0xff]
    %v3651 = vsel %vm356, %v3444, 0
    %3653 = vmatpush.msra.mxu0 0.0
    %3654 = vmatpush.msra.mxu0 0.0
    %3655 = vmatpush.msra.mxu0 0.0
    %3656 = vmatpush.msra.mxu0 0.0
    %3657 = vmatpush.msra.mxu0 0.0
    %3658 = vmatpush.msra.mxu0 0.0
    %3659 = vmatpush.msra.mxu0 0.0
    %3660 = vmatpush.msra.mxu0 0.0
    %3661 = vmatpush.msra.mxu0 0.0
    %3662 = vmatpush.msra.mxu0 0.0
    %3663 = vmatpush.msra.mxu0 0.0
    %3664 = vmatpush.msra.mxu0 0.0
    %3665 = vmatpush.msra.mxu0 %v3650
    %3666 = vmatpush.msra.mxu0 %v3649
    %3667 = vmatpush.msra.mxu0 %v3648
    %3668 = vmatpush.msra.mxu0 %v3647
    %3669 = vmatmul.f32.gmra.mxu0 %v3651
    %v3670 = vpop.f32.mrf.mxu0
    %v3671 = vadd.f32 %v289, %v3670
    %3672 = vdwg.mxu0
    %v3673 = vmul.f32 %v3671, 0.5
    %v3674 = vtanh.pop %v3673
    %v3675 = vadd.f32 %v3674, 1.0
    %v3676 = vmul.f32 %v3675, 0.5
    %v3677 = vtanh.pop %v3671
    %v3678 = vmul.f32 %v3676, %v3435
    %3680 = vrot.lane.b32.xlu0 %v3677, 64
    %v3681 = vpop.permute.xlu0 %3680
    %v3683 = vmul.f32 %v3676, %v3681
    %3685 = vrot.lane.b32.xlu0 %v3683, 32
    %v3686 = vpop.permute.xlu0 %3685
    %v3688 = vadd.f32 %v3678, %v3686
    %v3689 = vtanh.pop %v3688
    %3691 = vrot.lane.b32.xlu0 %v3689, 64
    %v3692 = vpop.permute.xlu0 %3691
    %v3694 = vmul.f32 %v3676, %v3692
    %3696 = vrot.lane.b32.xlu0 %v3694, 32
    %v3697 = vpop.permute.xlu0 %3696
    %3699 = vrot.lane.b32.xlu0 %v3502, 64
    %v3700 = vpop.permute.xlu0 %3699
    %v3702 = vsel %vm356, %v3697, %v3700
    %v3703 = vld [vmem:[#allocation11] sm:$0xff]
    %v3704 = vld [vmem:[#allocation11 + $0x8] sm:$0xff]
    %v3705 = vld [vmem:[#allocation11 + $0x10] sm:$0xff]
    %v3706 = vld [vmem:[#allocation11 + $0x18] sm:$0xff]
    %v3707 = vld [vmem:[#allocation11 + $0x20] sm:$0xff]
    %v3708 = vld [vmem:[#allocation11 + $0x28] sm:$0xff]
    %v3709 = vld [vmem:[#allocation11 + $0x30] sm:$0xff]
    %v3710 = vld [vmem:[#allocation11 + $0x38] sm:$0xff]
    %v3712 = vsel %vm416, %v3702, 0
    %3714 = vmatpush.msra.mxu0 0.0
    %3715 = vmatpush.msra.mxu0 0.0
    %3716 = vmatpush.msra.mxu0 0.0
    %3717 = vmatpush.msra.mxu0 0.0
    %3718 = vmatpush.msra.mxu0 0.0
    %3719 = vmatpush.msra.mxu0 0.0
    %3720 = vmatpush.msra.mxu0 0.0
    %3721 = vmatpush.msra.mxu0 0.0
    %3722 = vmatpush.msra.mxu0 %v3710
    %3723 = vmatpush.msra.mxu0 %v3709
    %3724 = vmatpush.msra.mxu0 %v3708
    %3725 = vmatpush.msra.mxu0 %v3707
    %3726 = vmatpush.msra.mxu0 %v3706
    %3727 = vmatpush.msra.mxu0 %v3705
    %3728 = vmatpush.msra.mxu0 %v3704
    %3729 = vmatpush.msra.mxu0 %v3703
    %3730 = vmatmul.f32.gmra.mxu0 %v3712
    %v3731 = vpop.f32.mrf.mxu0
    %v3732 = vadd.f32 %v415, %v3731
    %3733 = vdwg.mxu0
    %v3734 = vmul.f32 %v3732, 0.5
    %v3735 = vtanh.pop %v3734
    %v3736 = vadd.f32 %v3735, 1.0
    %v3737 = vmul.f32 %v3736, 0.5
    %v3738 = vtanh.pop %v3732
    %v3739 = vmul.f32 %v3737, %v3496
    %3741 = vrot.lane.b32.xlu0 %v3738, 64
    %v3742 = vpop.permute.xlu0 %3741
    %v3744 = vmul.f32 %v3737, %v3742
    %3746 = vrot.lane.b32.xlu0 %v3744, 32
    %v3747 = vpop.permute.xlu0 %3746
    %v3749 = vadd.f32 %v3739, %v3747
    %v3750 = vtanh.pop %v3749
    %3752 = vrot.lane.b32.xlu0 %v3750, 64
    %v3753 = vpop.permute.xlu0 %3752
    %v3755 = vmul.f32 %v3737, %v3753
    %3757 = vrot.lane.b32.xlu0 %v3755, 32
    %v3758 = vpop.permute.xlu0 %3757
    %3760 = vrot.lane.b32.xlu0 %v3563, 64
    %v3761 = vpop.permute.xlu0 %3760
    %v3763 = vsel %vm356, %v3758, %v3761
    %v3764 = vld [vmem:[%s467] sm:$0xff]
    %v3765 = vld [vmem:[%s467 + $0x8] sm:$0xff]
    %v3766 = vld [vmem:[%s467 + $0x10] sm:$0xff]
    %v3767 = vld [vmem:[%s467 + $0x18] sm:$0xff]
    %v3768 = vld [vmem:[%s467 + $0x20] sm:$0xff]
    %v3769 = vld [vmem:[%s467 + $0x28] sm:$0xff]
    %v3770 = vld [vmem:[%s467 + $0x30] sm:$0xff]
    %v3771 = vld [vmem:[%s467 + $0x38] sm:$0xff]
    %v3773 = vsel %vm416, %v3763, 0
    %3775 = vmatpush.msra.mxu0 0.0
    %3776 = vmatpush.msra.mxu0 0.0
    %3777 = vmatpush.msra.mxu0 0.0
    %3778 = vmatpush.msra.mxu0 0.0
    %3779 = vmatpush.msra.mxu0 0.0
    %3780 = vmatpush.msra.mxu0 0.0
    %3781 = vmatpush.msra.mxu0 0.0
    %3782 = vmatpush.msra.mxu0 0.0
    %3783 = vmatpush.msra.mxu0 %v3771
    %3784 = vmatpush.msra.mxu0 %v3770
    %3785 = vmatpush.msra.mxu0 %v3769
    %3786 = vmatpush.msra.mxu0 %v3768
    %3787 = vmatpush.msra.mxu0 %v3767
    %3788 = vmatpush.msra.mxu0 %v3766
    %3789 = vmatpush.msra.mxu0 %v3765
    %3790 = vmatpush.msra.mxu0 %v3764
    %3791 = vmatmul.f32.gmra.mxu0 %v3773
    %v3792 = vpop.f32.mrf.mxu0
    %v3793 = vadd.f32 %v476, %v3792
    %3794 = vdwg.mxu0
    %v3795 = vmul.f32 %v3793, 0.5
    %v3796 = vtanh.pop %v3795
    %v3797 = vadd.f32 %v3796, 1.0
    %v3798 = vmul.f32 %v3797, 0.5
    %v3799 = vtanh.pop %v3793
    %v3800 = vmul.f32 %v3798, %v3557
    %3802 = vrot.lane.b32.xlu0 %v3799, 64
    %v3803 = vpop.permute.xlu0 %3802
    %v3805 = vmul.f32 %v3798, %v3803
    %3807 = vrot.lane.b32.xlu0 %v3805, 32
    %v3808 = vpop.permute.xlu0 %3807
    %v3810 = vadd.f32 %v3800, %v3808
    %v3811 = vtanh.pop %v3810
    %3813 = vrot.lane.b32.xlu0 %v3811, 64
    %v3814 = vpop.permute.xlu0 %3813
    %v3816 = vmul.f32 %v3798, %v3814
    %3818 = vrot.lane.b32.xlu0 %v3816, 32
    %v3819 = vpop.permute.xlu0 %3818
    %3822 = vrot.lane.b32.xlu0 %v3625, 64
    %v3823 = vpop.permute.xlu0 %3822
    %v3825 = vsel %vm356, %v3819, %v3823
    %v3826 = vld [vmem:[%s527] sm:$0xff]
    %v3827 = vld [vmem:[%s527 + $0x8] sm:$0xff]
    %v3828 = vld [vmem:[%s527 + $0x10] sm:$0xff]
    %v3829 = vld [vmem:[%s527 + $0x18] sm:$0xff]
    %v3830 = vld [vmem:[%s527 + $0x20] sm:$0xff]
    %v3831 = vld [vmem:[%s527 + $0x28] sm:$0xff]
    %v3832 = vld [vmem:[%s527 + $0x30] sm:$0xff]
    %v3833 = vld [vmem:[%s527 + $0x38] sm:$0xff]
    %v3835 = vsel %vm416, %v3825, 0
    %3837 = vmatpush.msra.mxu0 0.0
    %3838 = vmatpush.msra.mxu0 0.0
    %3839 = vmatpush.msra.mxu0 0.0
    %3840 = vmatpush.msra.mxu0 0.0
    %3841 = vmatpush.msra.mxu0 0.0
    %3842 = vmatpush.msra.mxu0 0.0
    %3843 = vmatpush.msra.mxu0 0.0
    %3844 = vmatpush.msra.mxu0 0.0
    %3845 = vmatpush.msra.mxu0 %v3833
    %3846 = vmatpush.msra.mxu0 %v3832
    %3847 = vmatpush.msra.mxu0 %v3831
    %3848 = vmatpush.msra.mxu0 %v3830
    %3849 = vmatpush.msra.mxu0 %v3829
    %3850 = vmatpush.msra.mxu0 %v3828
    %3851 = vmatpush.msra.mxu0 %v3827
    %3852 = vmatpush.msra.mxu0 %v3826
    %3853 = vmatmul.f32.gmra.mxu0 %v3835
    %v3854 = vpop.f32.mrf.mxu0
    %v3855 = vadd.f32 %v536, %v3854
    %3856 = vdwg.mxu0
    %v3857 = vmul.f32 %v3855, 0.5
    %v3858 = vtanh.pop %v3857
    %v3859 = vadd.f32 %v3858, 1.0
    %v3860 = vmul.f32 %v3859, 0.5
    %v3861 = vtanh.pop %v3855
    %v3862 = vmul.f32 %v3860, %v3619
    %3864 = vrot.lane.b32.xlu0 %v3861, 64
    %v3865 = vpop.permute.xlu0 %3864
    %v3867 = vmul.f32 %v3860, %v3865
    %3869 = vrot.lane.b32.xlu0 %v3867, 32
    %v3870 = vpop.permute.xlu0 %3869
    %v3872 = vadd.f32 %v3862, %v3870
    %v3873 = vtanh.pop %v3872
    %3875 = vrot.lane.b32.xlu0 %v3873, 64
    %v3876 = vpop.permute.xlu0 %3875
    %v3878 = vmul.f32 %v3860, %v3876
    %v3879 = vmul.f32 %v3878, %v585
    %3881 = vrot.lane.b32.xlu0 %v3879, 32
    %v3882 = vpop.permute.xlu0 %3881
    %v3884 = vsel %vm356, %v3882, 0.0
    %3885 = vadd.xlane.f32.xlu0 %v3884
    %v3886 = vpop.xlane.xlu0 %3885
    %v3887 = vadd.f32 %v3886, %v596
    %v3888 = vtanh.pop %v3887
    %3890 = vrot.lane.b32.xlu0 %v3888, 14
    %v3891 = vpop.permute.xlu0 %3890
    %v3893 = vadd.f32 %v115, %v3891
    %3895 = vrot.lane.b32.xlu0 %v3893, 127
    %v3896 = vpop.permute.xlu0 %3895
    %vm3898 = vcmask 113768
    %3899 = vst.msk [vmem:[#allocation12] sm:$0xff] %vm3898, %v3896
    %v3900 = vld [vmem:[#allocation9] sm:$0xff]
    %v3901 = vld [vmem:[#allocation9 + $0x8] sm:$0xff]
    %v3902 = vld [vmem:[#allocation9 + $0x10] sm:$0xff]
    %v3903 = vld [vmem:[#allocation9 + $0x18] sm:$0xff]
    %v3904 = vsel %vm356, %v3697, 0
    %3906 = vmatpush.msra.mxu0 0.0
    %3907 = vmatpush.msra.mxu0 0.0
    %3908 = vmatpush.msra.mxu0 0.0
    %3909 = vmatpush.msra.mxu0 0.0
    %3910 = vmatpush.msra.mxu0 0.0
    %3911 = vmatpush.msra.mxu0 0.0
    %3912 = vmatpush.msra.mxu0 0.0
    %3913 = vmatpush.msra.mxu0 0.0
    %3914 = vmatpush.msra.mxu0 0.0
    %3915 = vmatpush.msra.mxu0 0.0
    %3916 = vmatpush.msra.mxu0 0.0
    %3917 = vmatpush.msra.mxu0 0.0
    %3918 = vmatpush.msra.mxu0 %v3903
    %3919 = vmatpush.msra.mxu0 %v3902
    %3920 = vmatpush.msra.mxu0 %v3901
    %3921 = vmatpush.msra.mxu0 %v3900
    %3922 = vmatmul.f32.gmra.mxu0 %v3904
    %v3923 = vpop.f32.mrf.mxu0
    %v3924 = vadd.f32 %v301, %v3923
    %3925 = vdwg.mxu0
    %v3926 = vmul.f32 %v3924, 0.5
    %v3927 = vtanh.pop %v3926
    %v3928 = vadd.f32 %v3927, 1.0
    %v3929 = vmul.f32 %v3928, 0.5
    %v3930 = vtanh.pop %v3924
    %v3931 = vmul.f32 %v3929, %v3688
    %3933 = vrot.lane.b32.xlu0 %v3930, 64
    %v3934 = vpop.permute.xlu0 %3933
    %v3936 = vmul.f32 %v3929, %v3934
    %3938 = vrot.lane.b32.xlu0 %v3936, 32
    %v3939 = vpop.permute.xlu0 %3938
    %v3941 = vadd.f32 %v3931, %v3939
    %v3942 = vtanh.pop %v3941
    %3944 = vrot.lane.b32.xlu0 %v3942, 64
    %v3945 = vpop.permute.xlu0 %3944
    %v3947 = vmul.f32 %v3929, %v3945
    %3949 = vrot.lane.b32.xlu0 %v3947, 32
    %v3950 = vpop.permute.xlu0 %3949
    %3952 = vrot.lane.b32.xlu0 %v3755, 64
    %v3953 = vpop.permute.xlu0 %3952
    %v3955 = vsel %vm356, %v3950, %v3953
    %v3956 = vld [vmem:[#allocation11] sm:$0xff]
    %v3957 = vld [vmem:[#allocation11 + $0x8] sm:$0xff]
    %v3958 = vld [vmem:[#allocation11 + $0x10] sm:$0xff]
    %v3959 = vld [vmem:[#allocation11 + $0x18] sm:$0xff]
    %v3960 = vld [vmem:[#allocation11 + $0x20] sm:$0xff]
    %v3961 = vld [vmem:[#allocation11 + $0x28] sm:$0xff]
    %v3962 = vld [vmem:[#allocation11 + $0x30] sm:$0xff]
    %v3963 = vld [vmem:[#allocation11 + $0x38] sm:$0xff]
    %v3965 = vsel %vm416, %v3955, 0
    %3967 = vmatpush.msra.mxu0 0.0
    %3968 = vmatpush.msra.mxu0 0.0
    %3969 = vmatpush.msra.mxu0 0.0
    %3970 = vmatpush.msra.mxu0 0.0
    %3971 = vmatpush.msra.mxu0 0.0
    %3972 = vmatpush.msra.mxu0 0.0
    %3973 = vmatpush.msra.mxu0 0.0
    %3974 = vmatpush.msra.mxu0 0.0
    %3975 = vmatpush.msra.mxu0 %v3963
    %3976 = vmatpush.msra.mxu0 %v3962
    %3977 = vmatpush.msra.mxu0 %v3961
    %3978 = vmatpush.msra.mxu0 %v3960
    %3979 = vmatpush.msra.mxu0 %v3959
    %3980 = vmatpush.msra.mxu0 %v3958
    %3981 = vmatpush.msra.mxu0 %v3957
    %3982 = vmatpush.msra.mxu0 %v3956
    %3983 = vmatmul.f32.gmra.mxu0 %v3965
    %v3984 = vpop.f32.mrf.mxu0
    %v3985 = vadd.f32 %v415, %v3984
    %3986 = vdwg.mxu0
    %v3987 = vmul.f32 %v3985, 0.5
    %v3988 = vtanh.pop %v3987
    %v3989 = vadd.f32 %v3988, 1.0
    %v3990 = vmul.f32 %v3989, 0.5
    %v3991 = vtanh.pop %v3985
    %v3992 = vmul.f32 %v3990, %v3749
    %3994 = vrot.lane.b32.xlu0 %v3991, 64
    %v3995 = vpop.permute.xlu0 %3994
    %v3997 = vmul.f32 %v3990, %v3995
    %3999 = vrot.lane.b32.xlu0 %v3997, 32
    %v4000 = vpop.permute.xlu0 %3999
    %v4002 = vadd.f32 %v3992, %v4000
    %v4003 = vtanh.pop %v4002
    %4005 = vrot.lane.b32.xlu0 %v4003, 64
    %v4006 = vpop.permute.xlu0 %4005
    %v4008 = vmul.f32 %v3990, %v4006
    %4010 = vrot.lane.b32.xlu0 %v4008, 32
    %v4011 = vpop.permute.xlu0 %4010
    %4013 = vrot.lane.b32.xlu0 %v3816, 64
    %v4014 = vpop.permute.xlu0 %4013
    %v4016 = vsel %vm356, %v4011, %v4014
    %v4017 = vld [vmem:[%s467] sm:$0xff]
    %v4018 = vld [vmem:[%s467 + $0x8] sm:$0xff]
    %v4019 = vld [vmem:[%s467 + $0x10] sm:$0xff]
    %v4020 = vld [vmem:[%s467 + $0x18] sm:$0xff]
    %v4021 = vld [vmem:[%s467 + $0x20] sm:$0xff]
    %v4022 = vld [vmem:[%s467 + $0x28] sm:$0xff]
    %v4023 = vld [vmem:[%s467 + $0x30] sm:$0xff]
    %v4024 = vld [vmem:[%s467 + $0x38] sm:$0xff]
    %v4026 = vsel %vm416, %v4016, 0
    %4028 = vmatpush.msra.mxu0 0.0
    %4029 = vmatpush.msra.mxu0 0.0
    %4030 = vmatpush.msra.mxu0 0.0
    %4031 = vmatpush.msra.mxu0 0.0
    %4032 = vmatpush.msra.mxu0 0.0
    %4033 = vmatpush.msra.mxu0 0.0
    %4034 = vmatpush.msra.mxu0 0.0
    %4035 = vmatpush.msra.mxu0 0.0
    %4036 = vmatpush.msra.mxu0 %v4024
    %4037 = vmatpush.msra.mxu0 %v4023
    %4038 = vmatpush.msra.mxu0 %v4022
    %4039 = vmatpush.msra.mxu0 %v4021
    %4040 = vmatpush.msra.mxu0 %v4020
    %4041 = vmatpush.msra.mxu0 %v4019
    %4042 = vmatpush.msra.mxu0 %v4018
    %4043 = vmatpush.msra.mxu0 %v4017
    %4044 = vmatmul.f32.gmra.mxu0 %v4026
    %v4045 = vpop.f32.mrf.mxu0
    %v4046 = vadd.f32 %v476, %v4045
    %4047 = vdwg.mxu0
    %v4048 = vmul.f32 %v4046, 0.5
    %v4049 = vtanh.pop %v4048
    %v4050 = vadd.f32 %v4049, 1.0
    %v4051 = vmul.f32 %v4050, 0.5
    %v4052 = vtanh.pop %v4046
    %v4053 = vmul.f32 %v4051, %v3810
    %4055 = vrot.lane.b32.xlu0 %v4052, 64
    %v4056 = vpop.permute.xlu0 %4055
    %v4058 = vmul.f32 %v4051, %v4056
    %4060 = vrot.lane.b32.xlu0 %v4058, 32
    %v4061 = vpop.permute.xlu0 %4060
    %v4063 = vadd.f32 %v4053, %v4061
    %v4064 = vtanh.pop %v4063
    %4066 = vrot.lane.b32.xlu0 %v4064, 64
    %v4067 = vpop.permute.xlu0 %4066
    %v4069 = vmul.f32 %v4051, %v4067
    %4071 = vrot.lane.b32.xlu0 %v4069, 32
    %v4072 = vpop.permute.xlu0 %4071
    %4075 = vrot.lane.b32.xlu0 %v3878, 64
    %v4076 = vpop.permute.xlu0 %4075
    %v4078 = vsel %vm356, %v4072, %v4076
    %v4079 = vld [vmem:[%s527] sm:$0xff]
    %v4080 = vld [vmem:[%s527 + $0x8] sm:$0xff]
    %v4081 = vld [vmem:[%s527 + $0x10] sm:$0xff]
    %v4082 = vld [vmem:[%s527 + $0x18] sm:$0xff]
    %v4083 = vld [vmem:[%s527 + $0x20] sm:$0xff]
    %v4084 = vld [vmem:[%s527 + $0x28] sm:$0xff]
    %v4085 = vld [vmem:[%s527 + $0x30] sm:$0xff]
    %v4086 = vld [vmem:[%s527 + $0x38] sm:$0xff]
    %v4088 = vsel %vm416, %v4078, 0
    %4090 = vmatpush.msra.mxu0 0.0
    %4091 = vmatpush.msra.mxu0 0.0
    %4092 = vmatpush.msra.mxu0 0.0
    %4093 = vmatpush.msra.mxu0 0.0
    %4094 = vmatpush.msra.mxu0 0.0
    %4095 = vmatpush.msra.mxu0 0.0
    %4096 = vmatpush.msra.mxu0 0.0
    %4097 = vmatpush.msra.mxu0 0.0
    %4098 = vmatpush.msra.mxu0 %v4086
    %4099 = vmatpush.msra.mxu0 %v4085
    %4100 = vmatpush.msra.mxu0 %v4084
    %4101 = vmatpush.msra.mxu0 %v4083
    %4102 = vmatpush.msra.mxu0 %v4082
    %4103 = vmatpush.msra.mxu0 %v4081
    %4104 = vmatpush.msra.mxu0 %v4080
    %4105 = vmatpush.msra.mxu0 %v4079
    %4106 = vmatmul.f32.gmra.mxu0 %v4088
    %v4107 = vpop.f32.mrf.mxu0
    %v4108 = vadd.f32 %v536, %v4107
    %4109 = vdwg.mxu0
    %v4110 = vmul.f32 %v4108, 0.5
    %v4111 = vtanh.pop %v4110
    %v4112 = vadd.f32 %v4111, 1.0
    %v4113 = vmul.f32 %v4112, 0.5
    %v4114 = vtanh.pop %v4108
    %v4115 = vmul.f32 %v4113, %v3872
    %4117 = vrot.lane.b32.xlu0 %v4114, 64
    %v4118 = vpop.permute.xlu0 %4117
    %v4120 = vmul.f32 %v4113, %v4118
    %4122 = vrot.lane.b32.xlu0 %v4120, 32
    %v4123 = vpop.permute.xlu0 %4122
    %v4125 = vadd.f32 %v4115, %v4123
    %v4126 = vtanh.pop %v4125
    %4128 = vrot.lane.b32.xlu0 %v4126, 64
    %v4129 = vpop.permute.xlu0 %4128
    %v4131 = vmul.f32 %v4113, %v4129
    %v4132 = vmul.f32 %v4131, %v585
    %4134 = vrot.lane.b32.xlu0 %v4132, 32
    %v4135 = vpop.permute.xlu0 %4134
    %v4137 = vsel %vm356, %v4135, 0.0
    %4138 = vadd.xlane.f32.xlu0 %v4137
    %v4139 = vpop.xlane.xlu0 %4138
    %v4140 = vadd.f32 %v4139, %v596
    %v4141 = vtanh.pop %v4140
    %4143 = vrot.lane.b32.xlu0 %v4141, 15
    %v4144 = vpop.permute.xlu0 %4143
    %v4146 = vadd.f32 %v115, %v4144
    %4148 = vrot.lane.b32.xlu0 %v4146, 127
    %v4149 = vpop.permute.xlu0 %4148
    %vm4151 = vcmask 121968
    %4152 = vst.msk [vmem:[#allocation12] sm:$0xff] %vm4151, %v4149
    %v4153 = vld [vmem:[#allocation3] sm:$0xff]
    %4155 = vset.pattern.permute.xlu0 15
    %4156 = vperm.xlu0 %4155, %v4153
    %v4157 = vpop.permute.xlu0 %4156
    %v4159 = vmul.f32 %v4157, %v122
    %v4160 = vadd.f32 %v4159, %v309
    %v4161 = vld [vmem:[#allocation9] sm:$0xff]
    %v4162 = vld [vmem:[#allocation9 + $0x8] sm:$0xff]
    %v4163 = vld [vmem:[#allocation9 + $0x10] sm:$0xff]
    %v4164 = vld [vmem:[#allocation9 + $0x18] sm:$0xff]
    %v4165 = vsel %vm356, %v3950, 0
    %4167 = vmatpush.msra.mxu0 0.0
    %4168 = vmatpush.msra.mxu0 0.0
    %4169 = vmatpush.msra.mxu0 0.0
    %4170 = vmatpush.msra.mxu0 0.0
    %4171 = vmatpush.msra.mxu0 0.0
    %4172 = vmatpush.msra.mxu0 0.0
    %4173 = vmatpush.msra.mxu0 0.0
    %4174 = vmatpush.msra.mxu0 0.0
    %4175 = vmatpush.msra.mxu0 0.0
    %4176 = vmatpush.msra.mxu0 0.0
    %4177 = vmatpush.msra.mxu0 0.0
    %4178 = vmatpush.msra.mxu0 0.0
    %4179 = vmatpush.msra.mxu0 %v4164
    %4180 = vmatpush.msra.mxu0 %v4163
    %4181 = vmatpush.msra.mxu0 %v4162
    %4182 = vmatpush.msra.mxu0 %v4161
    %4183 = vmatmul.f32.gmra.mxu0 %v4165
    %v4184 = vpop.f32.mrf.mxu0
    %v4185 = vadd.f32 %v4160, %v4184
    %4186 = vdwg.mxu0
    %v4187 = vmul.f32 %v4185, 0.5
    %v4188 = vtanh.pop %v4187
    %v4189 = vadd.f32 %v4188, 1.0
    %v4190 = vmul.f32 %v4189, 0.5
    %v4191 = vtanh.pop %v4185
    %v4192 = vmul.f32 %v4190, %v3941
    %4194 = vrot.lane.b32.xlu0 %v4191, 64
    %v4195 = vpop.permute.xlu0 %4194
    %v4197 = vmul.f32 %v4190, %v4195
    %4199 = vrot.lane.b32.xlu0 %v4197, 32
    %v4200 = vpop.permute.xlu0 %4199
    %v4202 = vadd.f32 %v4192, %v4200
    %v4203 = vtanh.pop %v4202
    %4205 = vrot.lane.b32.xlu0 %v4203, 64
    %v4206 = vpop.permute.xlu0 %4205
    %v4208 = vmul.f32 %v4190, %v4206
    %4210 = vrot.lane.b32.xlu0 %v4208, 32
    %v4211 = vpop.permute.xlu0 %4210
    %4213 = vrot.lane.b32.xlu0 %v4008, 64
    %v4214 = vpop.permute.xlu0 %4213
    %v4216 = vsel %vm356, %v4211, %v4214
    %v4217 = vld [vmem:[#allocation11] sm:$0xff]
    %v4218 = vld [vmem:[#allocation11 + $0x8] sm:$0xff]
    %v4219 = vld [vmem:[#allocation11 + $0x10] sm:$0xff]
    %v4220 = vld [vmem:[#allocation11 + $0x18] sm:$0xff]
    %v4221 = vld [vmem:[#allocation11 + $0x20] sm:$0xff]
    %v4222 = vld [vmem:[#allocation11 + $0x28] sm:$0xff]
    %v4223 = vld [vmem:[#allocation11 + $0x30] sm:$0xff]
    %v4224 = vld [vmem:[#allocation11 + $0x38] sm:$0xff]
    %v4226 = vsel %vm416, %v4216, 0
    %4228 = vmatpush.msra.mxu0 0.0
    %4229 = vmatpush.msra.mxu0 0.0
    %4230 = vmatpush.msra.mxu0 0.0
    %4231 = vmatpush.msra.mxu0 0.0
    %4232 = vmatpush.msra.mxu0 0.0
    %4233 = vmatpush.msra.mxu0 0.0
    %4234 = vmatpush.msra.mxu0 0.0
    %4235 = vmatpush.msra.mxu0 0.0
    %4236 = vmatpush.msra.mxu0 %v4224
    %4237 = vmatpush.msra.mxu0 %v4223
    %4238 = vmatpush.msra.mxu0 %v4222
    %4239 = vmatpush.msra.mxu0 %v4221
    %4240 = vmatpush.msra.mxu0 %v4220
    %4241 = vmatpush.msra.mxu0 %v4219
    %4242 = vmatpush.msra.mxu0 %v4218
    %4243 = vmatpush.msra.mxu0 %v4217
    %4244 = vmatmul.f32.gmra.mxu0 %v4226
    %v4245 = vpop.f32.mrf.mxu0
    %v4246 = vadd.f32 %v415, %v4245
    %4247 = vdwg.mxu0
    %v4248 = vmul.f32 %v4246, 0.5
    %v4249 = vtanh.pop %v4248
    %v4250 = vadd.f32 %v4249, 1.0
    %v4251 = vmul.f32 %v4250, 0.5
    %v4252 = vtanh.pop %v4246
    %v4253 = vmul.f32 %v4251, %v4002
    %4255 = vrot.lane.b32.xlu0 %v4252, 64
    %v4256 = vpop.permute.xlu0 %4255
    %v4258 = vmul.f32 %v4251, %v4256
    %4260 = vrot.lane.b32.xlu0 %v4258, 32
    %v4261 = vpop.permute.xlu0 %4260
    %v4263 = vadd.f32 %v4253, %v4261
    %v4264 = vtanh.pop %v4263
    %4266 = vrot.lane.b32.xlu0 %v4264, 64
    %v4267 = vpop.permute.xlu0 %4266
    %v4269 = vmul.f32 %v4251, %v4267
    %4271 = vrot.lane.b32.xlu0 %v4269, 32
    %v4272 = vpop.permute.xlu0 %4271
    %4274 = vrot.lane.b32.xlu0 %v4069, 64
    %v4275 = vpop.permute.xlu0 %4274
    %v4277 = vsel %vm356, %v4272, %v4275
    %v4278 = vld [vmem:[%s467] sm:$0xff]
    %v4279 = vld [vmem:[%s467 + $0x8] sm:$0xff]
    %v4280 = vld [vmem:[%s467 + $0x10] sm:$0xff]
    %v4281 = vld [vmem:[%s467 + $0x18] sm:$0xff]
    %v4282 = vld [vmem:[%s467 + $0x20] sm:$0xff]
    %v4283 = vld [vmem:[%s467 + $0x28] sm:$0xff]
    %v4284 = vld [vmem:[%s467 + $0x30] sm:$0xff]
    %v4285 = vld [vmem:[%s467 + $0x38] sm:$0xff]
    %v4287 = vsel %vm416, %v4277, 0
    %4289 = vmatpush.msra.mxu0 0.0
    %4290 = vmatpush.msra.mxu0 0.0
    %4291 = vmatpush.msra.mxu0 0.0
    %4292 = vmatpush.msra.mxu0 0.0
    %4293 = vmatpush.msra.mxu0 0.0
    %4294 = vmatpush.msra.mxu0 0.0
    %4295 = vmatpush.msra.mxu0 0.0
    %4296 = vmatpush.msra.mxu0 0.0
    %4297 = vmatpush.msra.mxu0 %v4285
    %4298 = vmatpush.msra.mxu0 %v4284
    %4299 = vmatpush.msra.mxu0 %v4283
    %4300 = vmatpush.msra.mxu0 %v4282
    %4301 = vmatpush.msra.mxu0 %v4281
    %4302 = vmatpush.msra.mxu0 %v4280
    %4303 = vmatpush.msra.mxu0 %v4279
    %4304 = vmatpush.msra.mxu0 %v4278
    %4305 = vmatmul.f32.gmra.mxu0 %v4287
    %v4306 = vpop.f32.mrf.mxu0
    %v4307 = vadd.f32 %v476, %v4306
    %4308 = vdwg.mxu0
    %v4309 = vmul.f32 %v4307, 0.5
    %v4310 = vtanh.pop %v4309
    %v4311 = vadd.f32 %v4310, 1.0
    %v4312 = vmul.f32 %v4311, 0.5
    %v4313 = vtanh.pop %v4307
    %v4314 = vmul.f32 %v4312, %v4063
    %4316 = vrot.lane.b32.xlu0 %v4313, 64
    %v4317 = vpop.permute.xlu0 %4316
    %v4319 = vmul.f32 %v4312, %v4317
    %4321 = vrot.lane.b32.xlu0 %v4319, 32
    %v4322 = vpop.permute.xlu0 %4321
    %v4324 = vadd.f32 %v4314, %v4322
    %v4325 = vtanh.pop %v4324
    %4327 = vrot.lane.b32.xlu0 %v4325, 64
    %v4328 = vpop.permute.xlu0 %4327
    %v4330 = vmul.f32 %v4312, %v4328
    %4332 = vrot.lane.b32.xlu0 %v4330, 32
    %v4333 = vpop.permute.xlu0 %4332
    %4336 = vrot.lane.b32.xlu0 %v4131, 64
    %v4337 = vpop.permute.xlu0 %4336
    %v4339 = vsel %vm356, %v4333, %v4337
    %v4340 = vld [vmem:[%s527] sm:$0xff]
    %v4341 = vld [vmem:[%s527 + $0x8] sm:$0xff]
    %v4342 = vld [vmem:[%s527 + $0x10] sm:$0xff]
    %v4343 = vld [vmem:[%s527 + $0x18] sm:$0xff]
    %v4344 = vld [vmem:[%s527 + $0x20] sm:$0xff]
    %v4345 = vld [vmem:[%s527 + $0x28] sm:$0xff]
    %v4346 = vld [vmem:[%s527 + $0x30] sm:$0xff]
    %v4347 = vld [vmem:[%s527 + $0x38] sm:$0xff]
    %v4349 = vsel %vm416, %v4339, 0
    %4351 = vmatpush.msra.mxu0 0.0
    %4352 = vmatpush.msra.mxu0 0.0
    %4353 = vmatpush.msra.mxu0 0.0
    %4354 = vmatpush.msra.mxu0 0.0
    %4355 = vmatpush.msra.mxu0 0.0
    %4356 = vmatpush.msra.mxu0 0.0
    %4357 = vmatpush.msra.mxu0 0.0
    %4358 = vmatpush.msra.mxu0 0.0
    %4359 = vmatpush.msra.mxu0 %v4347
    %4360 = vmatpush.msra.mxu0 %v4346
    %4361 = vmatpush.msra.mxu0 %v4345
    %4362 = vmatpush.msra.mxu0 %v4344
    %4363 = vmatpush.msra.mxu0 %v4343
    %4364 = vmatpush.msra.mxu0 %v4342
    %4365 = vmatpush.msra.mxu0 %v4341
    %4366 = vmatpush.msra.mxu0 %v4340
    %4367 = vmatmul.f32.gmra.mxu0 %v4349
    %v4368 = vpop.f32.mrf.mxu0
    %v4369 = vadd.f32 %v536, %v4368
    %4370 = vdwg.mxu0
    %v4371 = vmul.f32 %v4369, 0.5
    %v4372 = vtanh.pop %v4371
    %v4373 = vadd.f32 %v4372, 1.0
    %v4374 = vmul.f32 %v4373, 0.5
    %v4375 = vtanh.pop %v4369
    %v4376 = vmul.f32 %v4374, %v4125
    %4378 = vrot.lane.b32.xlu0 %v4375, 64
    %v4379 = vpop.permute.xlu0 %4378
    %v4381 = vmul.f32 %v4374, %v4379
    %4383 = vrot.lane.b32.xlu0 %v4381, 32
    %v4384 = vpop.permute.xlu0 %4383
    %v4386 = vadd.f32 %v4376, %v4384
    %v4387 = vtanh.pop %v4386
    %4389 = vrot.lane.b32.xlu0 %v4387, 64
    %v4390 = vpop.permute.xlu0 %4389
    %v4392 = vmul.f32 %v4374, %v4390
    %v4393 = vmul.f32 %v4392, %v585
    %4395 = vrot.lane.b32.xlu0 %v4393, 32
    %v4396 = vpop.permute.xlu0 %4395
    %v4398 = vsel %vm356, %v4396, 0.0
    %4399 = vadd.xlane.f32.xlu0 %v4398
    %v4400 = vpop.xlane.xlu0 %4399
    %v4401 = vadd.f32 %v4400, %v596
    %v4402 = vtanh.pop %v4401
    %v4403 = vadd.f32 %v302, %v4402
    %4405 = vrot.lane.b32.xlu0 %v4403, 15
    %v4406 = vpop.permute.xlu0 %4405
    %vm4408 = vcmask 130168
    %4409 = vst.msk [vmem:[#allocation12] sm:$0xff] %vm4408, %v4406
    %4410 = vset.pattern.permute.xlu0 0
    %4411 = vperm.xlu0 %4410, %v4403
    %v4412 = vpop.permute.xlu0 %4411
    %v4414 = vmul.f32 %v4412, %v122
    %v4415 = vadd.f32 %v4414, %v315
    %v4416 = vld [vmem:[#allocation9] sm:$0xff]
    %v4417 = vld [vmem:[#allocation9 + $0x8] sm:$0xff]
    %v4418 = vld [vmem:[#allocation9 + $0x10] sm:$0xff]
    %v4419 = vld [vmem:[#allocation9 + $0x18] sm:$0xff]
    %v4420 = vsel %vm356, %v4211, 0
    %4422 = vmatpush.msra.mxu0 0.0
    %4423 = vmatpush.msra.mxu0 0.0
    %4424 = vmatpush.msra.mxu0 0.0
    %4425 = vmatpush.msra.mxu0 0.0
    %4426 = vmatpush.msra.mxu0 0.0
    %4427 = vmatpush.msra.mxu0 0.0
    %4428 = vmatpush.msra.mxu0 0.0
    %4429 = vmatpush.msra.mxu0 0.0
    %4430 = vmatpush.msra.mxu0 0.0
    %4431 = vmatpush.msra.mxu0 0.0
    %4432 = vmatpush.msra.mxu0 0.0
    %4433 = vmatpush.msra.mxu0 0.0
    %4434 = vmatpush.msra.mxu0 %v4419
    %4435 = vmatpush.msra.mxu0 %v4418
    %4436 = vmatpush.msra.mxu0 %v4417
    %4437 = vmatpush.msra.mxu0 %v4416
    %4438 = vmatmul.f32.gmra.mxu0 %v4420
    %v4439 = vpop.f32.mrf.mxu0
    %v4440 = vadd.f32 %v4415, %v4439
    %4441 = vdwg.mxu0
    %v4442 = vmul.f32 %v4440, 0.5
    %v4443 = vtanh.pop %v4442
    %v4444 = vadd.f32 %v4443, 1.0
    %v4445 = vmul.f32 %v4444, 0.5
    %v4446 = vtanh.pop %v4440
    %v4447 = vmul.f32 %v4445, %v4202
    %4449 = vrot.lane.b32.xlu0 %v4446, 64
    %v4450 = vpop.permute.xlu0 %4449
    %v4452 = vmul.f32 %v4445, %v4450
    %4454 = vrot.lane.b32.xlu0 %v4452, 32
    %v4455 = vpop.permute.xlu0 %4454
    %v4457 = vadd.f32 %v4447, %v4455
    %v4458 = vtanh.pop %v4457
    %4460 = vrot.lane.b32.xlu0 %v4458, 64
    %v4461 = vpop.permute.xlu0 %4460
    %v4463 = vmul.f32 %v4445, %v4461
    %4465 = vrot.lane.b32.xlu0 %v4463, 32
    %v4466 = vpop.permute.xlu0 %4465
    %4468 = vrot.lane.b32.xlu0 %v4269, 64
    %v4469 = vpop.permute.xlu0 %4468
    %v4471 = vsel %vm356, %v4466, %v4469
    %v4472 = vld [vmem:[#allocation11] sm:$0xff]
    %v4473 = vld [vmem:[#allocation11 + $0x8] sm:$0xff]
    %v4474 = vld [vmem:[#allocation11 + $0x10] sm:$0xff]
    %v4475 = vld [vmem:[#allocation11 + $0x18] sm:$0xff]
    %v4476 = vld [vmem:[#allocation11 + $0x20] sm:$0xff]
    %v4477 = vld [vmem:[#allocation11 + $0x28] sm:$0xff]
    %v4478 = vld [vmem:[#allocation11 + $0x30] sm:$0xff]
    %v4479 = vld [vmem:[#allocation11 + $0x38] sm:$0xff]
    %v4481 = vsel %vm416, %v4471, 0
    %4483 = vmatpush.msra.mxu0 0.0
    %4484 = vmatpush.msra.mxu0 0.0
    %4485 = vmatpush.msra.mxu0 0.0
    %4486 = vmatpush.msra.mxu0 0.0
    %4487 = vmatpush.msra.mxu0 0.0
    %4488 = vmatpush.msra.mxu0 0.0
    %4489 = vmatpush.msra.mxu0 0.0
    %4490 = vmatpush.msra.mxu0 0.0
    %4491 = vmatpush.msra.mxu0 %v4479
    %4492 = vmatpush.msra.mxu0 %v4478
    %4493 = vmatpush.msra.mxu0 %v4477
    %4494 = vmatpush.msra.mxu0 %v4476
    %4495 = vmatpush.msra.mxu0 %v4475
    %4496 = vmatpush.msra.mxu0 %v4474
    %4497 = vmatpush.msra.mxu0 %v4473
    %4498 = vmatpush.msra.mxu0 %v4472
    %4499 = vmatmul.f32.gmra.mxu0 %v4481
    %v4500 = vpop.f32.mrf.mxu0
    %v4501 = vadd.f32 %v415, %v4500
    %4502 = vdwg.mxu0
    %v4503 = vmul.f32 %v4501, 0.5
    %v4504 = vtanh.pop %v4503
    %v4505 = vadd.f32 %v4504, 1.0
    %v4506 = vmul.f32 %v4505, 0.5
    %v4507 = vtanh.pop %v4501
    %v4508 = vmul.f32 %v4506, %v4263
    %4510 = vrot.lane.b32.xlu0 %v4507, 64
    %v4511 = vpop.permute.xlu0 %4510
    %v4513 = vmul.f32 %v4506, %v4511
    %4515 = vrot.lane.b32.xlu0 %v4513, 32
    %v4516 = vpop.permute.xlu0 %4515
    %v4518 = vadd.f32 %v4508, %v4516
    %v4519 = vtanh.pop %v4518
    %4521 = vrot.lane.b32.xlu0 %v4519, 64
    %v4522 = vpop.permute.xlu0 %4521
    %v4524 = vmul.f32 %v4506, %v4522
    %4526 = vrot.lane.b32.xlu0 %v4524, 32
    %v4527 = vpop.permute.xlu0 %4526
    %4529 = vrot.lane.b32.xlu0 %v4330, 64
    %v4530 = vpop.permute.xlu0 %4529
    %v4532 = vsel %vm356, %v4527, %v4530
    %v4533 = vld [vmem:[%s467] sm:$0xff]
    %v4534 = vld [vmem:[%s467 + $0x8] sm:$0xff]
    %v4535 = vld [vmem:[%s467 + $0x10] sm:$0xff]
    %v4536 = vld [vmem:[%s467 + $0x18] sm:$0xff]
    %v4537 = vld [vmem:[%s467 + $0x20] sm:$0xff]
    %v4538 = vld [vmem:[%s467 + $0x28] sm:$0xff]
    %v4539 = vld [vmem:[%s467 + $0x30] sm:$0xff]
    %v4540 = vld [vmem:[%s467 + $0x38] sm:$0xff]
    %v4542 = vsel %vm416, %v4532, 0
    %4544 = vmatpush.msra.mxu0 0.0
    %4545 = vmatpush.msra.mxu0 0.0
    %4546 = vmatpush.msra.mxu0 0.0
    %4547 = vmatpush.msra.mxu0 0.0
    %4548 = vmatpush.msra.mxu0 0.0
    %4549 = vmatpush.msra.mxu0 0.0
    %4550 = vmatpush.msra.mxu0 0.0
    %4551 = vmatpush.msra.mxu0 0.0
    %4552 = vmatpush.msra.mxu0 %v4540
    %4553 = vmatpush.msra.mxu0 %v4539
    %4554 = vmatpush.msra.mxu0 %v4538
    %4555 = vmatpush.msra.mxu0 %v4537
    %4556 = vmatpush.msra.mxu0 %v4536
    %4557 = vmatpush.msra.mxu0 %v4535
    %4558 = vmatpush.msra.mxu0 %v4534
    %4559 = vmatpush.msra.mxu0 %v4533
    %4560 = vmatmul.f32.gmra.mxu0 %v4542
    %v4561 = vpop.f32.mrf.mxu0
    %v4562 = vadd.f32 %v476, %v4561
    %4563 = vdwg.mxu0
    %v4564 = vmul.f32 %v4562, 0.5
    %v4565 = vtanh.pop %v4564
    %v4566 = vadd.f32 %v4565, 1.0
    %v4567 = vmul.f32 %v4566, 0.5
    %v4568 = vtanh.pop %v4562
    %v4569 = vmul.f32 %v4567, %v4324
    %4571 = vrot.lane.b32.xlu0 %v4568, 64
    %v4572 = vpop.permute.xlu0 %4571
    %v4574 = vmul.f32 %v4567, %v4572
    %4576 = vrot.lane.b32.xlu0 %v4574, 32
    %v4577 = vpop.permute.xlu0 %4576
    %v4579 = vadd.f32 %v4569, %v4577
    %v4580 = vtanh.pop %v4579
    %4582 = vrot.lane.b32.xlu0 %v4580, 64
    %v4583 = vpop.permute.xlu0 %4582
    %v4585 = vmul.f32 %v4567, %v4583
    %4587 = vrot.lane.b32.xlu0 %v4585, 32
    %v4588 = vpop.permute.xlu0 %4587
    %4591 = vrot.lane.b32.xlu0 %v4392, 64
    %v4592 = vpop.permute.xlu0 %4591
    %v4594 = vsel %vm356, %v4588, %v4592
    %v4595 = vld [vmem:[%s527] sm:$0xff]
    %v4596 = vld [vmem:[%s527 + $0x8] sm:$0xff]
    %v4597 = vld [vmem:[%s527 + $0x10] sm:$0xff]
    %v4598 = vld [vmem:[%s527 + $0x18] sm:$0xff]
    %v4599 = vld [vmem:[%s527 + $0x20] sm:$0xff]
    %v4600 = vld [vmem:[%s527 + $0x28] sm:$0xff]
    %v4601 = vld [vmem:[%s527 + $0x30] sm:$0xff]
    %v4602 = vld [vmem:[%s527 + $0x38] sm:$0xff]
    %v4604 = vsel %vm416, %v4594, 0
    %4606 = vmatpush.msra.mxu0 0.0
    %4607 = vmatpush.msra.mxu0 0.0
    %4608 = vmatpush.msra.mxu0 0.0
    %4609 = vmatpush.msra.mxu0 0.0
    %4610 = vmatpush.msra.mxu0 0.0
    %4611 = vmatpush.msra.mxu0 0.0
    %4612 = vmatpush.msra.mxu0 0.0
    %4613 = vmatpush.msra.mxu0 0.0
    %4614 = vmatpush.msra.mxu0 %v4602
    %4615 = vmatpush.msra.mxu0 %v4601
    %4616 = vmatpush.msra.mxu0 %v4600
    %4617 = vmatpush.msra.mxu0 %v4599
    %4618 = vmatpush.msra.mxu0 %v4598
    %4619 = vmatpush.msra.mxu0 %v4597
    %4620 = vmatpush.msra.mxu0 %v4596
    %4621 = vmatpush.msra.mxu0 %v4595
    %4622 = vmatmul.f32.gmra.mxu0 %v4604
    %v4623 = vpop.f32.mrf.mxu0
    %v4624 = vadd.f32 %v536, %v4623
    %4625 = vdwg.mxu0
    %v4626 = vmul.f32 %v4624, 0.5
    %v4627 = vtanh.pop %v4626
    %v4628 = vadd.f32 %v4627, 1.0
    %v4629 = vmul.f32 %v4628, 0.5
    %v4630 = vtanh.pop %v4624
    %v4631 = vmul.f32 %v4629, %v4386
    %4633 = vrot.lane.b32.xlu0 %v4630, 64
    %v4634 = vpop.permute.xlu0 %4633
    %v4636 = vmul.f32 %v4629, %v4634
    %4638 = vrot.lane.b32.xlu0 %v4636, 32
    %v4639 = vpop.permute.xlu0 %4638
    %v4641 = vadd.f32 %v4631, %v4639
    %v4642 = vtanh.pop %v4641
    %4644 = vrot.lane.b32.xlu0 %v4642, 64
    %v4645 = vpop.permute.xlu0 %4644
    %v4647 = vmul.f32 %v4629, %v4645
    %v4648 = vmul.f32 %v4647, %v585
    %4650 = vrot.lane.b32.xlu0 %v4648, 32
    %v4651 = vpop.permute.xlu0 %4650
    %v4653 = vsel %vm356, %v4651, 0.0
    %4654 = vadd.xlane.f32.xlu0 %v4653
    %v4655 = vpop.xlane.xlu0 %4654
    %v4656 = vadd.f32 %v4655, %v596
    %v4657 = vtanh.pop %v4656
    %4659 = vrot.lane.b32.xlu0 %v4657, 1
    %v4660 = vpop.permute.xlu0 %4659
    %v4662 = vadd.f32 %v302, %v4660
    %4664 = vrot.lane.b32.xlu0 %v4662, 15
    %v4665 = vpop.permute.xlu0 %4664
    %vm4667 = vcmask 138368
    %4668 = vst.msk [vmem:[#allocation12] sm:$0xff] %vm4667, %v4665
    %4669 = vset.pattern.permute.xlu0 1
    %4670 = vperm.xlu0 %4669, %v4662
    %v4671 = vpop.permute.xlu0 %4670
    %v4673 = vmul.f32 %v4671, %v122
    %v4674 = vadd.f32 %v4673, %v321
    %v4675 = vld [vmem:[#allocation9] sm:$0xff]
    %v4676 = vld [vmem:[#allocation9 + $0x8] sm:$0xff]
    %v4677 = vld [vmem:[#allocation9 + $0x10] sm:$0xff]
    %v4678 = vld [vmem:[#allocation9 + $0x18] sm:$0xff]
    %v4679 = vsel %vm356, %v4466, 0
    %4681 = vmatpush.msra.mxu0 0.0
    %4682 = vmatpush.msra.mxu0 0.0
    %4683 = vmatpush.msra.mxu0 0.0
    %4684 = vmatpush.msra.mxu0 0.0
    %4685 = vmatpush.msra.mxu0 0.0
    %4686 = vmatpush.msra.mxu0 0.0
    %4687 = vmatpush.msra.mxu0 0.0
    %4688 = vmatpush.msra.mxu0 0.0
    %4689 = vmatpush.msra.mxu0 0.0
    %4690 = vmatpush.msra.mxu0 0.0
    %4691 = vmatpush.msra.mxu0 0.0
    %4692 = vmatpush.msra.mxu0 0.0
    %4693 = vmatpush.msra.mxu0 %v4678
    %4694 = vmatpush.msra.mxu0 %v4677
    %4695 = vmatpush.msra.mxu0 %v4676
    %4696 = vmatpush.msra.mxu0 %v4675
    %4697 = vmatmul.f32.gmra.mxu0 %v4679
    %v4698 = vpop.f32.mrf.mxu0
    %v4699 = vadd.f32 %v4674, %v4698
    %4700 = vdwg.mxu0
    %v4701 = vmul.f32 %v4699, 0.5
    %v4702 = vtanh.pop %v4701
    %v4703 = vadd.f32 %v4702, 1.0
    %v4704 = vmul.f32 %v4703, 0.5
    %v4705 = vtanh.pop %v4699
    %v4706 = vmul.f32 %v4704, %v4457
    %4708 = vrot.lane.b32.xlu0 %v4705, 64
    %v4709 = vpop.permute.xlu0 %4708
    %v4711 = vmul.f32 %v4704, %v4709
    %4713 = vrot.lane.b32.xlu0 %v4711, 32
    %v4714 = vpop.permute.xlu0 %4713
    %v4716 = vadd.f32 %v4706, %v4714
    %v4717 = vtanh.pop %v4716
    %4719 = vrot.lane.b32.xlu0 %v4717, 64
    %v4720 = vpop.permute.xlu0 %4719
    %v4722 = vmul.f32 %v4704, %v4720
    %4724 = vrot.lane.b32.xlu0 %v4722, 32
    %v4725 = vpop.permute.xlu0 %4724
    %4727 = vrot.lane.b32.xlu0 %v4524, 64
    %v4728 = vpop.permute.xlu0 %4727
    %v4730 = vsel %vm356, %v4725, %v4728
    %v4731 = vld [vmem:[#allocation11] sm:$0xff]
    %v4732 = vld [vmem:[#allocation11 + $0x8] sm:$0xff]
    %v4733 = vld [vmem:[#allocation11 + $0x10] sm:$0xff]
    %v4734 = vld [vmem:[#allocation11 + $0x18] sm:$0xff]
    %v4735 = vld [vmem:[#allocation11 + $0x20] sm:$0xff]
    %v4736 = vld [vmem:[#allocation11 + $0x28] sm:$0xff]
    %v4737 = vld [vmem:[#allocation11 + $0x30] sm:$0xff]
    %v4738 = vld [vmem:[#allocation11 + $0x38] sm:$0xff]
    %v4740 = vsel %vm416, %v4730, 0
    %4742 = vmatpush.msra.mxu0 0.0
    %4743 = vmatpush.msra.mxu0 0.0
    %4744 = vmatpush.msra.mxu0 0.0
    %4745 = vmatpush.msra.mxu0 0.0
    %4746 = vmatpush.msra.mxu0 0.0
    %4747 = vmatpush.msra.mxu0 0.0
    %4748 = vmatpush.msra.mxu0 0.0
    %4749 = vmatpush.msra.mxu0 0.0
    %4750 = vmatpush.msra.mxu0 %v4738
    %4751 = vmatpush.msra.mxu0 %v4737
    %4752 = vmatpush.msra.mxu0 %v4736
    %4753 = vmatpush.msra.mxu0 %v4735
    %4754 = vmatpush.msra.mxu0 %v4734
    %4755 = vmatpush.msra.mxu0 %v4733
    %4756 = vmatpush.msra.mxu0 %v4732
    %4757 = vmatpush.msra.mxu0 %v4731
    %4758 = vmatmul.f32.gmra.mxu0 %v4740
    %v4759 = vpop.f32.mrf.mxu0
    %v4760 = vadd.f32 %v415, %v4759
    %4761 = vdwg.mxu0
    %v4762 = vmul.f32 %v4760, 0.5
    %v4763 = vtanh.pop %v4762
    %v4764 = vadd.f32 %v4763, 1.0
    %v4765 = vmul.f32 %v4764, 0.5
    %v4766 = vtanh.pop %v4760
    %v4767 = vmul.f32 %v4765, %v4518
    %4769 = vrot.lane.b32.xlu0 %v4766, 64
    %v4770 = vpop.permute.xlu0 %4769
    %v4772 = vmul.f32 %v4765, %v4770
    %4774 = vrot.lane.b32.xlu0 %v4772, 32
    %v4775 = vpop.permute.xlu0 %4774
    %v4777 = vadd.f32 %v4767, %v4775
    %v4778 = vtanh.pop %v4777
    %4780 = vrot.lane.b32.xlu0 %v4778, 64
    %v4781 = vpop.permute.xlu0 %4780
    %v4783 = vmul.f32 %v4765, %v4781
    %4785 = vrot.lane.b32.xlu0 %v4783, 32
    %v4786 = vpop.permute.xlu0 %4785
    %4788 = vrot.lane.b32.xlu0 %v4585, 64
    %v4789 = vpop.permute.xlu0 %4788
    %v4791 = vsel %vm356, %v4786, %v4789
    %v4792 = vld [vmem:[%s467] sm:$0xff]
    %v4793 = vld [vmem:[%s467 + $0x8] sm:$0xff]
    %v4794 = vld [vmem:[%s467 + $0x10] sm:$0xff]
    %v4795 = vld [vmem:[%s467 + $0x18] sm:$0xff]
    %v4796 = vld [vmem:[%s467 + $0x20] sm:$0xff]
    %v4797 = vld [vmem:[%s467 + $0x28] sm:$0xff]
    %v4798 = vld [vmem:[%s467 + $0x30] sm:$0xff]
    %v4799 = vld [vmem:[%s467 + $0x38] sm:$0xff]
    %v4801 = vsel %vm416, %v4791, 0
    %4803 = vmatpush.msra.mxu0 0.0
    %4804 = vmatpush.msra.mxu0 0.0
    %4805 = vmatpush.msra.mxu0 0.0
    %4806 = vmatpush.msra.mxu0 0.0
    %4807 = vmatpush.msra.mxu0 0.0
    %4808 = vmatpush.msra.mxu0 0.0
    %4809 = vmatpush.msra.mxu0 0.0
    %4810 = vmatpush.msra.mxu0 0.0
    %4811 = vmatpush.msra.mxu0 %v4799
    %4812 = vmatpush.msra.mxu0 %v4798
    %4813 = vmatpush.msra.mxu0 %v4797
    %4814 = vmatpush.msra.mxu0 %v4796
    %4815 = vmatpush.msra.mxu0 %v4795
    %4816 = vmatpush.msra.mxu0 %v4794
    %4817 = vmatpush.msra.mxu0 %v4793
    %4818 = vmatpush.msra.mxu0 %v4792
    %4819 = vmatmul.f32.gmra.mxu0 %v4801
    %v4820 = vpop.f32.mrf.mxu0
    %v4821 = vadd.f32 %v476, %v4820
    %4822 = vdwg.mxu0
    %v4823 = vmul.f32 %v4821, 0.5
    %v4824 = vtanh.pop %v4823
    %v4825 = vadd.f32 %v4824, 1.0
    %v4826 = vmul.f32 %v4825, 0.5
    %v4827 = vtanh.pop %v4821
    %v4828 = vmul.f32 %v4826, %v4579
    %4830 = vrot.lane.b32.xlu0 %v4827, 64
    %v4831 = vpop.permute.xlu0 %4830
    %v4833 = vmul.f32 %v4826, %v4831
    %4835 = vrot.lane.b32.xlu0 %v4833, 32
    %v4836 = vpop.permute.xlu0 %4835
    %v4838 = vadd.f32 %v4828, %v4836
    %v4839 = vtanh.pop %v4838
    %4841 = vrot.lane.b32.xlu0 %v4839, 64
    %v4842 = vpop.permute.xlu0 %4841
    %v4844 = vmul.f32 %v4826, %v4842
    %4846 = vrot.lane.b32.xlu0 %v4844, 32
    %v4847 = vpop.permute.xlu0 %4846
    %4850 = vrot.lane.b32.xlu0 %v4647, 64
    %v4851 = vpop.permute.xlu0 %4850
    %v4853 = vsel %vm356, %v4847, %v4851
    %v4854 = vld [vmem:[%s527] sm:$0xff]
    %v4855 = vld [vmem:[%s527 + $0x8] sm:$0xff]
    %v4856 = vld [vmem:[%s527 + $0x10] sm:$0xff]
    %v4857 = vld [vmem:[%s527 + $0x18] sm:$0xff]
    %v4858 = vld [vmem:[%s527 + $0x20] sm:$0xff]
    %v4859 = vld [vmem:[%s527 + $0x28] sm:$0xff]
    %v4860 = vld [vmem:[%s527 + $0x30] sm:$0xff]
    %v4861 = vld [vmem:[%s527 + $0x38] sm:$0xff]
    %v4863 = vsel %vm416, %v4853, 0
    %4865 = vmatpush.msra.mxu0 0.0
    %4866 = vmatpush.msra.mxu0 0.0
    %4867 = vmatpush.msra.mxu0 0.0
    %4868 = vmatpush.msra.mxu0 0.0
    %4869 = vmatpush.msra.mxu0 0.0
    %4870 = vmatpush.msra.mxu0 0.0
    %4871 = vmatpush.msra.mxu0 0.0
    %4872 = vmatpush.msra.mxu0 0.0
    %4873 = vmatpush.msra.mxu0 %v4861
    %4874 = vmatpush.msra.mxu0 %v4860
    %4875 = vmatpush.msra.mxu0 %v4859
    %4876 = vmatpush.msra.mxu0 %v4858
    %4877 = vmatpush.msra.mxu0 %v4857
    %4878 = vmatpush.msra.mxu0 %v4856
    %4879 = vmatpush.msra.mxu0 %v4855
    %4880 = vmatpush.msra.mxu0 %v4854
    %4881 = vmatmul.f32.gmra.mxu0 %v4863
    %v4882 = vpop.f32.mrf.mxu0
    %v4883 = vadd.f32 %v536, %v4882
    %4884 = vdwg.mxu0
    %v4885 = vmul.f32 %v4883, 0.5
    %v4886 = vtanh.pop %v4885
    %v4887 = vadd.f32 %v4886, 1.0
    %v4888 = vmul.f32 %v4887, 0.5
    %v4889 = vtanh.pop %v4883
    %v4890 = vmul.f32 %v4888, %v4641
    %4892 = vrot.lane.b32.xlu0 %v4889, 64
    %v4893 = vpop.permute.xlu0 %4892
    %v4895 = vmul.f32 %v4888, %v4893
    %4897 = vrot.lane.b32.xlu0 %v4895, 32
    %v4898 = vpop.permute.xlu0 %4897
    %v4900 = vadd.f32 %v4890, %v4898
    %v4901 = vtanh.pop %v4900
    %4903 = vrot.lane.b32.xlu0 %v4901, 64
    %v4904 = vpop.permute.xlu0 %4903
    %v4906 = vmul.f32 %v4888, %v4904
    %v4907 = vmul.f32 %v4906, %v585
    %4909 = vrot.lane.b32.xlu0 %v4907, 32
    %v4910 = vpop.permute.xlu0 %4909
    %v4912 = vsel %vm356, %v4910, 0.0
    %4913 = vadd.xlane.f32.xlu0 %v4912
    %v4914 = vpop.xlane.xlu0 %4913
    %v4915 = vadd.f32 %v4914, %v596
    %v4916 = vtanh.pop %v4915
    %4918 = vrot.lane.b32.xlu0 %v4916, 2
    %v4919 = vpop.permute.xlu0 %4918
    %v4921 = vadd.f32 %v302, %v4919
    %4923 = vrot.lane.b32.xlu0 %v4921, 15
    %v4924 = vpop.permute.xlu0 %4923
    %vm4926 = vcmask 146568
    %4927 = vst.msk [vmem:[#allocation12] sm:$0xff] %vm4926, %v4924
    %4928 = vset.pattern.permute.xlu0 2
    %4929 = vperm.xlu0 %4928, %v4921
    %v4930 = vpop.permute.xlu0 %4929
    %v4932 = vmul.f32 %v4930, %v122
    %v4933 = vadd.f32 %v4932, %v327
    %v4934 = vld [vmem:[#allocation9] sm:$0xff]
    %v4935 = vld [vmem:[#allocation9 + $0x8] sm:$0xff]
    %v4936 = vld [vmem:[#allocation9 + $0x10] sm:$0xff]
    %v4937 = vld [vmem:[#allocation9 + $0x18] sm:$0xff]
    %v4938 = vsel %vm356, %v4725, 0
    %4940 = vmatpush.msra.mxu0 0.0
    %4941 = vmatpush.msra.mxu0 0.0
    %4942 = vmatpush.msra.mxu0 0.0
    %4943 = vmatpush.msra.mxu0 0.0
    %4944 = vmatpush.msra.mxu0 0.0
    %4945 = vmatpush.msra.mxu0 0.0
    %4946 = vmatpush.msra.mxu0 0.0
    %4947 = vmatpush.msra.mxu0 0.0
    %4948 = vmatpush.msra.mxu0 0.0
    %4949 = vmatpush.msra.mxu0 0.0
    %4950 = vmatpush.msra.mxu0 0.0
    %4951 = vmatpush.msra.mxu0 0.0
    %4952 = vmatpush.msra.mxu0 %v4937
    %4953 = vmatpush.msra.mxu0 %v4936
    %4954 = vmatpush.msra.mxu0 %v4935
    %4955 = vmatpush.msra.mxu0 %v4934
    %4956 = vmatmul.f32.gmra.mxu0 %v4938
    %v4957 = vpop.f32.mrf.mxu0
    %v4958 = vadd.f32 %v4933, %v4957
    %4959 = vdwg.mxu0
    %v4960 = vmul.f32 %v4958, 0.5
    %v4961 = vtanh.pop %v4960
    %v4962 = vadd.f32 %v4961, 1.0
    %v4963 = vmul.f32 %v4962, 0.5
    %v4964 = vtanh.pop %v4958
    %v4965 = vmul.f32 %v4963, %v4716
    %4967 = vrot.lane.b32.xlu0 %v4964, 64
    %v4968 = vpop.permute.xlu0 %4967
    %v4970 = vmul.f32 %v4963, %v4968
    %4972 = vrot.lane.b32.xlu0 %v4970, 32
    %v4973 = vpop.permute.xlu0 %4972
    %v4975 = vadd.f32 %v4965, %v4973
    %v4976 = vtanh.pop %v4975
    %4978 = vrot.lane.b32.xlu0 %v4976, 64
    %v4979 = vpop.permute.xlu0 %4978
    %v4981 = vmul.f32 %v4963, %v4979
    %4983 = vrot.lane.b32.xlu0 %v4981, 32
    %v4984 = vpop.permute.xlu0 %4983
    %4986 = vrot.lane.b32.xlu0 %v4783, 64
    %v4987 = vpop.permute.xlu0 %4986
    %v4989 = vsel %vm356, %v4984, %v4987
    %v4990 = vld [vmem:[#allocation11] sm:$0xff]
    %v4991 = vld [vmem:[#allocation11 + $0x8] sm:$0xff]
    %v4992 = vld [vmem:[#allocation11 + $0x10] sm:$0xff]
    %v4993 = vld [vmem:[#allocation11 + $0x18] sm:$0xff]
    %v4994 = vld [vmem:[#allocation11 + $0x20] sm:$0xff]
    %v4995 = vld [vmem:[#allocation11 + $0x28] sm:$0xff]
    %v4996 = vld [vmem:[#allocation11 + $0x30] sm:$0xff]
    %v4997 = vld [vmem:[#allocation11 + $0x38] sm:$0xff]
    %v4999 = vsel %vm416, %v4989, 0
    %5001 = vmatpush.msra.mxu0 0.0
    %5002 = vmatpush.msra.mxu0 0.0
    %5003 = vmatpush.msra.mxu0 0.0
    %5004 = vmatpush.msra.mxu0 0.0
    %5005 = vmatpush.msra.mxu0 0.0
    %5006 = vmatpush.msra.mxu0 0.0
    %5007 = vmatpush.msra.mxu0 0.0
    %5008 = vmatpush.msra.mxu0 0.0
    %5009 = vmatpush.msra.mxu0 %v4997
    %5010 = vmatpush.msra.mxu0 %v4996
    %5011 = vmatpush.msra.mxu0 %v4995
    %5012 = vmatpush.msra.mxu0 %v4994
    %5013 = vmatpush.msra.mxu0 %v4993
    %5014 = vmatpush.msra.mxu0 %v4992
    %5015 = vmatpush.msra.mxu0 %v4991
    %5016 = vmatpush.msra.mxu0 %v4990
    %5017 = vmatmul.f32.gmra.mxu0 %v4999
    %v5018 = vpop.f32.mrf.mxu0
    %v5019 = vadd.f32 %v415, %v5018
    %5020 = vdwg.mxu0
    %v5021 = vmul.f32 %v5019, 0.5
    %v5022 = vtanh.pop %v5021
    %v5023 = vadd.f32 %v5022, 1.0
    %v5024 = vmul.f32 %v5023, 0.5
    %v5025 = vtanh.pop %v5019
    %v5026 = vmul.f32 %v5024, %v4777
    %5028 = vrot.lane.b32.xlu0 %v5025, 64
    %v5029 = vpop.permute.xlu0 %5028
    %v5031 = vmul.f32 %v5024, %v5029
    %5033 = vrot.lane.b32.xlu0 %v5031, 32
    %v5034 = vpop.permute.xlu0 %5033
    %v5036 = vadd.f32 %v5026, %v5034
    %v5037 = vtanh.pop %v5036
    %5039 = vrot.lane.b32.xlu0 %v5037, 64
    %v5040 = vpop.permute.xlu0 %5039
    %v5042 = vmul.f32 %v5024, %v5040
    %5044 = vrot.lane.b32.xlu0 %v5042, 32
    %v5045 = vpop.permute.xlu0 %5044
    %5047 = vrot.lane.b32.xlu0 %v4844, 64
    %v5048 = vpop.permute.xlu0 %5047
    %v5050 = vsel %vm356, %v5045, %v5048
    %v5051 = vld [vmem:[%s467] sm:$0xff]
    %v5052 = vld [vmem:[%s467 + $0x8] sm:$0xff]
    %v5053 = vld [vmem:[%s467 + $0x10] sm:$0xff]
    %v5054 = vld [vmem:[%s467 + $0x18] sm:$0xff]
    %v5055 = vld [vmem:[%s467 + $0x20] sm:$0xff]
    %v5056 = vld [vmem:[%s467 + $0x28] sm:$0xff]
    %v5057 = vld [vmem:[%s467 + $0x30] sm:$0xff]
    %v5058 = vld [vmem:[%s467 + $0x38] sm:$0xff]
    %v5060 = vsel %vm416, %v5050, 0
    %5062 = vmatpush.msra.mxu0 0.0
    %5063 = vmatpush.msra.mxu0 0.0
    %5064 = vmatpush.msra.mxu0 0.0
    %5065 = vmatpush.msra.mxu0 0.0
    %5066 = vmatpush.msra.mxu0 0.0
    %5067 = vmatpush.msra.mxu0 0.0
    %5068 = vmatpush.msra.mxu0 0.0
    %5069 = vmatpush.msra.mxu0 0.0
    %5070 = vmatpush.msra.mxu0 %v5058
    %5071 = vmatpush.msra.mxu0 %v5057
    %5072 = vmatpush.msra.mxu0 %v5056
    %5073 = vmatpush.msra.mxu0 %v5055
    %5074 = vmatpush.msra.mxu0 %v5054
    %5075 = vmatpush.msra.mxu0 %v5053
    %5076 = vmatpush.msra.mxu0 %v5052
    %5077 = vmatpush.msra.mxu0 %v5051
    %5078 = vmatmul.f32.gmra.mxu0 %v5060
    %v5079 = vpop.f32.mrf.mxu0
    %v5080 = vadd.f32 %v476, %v5079
    %5081 = vdwg.mxu0
    %v5082 = vmul.f32 %v5080, 0.5
    %v5083 = vtanh.pop %v5082
    %v5084 = vadd.f32 %v5083, 1.0
    %v5085 = vmul.f32 %v5084, 0.5
    %v5086 = vtanh.pop %v5080
    %v5087 = vmul.f32 %v5085, %v4838
    %5089 = vrot.lane.b32.xlu0 %v5086, 64
    %v5090 = vpop.permute.xlu0 %5089
    %v5092 = vmul.f32 %v5085, %v5090
    %5094 = vrot.lane.b32.xlu0 %v5092, 32
    %v5095 = vpop.permute.xlu0 %5094
    %v5097 = vadd.f32 %v5087, %v5095
    %v5098 = vtanh.pop %v5097
    %5100 = vrot.lane.b32.xlu0 %v5098, 64
    %v5101 = vpop.permute.xlu0 %5100
    %v5103 = vmul.f32 %v5085, %v5101
    %5105 = vrot.lane.b32.xlu0 %v5103, 32
    %v5106 = vpop.permute.xlu0 %5105
    %5109 = vrot.lane.b32.xlu0 %v4906, 64
    %v5110 = vpop.permute.xlu0 %5109
    %v5112 = vsel %vm356, %v5106, %v5110
    %v5113 = vld [vmem:[%s527] sm:$0xff]
    %v5114 = vld [vmem:[%s527 + $0x8] sm:$0xff]
    %v5115 = vld [vmem:[%s527 + $0x10] sm:$0xff]
    %v5116 = vld [vmem:[%s527 + $0x18] sm:$0xff]
    %v5117 = vld [vmem:[%s527 + $0x20] sm:$0xff]
    %v5118 = vld [vmem:[%s527 + $0x28] sm:$0xff]
    %v5119 = vld [vmem:[%s527 + $0x30] sm:$0xff]
    %v5120 = vld [vmem:[%s527 + $0x38] sm:$0xff]
    %v5122 = vsel %vm416, %v5112, 0
    %5124 = vmatpush.msra.mxu0 0.0
    %5125 = vmatpush.msra.mxu0 0.0
    %5126 = vmatpush.msra.mxu0 0.0
    %5127 = vmatpush.msra.mxu0 0.0
    %5128 = vmatpush.msra.mxu0 0.0
    %5129 = vmatpush.msra.mxu0 0.0
    %5130 = vmatpush.msra.mxu0 0.0
    %5131 = vmatpush.msra.mxu0 0.0
    %5132 = vmatpush.msra.mxu0 %v5120
    %5133 = vmatpush.msra.mxu0 %v5119
    %5134 = vmatpush.msra.mxu0 %v5118
    %5135 = vmatpush.msra.mxu0 %v5117
    %5136 = vmatpush.msra.mxu0 %v5116
    %5137 = vmatpush.msra.mxu0 %v5115
    %5138 = vmatpush.msra.mxu0 %v5114
    %5139 = vmatpush.msra.mxu0 %v5113
    %5140 = vmatmul.f32.gmra.mxu0 %v5122
    %v5141 = vpop.f32.mrf.mxu0
    %v5142 = vadd.f32 %v536, %v5141
    %5143 = vdwg.mxu0
    %v5144 = vmul.f32 %v5142, 0.5
    %v5145 = vtanh.pop %v5144
    %v5146 = vadd.f32 %v5145, 1.0
    %v5147 = vmul.f32 %v5146, 0.5
    %v5148 = vtanh.pop %v5142
    %v5149 = vmul.f32 %v5147, %v4900
    %5151 = vrot.lane.b32.xlu0 %v5148, 64
    %v5152 = vpop.permute.xlu0 %5151
    %v5154 = vmul.f32 %v5147, %v5152
    %5156 = vrot.lane.b32.xlu0 %v5154, 32
    %v5157 = vpop.permute.xlu0 %5156
    %v5159 = vadd.f32 %v5149, %v5157
    %v5160 = vtanh.pop %v5159
    %5162 = vrot.lane.b32.xlu0 %v5160, 64
    %v5163 = vpop.permute.xlu0 %5162
    %v5165 = vmul.f32 %v5147, %v5163
    %v5166 = vmul.f32 %v5165, %v585
    %5168 = vrot.lane.b32.xlu0 %v5166, 32
    %v5169 = vpop.permute.xlu0 %5168
    %v5171 = vsel %vm356, %v5169, 0.0
    %5172 = vadd.xlane.f32.xlu0 %v5171
    %v5173 = vpop.xlane.xlu0 %5172
    %v5174 = vadd.f32 %v5173, %v596
    %v5175 = vtanh.pop %v5174
    %5177 = vrot.lane.b32.xlu0 %v5175, 3
    %v5178 = vpop.permute.xlu0 %5177
    %v5180 = vadd.f32 %v302, %v5178
    %5182 = vrot.lane.b32.xlu0 %v5180, 15
    %v5183 = vpop.permute.xlu0 %5182
    %vm5185 = vcmask 154768
    %5186 = vst.msk [vmem:[#allocation12] sm:$0xff] %vm5185, %v5183
    %5187 = vset.pattern.permute.xlu0 3
    %5188 = vperm.xlu0 %5187, %v5180
    %v5189 = vpop.permute.xlu0 %5188
    %v5191 = vmul.f32 %v5189, %v122
    %v5192 = vadd.f32 %v5191, %v333
    %v5193 = vld [vmem:[#allocation9] sm:$0xff]
    %v5194 = vld [vmem:[#allocation9 + $0x8] sm:$0xff]
    %v5195 = vld [vmem:[#allocation9 + $0x10] sm:$0xff]
    %v5196 = vld [vmem:[#allocation9 + $0x18] sm:$0xff]
    %v5197 = vsel %vm356, %v4984, 0
    %5199 = vmatpush.msra.mxu0 0.0
    %5200 = vmatpush.msra.mxu0 0.0
    %5201 = vmatpush.msra.mxu0 0.0
    %5202 = vmatpush.msra.mxu0 0.0
    %5203 = vmatpush.msra.mxu0 0.0
    %5204 = vmatpush.msra.mxu0 0.0
    %5205 = vmatpush.msra.mxu0 0.0
    %5206 = vmatpush.msra.mxu0 0.0
    %5207 = vmatpush.msra.mxu0 0.0
    %5208 = vmatpush.msra.mxu0 0.0
    %5209 = vmatpush.msra.mxu0 0.0
    %5210 = vmatpush.msra.mxu0 0.0
    %5211 = vmatpush.msra.mxu0 %v5196
    %5212 = vmatpush.msra.mxu0 %v5195
    %5213 = vmatpush.msra.mxu0 %v5194
    %5214 = vmatpush.msra.mxu0 %v5193
    %5215 = vmatmul.f32.gmra.mxu0 %v5197
    %v5216 = vpop.f32.mrf.mxu0
    %v5217 = vadd.f32 %v5192, %v5216
    %5218 = vdwg.mxu0
    %v5219 = vmul.f32 %v5217, 0.5
    %v5220 = vtanh.pop %v5219
    %v5221 = vadd.f32 %v5220, 1.0
    %v5222 = vmul.f32 %v5221, 0.5
    %v5223 = vtanh.pop %v5217
    %v5224 = vmul.f32 %v5222, %v4975
    %5226 = vrot.lane.b32.xlu0 %v5223, 64
    %v5227 = vpop.permute.xlu0 %5226
    %v5229 = vmul.f32 %v5222, %v5227
    %5231 = vrot.lane.b32.xlu0 %v5229, 32
    %v5232 = vpop.permute.xlu0 %5231
    %v5234 = vadd.f32 %v5224, %v5232
    %v5235 = vtanh.pop %v5234
    %5237 = vrot.lane.b32.xlu0 %v5235, 64
    %v5238 = vpop.permute.xlu0 %5237
    %v5240 = vmul.f32 %v5222, %v5238
    %5242 = vrot.lane.b32.xlu0 %v5240, 32
    %v5243 = vpop.permute.xlu0 %5242
    %5245 = vrot.lane.b32.xlu0 %v5042, 64
    %v5246 = vpop.permute.xlu0 %5245
    %v5248 = vsel %vm356, %v5243, %v5246
    %v5249 = vld [vmem:[#allocation11] sm:$0xff]
    %v5250 = vld [vmem:[#allocation11 + $0x8] sm:$0xff]
    %v5251 = vld [vmem:[#allocation11 + $0x10] sm:$0xff]
    %v5252 = vld [vmem:[#allocation11 + $0x18] sm:$0xff]
    %v5253 = vld [vmem:[#allocation11 + $0x20] sm:$0xff]
    %v5254 = vld [vmem:[#allocation11 + $0x28] sm:$0xff]
    %v5255 = vld [vmem:[#allocation11 + $0x30] sm:$0xff]
    %v5256 = vld [vmem:[#allocation11 + $0x38] sm:$0xff]
    %v5258 = vsel %vm416, %v5248, 0
    %5260 = vmatpush.msra.mxu0 0.0
    %5261 = vmatpush.msra.mxu0 0.0
    %5262 = vmatpush.msra.mxu0 0.0
    %5263 = vmatpush.msra.mxu0 0.0
    %5264 = vmatpush.msra.mxu0 0.0
    %5265 = vmatpush.msra.mxu0 0.0
    %5266 = vmatpush.msra.mxu0 0.0
    %5267 = vmatpush.msra.mxu0 0.0
    %5268 = vmatpush.msra.mxu0 %v5256
    %5269 = vmatpush.msra.mxu0 %v5255
    %5270 = vmatpush.msra.mxu0 %v5254
    %5271 = vmatpush.msra.mxu0 %v5253
    %5272 = vmatpush.msra.mxu0 %v5252
    %5273 = vmatpush.msra.mxu0 %v5251
    %5274 = vmatpush.msra.mxu0 %v5250
    %5275 = vmatpush.msra.mxu0 %v5249
    %5276 = vmatmul.f32.gmra.mxu0 %v5258
    %v5277 = vpop.f32.mrf.mxu0
    %v5278 = vadd.f32 %v415, %v5277
    %5279 = vdwg.mxu0
    %v5280 = vmul.f32 %v5278, 0.5
    %v5281 = vtanh.pop %v5280
    %v5282 = vadd.f32 %v5281, 1.0
    %v5283 = vmul.f32 %v5282, 0.5
    %v5284 = vtanh.pop %v5278
    %v5285 = vmul.f32 %v5283, %v5036
    %5287 = vrot.lane.b32.xlu0 %v5284, 64
    %v5288 = vpop.permute.xlu0 %5287
    %v5290 = vmul.f32 %v5283, %v5288
    %5292 = vrot.lane.b32.xlu0 %v5290, 32
    %v5293 = vpop.permute.xlu0 %5292
    %v5295 = vadd.f32 %v5285, %v5293
    %v5296 = vtanh.pop %v5295
    %5298 = vrot.lane.b32.xlu0 %v5296, 64
    %v5299 = vpop.permute.xlu0 %5298
    %v5301 = vmul.f32 %v5283, %v5299
    %5303 = vrot.lane.b32.xlu0 %v5301, 32
    %v5304 = vpop.permute.xlu0 %5303
    %5306 = vrot.lane.b32.xlu0 %v5103, 64
    %v5307 = vpop.permute.xlu0 %5306
    %v5309 = vsel %vm356, %v5304, %v5307
    %v5310 = vld [vmem:[%s467] sm:$0xff]
    %v5311 = vld [vmem:[%s467 + $0x8] sm:$0xff]
    %v5312 = vld [vmem:[%s467 + $0x10] sm:$0xff]
    %v5313 = vld [vmem:[%s467 + $0x18] sm:$0xff]
    %v5314 = vld [vmem:[%s467 + $0x20] sm:$0xff]
    %v5315 = vld [vmem:[%s467 + $0x28] sm:$0xff]
    %v5316 = vld [vmem:[%s467 + $0x30] sm:$0xff]
    %v5317 = vld [vmem:[%s467 + $0x38] sm:$0xff]
    %v5319 = vsel %vm416, %v5309, 0
    %5321 = vmatpush.msra.mxu0 0.0
    %5322 = vmatpush.msra.mxu0 0.0
    %5323 = vmatpush.msra.mxu0 0.0
    %5324 = vmatpush.msra.mxu0 0.0
    %5325 = vmatpush.msra.mxu0 0.0
    %5326 = vmatpush.msra.mxu0 0.0
    %5327 = vmatpush.msra.mxu0 0.0
    %5328 = vmatpush.msra.mxu0 0.0
    %5329 = vmatpush.msra.mxu0 %v5317
    %5330 = vmatpush.msra.mxu0 %v5316
    %5331 = vmatpush.msra.mxu0 %v5315
    %5332 = vmatpush.msra.mxu0 %v5314
    %5333 = vmatpush.msra.mxu0 %v5313
    %5334 = vmatpush.msra.mxu0 %v5312
    %5335 = vmatpush.msra.mxu0 %v5311
    %5336 = vmatpush.msra.mxu0 %v5310
    %5337 = vmatmul.f32.gmra.mxu0 %v5319
    %v5338 = vpop.f32.mrf.mxu0
    %v5339 = vadd.f32 %v476, %v5338
    %5340 = vdwg.mxu0
    %v5341 = vmul.f32 %v5339, 0.5
    %v5342 = vtanh.pop %v5341
    %v5343 = vadd.f32 %v5342, 1.0
    %v5344 = vmul.f32 %v5343, 0.5
    %v5345 = vtanh.pop %v5339
    %v5346 = vmul.f32 %v5344, %v5097
    %5348 = vrot.lane.b32.xlu0 %v5345, 64
    %v5349 = vpop.permute.xlu0 %5348
    %v5351 = vmul.f32 %v5344, %v5349
    %5353 = vrot.lane.b32.xlu0 %v5351, 32
    %v5354 = vpop.permute.xlu0 %5353
    %v5356 = vadd.f32 %v5346, %v5354
    %v5357 = vtanh.pop %v5356
    %5359 = vrot.lane.b32.xlu0 %v5357, 64
    %v5360 = vpop.permute.xlu0 %5359
    %v5362 = vmul.f32 %v5344, %v5360
    %5364 = vrot.lane.b32.xlu0 %v5362, 32
    %v5365 = vpop.permute.xlu0 %5364
    %5368 = vrot.lane.b32.xlu0 %v5165, 64
    %v5369 = vpop.permute.xlu0 %5368
    %v5371 = vsel %vm356, %v5365, %v5369
    %v5372 = vld [vmem:[%s527] sm:$0xff]
    %v5373 = vld [vmem:[%s527 + $0x8] sm:$0xff]
    %v5374 = vld [vmem:[%s527 + $0x10] sm:$0xff]
    %v5375 = vld [vmem:[%s527 + $0x18] sm:$0xff]
    %v5376 = vld [vmem:[%s527 + $0x20] sm:$0xff]
    %v5377 = vld [vmem:[%s527 + $0x28] sm:$0xff]
    %v5378 = vld [vmem:[%s527 + $0x30] sm:$0xff]
    %v5379 = vld [vmem:[%s527 + $0x38] sm:$0xff]
    %v5381 = vsel %vm416, %v5371, 0
    %5383 = vmatpush.msra.mxu0 0.0
    %5384 = vmatpush.msra.mxu0 0.0
    %5385 = vmatpush.msra.mxu0 0.0
    %5386 = vmatpush.msra.mxu0 0.0
    %5387 = vmatpush.msra.mxu0 0.0
    %5388 = vmatpush.msra.mxu0 0.0
    %5389 = vmatpush.msra.mxu0 0.0
    %5390 = vmatpush.msra.mxu0 0.0
    %5391 = vmatpush.msra.mxu0 %v5379
    %5392 = vmatpush.msra.mxu0 %v5378
    %5393 = vmatpush.msra.mxu0 %v5377
    %5394 = vmatpush.msra.mxu0 %v5376
    %5395 = vmatpush.msra.mxu0 %v5375
    %5396 = vmatpush.msra.mxu0 %v5374
    %5397 = vmatpush.msra.mxu0 %v5373
    %5398 = vmatpush.msra.mxu0 %v5372
    %5399 = vmatmul.f32.gmra.mxu0 %v5381
    %v5400 = vpop.f32.mrf.mxu0
    %v5401 = vadd.f32 %v536, %v5400
    %5402 = vdwg.mxu0
    %v5403 = vmul.f32 %v5401, 0.5
    %v5404 = vtanh.pop %v5403
    %v5405 = vadd.f32 %v5404, 1.0
    %v5406 = vmul.f32 %v5405, 0.5
    %v5407 = vtanh.pop %v5401
    %v5408 = vmul.f32 %v5406, %v5159
    %5410 = vrot.lane.b32.xlu0 %v5407, 64
    %v5411 = vpop.permute.xlu0 %5410
    %v5413 = vmul.f32 %v5406, %v5411
    %5415 = vrot.lane.b32.xlu0 %v5413, 32
    %v5416 = vpop.permute.xlu0 %5415
    %v5418 = vadd.f32 %v5408, %v5416
    %v5419 = vtanh.pop %v5418
    %5421 = vrot.lane.b32.xlu0 %v5419, 64
    %v5422 = vpop.permute.xlu0 %5421
    %v5424 = vmul.f32 %v5406, %v5422
    %v5425 = vmul.f32 %v5424, %v585
    %5427 = vrot.lane.b32.xlu0 %v5425, 32
    %v5428 = vpop.permute.xlu0 %5427
    %v5430 = vsel %vm356, %v5428, 0.0
    %5431 = vadd.xlane.f32.xlu0 %v5430
    %v5432 = vpop.xlane.xlu0 %5431
    %v5433 = vadd.f32 %v5432, %v596
    %v5434 = vtanh.pop %v5433
    %5436 = vrot.lane.b32.xlu0 %v5434, 4
    %v5437 = vpop.permute.xlu0 %5436
    %v5439 = vadd.f32 %v302, %v5437
    %5441 = vrot.lane.b32.xlu0 %v5439, 15
    %v5442 = vpop.permute.xlu0 %5441
    %vm5444 = vcmask 162968
    %5445 = vst.msk [vmem:[#allocation12] sm:$0xff] %vm5444, %v5442
    %5446 = vset.pattern.permute.xlu0 4
    %5447 = vperm.xlu0 %5446, %v5439
    %v5448 = vpop.permute.xlu0 %5447
    %v5450 = vmul.f32 %v5448, %v122
    %v5451 = vadd.f32 %v5450, %v339
    %v5452 = vld [vmem:[#allocation9] sm:$0xff]
    %v5453 = vld [vmem:[#allocation9 + $0x8] sm:$0xff]
    %v5454 = vld [vmem:[#allocation9 + $0x10] sm:$0xff]
    %v5455 = vld [vmem:[#allocation9 + $0x18] sm:$0xff]
    %v5456 = vsel %vm356, %v5243, 0
    %5458 = vmatpush.msra.mxu0 0.0
    %5459 = vmatpush.msra.mxu0 0.0
    %5460 = vmatpush.msra.mxu0 0.0
    %5461 = vmatpush.msra.mxu0 0.0
    %5462 = vmatpush.msra.mxu0 0.0
    %5463 = vmatpush.msra.mxu0 0.0
    %5464 = vmatpush.msra.mxu0 0.0
    %5465 = vmatpush.msra.mxu0 0.0
    %5466 = vmatpush.msra.mxu0 0.0
    %5467 = vmatpush.msra.mxu0 0.0
    %5468 = vmatpush.msra.mxu0 0.0
    %5469 = vmatpush.msra.mxu0 0.0
    %5470 = vmatpush.msra.mxu0 %v5455
    %5471 = vmatpush.msra.mxu0 %v5454
    %5472 = vmatpush.msra.mxu0 %v5453
    %5473 = vmatpush.msra.mxu0 %v5452
    %5474 = vmatmul.f32.gmra.mxu0 %v5456
    %v5475 = vpop.f32.mrf.mxu0
    %v5476 = vadd.f32 %v5451, %v5475
    %5477 = vdwg.mxu0
    %v5478 = vmul.f32 %v5476, 0.5
    %v5479 = vtanh.pop %v5478
    %v5480 = vadd.f32 %v5479, 1.0
    %v5481 = vmul.f32 %v5480, 0.5
    %v5482 = vtanh.pop %v5476
    %v5483 = vmul.f32 %v5481, %v5234
    %5485 = vrot.lane.b32.xlu0 %v5482, 64
    %v5486 = vpop.permute.xlu0 %5485
    %v5488 = vmul.f32 %v5481, %v5486
    %5490 = vrot.lane.b32.xlu0 %v5488, 32
    %v5491 = vpop.permute.xlu0 %5490
    %v5493 = vadd.f32 %v5483, %v5491
    %v5494 = vtanh.pop %v5493
    %5496 = vrot.lane.b32.xlu0 %v5494, 64
    %v5497 = vpop.permute.xlu0 %5496
    %v5499 = vmul.f32 %v5481, %v5497
    %5501 = vrot.lane.b32.xlu0 %v5499, 32
    %v5502 = vpop.permute.xlu0 %5501
    %5504 = vrot.lane.b32.xlu0 %v5301, 64
    %v5505 = vpop.permute.xlu0 %5504
    %v5507 = vsel %vm356, %v5502, %v5505
    %v5508 = vld [vmem:[#allocation11] sm:$0xff]
    %v5509 = vld [vmem:[#allocation11 + $0x8] sm:$0xff]
    %v5510 = vld [vmem:[#allocation11 + $0x10] sm:$0xff]
    %v5511 = vld [vmem:[#allocation11 + $0x18] sm:$0xff]
    %v5512 = vld [vmem:[#allocation11 + $0x20] sm:$0xff]
    %v5513 = vld [vmem:[#allocation11 + $0x28] sm:$0xff]
    %v5514 = vld [vmem:[#allocation11 + $0x30] sm:$0xff]
    %v5515 = vld [vmem:[#allocation11 + $0x38] sm:$0xff]
    %v5517 = vsel %vm416, %v5507, 0
    %5519 = vmatpush.msra.mxu0 0.0
    %5520 = vmatpush.msra.mxu0 0.0
    %5521 = vmatpush.msra.mxu0 0.0
    %5522 = vmatpush.msra.mxu0 0.0
    %5523 = vmatpush.msra.mxu0 0.0
    %5524 = vmatpush.msra.mxu0 0.0
    %5525 = vmatpush.msra.mxu0 0.0
    %5526 = vmatpush.msra.mxu0 0.0
    %5527 = vmatpush.msra.mxu0 %v5515
    %5528 = vmatpush.msra.mxu0 %v5514
    %5529 = vmatpush.msra.mxu0 %v5513
    %5530 = vmatpush.msra.mxu0 %v5512
    %5531 = vmatpush.msra.mxu0 %v5511
    %5532 = vmatpush.msra.mxu0 %v5510
    %5533 = vmatpush.msra.mxu0 %v5509
    %5534 = vmatpush.msra.mxu0 %v5508
    %5535 = vmatmul.f32.gmra.mxu0 %v5517
    %v5536 = vpop.f32.mrf.mxu0
    %v5537 = vadd.f32 %v415, %v5536
    %5538 = vdwg.mxu0
    %v5539 = vmul.f32 %v5537, 0.5
    %v5540 = vtanh.pop %v5539
    %v5541 = vadd.f32 %v5540, 1.0
    %v5542 = vmul.f32 %v5541, 0.5
    %v5543 = vtanh.pop %v5537
    %v5544 = vmul.f32 %v5542, %v5295
    %5546 = vrot.lane.b32.xlu0 %v5543, 64
    %v5547 = vpop.permute.xlu0 %5546
    %v5549 = vmul.f32 %v5542, %v5547
    %5551 = vrot.lane.b32.xlu0 %v5549, 32
    %v5552 = vpop.permute.xlu0 %5551
    %v5554 = vadd.f32 %v5544, %v5552
    %v5555 = vtanh.pop %v5554
    %5557 = vrot.lane.b32.xlu0 %v5555, 64
    %v5558 = vpop.permute.xlu0 %5557
    %v5560 = vmul.f32 %v5542, %v5558
    %5562 = vrot.lane.b32.xlu0 %v5560, 32
    %v5563 = vpop.permute.xlu0 %5562
    %5565 = vrot.lane.b32.xlu0 %v5362, 64
    %v5566 = vpop.permute.xlu0 %5565
    %v5568 = vsel %vm356, %v5563, %v5566
    %v5569 = vld [vmem:[%s467] sm:$0xff]
    %v5570 = vld [vmem:[%s467 + $0x8] sm:$0xff]
    %v5571 = vld [vmem:[%s467 + $0x10] sm:$0xff]
    %v5572 = vld [vmem:[%s467 + $0x18] sm:$0xff]
    %v5573 = vld [vmem:[%s467 + $0x20] sm:$0xff]
    %v5574 = vld [vmem:[%s467 + $0x28] sm:$0xff]
    %v5575 = vld [vmem:[%s467 + $0x30] sm:$0xff]
    %v5576 = vld [vmem:[%s467 + $0x38] sm:$0xff]
    %v5578 = vsel %vm416, %v5568, 0
    %5580 = vmatpush.msra.mxu0 0.0
    %5581 = vmatpush.msra.mxu0 0.0
    %5582 = vmatpush.msra.mxu0 0.0
    %5583 = vmatpush.msra.mxu0 0.0
    %5584 = vmatpush.msra.mxu0 0.0
    %5585 = vmatpush.msra.mxu0 0.0
    %5586 = vmatpush.msra.mxu0 0.0
    %5587 = vmatpush.msra.mxu0 0.0
    %5588 = vmatpush.msra.mxu0 %v5576
    %5589 = vmatpush.msra.mxu0 %v5575
    %5590 = vmatpush.msra.mxu0 %v5574
    %5591 = vmatpush.msra.mxu0 %v5573
    %5592 = vmatpush.msra.mxu0 %v5572
    %5593 = vmatpush.msra.mxu0 %v5571
    %5594 = vmatpush.msra.mxu0 %v5570
    %5595 = vmatpush.msra.mxu0 %v5569
    %5596 = vmatmul.f32.gmra.mxu0 %v5578
    %v5597 = vpop.f32.mrf.mxu0
    %v5598 = vadd.f32 %v476, %v5597
    %5599 = vdwg.mxu0
    %v5600 = vmul.f32 %v5598, 0.5
    %v5601 = vtanh.pop %v5600
    %v5602 = vadd.f32 %v5601, 1.0
    %v5603 = vmul.f32 %v5602, 0.5
    %v5604 = vtanh.pop %v5598
    %v5605 = vmul.f32 %v5603, %v5356
    %5607 = vrot.lane.b32.xlu0 %v5604, 64
    %v5608 = vpop.permute.xlu0 %5607
    %v5610 = vmul.f32 %v5603, %v5608
    %5612 = vrot.lane.b32.xlu0 %v5610, 32
    %v5613 = vpop.permute.xlu0 %5612
    %v5615 = vadd.f32 %v5605, %v5613
    %v5616 = vtanh.pop %v5615
    %5618 = vrot.lane.b32.xlu0 %v5616, 64
    %v5619 = vpop.permute.xlu0 %5618
    %v5621 = vmul.f32 %v5603, %v5619
    %5623 = vrot.lane.b32.xlu0 %v5621, 32
    %v5624 = vpop.permute.xlu0 %5623
    %5627 = vrot.lane.b32.xlu0 %v5424, 64
    %v5628 = vpop.permute.xlu0 %5627
    %v5630 = vsel %vm356, %v5624, %v5628
    %v5631 = vld [vmem:[%s527] sm:$0xff]
    %v5632 = vld [vmem:[%s527 + $0x8] sm:$0xff]
    %v5633 = vld [vmem:[%s527 + $0x10] sm:$0xff]
    %v5634 = vld [vmem:[%s527 + $0x18] sm:$0xff]
    %v5635 = vld [vmem:[%s527 + $0x20] sm:$0xff]
    %v5636 = vld [vmem:[%s527 + $0x28] sm:$0xff]
    %v5637 = vld [vmem:[%s527 + $0x30] sm:$0xff]
    %v5638 = vld [vmem:[%s527 + $0x38] sm:$0xff]
    %v5640 = vsel %vm416, %v5630, 0
    %5642 = vmatpush.msra.mxu0 0.0
    %5643 = vmatpush.msra.mxu0 0.0
    %5644 = vmatpush.msra.mxu0 0.0
    %5645 = vmatpush.msra.mxu0 0.0
    %5646 = vmatpush.msra.mxu0 0.0
    %5647 = vmatpush.msra.mxu0 0.0
    %5648 = vmatpush.msra.mxu0 0.0
    %5649 = vmatpush.msra.mxu0 0.0
    %5650 = vmatpush.msra.mxu0 %v5638
    %5651 = vmatpush.msra.mxu0 %v5637
    %5652 = vmatpush.msra.mxu0 %v5636
    %5653 = vmatpush.msra.mxu0 %v5635
    %5654 = vmatpush.msra.mxu0 %v5634
    %5655 = vmatpush.msra.mxu0 %v5633
    %5656 = vmatpush.msra.mxu0 %v5632
    %5657 = vmatpush.msra.mxu0 %v5631
    %5658 = vmatmul.f32.gmra.mxu0 %v5640
    %v5659 = vpop.f32.mrf.mxu0
    %v5660 = vadd.f32 %v536, %v5659
    %5661 = vdwg.mxu0
    %v5662 = vmul.f32 %v5660, 0.5
    %v5663 = vtanh.pop %v5662
    %v5664 = vadd.f32 %v5663, 1.0
    %v5665 = vmul.f32 %v5664, 0.5
    %v5666 = vtanh.pop %v5660
    %v5667 = vmul.f32 %v5665, %v5418
    %5669 = vrot.lane.b32.xlu0 %v5666, 64
    %v5670 = vpop.permute.xlu0 %5669
    %v5672 = vmul.f32 %v5665, %v5670
    %5674 = vrot.lane.b32.xlu0 %v5672, 32
    %v5675 = vpop.permute.xlu0 %5674
    %v5677 = vadd.f32 %v5667, %v5675
    %v5678 = vtanh.pop %v5677
    %5680 = vrot.lane.b32.xlu0 %v5678, 64
    %v5681 = vpop.permute.xlu0 %5680
    %v5683 = vmul.f32 %v5665, %v5681
    %v5684 = vmul.f32 %v5683, %v585
    %5686 = vrot.lane.b32.xlu0 %v5684, 32
    %v5687 = vpop.permute.xlu0 %5686
    %v5689 = vsel %vm356, %v5687, 0.0
    %5690 = vadd.xlane.f32.xlu0 %v5689
    %v5691 = vpop.xlane.xlu0 %5690
    %v5692 = vadd.f32 %v5691, %v596
    %v5693 = vtanh.pop %v5692
    %5695 = vrot.lane.b32.xlu0 %v5693, 5
    %v5696 = vpop.permute.xlu0 %5695
    %v5698 = vadd.f32 %v302, %v5696
    %5700 = vrot.lane.b32.xlu0 %v5698, 15
    %v5701 = vpop.permute.xlu0 %5700
    %vm5703 = vcmask 171168
    %5704 = vst.msk [vmem:[#allocation12] sm:$0xff] %vm5703, %v5701
    %5705 = vset.pattern.permute.xlu0 5
    %5706 = vperm.xlu0 %5705, %v5698
    %v5707 = vpop.permute.xlu0 %5706
    %v5709 = vmul.f32 %v5707, %v122
    %v5710 = vadd.f32 %v5709, %v345
    %v5711 = vld [vmem:[#allocation9] sm:$0xff]
    %v5712 = vld [vmem:[#allocation9 + $0x8] sm:$0xff]
    %v5713 = vld [vmem:[#allocation9 + $0x10] sm:$0xff]
    %v5714 = vld [vmem:[#allocation9 + $0x18] sm:$0xff]
    %v5715 = vsel %vm356, %v5502, 0
    %5717 = vmatpush.msra.mxu0 0.0
    %5718 = vmatpush.msra.mxu0 0.0
    %5719 = vmatpush.msra.mxu0 0.0
    %5720 = vmatpush.msra.mxu0 0.0
    %5721 = vmatpush.msra.mxu0 0.0
    %5722 = vmatpush.msra.mxu0 0.0
    %5723 = vmatpush.msra.mxu0 0.0
    %5724 = vmatpush.msra.mxu0 0.0
    %5725 = vmatpush.msra.mxu0 0.0
    %5726 = vmatpush.msra.mxu0 0.0
    %5727 = vmatpush.msra.mxu0 0.0
    %5728 = vmatpush.msra.mxu0 0.0
    %5729 = vmatpush.msra.mxu0 %v5714
    %5730 = vmatpush.msra.mxu0 %v5713
    %5731 = vmatpush.msra.mxu0 %v5712
    %5732 = vmatpush.msra.mxu0 %v5711
    %5733 = vmatmul.f32.gmra.mxu0 %v5715
    %v5734 = vpop.f32.mrf.mxu0
    %v5735 = vadd.f32 %v5710, %v5734
    %5736 = vdwg.mxu0
    %v5737 = vmul.f32 %v5735, 0.5
    %v5738 = vtanh.pop %v5737
    %v5739 = vadd.f32 %v5738, 1.0
    %v5740 = vmul.f32 %v5739, 0.5
    %v5741 = vtanh.pop %v5735
    %v5742 = vmul.f32 %v5740, %v5493
    %5744 = vrot.lane.b32.xlu0 %v5741, 64
    %v5745 = vpop.permute.xlu0 %5744
    %v5747 = vmul.f32 %v5740, %v5745
    %5749 = vrot.lane.b32.xlu0 %v5747, 32
    %v5750 = vpop.permute.xlu0 %5749
    %v5752 = vadd.f32 %v5742, %v5750
    %v5753 = vtanh.pop %v5752
    %5755 = vrot.lane.b32.xlu0 %v5753, 64
    %v5756 = vpop.permute.xlu0 %5755
    %v5758 = vmul.f32 %v5740, %v5756
    %5760 = vrot.lane.b32.xlu0 %v5758, 32
    %v5761 = vpop.permute.xlu0 %5760
    %5763 = vrot.lane.b32.xlu0 %v5560, 64
    %v5764 = vpop.permute.xlu0 %5763
    %v5766 = vsel %vm356, %v5761, %v5764
    %v5767 = vld [vmem:[#allocation11] sm:$0xff]
    %v5768 = vld [vmem:[#allocation11 + $0x8] sm:$0xff]
    %v5769 = vld [vmem:[#allocation11 + $0x10] sm:$0xff]
    %v5770 = vld [vmem:[#allocation11 + $0x18] sm:$0xff]
    %v5771 = vld [vmem:[#allocation11 + $0x20] sm:$0xff]
    %v5772 = vld [vmem:[#allocation11 + $0x28] sm:$0xff]
    %v5773 = vld [vmem:[#allocation11 + $0x30] sm:$0xff]
    %v5774 = vld [vmem:[#allocation11 + $0x38] sm:$0xff]
    %v5776 = vsel %vm416, %v5766, 0
    %5778 = vmatpush.msra.mxu0 0.0
    %5779 = vmatpush.msra.mxu0 0.0
    %5780 = vmatpush.msra.mxu0 0.0
    %5781 = vmatpush.msra.mxu0 0.0
    %5782 = vmatpush.msra.mxu0 0.0
    %5783 = vmatpush.msra.mxu0 0.0
    %5784 = vmatpush.msra.mxu0 0.0
    %5785 = vmatpush.msra.mxu0 0.0
    %5786 = vmatpush.msra.mxu0 %v5774
    %5787 = vmatpush.msra.mxu0 %v5773
    %5788 = vmatpush.msra.mxu0 %v5772
    %5789 = vmatpush.msra.mxu0 %v5771
    %5790 = vmatpush.msra.mxu0 %v5770
    %5791 = vmatpush.msra.mxu0 %v5769
    %5792 = vmatpush.msra.mxu0 %v5768
    %5793 = vmatpush.msra.mxu0 %v5767
    %5794 = vmatmul.f32.gmra.mxu0 %v5776
    %v5795 = vpop.f32.mrf.mxu0
    %v5796 = vadd.f32 %v415, %v5795
    %5797 = vdwg.mxu0
    %v5798 = vmul.f32 %v5796, 0.5
    %v5799 = vtanh.pop %v5798
    %v5800 = vadd.f32 %v5799, 1.0
    %v5801 = vmul.f32 %v5800, 0.5
    %v5802 = vtanh.pop %v5796
    %v5803 = vmul.f32 %v5801, %v5554
    %5805 = vrot.lane.b32.xlu0 %v5802, 64
    %v5806 = vpop.permute.xlu0 %5805
    %v5808 = vmul.f32 %v5801, %v5806
    %5810 = vrot.lane.b32.xlu0 %v5808, 32
    %v5811 = vpop.permute.xlu0 %5810
    %v5813 = vadd.f32 %v5803, %v5811
    %v5814 = vtanh.pop %v5813
    %5816 = vrot.lane.b32.xlu0 %v5814, 64
    %v5817 = vpop.permute.xlu0 %5816
    %v5819 = vmul.f32 %v5801, %v5817
    %5821 = vrot.lane.b32.xlu0 %v5819, 32
    %v5822 = vpop.permute.xlu0 %5821
    %5824 = vrot.lane.b32.xlu0 %v5621, 64
    %v5825 = vpop.permute.xlu0 %5824
    %v5827 = vsel %vm356, %v5822, %v5825
    %v5828 = vld [vmem:[%s467] sm:$0xff]
    %v5829 = vld [vmem:[%s467 + $0x8] sm:$0xff]
    %v5830 = vld [vmem:[%s467 + $0x10] sm:$0xff]
    %v5831 = vld [vmem:[%s467 + $0x18] sm:$0xff]
    %v5832 = vld [vmem:[%s467 + $0x20] sm:$0xff]
    %v5833 = vld [vmem:[%s467 + $0x28] sm:$0xff]
    %v5834 = vld [vmem:[%s467 + $0x30] sm:$0xff]
    %v5835 = vld [vmem:[%s467 + $0x38] sm:$0xff]
    %v5837 = vsel %vm416, %v5827, 0
    %5839 = vmatpush.msra.mxu0 0.0
    %5840 = vmatpush.msra.mxu0 0.0
    %5841 = vmatpush.msra.mxu0 0.0
    %5842 = vmatpush.msra.mxu0 0.0
    %5843 = vmatpush.msra.mxu0 0.0
    %5844 = vmatpush.msra.mxu0 0.0
    %5845 = vmatpush.msra.mxu0 0.0
    %5846 = vmatpush.msra.mxu0 0.0
    %5847 = vmatpush.msra.mxu0 %v5835
    %5848 = vmatpush.msra.mxu0 %v5834
    %5849 = vmatpush.msra.mxu0 %v5833
    %5850 = vmatpush.msra.mxu0 %v5832
    %5851 = vmatpush.msra.mxu0 %v5831
    %5852 = vmatpush.msra.mxu0 %v5830
    %5853 = vmatpush.msra.mxu0 %v5829
    %5854 = vmatpush.msra.mxu0 %v5828
    %5855 = vmatmul.f32.gmra.mxu0 %v5837
    %v5856 = vpop.f32.mrf.mxu0
    %v5857 = vadd.f32 %v476, %v5856
    %5858 = vdwg.mxu0
    %v5859 = vmul.f32 %v5857, 0.5
    %v5860 = vtanh.pop %v5859
    %v5861 = vadd.f32 %v5860, 1.0
    %v5862 = vmul.f32 %v5861, 0.5
    %v5863 = vtanh.pop %v5857
    %v5864 = vmul.f32 %v5862, %v5615
    %5866 = vrot.lane.b32.xlu0 %v5863, 64
    %v5867 = vpop.permute.xlu0 %5866
    %v5869 = vmul.f32 %v5862, %v5867
    %5871 = vrot.lane.b32.xlu0 %v5869, 32
    %v5872 = vpop.permute.xlu0 %5871
    %v5874 = vadd.f32 %v5864, %v5872
    %v5875 = vtanh.pop %v5874
    %5877 = vrot.lane.b32.xlu0 %v5875, 64
    %v5878 = vpop.permute.xlu0 %5877
    %v5880 = vmul.f32 %v5862, %v5878
    %5882 = vrot.lane.b32.xlu0 %v5880, 32
    %v5883 = vpop.permute.xlu0 %5882
    %5886 = vrot.lane.b32.xlu0 %v5683, 64
    %v5887 = vpop.permute.xlu0 %5886
    %v5889 = vsel %vm356, %v5883, %v5887
    %v5890 = vld [vmem:[%s527] sm:$0xff]
    %v5891 = vld [vmem:[%s527 + $0x8] sm:$0xff]
    %v5892 = vld [vmem:[%s527 + $0x10] sm:$0xff]
    %v5893 = vld [vmem:[%s527 + $0x18] sm:$0xff]
    %v5894 = vld [vmem:[%s527 + $0x20] sm:$0xff]
    %v5895 = vld [vmem:[%s527 + $0x28] sm:$0xff]
    %v5896 = vld [vmem:[%s527 + $0x30] sm:$0xff]
    %v5897 = vld [vmem:[%s527 + $0x38] sm:$0xff]
    %v5899 = vsel %vm416, %v5889, 0
    %5901 = vmatpush.msra.mxu0 0.0
    %5902 = vmatpush.msra.mxu0 0.0
    %5903 = vmatpush.msra.mxu0 0.0
    %5904 = vmatpush.msra.mxu0 0.0
    %5905 = vmatpush.msra.mxu0 0.0
    %5906 = vmatpush.msra.mxu0 0.0
    %5907 = vmatpush.msra.mxu0 0.0
    %5908 = vmatpush.msra.mxu0 0.0
    %5909 = vmatpush.msra.mxu0 %v5897
    %5910 = vmatpush.msra.mxu0 %v5896
    %5911 = vmatpush.msra.mxu0 %v5895
    %5912 = vmatpush.msra.mxu0 %v5894
    %5913 = vmatpush.msra.mxu0 %v5893
    %5914 = vmatpush.msra.mxu0 %v5892
    %5915 = vmatpush.msra.mxu0 %v5891
    %5916 = vmatpush.msra.mxu0 %v5890
    %5917 = vmatmul.f32.gmra.mxu0 %v5899
    %v5918 = vpop.f32.mrf.mxu0
    %v5919 = vadd.f32 %v536, %v5918
    %5920 = vdwg.mxu0
    %v5921 = vmul.f32 %v5919, 0.5
    %v5922 = vtanh.pop %v5921
    %v5923 = vadd.f32 %v5922, 1.0
    %v5924 = vmul.f32 %v5923, 0.5
    %v5925 = vtanh.pop %v5919
    %v5926 = vmul.f32 %v5924, %v5677
    %5928 = vrot.lane.b32.xlu0 %v5925, 64
    %v5929 = vpop.permute.xlu0 %5928
    %v5931 = vmul.f32 %v5924, %v5929
    %5933 = vrot.lane.b32.xlu0 %v5931, 32
    %v5934 = vpop.permute.xlu0 %5933
    %v5936 = vadd.f32 %v5926, %v5934
    %v5937 = vtanh.pop %v5936
    %5939 = vrot.lane.b32.xlu0 %v5937, 64
    %v5940 = vpop.permute.xlu0 %5939
    %v5942 = vmul.f32 %v5924, %v5940
    %v5943 = vmul.f32 %v5942, %v585
    %5945 = vrot.lane.b32.xlu0 %v5943, 32
    %v5946 = vpop.permute.xlu0 %5945
    %v5948 = vsel %vm356, %v5946, 0.0
    %5949 = vadd.xlane.f32.xlu0 %v5948
    %v5950 = vpop.xlane.xlu0 %5949
    %v5951 = vadd.f32 %v5950, %v596
    %v5952 = vtanh.pop %v5951
    %5954 = vrot.lane.b32.xlu0 %v5952, 6
    %v5955 = vpop.permute.xlu0 %5954
    %v5957 = vadd.f32 %v302, %v5955
    %5959 = vrot.lane.b32.xlu0 %v5957, 15
    %v5960 = vpop.permute.xlu0 %5959
    %vm5962 = vcmask 179368
    %5963 = vst.msk [vmem:[#allocation12] sm:$0xff] %vm5962, %v5960
    %5964 = vset.pattern.permute.xlu0 6
    %5965 = vperm.xlu0 %5964, %v5957
    %v5966 = vpop.permute.xlu0 %5965
    %v5968 = vmul.f32 %v5966, %v122
    %v5969 = vadd.f32 %v5968, %v351
    %v5970 = vld [vmem:[#allocation9] sm:$0xff]
    %v5971 = vld [vmem:[#allocation9 + $0x8] sm:$0xff]
    %v5972 = vld [vmem:[#allocation9 + $0x10] sm:$0xff]
    %v5973 = vld [vmem:[#allocation9 + $0x18] sm:$0xff]
    %v5974 = vsel %vm356, %v5761, 0
    %5976 = vmatpush.msra.mxu0 0.0
    %5977 = vmatpush.msra.mxu0 0.0
    %5978 = vmatpush.msra.mxu0 0.0
    %5979 = vmatpush.msra.mxu0 0.0
    %5980 = vmatpush.msra.mxu0 0.0
    %5981 = vmatpush.msra.mxu0 0.0
    %5982 = vmatpush.msra.mxu0 0.0
    %5983 = vmatpush.msra.mxu0 0.0
    %5984 = vmatpush.msra.mxu0 0.0
    %5985 = vmatpush.msra.mxu0 0.0
    %5986 = vmatpush.msra.mxu0 0.0
    %5987 = vmatpush.msra.mxu0 0.0
    %5988 = vmatpush.msra.mxu0 %v5973
    %5989 = vmatpush.msra.mxu0 %v5972
    %5990 = vmatpush.msra.mxu0 %v5971
    %5991 = vmatpush.msra.mxu0 %v5970
    %5992 = vmatmul.f32.gmra.mxu0 %v5974
    %v5993 = vpop.f32.mrf.mxu0
    %v5994 = vadd.f32 %v5969, %v5993
    %5995 = vdwg.mxu0
    %v5996 = vmul.f32 %v5994, 0.5
    %v5997 = vtanh.pop %v5996
    %v5998 = vadd.f32 %v5997, 1.0
    %v5999 = vmul.f32 %v5998, 0.5
    %v6000 = vtanh.pop %v5994
    %v6001 = vmul.f32 %v5999, %v5752
    %6003 = vrot.lane.b32.xlu0 %v6000, 64
    %v6004 = vpop.permute.xlu0 %6003
    %v6006 = vmul.f32 %v5999, %v6004
    %6008 = vrot.lane.b32.xlu0 %v6006, 32
    %v6009 = vpop.permute.xlu0 %6008
    %v6011 = vadd.f32 %v6001, %v6009
    %v6012 = vtanh.pop %v6011
    %6014 = vrot.lane.b32.xlu0 %v6012, 64
    %v6015 = vpop.permute.xlu0 %6014
    %v6017 = vmul.f32 %v5999, %v6015
    %6019 = vrot.lane.b32.xlu0 %v6017, 32
    %v6020 = vpop.permute.xlu0 %6019
    %6022 = vrot.lane.b32.xlu0 %v5819, 64
    %v6023 = vpop.permute.xlu0 %6022
    %v6025 = vsel %vm356, %v6020, %v6023
    %v6026 = vld [vmem:[#allocation11] sm:$0xff]
    %v6027 = vld [vmem:[#allocation11 + $0x8] sm:$0xff]
    %v6028 = vld [vmem:[#allocation11 + $0x10] sm:$0xff]
    %v6029 = vld [vmem:[#allocation11 + $0x18] sm:$0xff]
    %v6030 = vld [vmem:[#allocation11 + $0x20] sm:$0xff]
    %v6031 = vld [vmem:[#allocation11 + $0x28] sm:$0xff]
    %v6032 = vld [vmem:[#allocation11 + $0x30] sm:$0xff]
    %v6033 = vld [vmem:[#allocation11 + $0x38] sm:$0xff]
    %v6035 = vsel %vm416, %v6025, 0
    %6037 = vmatpush.msra.mxu0 0.0
    %6038 = vmatpush.msra.mxu0 0.0
    %6039 = vmatpush.msra.mxu0 0.0
    %6040 = vmatpush.msra.mxu0 0.0
    %6041 = vmatpush.msra.mxu0 0.0
    %6042 = vmatpush.msra.mxu0 0.0
    %6043 = vmatpush.msra.mxu0 0.0
    %6044 = vmatpush.msra.mxu0 0.0
    %6045 = vmatpush.msra.mxu0 %v6033
    %6046 = vmatpush.msra.mxu0 %v6032
    %6047 = vmatpush.msra.mxu0 %v6031
    %6048 = vmatpush.msra.mxu0 %v6030
    %6049 = vmatpush.msra.mxu0 %v6029
    %6050 = vmatpush.msra.mxu0 %v6028
    %6051 = vmatpush.msra.mxu0 %v6027
    %6052 = vmatpush.msra.mxu0 %v6026
    %6053 = vmatmul.f32.gmra.mxu0 %v6035
    %v6054 = vpop.f32.mrf.mxu0
    %v6055 = vadd.f32 %v415, %v6054
    %6056 = vdwg.mxu0
    %v6057 = vmul.f32 %v6055, 0.5
    %v6058 = vtanh.pop %v6057
    %v6059 = vadd.f32 %v6058, 1.0
    %v6060 = vmul.f32 %v6059, 0.5
    %v6061 = vtanh.pop %v6055
    %v6062 = vmul.f32 %v6060, %v5813
    %6064 = vrot.lane.b32.xlu0 %v6061, 64
    %v6065 = vpop.permute.xlu0 %6064
    %v6067 = vmul.f32 %v6060, %v6065
    %6069 = vrot.lane.b32.xlu0 %v6067, 32
    %v6070 = vpop.permute.xlu0 %6069
    %v6072 = vadd.f32 %v6062, %v6070
    %v6073 = vtanh.pop %v6072
    %6075 = vrot.lane.b32.xlu0 %v6073, 64
    %v6076 = vpop.permute.xlu0 %6075
    %v6078 = vmul.f32 %v6060, %v6076
    %6080 = vrot.lane.b32.xlu0 %v6078, 32
    %v6081 = vpop.permute.xlu0 %6080
    %6083 = vrot.lane.b32.xlu0 %v5880, 64
    %v6084 = vpop.permute.xlu0 %6083
    %v6086 = vsel %vm356, %v6081, %v6084
    %v6087 = vld [vmem:[%s467] sm:$0xff]
    %v6088 = vld [vmem:[%s467 + $0x8] sm:$0xff]
    %v6089 = vld [vmem:[%s467 + $0x10] sm:$0xff]
    %v6090 = vld [vmem:[%s467 + $0x18] sm:$0xff]
    %v6091 = vld [vmem:[%s467 + $0x20] sm:$0xff]
    %v6092 = vld [vmem:[%s467 + $0x28] sm:$0xff]
    %v6093 = vld [vmem:[%s467 + $0x30] sm:$0xff]
    %v6094 = vld [vmem:[%s467 + $0x38] sm:$0xff]
    %v6096 = vsel %vm416, %v6086, 0
    %6098 = vmatpush.msra.mxu0 0.0
    %6099 = vmatpush.msra.mxu0 0.0
    %6100 = vmatpush.msra.mxu0 0.0
    %6101 = vmatpush.msra.mxu0 0.0
    %6102 = vmatpush.msra.mxu0 0.0
    %6103 = vmatpush.msra.mxu0 0.0
    %6104 = vmatpush.msra.mxu0 0.0
    %6105 = vmatpush.msra.mxu0 0.0
    %6106 = vmatpush.msra.mxu0 %v6094
    %6107 = vmatpush.msra.mxu0 %v6093
    %6108 = vmatpush.msra.mxu0 %v6092
    %6109 = vmatpush.msra.mxu0 %v6091
    %6110 = vmatpush.msra.mxu0 %v6090
    %6111 = vmatpush.msra.mxu0 %v6089
    %6112 = vmatpush.msra.mxu0 %v6088
    %6113 = vmatpush.msra.mxu0 %v6087
    %6114 = vmatmul.f32.gmra.mxu0 %v6096
    %v6115 = vpop.f32.mrf.mxu0
    %v6116 = vadd.f32 %v476, %v6115
    %6117 = vdwg.mxu0
    %v6118 = vmul.f32 %v6116, 0.5
    %v6119 = vtanh.pop %v6118
    %v6120 = vadd.f32 %v6119, 1.0
    %v6121 = vmul.f32 %v6120, 0.5
    %v6122 = vtanh.pop %v6116
    %v6123 = vmul.f32 %v6121, %v5874
    %6125 = vrot.lane.b32.xlu0 %v6122, 64
    %v6126 = vpop.permute.xlu0 %6125
    %v6128 = vmul.f32 %v6121, %v6126
    %6130 = vrot.lane.b32.xlu0 %v6128, 32
    %v6131 = vpop.permute.xlu0 %6130
    %v6133 = vadd.f32 %v6123, %v6131
    %v6134 = vtanh.pop %v6133
    %6136 = vrot.lane.b32.xlu0 %v6134, 64
    %v6137 = vpop.permute.xlu0 %6136
    %v6139 = vmul.f32 %v6121, %v6137
    %6141 = vrot.lane.b32.xlu0 %v6139, 32
    %v6142 = vpop.permute.xlu0 %6141
    %6145 = vrot.lane.b32.xlu0 %v5942, 64
    %v6146 = vpop.permute.xlu0 %6145
    %v6148 = vsel %vm356, %v6142, %v6146
    %v6149 = vld [vmem:[%s527] sm:$0xff]
    %v6150 = vld [vmem:[%s527 + $0x8] sm:$0xff]
    %v6151 = vld [vmem:[%s527 + $0x10] sm:$0xff]
    %v6152 = vld [vmem:[%s527 + $0x18] sm:$0xff]
    %v6153 = vld [vmem:[%s527 + $0x20] sm:$0xff]
    %v6154 = vld [vmem:[%s527 + $0x28] sm:$0xff]
    %v6155 = vld [vmem:[%s527 + $0x30] sm:$0xff]
    %v6156 = vld [vmem:[%s527 + $0x38] sm:$0xff]
    %v6158 = vsel %vm416, %v6148, 0
    %6160 = vmatpush.msra.mxu0 0.0
    %6161 = vmatpush.msra.mxu0 0.0
    %6162 = vmatpush.msra.mxu0 0.0
    %6163 = vmatpush.msra.mxu0 0.0
    %6164 = vmatpush.msra.mxu0 0.0
    %6165 = vmatpush.msra.mxu0 0.0
    %6166 = vmatpush.msra.mxu0 0.0
    %6167 = vmatpush.msra.mxu0 0.0
    %6168 = vmatpush.msra.mxu0 %v6156
    %6169 = vmatpush.msra.mxu0 %v6155
    %6170 = vmatpush.msra.mxu0 %v6154
    %6171 = vmatpush.msra.mxu0 %v6153
    %6172 = vmatpush.msra.mxu0 %v6152
    %6173 = vmatpush.msra.mxu0 %v6151
    %6174 = vmatpush.msra.mxu0 %v6150
    %6175 = vmatpush.msra.mxu0 %v6149
    %6176 = vmatmul.f32.gmra.mxu0 %v6158
    %v6177 = vpop.f32.mrf.mxu0
    %v6178 = vadd.f32 %v536, %v6177
    %6179 = vdwg.mxu0
    %v6180 = vmul.f32 %v6178, 0.5
    %v6181 = vtanh.pop %v6180
    %v6182 = vadd.f32 %v6181, 1.0
    %v6183 = vmul.f32 %v6182, 0.5
    %v6184 = vtanh.pop %v6178
    %v6185 = vmul.f32 %v6183, %v5936
    %6187 = vrot.lane.b32.xlu0 %v6184, 64
    %v6188 = vpop.permute.xlu0 %6187
    %v6190 = vmul.f32 %v6183, %v6188
    %6192 = vrot.lane.b32.xlu0 %v6190, 32
    %v6193 = vpop.permute.xlu0 %6192
    %v6195 = vadd.f32 %v6185, %v6193
    %v6196 = vtanh.pop %v6195
    %6198 = vrot.lane.b32.xlu0 %v6196, 64
    %v6199 = vpop.permute.xlu0 %6198
    %v6201 = vmul.f32 %v6183, %v6199
    %v6202 = vmul.f32 %v6201, %v585
    %6204 = vrot.lane.b32.xlu0 %v6202, 32
    %v6205 = vpop.permute.xlu0 %6204
    %v6207 = vsel %vm356, %v6205, 0.0
    %6208 = vadd.xlane.f32.xlu0 %v6207
    %v6209 = vpop.xlane.xlu0 %6208
    %v6210 = vadd.f32 %v6209, %v596
    %v6211 = vtanh.pop %v6210
    %6213 = vrot.lane.b32.xlu0 %v6211, 7
    %v6214 = vpop.permute.xlu0 %6213
    %v6216 = vadd.f32 %v302, %v6214
    %6218 = vrot.lane.b32.xlu0 %v6216, 15
    %v6219 = vpop.permute.xlu0 %6218
    %vm6221 = vcmask 187568
    %6222 = vst.msk [vmem:[#allocation12] sm:$0xff] %vm6221, %v6219
    // Predicated region
    $region58: #{tpu_custom_call.1} parent=1 // pred_check
      _
    $region59: #{tpu_custom_call.1} parent=1 // pred_check_branch
      %6224 = sbr.rel (0) target = $region61
    $region60: #{tpu_custom_call.1} parent=1 // pred_region
      %6226 = vsyncadd [#allocation5], 0
      %s6228 = sshll.u32 [#allocation12], 4
      %s6229 = int_to_ptr.vmem [resolvable:$true] %s6228
      %s6230 = sshll.u32 %s9, 4
      %s6231 = int_to_ptr.hbm [resolvable:$true] %s6230
      %6233 = dma.vmem_to_hbm [thread:$0]  %s6229, 128, %s6231, [#allocation5]
    $region61: #{tpu_custom_call.1} parent=1 // pred_fallthru
      _
    // Predicated region
    $region62: #{tpu_custom_call.1} parent=1 // pred_check
      _
    $region63: #{tpu_custom_call.1} parent=1 // pred_check_branch
      %6235 = sbr.rel (0) target = $region65
    $region64: #{tpu_custom_call.1} parent=1 // pred_region
      %6237 = dma.done [#allocation5], 128
    $region65: #{tpu_custom_call.1} parent=1 // pred_fallthru
      _
    %6238 = vsyncpa [#allocation4], 1
    %6239 = vsyncpa [#allocation7], 1
    %6240 = vsyncpa [#allocation10], 1
    %6241 = vsyncpa [#allocation5], 1

</llo_original>
